<compile_context>
chip_gen: v5e
topology: v5e:2x2
jax: 0.10.0
libtpu: 0.0.40
codegen_flags: <defaults>
</compile_context>

<pallas_src>
import functools

import jax
import jax.numpy as jnp
from jax.experimental import pallas as pl
from jax.experimental.pallas import tpu as pltpu

_VMEM_LIMIT = 32 * 1024 * 1024  # safe on v5e/v6e (128 MiB) and v7x (64 MiB physical)


# ----------------------------------------------------------------------------
# Kernel 1: fused Conv2d(3x3, pad=1) + BatchNorm(eval) + ReLU + MaxPool2d(2)
# ----------------------------------------------------------------------------
def _conv_bn_relu_pool_kernel(ph_ref, w_ref, shift_ref, o_ref, *, h2, b):
    """One image per grid step.

    ph_ref:    (1, 4, A*B, C_in)  stride-2 phases of the padded NHWC image;
               phase p = py*2+px holds xp[2a+py, 2b+px, :] flattened over (a, b).
    w_ref:     (9, C_in, C_out)   3x3 taps (kh*3+kw), BN scale pre-folded in.
    shift_ref: (1, C_out)         folded BN shift (+ conv bias).
    o_ref:     (1, h2*b, C_out)   pooled output; row i*b + j.  Column j == b-1 is
               junk (dropped / zero-weighted by the caller).
    """
    n_rows = h2 * b
    c_in = w_ref.shape[1]
    c_out = w_ref.shape[2]
    pooled = None
    for dy in range(2):              # which row of the 2x2 pooling window
        for dx in range(2):          # which column of the 2x2 pooling window
            acc = jnp.zeros((n_rows, c_out), jnp.float32)
            for kh in range(3):      # 3x3 conv taps
                for kw in range(3):
                    u, v = dy + kh, dx + kw
                    src = (u % 2) * 2 + (v % 2)          # source input phase
                    off = (u // 2) * b + (v // 2)        # constant row offset
                    lhs = ph_ref[0, src, off:off + n_rows, :]   # (n_rows, C_in)
                    w_tap = w_ref[kh * 3 + kw]                  # (C_in, C_out)
                    if c_in == 1:
                        acc = acc + lhs * w_tap          # VPU broadcast MAC
                    else:
                        acc = acc + jnp.dot(lhs, w_tap,
                                            preferred_element_type=jnp.float32)
            pooled = acc if pooled is None else jnp.maximum(pooled, acc)
    # shift is per-channel (same for all 4 phases) and ReLU is monotonic, so
    # applying them after the max is exactly Conv->BN->ReLU->MaxPool.
    out = jnp.maximum(pooled + shift_ref[...], 0.0)
    o_ref[0] = out.astype(o_ref.dtype)


def conv_bn_relu_pool(phases, w_folded, shift, h2, b):
    n, _, ab, c_in = phases.shape
    c_out = w_folded.shape[2]
    return pl.pallas_call(
        functools.partial(_conv_bn_relu_pool_kernel, h2=h2, b=b),
        out_shape=jax.ShapeDtypeStruct((n, h2 * b, c_out), jnp.float32),
        grid=(n,),
        in_specs=[
            pl.BlockSpec((1, 4, ab, c_in), lambda i: (i, 0, 0, 0)),
            pl.BlockSpec((9, c_in, c_out), lambda i: (0, 0, 0)),
            pl.BlockSpec((1, c_out), lambda i: (0, 0)),
        ],
        out_specs=pl.BlockSpec((1, h2 * b, c_out), lambda i: (i, 0, 0)),
        compiler_params=pltpu.CompilerParams(
            dimension_semantics=("parallel",),
            vmem_limit_bytes=_VMEM_LIMIT),
    )(phases, w_folded, shift)


# ----------------------------------------------------------------------------
# Kernel 2: M-tiled Linear (+ optional ReLU)
# ----------------------------------------------------------------------------
def _linear_kernel(a_ref, w_ref, b_ref, o_ref, *, relu):
    out = jnp.dot(a_ref[...], w_ref[...], preferred_element_type=jnp.float32)
    out = out + b_ref[...]
    if relu:
        out = jnp.maximum(out, 0.0)
    o_ref[...] = out.astype(o_ref.dtype)


def linear(a, w, b, *, relu, tile_m=512):
    m, k = a.shape
    k2, nout = w.shape
    assert k == k2
    tm = min(tile_m, m)
    mp = ((m + tm - 1) // tm) * tm
    a_p = jnp.pad(a, ((0, mp - m), (0, 0))) if mp != m else a
    out = pl.pallas_call(
        functools.partial(_linear_kernel, relu=relu),
        out_shape=jax.ShapeDtypeStruct((mp, nout), jnp.float32),
        grid=(mp // tm,),
        in_specs=[
            pl.BlockSpec((tm, k), lambda i: (i, 0)),
            pl.BlockSpec((k, nout), lambda i: (0, 0)),
            pl.BlockSpec((1, nout), lambda i: (0, 0)),
        ],
        out_specs=pl.BlockSpec((tm, nout), lambda i: (i, 0)),
        compiler_params=pltpu.CompilerParams(
            dimension_semantics=("parallel",),
            vmem_limit_bytes=_VMEM_LIMIT),
    )(a_p, w, b)
    return out[:m] if mp != m else out


# ----------------------------------------------------------------------------
# XLA-side glue: phase split (same byte count as the activation, no blow-up)
# ----------------------------------------------------------------------------
def make_phases(x):
    """NHWC -> (N, 4, A*B, C) stride-2 phases of the zero-padded image.

    Padding is (top=1, bottom=3, left=1, right=1): the extra bottom rows give the
    in-kernel constant-offset slices head-room; they never touch valid outputs.
    """
    n, h, w, c = x.shape
    xp = jnp.pad(x, ((0, 0), (1, 3), (1, 1), (0, 0)))
    a, b = (h + 4) // 2, (w + 2) // 2
    ph = jnp.stack([xp[:, py::2, px::2, :] for py in (0, 1) for px in (0, 1)],
                   axis=1)                              # (N, 4, A, B, C)
    return ph.reshape(n, 4, a * b, c), h // 2, b


# ----------------------------------------------------------------------------
# One-time parameter preparation (outside the traced forward)
# ----------------------------------------------------------------------------
def prepare_params(params, eps=1e-5):
    def fold(w, bias, gamma, beta, mean, var):
        s = gamma / jnp.sqrt(var + eps)                         # (C_out,)
        wf = (jnp.transpose(w, (2, 3, 1, 0)) * s)               # (3,3,C_in,C_out)
        wf = wf.reshape(9, w.shape[1], w.shape[0])
        shift = ((bias - mean) * s + beta).reshape(1, -1)
        return wf.astype(jnp.float32), shift.astype(jnp.float32)

    w1f, shift1 = fold(params["conv1_w"], params["conv1_b"], params["bn1_gamma"],
                       params["bn1_beta"], params["bn1_mean"], params["bn1_var"])
    w2f, shift2 = fold(params["conv2_w"], params["conv2_b"], params["bn2_gamma"],
                       params["bn2_beta"], params["bn2_mean"], params["bn2_var"])

    # fc1: torch columns are c*49 + h*7 + w; re-order to (h, w, c) channels-last,
    # pad w 7->8 with zero rows (absorbs the conv-kernel junk column), store as (K, N).
    fw1 = params["fc1_w"].reshape(128, 64, 7, 7)
    fw1 = jnp.transpose(fw1, (2, 3, 1, 0))            # (h, w, c, out)
    fw1 = jnp.pad(fw1, ((0, 0), (0, 1), (0, 0), (0, 0)))
    fw1 = fw1.reshape(7 * 8 * 64, 128)

    return {
        "w1f": w1f, "shift1": shift1,
        "w2f": w2f, "shift2": shift2,
        "fc1_w": fw1, "fc1_b": params["fc1_b"].reshape(1, -1),
        "fc2_w": params["fc2_w"].T, "fc2_b": params["fc2_b"].reshape(1, -1),
    }


# ----------------------------------------------------------------------------
# Forward pass (eval mode)
# ----------------------------------------------------------------------------
def simple_cnn_forward(x_nchw, p):
    n = x_nchw.shape[0]
    x = jnp.transpose(x_nchw, (0, 2, 3, 1))                    # NCHW -> NHWC (C=1: free)

    # block 1: Conv(1->32)+BN+ReLU+Pool, fused
    ph1, h2, b1 = make_phases(x)
    y = conv_bn_relu_pool(ph1, p["w1f"], p["shift1"], h2, b1)  # (N, 14*15, 32)
    y = y.reshape(n, h2, b1, -1)[:, :, : b1 - 1, :]            # drop junk col -> (N,14,14,32)

    # block 2: Conv(32->64)+BN+ReLU+Pool, fused
    ph2, h2b, b2 = make_phases(y)
    y2 = conv_bn_relu_pool(ph2, p["w2f"], p["shift2"], h2b, b2)  # (N, 7*8, 64)

    # flatten channels-last (junk column gets zero weights in fc1_w)
    flat = y2.reshape(n, -1)                                   # (N, 3584)

    h = linear(flat, p["fc1_w"], p["fc1_b"], relu=True)        # fc1 + (eval-Dropout) + ReLU
    return linear(h, p["fc2_w"], p["fc2_b"], relu=False)       # fc2


# ----------------------------------------------------------------------------
# Pure-JAX reference (torch eval semantics) and deterministic params
# ----------------------------------------------------------------------------
def reference_forward(x, params, eps=1e-5):
    hp = jax.lax.Precision.HIGHEST

    def block(x, w, bias, gamma, beta, mean, var):
        y = jax.lax.conv_general_dilated(
            x, w, window_strides=(1, 1), padding=((1, 1), (1, 1)),
            dimension_numbers=("NCHW", "OIHW", "NCHW"), precision=hp)
        y = y + bias[None, :, None, None]
        s = gamma / jnp.sqrt(var + eps)
        y = y * s[None, :, None, None] + (beta - mean * s)[None, :, None, None]
        y = jnp.maximum(y, 0.0)
        n, c, h, w_ = y.shape
        return y.reshape(n, c, h // 2, 2, w_ // 2, 2).max(axis=(3, 5))

    y = block(x, params["conv1_w"], params["conv1_b"], params["bn1_gamma"],
              params["bn1_beta"], params["bn1_mean"], params["bn1_var"])
    y = block(y, params["conv2_w"], params["conv2_b"], params["bn2_gamma"],
              params["bn2_beta"], params["bn2_mean"], params["bn2_var"])
    flat = y.reshape(y.shape[0], -1)
    h = jnp.maximum(jnp.dot(flat, params["fc1_w"].T, precision=hp) + params["fc1_b"], 0.0)
    return jnp.dot(h, params["fc2_w"].T, precision=hp) + params["fc2_b"]


def make_params(key):
    ks = jax.random.split(key, 16)
    f32 = jnp.float32
    return {
        "conv1_w": 0.1 * jax.random.normal(ks[0], (32, 1, 3, 3), f32),
        "conv1_b": 0.1 * jax.random.normal(ks[1], (32,), f32),
        "bn1_gamma": 1.0 + 0.05 * jax.random.normal(ks[2], (32,), f32),
        "bn1_beta": 0.05 * jax.random.normal(ks[3], (32,), f32),
        "bn1_mean": 0.05 * jax.random.normal(ks[4], (32,), f32),
        "bn1_var": 1.0 + 0.05 * jnp.abs(jax.random.normal(ks[5], (32,), f32)),
        "conv2_w": 0.05 * jax.random.normal(ks[6], (64, 32, 3, 3), f32),
        "conv2_b": 0.1 * jax.random.normal(ks[7], (64,), f32),
        "bn2_gamma": 1.0 + 0.05 * jax.random.normal(ks[8], (64,), f32),
        "bn2_beta": 0.05 * jax.random.normal(ks[9], (64,), f32),
        "bn2_mean": 0.05 * jax.random.normal(ks[10], (64,), f32),
        "bn2_var": 1.0 + 0.05 * jnp.abs(jax.random.normal(ks[11], (64,), f32)),
        "fc1_w": 0.02 * jax.random.normal(ks[12], (128, 64 * 7 * 7), f32),
        "fc1_b": 0.1 * jax.random.normal(ks[13], (128,), f32),
        "fc2_w": 0.1 * jax.random.normal(ks[14], (10, 128), f32),
        "fc2_b": 0.1 * jax.random.normal(ks[15], (10,), f32),
    }


if __name__ == "__main__":
    key = jax.random.PRNGKey(0)
    k_x, k_p = jax.random.split(key)
    # MNIST-style input: the 64*7*7 flatten in the module implies 28x28 spatial.
    x = jax.random.normal(k_x, (2, 1, 28, 28), jnp.float32)
    params = make_params(k_p)
    inf_params = prepare_params(params)          # one-time folding / layout prep

    logits = jax.jit(simple_cnn_forward)(x, inf_params)
    jax.block_until_ready(logits)
    assert logits.shape == (2, 10) and logits.dtype == jnp.float32

    ref = reference_forward(x, params)
    assert jnp.allclose(logits, ref, rtol=3e-2, atol=3e-3), float(
        jnp.max(jnp.abs(logits - ref)))
    print("KERNEL_OK")
</pallas_src>

<mosaic_0001>
module attributes {stable_mosaic.version = 11 : i64} {
  func.func @_conv_bn_relu_pool_kernel(%arg0: i32, %arg1: memref<1x4x240x1xf32, #tpu.memory_space<vmem>>, %arg2: memref<9x1x32xf32, #tpu.memory_space<vmem>>, %arg3: memref<1x32xf32, #tpu.memory_space<vmem>>, %arg4: memref<1x210x32xf32, #tpu.memory_space<vmem>>) attributes {dimension_semantics = [#tpu.dimension_semantics<parallel>], iteration_bounds = array<i64: 2>, scalar_prefetch = 0 : i64, scratch_operands = 0 : i64, tpu.core_type = #tpu.core_type<tc>, window_params = [{transform_indices = @transform_0, window_bounds = array<i64: 1, 4, 240, 1>}, {pipeline_mode = #tpu.pipeline_mode<synchronous>, transform_indices = @transform_1, window_bounds = array<i64: 9, 1, 32>}, {pipeline_mode = #tpu.pipeline_mode<synchronous>, transform_indices = @transform_2, window_bounds = array<i64: 1, 32>}, {transform_indices = @transform_3, window_bounds = array<i64: 1, 210, 32>}]} {
    %cst = arith.constant 0.000000e+00 : f32
    %0 = vector.broadcast %cst : f32 to vector<210x32xf32>
    %c0 = arith.constant 0 : index
    %c0_0 = arith.constant 0 : index
    %c0_1 = arith.constant 0 : index
    %c0_2 = arith.constant 0 : index
    %1 = vector.load %arg1[%c0, %c0_0, %c0_1, %c0_2] : memref<1x4x240x1xf32, #tpu.memory_space<vmem>>, vector<1x1x210x1xf32>
    %2 = vector.shape_cast %1 : vector<1x1x210x1xf32> to vector<210x1xf32>
    %c0_3 = arith.constant 0 : index
    %c0_4 = arith.constant 0 : index
    %c0_5 = arith.constant 0 : index
    %3 = vector.load %arg2[%c0_3, %c0_4, %c0_5] : memref<9x1x32xf32, #tpu.memory_space<vmem>>, vector<1x1x32xf32>
    %4 = vector.shape_cast %3 : vector<1x1x32xf32> to vector<1x32xf32>
    %5 = vector.broadcast %2 : vector<210x1xf32> to vector<210x32xf32>
    %6 = vector.broadcast %4 : vector<1x32xf32> to vector<210x32xf32>
    %7 = arith.mulf %5, %6 : vector<210x32xf32>
    %8 = arith.addf %0, %7 : vector<210x32xf32>
    %c0_6 = arith.constant 0 : index
    %c1 = arith.constant 1 : index
    %c0_7 = arith.constant 0 : index
    %c0_8 = arith.constant 0 : index
    %9 = vector.load %arg1[%c0_6, %c1, %c0_7, %c0_8] : memref<1x4x240x1xf32, #tpu.memory_space<vmem>>, vector<1x1x210x1xf32>
    %10 = vector.shape_cast %9 : vector<1x1x210x1xf32> to vector<210x1xf32>
    %c1_9 = arith.constant 1 : index
    %c0_10 = arith.constant 0 : index
    %c0_11 = arith.constant 0 : index
    %11 = vector.load %arg2[%c1_9, %c0_10, %c0_11] : memref<9x1x32xf32, #tpu.memory_space<vmem>>, vector<1x1x32xf32>
    %12 = vector.shape_cast %11 : vector<1x1x32xf32> to vector<1x32xf32>
    %13 = vector.broadcast %10 : vector<210x1xf32> to vector<210x32xf32>
    %14 = vector.broadcast %12 : vector<1x32xf32> to vector<210x32xf32>
    %15 = arith.mulf %13, %14 : vector<210x32xf32>
    %16 = arith.addf %8, %15 : vector<210x32xf32>
    %c0_12 = arith.constant 0 : index
    %c0_13 = arith.constant 0 : index
    %c1_14 = arith.constant 1 : index
    %c0_15 = arith.constant 0 : index
    %17 = vector.load %arg1[%c0_12, %c0_13, %c1_14, %c0_15] : memref<1x4x240x1xf32, #tpu.memory_space<vmem>>, vector<1x1x210x1xf32>
    %18 = vector.shape_cast %17 : vector<1x1x210x1xf32> to vector<210x1xf32>
    %c2 = arith.constant 2 : index
    %c0_16 = arith.constant 0 : index
    %c0_17 = arith.constant 0 : index
    %19 = vector.load %arg2[%c2, %c0_16, %c0_17] : memref<9x1x32xf32, #tpu.memory_space<vmem>>, vector<1x1x32xf32>
    %20 = vector.shape_cast %19 : vector<1x1x32xf32> to vector<1x32xf32>
    %21 = vector.broadcast %18 : vector<210x1xf32> to vector<210x32xf32>
    %22 = vector.broadcast %20 : vector<1x32xf32> to vector<210x32xf32>
    %23 = arith.mulf %21, %22 : vector<210x32xf32>
    %24 = arith.addf %16, %23 : vector<210x32xf32>
    %c0_18 = arith.constant 0 : index
    %c2_19 = arith.constant 2 : index
    %c0_20 = arith.constant 0 : index
    %c0_21 = arith.constant 0 : index
    %25 = vector.load %arg1[%c0_18, %c2_19, %c0_20, %c0_21] : memref<1x4x240x1xf32, #tpu.memory_space<vmem>>, vector<1x1x210x1xf32>
    %26 = vector.shape_cast %25 : vector<1x1x210x1xf32> to vector<210x1xf32>
    %c3 = arith.constant 3 : index
    %c0_22 = arith.constant 0 : index
    %c0_23 = arith.constant 0 : index
    %27 = vector.load %arg2[%c3, %c0_22, %c0_23] : memref<9x1x32xf32, #tpu.memory_space<vmem>>, vector<1x1x32xf32>
    %28 = vector.shape_cast %27 : vector<1x1x32xf32> to vector<1x32xf32>
    %29 = vector.broadcast %26 : vector<210x1xf32> to vector<210x32xf32>
    %30 = vector.broadcast %28 : vector<1x32xf32> to vector<210x32xf32>
    %31 = arith.mulf %29, %30 : vector<210x32xf32>
    %32 = arith.addf %24, %31 : vector<210x32xf32>
    %c0_24 = arith.constant 0 : index
    %c3_25 = arith.constant 3 : index
    %c0_26 = arith.constant 0 : index
    %c0_27 = arith.constant 0 : index
    %33 = vector.load %arg1[%c0_24, %c3_25, %c0_26, %c0_27] : memref<1x4x240x1xf32, #tpu.memory_space<vmem>>, vector<1x1x210x1xf32>
    %34 = vector.shape_cast %33 : vector<1x1x210x1xf32> to vector<210x1xf32>
    %c4 = arith.constant 4 : index
    %c0_28 = arith.constant 0 : index
    %c0_29 = arith.constant 0 : index
    %35 = vector.load %arg2[%c4, %c0_28, %c0_29] : memref<9x1x32xf32, #tpu.memory_space<vmem>>, vector<1x1x32xf32>
    %36 = vector.shape_cast %35 : vector<1x1x32xf32> to vector<1x32xf32>
    %37 = vector.broadcast %34 : vector<210x1xf32> to vector<210x32xf32>
    %38 = vector.broadcast %36 : vector<1x32xf32> to vector<210x32xf32>
    %39 = arith.mulf %37, %38 : vector<210x32xf32>
    %40 = arith.addf %32, %39 : vector<210x32xf32>
    %c0_30 = arith.constant 0 : index
    %c2_31 = arith.constant 2 : index
    %c1_32 = arith.constant 1 : index
    %c0_33 = arith.constant 0 : index
    %41 = vector.load %arg1[%c0_30, %c2_31, %c1_32, %c0_33] : memref<1x4x240x1xf32, #tpu.memory_space<vmem>>, vector<1x1x210x1xf32>
    %42 = vector.shape_cast %41 : vector<1x1x210x1xf32> to vector<210x1xf32>
    %c5 = arith.constant 5 : index
    %c0_34 = arith.constant 0 : index
    %c0_35 = arith.constant 0 : index
    %43 = vector.load %arg2[%c5, %c0_34, %c0_35] : memref<9x1x32xf32, #tpu.memory_space<vmem>>, vector<1x1x32xf32>
    %44 = vector.shape_cast %43 : vector<1x1x32xf32> to vector<1x32xf32>
    %45 = vector.broadcast %42 : vector<210x1xf32> to vector<210x32xf32>
    %46 = vector.broadcast %44 : vector<1x32xf32> to vector<210x32xf32>
    %47 = arith.mulf %45, %46 : vector<210x32xf32>
    %48 = arith.addf %40, %47 : vector<210x32xf32>
    %c0_36 = arith.constant 0 : index
    %c0_37 = arith.constant 0 : index
    %c15 = arith.constant 15 : index
    %c0_38 = arith.constant 0 : index
    %49 = vector.load %arg1[%c0_36, %c0_37, %c15, %c0_38] : memref<1x4x240x1xf32, #tpu.memory_space<vmem>>, vector<1x1x210x1xf32>
    %50 = vector.shape_cast %49 : vector<1x1x210x1xf32> to vector<210x1xf32>
    %c6 = arith.constant 6 : index
    %c0_39 = arith.constant 0 : index
    %c0_40 = arith.constant 0 : index
    %51 = vector.load %arg2[%c6, %c0_39, %c0_40] : memref<9x1x32xf32, #tpu.memory_space<vmem>>, vector<1x1x32xf32>
    %52 = vector.shape_cast %51 : vector<1x1x32xf32> to vector<1x32xf32>
    %53 = vector.broadcast %50 : vector<210x1xf32> to vector<210x32xf32>
    %54 = vector.broadcast %52 : vector<1x32xf32> to vector<210x32xf32>
    %55 = arith.mulf %53, %54 : vector<210x32xf32>
    %56 = arith.addf %48, %55 : vector<210x32xf32>
    %c0_41 = arith.constant 0 : index
    %c1_42 = arith.constant 1 : index
    %c15_43 = arith.constant 15 : index
    %c0_44 = arith.constant 0 : index
    %57 = vector.load %arg1[%c0_41, %c1_42, %c15_43, %c0_44] : memref<1x4x240x1xf32, #tpu.memory_space<vmem>>, vector<1x1x210x1xf32>
    %58 = vector.shape_cast %57 : vector<1x1x210x1xf32> to vector<210x1xf32>
    %c7 = arith.constant 7 : index
    %c0_45 = arith.constant 0 : index
    %c0_46 = arith.constant 0 : index
    %59 = vector.load %arg2[%c7, %c0_45, %c0_46] : memref<9x1x32xf32, #tpu.memory_space<vmem>>, vector<1x1x32xf32>
    %60 = vector.shape_cast %59 : vector<1x1x32xf32> to vector<1x32xf32>
    %61 = vector.broadcast %58 : vector<210x1xf32> to vector<210x32xf32>
    %62 = vector.broadcast %60 : vector<1x32xf32> to vector<210x32xf32>
    %63 = arith.mulf %61, %62 : vector<210x32xf32>
    %64 = arith.addf %56, %63 : vector<210x32xf32>
    %c0_47 = arith.constant 0 : index
    %c0_48 = arith.constant 0 : index
    %c16 = arith.constant 16 : index
    %c0_49 = arith.constant 0 : index
    %65 = vector.load %arg1[%c0_47, %c0_48, %c16, %c0_49] : memref<1x4x240x1xf32, #tpu.memory_space<vmem>>, vector<1x1x210x1xf32>
    %66 = vector.shape_cast %65 : vector<1x1x210x1xf32> to vector<210x1xf32>
    %c8 = arith.constant 8 : index
    %c0_50 = arith.constant 0 : index
    %c0_51 = arith.constant 0 : index
    %67 = vector.load %arg2[%c8, %c0_50, %c0_51] : memref<9x1x32xf32, #tpu.memory_space<vmem>>, vector<1x1x32xf32>
    %68 = vector.shape_cast %67 : vector<1x1x32xf32> to vector<1x32xf32>
    %69 = vector.broadcast %66 : vector<210x1xf32> to vector<210x32xf32>
    %70 = vector.broadcast %68 : vector<1x32xf32> to vector<210x32xf32>
    %71 = arith.mulf %69, %70 : vector<210x32xf32>
    %72 = arith.addf %64, %71 : vector<210x32xf32>
    %cst_52 = arith.constant 0.000000e+00 : f32
    %73 = vector.broadcast %cst_52 : f32 to vector<210x32xf32>
    %c0_53 = arith.constant 0 : index
    %c1_54 = arith.constant 1 : index
    %c0_55 = arith.constant 0 : index
    %c0_56 = arith.constant 0 : index
    %74 = vector.load %arg1[%c0_53, %c1_54, %c0_55, %c0_56] : memref<1x4x240x1xf32, #tpu.memory_space<vmem>>, vector<1x1x210x1xf32>
    %75 = vector.shape_cast %74 : vector<1x1x210x1xf32> to vector<210x1xf32>
    %c0_57 = arith.constant 0 : index
    %c0_58 = arith.constant 0 : index
    %c0_59 = arith.constant 0 : index
    %76 = vector.load %arg2[%c0_57, %c0_58, %c0_59] : memref<9x1x32xf32, #tpu.memory_space<vmem>>, vector<1x1x32xf32>
    %77 = vector.shape_cast %76 : vector<1x1x32xf32> to vector<1x32xf32>
    %78 = vector.broadcast %75 : vector<210x1xf32> to vector<210x32xf32>
    %79 = vector.broadcast %77 : vector<1x32xf32> to vector<210x32xf32>
    %80 = arith.mulf %78, %79 : vector<210x32xf32>
    %81 = arith.addf %73, %80 : vector<210x32xf32>
    %c0_60 = arith.constant 0 : index
    %c0_61 = arith.constant 0 : index
    %c1_62 = arith.constant 1 : index
    %c0_63 = arith.constant 0 : index
    %82 = vector.load %arg1[%c0_60, %c0_61, %c1_62, %c0_63] : memref<1x4x240x1xf32, #tpu.memory_space<vmem>>, vector<1x1x210x1xf32>
    %83 = vector.shape_cast %82 : vector<1x1x210x1xf32> to vector<210x1xf32>
    %c1_64 = arith.constant 1 : index
    %c0_65 = arith.constant 0 : index
    %c0_66 = arith.constant 0 : index
    %84 = vector.load %arg2[%c1_64, %c0_65, %c0_66] : memref<9x1x32xf32, #tpu.memory_space<vmem>>, vector<1x1x32xf32>
    %85 = vector.shape_cast %84 : vector<1x1x32xf32> to vector<1x32xf32>
    %86 = vector.broadcast %83 : vector<210x1xf32> to vector<210x32xf32>
    %87 = vector.broadcast %85 : vector<1x32xf32> to vector<210x32xf32>
    %88 = arith.mulf %86, %87 : vector<210x32xf32>
    %89 = arith.addf %81, %88 : vector<210x32xf32>
    %c0_67 = arith.constant 0 : index
    %c1_68 = arith.constant 1 : index
    %c1_69 = arith.constant 1 : index
    %c0_70 = arith.constant 0 : index
    %90 = vector.load %arg1[%c0_67, %c1_68, %c1_69, %c0_70] : memref<1x4x240x1xf32, #tpu.memory_space<vmem>>, vector<1x1x210x1xf32>
    %91 = vector.shape_cast %90 : vector<1x1x210x1xf32> to vector<210x1xf32>
    %c2_71 = arith.constant 2 : index
    %c0_72 = arith.constant 0 : index
    %c0_73 = arith.constant 0 : index
    %92 = vector.load %arg2[%c2_71, %c0_72, %c0_73] : memref<9x1x32xf32, #tpu.memory_space<vmem>>, vector<1x1x32xf32>
    %93 = vector.shape_cast %92 : vector<1x1x32xf32> to vector<1x32xf32>
    %94 = vector.broadcast %91 : vector<210x1xf32> to vector<210x32xf32>
    %95 = vector.broadcast %93 : vector<1x32xf32> to vector<210x32xf32>
    %96 = arith.mulf %94, %95 : vector<210x32xf32>
    %97 = arith.addf %89, %96 : vector<210x32xf32>
    %c0_74 = arith.constant 0 : index
    %c3_75 = arith.constant 3 : index
    %c0_76 = arith.constant 0 : index
    %c0_77 = arith.constant 0 : index
    %98 = vector.load %arg1[%c0_74, %c3_75, %c0_76, %c0_77] : memref<1x4x240x1xf32, #tpu.memory_space<vmem>>, vector<1x1x210x1xf32>
    %99 = vector.shape_cast %98 : vector<1x1x210x1xf32> to vector<210x1xf32>
    %c3_78 = arith.constant 3 : index
    %c0_79 = arith.constant 0 : index
    %c0_80 = arith.constant 0 : index
    %100 = vector.load %arg2[%c3_78, %c0_79, %c0_80] : memref<9x1x32xf32, #tpu.memory_space<vmem>>, vector<1x1x32xf32>
    %101 = vector.shape_cast %100 : vector<1x1x32xf32> to vector<1x32xf32>
    %102 = vector.broadcast %99 : vector<210x1xf32> to vector<210x32xf32>
    %103 = vector.broadcast %101 : vector<1x32xf32> to vector<210x32xf32>
    %104 = arith.mulf %102, %103 : vector<210x32xf32>
    %105 = arith.addf %97, %104 : vector<210x32xf32>
    %c0_81 = arith.constant 0 : index
    %c2_82 = arith.constant 2 : index
    %c1_83 = arith.constant 1 : index
    %c0_84 = arith.constant 0 : index
    %106 = vector.load %arg1[%c0_81, %c2_82, %c1_83, %c0_84] : memref<1x4x240x1xf32, #tpu.memory_space<vmem>>, vector<1x1x210x1xf32>
    %107 = vector.shape_cast %106 : vector<1x1x210x1xf32> to vector<210x1xf32>
    %c4_85 = arith.constant 4 : index
    %c0_86 = arith.constant 0 : index
    %c0_87 = arith.constant 0 : index
    %108 = vector.load %arg2[%c4_85, %c0_86, %c0_87] : memref<9x1x32xf32, #tpu.memory_space<vmem>>, vector<1x1x32xf32>
    %109 = vector.shape_cast %108 : vector<1x1x32xf32> to vector<1x32xf32>
    %110 = vector.broadcast %107 : vector<210x1xf32> to vector<210x32xf32>
    %111 = vector.broadcast %109 : vector<1x32xf32> to vector<210x32xf32>
    %112 = arith.mulf %110, %111 : vector<210x32xf32>
    %113 = arith.addf %105, %112 : vector<210x32xf32>
    %c0_88 = arith.constant 0 : index
    %c3_89 = arith.constant 3 : index
    %c1_90 = arith.constant 1 : index
    %c0_91 = arith.constant 0 : index
    %114 = vector.load %arg1[%c0_88, %c3_89, %c1_90, %c0_91] : memref<1x4x240x1xf32, #tpu.memory_space<vmem>>, vector<1x1x210x1xf32>
    %115 = vector.shape_cast %114 : vector<1x1x210x1xf32> to vector<210x1xf32>
    %c5_92 = arith.constant 5 : index
    %c0_93 = arith.constant 0 : index
    %c0_94 = arith.constant 0 : index
    %116 = vector.load %arg2[%c5_92, %c0_93, %c0_94] : memref<9x1x32xf32, #tpu.memory_space<vmem>>, vector<1x1x32xf32>
    %117 = vector.shape_cast %116 : vector<1x1x32xf32> to vector<1x32xf32>
    %118 = vector.broadcast %115 : vector<210x1xf32> to vector<210x32xf32>
    %119 = vector.broadcast %117 : vector<1x32xf32> to vector<210x32xf32>
    %120 = arith.mulf %118, %119 : vector<210x32xf32>
    %121 = arith.addf %113, %120 : vector<210x32xf32>
    %c0_95 = arith.constant 0 : index
    %c1_96 = arith.constant 1 : index
    %c15_97 = arith.constant 15 : index
    %c0_98 = arith.constant 0 : index
    %122 = vector.load %arg1[%c0_95, %c1_96, %c15_97, %c0_98] : memref<1x4x240x1xf32, #tpu.memory_space<vmem>>, vector<1x1x210x1xf32>
    %123 = vector.shape_cast %122 : vector<1x1x210x1xf32> to vector<210x1xf32>
    %c6_99 = arith.constant 6 : index
    %c0_100 = arith.constant 0 : index
    %c0_101 = arith.constant 0 : index
    %124 = vector.load %arg2[%c6_99, %c0_100, %c0_101] : memref<9x1x32xf32, #tpu.memory_space<vmem>>, vector<1x1x32xf32>
    %125 = vector.shape_cast %124 : vector<1x1x32xf32> to vector<1x32xf32>
    %126 = vector.broadcast %123 : vector<210x1xf32> to vector<210x32xf32>
    %127 = vector.broadcast %125 : vector<1x32xf32> to vector<210x32xf32>
    %128 = arith.mulf %126, %127 : vector<210x32xf32>
    %129 = arith.addf %121, %128 : vector<210x32xf32>
    %c0_102 = arith.constant 0 : index
    %c0_103 = arith.constant 0 : index
    %c16_104 = arith.constant 16 : index
    %c0_105 = arith.constant 0 : index
    %130 = vector.load %arg1[%c0_102, %c0_103, %c16_104, %c0_105] : memref<1x4x240x1xf32, #tpu.memory_space<vmem>>, vector<1x1x210x1xf32>
    %131 = vector.shape_cast %130 : vector<1x1x210x1xf32> to vector<210x1xf32>
    %c7_106 = arith.constant 7 : index
    %c0_107 = arith.constant 0 : index
    %c0_108 = arith.constant 0 : index
    %132 = vector.load %arg2[%c7_106, %c0_107, %c0_108] : memref<9x1x32xf32, #tpu.memory_space<vmem>>, vector<1x1x32xf32>
    %133 = vector.shape_cast %132 : vector<1x1x32xf32> to vector<1x32xf32>
    %134 = vector.broadcast %131 : vector<210x1xf32> to vector<210x32xf32>
    %135 = vector.broadcast %133 : vector<1x32xf32> to vector<210x32xf32>
    %136 = arith.mulf %134, %135 : vector<210x32xf32>
    %137 = arith.addf %129, %136 : vector<210x32xf32>
    %c0_109 = arith.constant 0 : index
    %c1_110 = arith.constant 1 : index
    %c16_111 = arith.constant 16 : index
    %c0_112 = arith.constant 0 : index
    %138 = vector.load %arg1[%c0_109, %c1_110, %c16_111, %c0_112] : memref<1x4x240x1xf32, #tpu.memory_space<vmem>>, vector<1x1x210x1xf32>
    %139 = vector.shape_cast %138 : vector<1x1x210x1xf32> to vector<210x1xf32>
    %c8_113 = arith.constant 8 : index
    %c0_114 = arith.constant 0 : index
    %c0_115 = arith.constant 0 : index
    %140 = vector.load %arg2[%c8_113, %c0_114, %c0_115] : memref<9x1x32xf32, #tpu.memory_space<vmem>>, vector<1x1x32xf32>
    %141 = vector.shape_cast %140 : vector<1x1x32xf32> to vector<1x32xf32>
    %142 = vector.broadcast %139 : vector<210x1xf32> to vector<210x32xf32>
    %143 = vector.broadcast %141 : vector<1x32xf32> to vector<210x32xf32>
    %144 = arith.mulf %142, %143 : vector<210x32xf32>
    %145 = arith.addf %137, %144 : vector<210x32xf32>
    %146 = arith.maximumf %72, %145 : vector<210x32xf32>
    %cst_116 = arith.constant 0.000000e+00 : f32
    %147 = vector.broadcast %cst_116 : f32 to vector<210x32xf32>
    %c0_117 = arith.constant 0 : index
    %c2_118 = arith.constant 2 : index
    %c0_119 = arith.constant 0 : index
    %c0_120 = arith.constant 0 : index
    %148 = vector.load %arg1[%c0_117, %c2_118, %c0_119, %c0_120] : memref<1x4x240x1xf32, #tpu.memory_space<vmem>>, vector<1x1x210x1xf32>
    %149 = vector.shape_cast %148 : vector<1x1x210x1xf32> to vector<210x1xf32>
    %c0_121 = arith.constant 0 : index
    %c0_122 = arith.constant 0 : index
    %c0_123 = arith.constant 0 : index
    %150 = vector.load %arg2[%c0_121, %c0_122, %c0_123] : memref<9x1x32xf32, #tpu.memory_space<vmem>>, vector<1x1x32xf32>
    %151 = vector.shape_cast %150 : vector<1x1x32xf32> to vector<1x32xf32>
    %152 = vector.broadcast %149 : vector<210x1xf32> to vector<210x32xf32>
    %153 = vector.broadcast %151 : vector<1x32xf32> to vector<210x32xf32>
    %154 = arith.mulf %152, %153 : vector<210x32xf32>
    %155 = arith.addf %147, %154 : vector<210x32xf32>
    %c0_124 = arith.constant 0 : index
    %c3_125 = arith.constant 3 : index
    %c0_126 = arith.constant 0 : index
    %c0_127 = arith.constant 0 : index
    %156 = vector.load %arg1[%c0_124, %c3_125, %c0_126, %c0_127] : memref<1x4x240x1xf32, #tpu.memory_space<vmem>>, vector<1x1x210x1xf32>
    %157 = vector.shape_cast %156 : vector<1x1x210x1xf32> to vector<210x1xf32>
    %c1_128 = arith.constant 1 : index
    %c0_129 = arith.constant 0 : index
    %c0_130 = arith.constant 0 : index
    %158 = vector.load %arg2[%c1_128, %c0_129, %c0_130] : memref<9x1x32xf32, #tpu.memory_space<vmem>>, vector<1x1x32xf32>
    %159 = vector.shape_cast %158 : vector<1x1x32xf32> to vector<1x32xf32>
    %160 = vector.broadcast %157 : vector<210x1xf32> to vector<210x32xf32>
    %161 = vector.broadcast %159 : vector<1x32xf32> to vector<210x32xf32>
    %162 = arith.mulf %160, %161 : vector<210x32xf32>
    %163 = arith.addf %155, %162 : vector<210x32xf32>
    %c0_131 = arith.constant 0 : index
    %c2_132 = arith.constant 2 : index
    %c1_133 = arith.constant 1 : index
    %c0_134 = arith.constant 0 : index
    %164 = vector.load %arg1[%c0_131, %c2_132, %c1_133, %c0_134] : memref<1x4x240x1xf32, #tpu.memory_space<vmem>>, vector<1x1x210x1xf32>
    %165 = vector.shape_cast %164 : vector<1x1x210x1xf32> to vector<210x1xf32>
    %c2_135 = arith.constant 2 : index
    %c0_136 = arith.constant 0 : index
    %c0_137 = arith.constant 0 : index
    %166 = vector.load %arg2[%c2_135, %c0_136, %c0_137] : memref<9x1x32xf32, #tpu.memory_space<vmem>>, vector<1x1x32xf32>
    %167 = vector.shape_cast %166 : vector<1x1x32xf32> to vector<1x32xf32>
    %168 = vector.broadcast %165 : vector<210x1xf32> to vector<210x32xf32>
    %169 = vector.broadcast %167 : vector<1x32xf32> to vector<210x32xf32>
    %170 = arith.mulf %168, %169 : vector<210x32xf32>
    %171 = arith.addf %163, %170 : vector<210x32xf32>
    %c0_138 = arith.constant 0 : index
    %c0_139 = arith.constant 0 : index
    %c15_140 = arith.constant 15 : index
    %c0_141 = arith.constant 0 : index
    %172 = vector.load %arg1[%c0_138, %c0_139, %c15_140, %c0_141] : memref<1x4x240x1xf32, #tpu.memory_space<vmem>>, vector<1x1x210x1xf32>
    %173 = vector.shape_cast %172 : vector<1x1x210x1xf32> to vector<210x1xf32>
    %c3_142 = arith.constant 3 : index
    %c0_143 = arith.constant 0 : index
    %c0_144 = arith.constant 0 : index
    %174 = vector.load %arg2[%c3_142, %c0_143, %c0_144] : memref<9x1x32xf32, #tpu.memory_space<vmem>>, vector<1x1x32xf32>
    %175 = vector.shape_cast %174 : vector<1x1x32xf32> to vector<1x32xf32>
    %176 = vector.broadcast %173 : vector<210x1xf32> to vector<210x32xf32>
    %177 = vector.broadcast %175 : vector<1x32xf32> to vector<210x32xf32>
    %178 = arith.mulf %176, %177 : vector<210x32xf32>
    %179 = arith.addf %171, %178 : vector<210x32xf32>
    %c0_145 = arith.constant 0 : index
    %c1_146 = arith.constant 1 : index
    %c15_147 = arith.constant 15 : index
    %c0_148 = arith.constant 0 : index
    %180 = vector.load %arg1[%c0_145, %c1_146, %c15_147, %c0_148] : memref<1x4x240x1xf32, #tpu.memory_space<vmem>>, vector<1x1x210x1xf32>
    %181 = vector.shape_cast %180 : vector<1x1x210x1xf32> to vector<210x1xf32>
    %c4_149 = arith.constant 4 : index
    %c0_150 = arith.constant 0 : index
    %c0_151 = arith.constant 0 : index
    %182 = vector.load %arg2[%c4_149, %c0_150, %c0_151] : memref<9x1x32xf32, #tpu.memory_space<vmem>>, vector<1x1x32xf32>
    %183 = vector.shape_cast %182 : vector<1x1x32xf32> to vector<1x32xf32>
    %184 = vector.broadcast %181 : vector<210x1xf32> to vector<210x32xf32>
    %185 = vector.broadcast %183 : vector<1x32xf32> to vector<210x32xf32>
    %186 = arith.mulf %184, %185 : vector<210x32xf32>
    %187 = arith.addf %179, %186 : vector<210x32xf32>
    %c0_152 = arith.constant 0 : index
    %c0_153 = arith.constant 0 : index
    %c16_154 = arith.constant 16 : index
    %c0_155 = arith.constant 0 : index
    %188 = vector.load %arg1[%c0_152, %c0_153, %c16_154, %c0_155] : memref<1x4x240x1xf32, #tpu.memory_space<vmem>>, vector<1x1x210x1xf32>
    %189 = vector.shape_cast %188 : vector<1x1x210x1xf32> to vector<210x1xf32>
    %c5_156 = arith.constant 5 : index
    %c0_157 = arith.constant 0 : index
    %c0_158 = arith.constant 0 : index
    %190 = vector.load %arg2[%c5_156, %c0_157, %c0_158] : memref<9x1x32xf32, #tpu.memory_space<vmem>>, vector<1x1x32xf32>
    %191 = vector.shape_cast %190 : vector<1x1x32xf32> to vector<1x32xf32>
    %192 = vector.broadcast %189 : vector<210x1xf32> to vector<210x32xf32>
    %193 = vector.broadcast %191 : vector<1x32xf32> to vector<210x32xf32>
    %194 = arith.mulf %192, %193 : vector<210x32xf32>
    %195 = arith.addf %187, %194 : vector<210x32xf32>
    %c0_159 = arith.constant 0 : index
    %c2_160 = arith.constant 2 : index
    %c15_161 = arith.constant 15 : index
    %c0_162 = arith.constant 0 : index
    %196 = vector.load %arg1[%c0_159, %c2_160, %c15_161, %c0_162] : memref<1x4x240x1xf32, #tpu.memory_space<vmem>>, vector<1x1x210x1xf32>
    %197 = vector.shape_cast %196 : vector<1x1x210x1xf32> to vector<210x1xf32>
    %c6_163 = arith.constant 6 : index
    %c0_164 = arith.constant 0 : index
    %c0_165 = arith.constant 0 : index
    %198 = vector.load %arg2[%c6_163, %c0_164, %c0_165] : memref<9x1x32xf32, #tpu.memory_space<vmem>>, vector<1x1x32xf32>
    %199 = vector.shape_cast %198 : vector<1x1x32xf32> to vector<1x32xf32>
    %200 = vector.broadcast %197 : vector<210x1xf32> to vector<210x32xf32>
    %201 = vector.broadcast %199 : vector<1x32xf32> to vector<210x32xf32>
    %202 = arith.mulf %200, %201 : vector<210x32xf32>
    %203 = arith.addf %195, %202 : vector<210x32xf32>
    %c0_166 = arith.constant 0 : index
    %c3_167 = arith.constant 3 : index
    %c15_168 = arith.constant 15 : index
    %c0_169 = arith.constant 0 : index
    %204 = vector.load %arg1[%c0_166, %c3_167, %c15_168, %c0_169] : memref<1x4x240x1xf32, #tpu.memory_space<vmem>>, vector<1x1x210x1xf32>
    %205 = vector.shape_cast %204 : vector<1x1x210x1xf32> to vector<210x1xf32>
    %c7_170 = arith.constant 7 : index
    %c0_171 = arith.constant 0 : index
    %c0_172 = arith.constant 0 : index
    %206 = vector.load %arg2[%c7_170, %c0_171, %c0_172] : memref<9x1x32xf32, #tpu.memory_space<vmem>>, vector<1x1x32xf32>
    %207 = vector.shape_cast %206 : vector<1x1x32xf32> to vector<1x32xf32>
    %208 = vector.broadcast %205 : vector<210x1xf32> to vector<210x32xf32>
    %209 = vector.broadcast %207 : vector<1x32xf32> to vector<210x32xf32>
    %210 = arith.mulf %208, %209 : vector<210x32xf32>
    %211 = arith.addf %203, %210 : vector<210x32xf32>
    %c0_173 = arith.constant 0 : index
    %c2_174 = arith.constant 2 : index
    %c16_175 = arith.constant 16 : index
    %c0_176 = arith.constant 0 : index
    %212 = vector.load %arg1[%c0_173, %c2_174, %c16_175, %c0_176] : memref<1x4x240x1xf32, #tpu.memory_space<vmem>>, vector<1x1x210x1xf32>
    %213 = vector.shape_cast %212 : vector<1x1x210x1xf32> to vector<210x1xf32>
    %c8_177 = arith.constant 8 : index
    %c0_178 = arith.constant 0 : index
    %c0_179 = arith.constant 0 : index
    %214 = vector.load %arg2[%c8_177, %c0_178, %c0_179] : memref<9x1x32xf32, #tpu.memory_space<vmem>>, vector<1x1x32xf32>
    %215 = vector.shape_cast %214 : vector<1x1x32xf32> to vector<1x32xf32>
    %216 = vector.broadcast %213 : vector<210x1xf32> to vector<210x32xf32>
    %217 = vector.broadcast %215 : vector<1x32xf32> to vector<210x32xf32>
    %218 = arith.mulf %216, %217 : vector<210x32xf32>
    %219 = arith.addf %211, %218 : vector<210x32xf32>
    %220 = arith.maximumf %146, %219 : vector<210x32xf32>
    %cst_180 = arith.constant 0.000000e+00 : f32
    %221 = vector.broadcast %cst_180 : f32 to vector<210x32xf32>
    %c0_181 = arith.constant 0 : index
    %c3_182 = arith.constant 3 : index
    %c0_183 = arith.constant 0 : index
    %c0_184 = arith.constant 0 : index
    %222 = vector.load %arg1[%c0_181, %c3_182, %c0_183, %c0_184] : memref<1x4x240x1xf32, #tpu.memory_space<vmem>>, vector<1x1x210x1xf32>
    %223 = vector.shape_cast %222 : vector<1x1x210x1xf32> to vector<210x1xf32>
    %c0_185 = arith.constant 0 : index
    %c0_186 = arith.constant 0 : index
    %c0_187 = arith.constant 0 : index
    %224 = vector.load %arg2[%c0_185, %c0_186, %c0_187] : memref<9x1x32xf32, #tpu.memory_space<vmem>>, vector<1x1x32xf32>
    %225 = vector.shape_cast %224 : vector<1x1x32xf32> to vector<1x32xf32>
    %226 = vector.broadcast %223 : vector<210x1xf32> to vector<210x32xf32>
    %227 = vector.broadcast %225 : vector<1x32xf32> to vector<210x32xf32>
    %228 = arith.mulf %226, %227 : vector<210x32xf32>
    %229 = arith.addf %221, %228 : vector<210x32xf32>
    %c0_188 = arith.constant 0 : index
    %c2_189 = arith.constant 2 : index
    %c1_190 = arith.constant 1 : index
    %c0_191 = arith.constant 0 : index
    %230 = vector.load %arg1[%c0_188, %c2_189, %c1_190, %c0_191] : memref<1x4x240x1xf32, #tpu.memory_space<vmem>>, vector<1x1x210x1xf32>
    %231 = vector.shape_cast %230 : vector<1x1x210x1xf32> to vector<210x1xf32>
    %c1_192 = arith.constant 1 : index
    %c0_193 = arith.constant 0 : index
    %c0_194 = arith.constant 0 : index
    %232 = vector.load %arg2[%c1_192, %c0_193, %c0_194] : memref<9x1x32xf32, #tpu.memory_space<vmem>>, vector<1x1x32xf32>
    %233 = vector.shape_cast %232 : vector<1x1x32xf32> to vector<1x32xf32>
    %234 = vector.broadcast %231 : vector<210x1xf32> to vector<210x32xf32>
    %235 = vector.broadcast %233 : vector<1x32xf32> to vector<210x32xf32>
    %236 = arith.mulf %234, %235 : vector<210x32xf32>
    %237 = arith.addf %229, %236 : vector<210x32xf32>
    %c0_195 = arith.constant 0 : index
    %c3_196 = arith.constant 3 : index
    %c1_197 = arith.constant 1 : index
    %c0_198 = arith.constant 0 : index
    %238 = vector.load %arg1[%c0_195, %c3_196, %c1_197, %c0_198] : memref<1x4x240x1xf32, #tpu.memory_space<vmem>>, vector<1x1x210x1xf32>
    %239 = vector.shape_cast %238 : vector<1x1x210x1xf32> to vector<210x1xf32>
    %c2_199 = arith.constant 2 : index
    %c0_200 = arith.constant 0 : index
    %c0_201 = arith.constant 0 : index
    %240 = vector.load %arg2[%c2_199, %c0_200, %c0_201] : memref<9x1x32xf32, #tpu.memory_space<vmem>>, vector<1x1x32xf32>
    %241 = vector.shape_cast %240 : vector<1x1x32xf32> to vector<1x32xf32>
    %242 = vector.broadcast %239 : vector<210x1xf32> to vector<210x32xf32>
    %243 = vector.broadcast %241 : vector<1x32xf32> to vector<210x32xf32>
    %244 = arith.mulf %242, %243 : vector<210x32xf32>
    %245 = arith.addf %237, %244 : vector<210x32xf32>
    %c0_202 = arith.constant 0 : index
    %c1_203 = arith.constant 1 : index
    %c15_204 = arith.constant 15 : index
    %c0_205 = arith.constant 0 : index
    %246 = vector.load %arg1[%c0_202, %c1_203, %c15_204, %c0_205] : memref<1x4x240x1xf32, #tpu.memory_space<vmem>>, vector<1x1x210x1xf32>
    %247 = vector.shape_cast %246 : vector<1x1x210x1xf32> to vector<210x1xf32>
    %c3_206 = arith.constant 3 : index
    %c0_207 = arith.constant 0 : index
    %c0_208 = arith.constant 0 : index
    %248 = vector.load %arg2[%c3_206, %c0_207, %c0_208] : memref<9x1x32xf32, #tpu.memory_space<vmem>>, vector<1x1x32xf32>
    %249 = vector.shape_cast %248 : vector<1x1x32xf32> to vector<1x32xf32>
    %250 = vector.broadcast %247 : vector<210x1xf32> to vector<210x32xf32>
    %251 = vector.broadcast %249 : vector<1x32xf32> to vector<210x32xf32>
    %252 = arith.mulf %250, %251 : vector<210x32xf32>
    %253 = arith.addf %245, %252 : vector<210x32xf32>
    %c0_209 = arith.constant 0 : index
    %c0_210 = arith.constant 0 : index
    %c16_211 = arith.constant 16 : index
    %c0_212 = arith.constant 0 : index
    %254 = vector.load %arg1[%c0_209, %c0_210, %c16_211, %c0_212] : memref<1x4x240x1xf32, #tpu.memory_space<vmem>>, vector<1x1x210x1xf32>
    %255 = vector.shape_cast %254 : vector<1x1x210x1xf32> to vector<210x1xf32>
    %c4_213 = arith.constant 4 : index
    %c0_214 = arith.constant 0 : index
    %c0_215 = arith.constant 0 : index
    %256 = vector.load %arg2[%c4_213, %c0_214, %c0_215] : memref<9x1x32xf32, #tpu.memory_space<vmem>>, vector<1x1x32xf32>
    %257 = vector.shape_cast %256 : vector<1x1x32xf32> to vector<1x32xf32>
    %258 = vector.broadcast %255 : vector<210x1xf32> to vector<210x32xf32>
    %259 = vector.broadcast %257 : vector<1x32xf32> to vector<210x32xf32>
    %260 = arith.mulf %258, %259 : vector<210x32xf32>
    %261 = arith.addf %253, %260 : vector<210x32xf32>
    %c0_216 = arith.constant 0 : index
    %c1_217 = arith.constant 1 : index
    %c16_218 = arith.constant 16 : index
    %c0_219 = arith.constant 0 : index
    %262 = vector.load %arg1[%c0_216, %c1_217, %c16_218, %c0_219] : memref<1x4x240x1xf32, #tpu.memory_space<vmem>>, vector<1x1x210x1xf32>
    %263 = vector.shape_cast %262 : vector<1x1x210x1xf32> to vector<210x1xf32>
    %c5_220 = arith.constant 5 : index
    %c0_221 = arith.constant 0 : index
    %c0_222 = arith.constant 0 : index
    %264 = vector.load %arg2[%c5_220, %c0_221, %c0_222] : memref<9x1x32xf32, #tpu.memory_space<vmem>>, vector<1x1x32xf32>
    %265 = vector.shape_cast %264 : vector<1x1x32xf32> to vector<1x32xf32>
    %266 = vector.broadcast %263 : vector<210x1xf32> to vector<210x32xf32>
    %267 = vector.broadcast %265 : vector<1x32xf32> to vector<210x32xf32>
    %268 = arith.mulf %266, %267 : vector<210x32xf32>
    %269 = arith.addf %261, %268 : vector<210x32xf32>
    %c0_223 = arith.constant 0 : index
    %c3_224 = arith.constant 3 : index
    %c15_225 = arith.constant 15 : index
    %c0_226 = arith.constant 0 : index
    %270 = vector.load %arg1[%c0_223, %c3_224, %c15_225, %c0_226] : memref<1x4x240x1xf32, #tpu.memory_space<vmem>>, vector<1x1x210x1xf32>
    %271 = vector.shape_cast %270 : vector<1x1x210x1xf32> to vector<210x1xf32>
    %c6_227 = arith.constant 6 : index
    %c0_228 = arith.constant 0 : index
    %c0_229 = arith.constant 0 : index
    %272 = vector.load %arg2[%c6_227, %c0_228, %c0_229] : memref<9x1x32xf32, #tpu.memory_space<vmem>>, vector<1x1x32xf32>
    %273 = vector.shape_cast %272 : vector<1x1x32xf32> to vector<1x32xf32>
    %274 = vector.broadcast %271 : vector<210x1xf32> to vector<210x32xf32>
    %275 = vector.broadcast %273 : vector<1x32xf32> to vector<210x32xf32>
    %276 = arith.mulf %274, %275 : vector<210x32xf32>
    %277 = arith.addf %269, %276 : vector<210x32xf32>
    %c0_230 = arith.constant 0 : index
    %c2_231 = arith.constant 2 : index
    %c16_232 = arith.constant 16 : index
    %c0_233 = arith.constant 0 : index
    %278 = vector.load %arg1[%c0_230, %c2_231, %c16_232, %c0_233] : memref<1x4x240x1xf32, #tpu.memory_space<vmem>>, vector<1x1x210x1xf32>
    %279 = vector.shape_cast %278 : vector<1x1x210x1xf32> to vector<210x1xf32>
    %c7_234 = arith.constant 7 : index
    %c0_235 = arith.constant 0 : index
    %c0_236 = arith.constant 0 : index
    %280 = vector.load %arg2[%c7_234, %c0_235, %c0_236] : memref<9x1x32xf32, #tpu.memory_space<vmem>>, vector<1x1x32xf32>
    %281 = vector.shape_cast %280 : vector<1x1x32xf32> to vector<1x32xf32>
    %282 = vector.broadcast %279 : vector<210x1xf32> to vector<210x32xf32>
    %283 = vector.broadcast %281 : vector<1x32xf32> to vector<210x32xf32>
    %284 = arith.mulf %282, %283 : vector<210x32xf32>
    %285 = arith.addf %277, %284 : vector<210x32xf32>
    %c0_237 = arith.constant 0 : index
    %c3_238 = arith.constant 3 : index
    %c16_239 = arith.constant 16 : index
    %c0_240 = arith.constant 0 : index
    %286 = vector.load %arg1[%c0_237, %c3_238, %c16_239, %c0_240] : memref<1x4x240x1xf32, #tpu.memory_space<vmem>>, vector<1x1x210x1xf32>
    %287 = vector.shape_cast %286 : vector<1x1x210x1xf32> to vector<210x1xf32>
    %c8_241 = arith.constant 8 : index
    %c0_242 = arith.constant 0 : index
    %c0_243 = arith.constant 0 : index
    %288 = vector.load %arg2[%c8_241, %c0_242, %c0_243] : memref<9x1x32xf32, #tpu.memory_space<vmem>>, vector<1x1x32xf32>
    %289 = vector.shape_cast %288 : vector<1x1x32xf32> to vector<1x32xf32>
    %290 = vector.broadcast %287 : vector<210x1xf32> to vector<210x32xf32>
    %291 = vector.broadcast %289 : vector<1x32xf32> to vector<210x32xf32>
    %292 = arith.mulf %290, %291 : vector<210x32xf32>
    %293 = arith.addf %285, %292 : vector<210x32xf32>
    %294 = arith.maximumf %220, %293 : vector<210x32xf32>
    %c0_244 = arith.constant 0 : index
    %c0_245 = arith.constant 0 : index
    %295 = vector.load %arg3[%c0_244, %c0_245] : memref<1x32xf32, #tpu.memory_space<vmem>>, vector<1x32xf32>
    %296 = vector.broadcast %295 : vector<1x32xf32> to vector<210x32xf32>
    %297 = arith.addf %294, %296 : vector<210x32xf32>
    %cst_246 = arith.constant 0.000000e+00 : f32
    %298 = vector.broadcast %cst_246 : f32 to vector<210x32xf32>
    %299 = arith.maximumf %297, %298 : vector<210x32xf32>
    %c0_247 = arith.constant 0 : index
    %c0_248 = arith.constant 0 : index
    %c0_249 = arith.constant 0 : index
    %300 = vector.load %arg4[%c0_247, %c0_248, %c0_249] : memref<1x210x32xf32, #tpu.memory_space<vmem>>, vector<1x210x32xf32>
    %301 = vector.shape_cast %300 : vector<1x210x32xf32> to vector<210x32xf32>
    %302 = vector.shape_cast %299 : vector<210x32xf32> to vector<1x210x32xf32>
    tpu.vector_store %arg4[%c0_247, %c0_248, %c0_249], %302 {strides = array<i32>} : memref<1x210x32xf32, #tpu.memory_space<vmem>>, vector<1x210x32xf32>,
    return
  }
  func.func @transform_0(%arg0: i32) -> (i32, i32, i32, i32) {
    %c0_i32 = arith.constant 0 : i32
    %c0_i32_0 = arith.constant 0 : i32
    %c0_i32_1 = arith.constant 0 : i32
    %c0_i32_2 = arith.constant 0 : i32
    return %arg0, %c0_i32, %c0_i32_0, %c0_i32_1 : i32, i32, i32, i32
  }
  func.func @transform_1(%arg0: i32) -> (i32, i32, i32) {
    %c0_i32 = arith.constant 0 : i32
    %c0_i32_0 = arith.constant 0 : i32
    %c0_i32_1 = arith.constant 0 : i32
    %c0_i32_2 = arith.constant 0 : i32
    return %c0_i32, %c0_i32_0, %c0_i32_1 : i32, i32, i32
  }
  func.func @transform_2(%arg0: i32) -> (i32, i32) {
    %c0_i32 = arith.constant 0 : i32
    %c0_i32_0 = arith.constant 0 : i32
    %c0_i32_1 = arith.constant 0 : i32
    return %c0_i32, %c0_i32_0 : i32, i32
  }
  func.func @transform_3(%arg0: i32) -> (i32, i32, i32) {
    %c0_i32 = arith.constant 0 : i32
    %c0_i32_0 = arith.constant 0 : i32
    %c0_i32_1 = arith.constant 0 : i32
    return %arg0, %c0_i32, %c0_i32_0 : i32, i32, i32
  }
}

module attributes {stable_mosaic.version = 11 : i64} {
  func.func @_conv_bn_relu_pool_kernel(%arg0: i32, %arg1: memref<1x4x72x32xf32, #tpu.memory_space<vmem>>, %arg2: memref<9x32x64xf32, #tpu.memory_space<vmem>>, %arg3: memref<1x64xf32, #tpu.memory_space<vmem>>, %arg4: memref<1x56x64xf32, #tpu.memory_space<vmem>>) attributes {dimension_semantics = [#tpu.dimension_semantics<parallel>], iteration_bounds = array<i64: 2>, scalar_prefetch = 0 : i64, scratch_operands = 0 : i64, tpu.core_type = #tpu.core_type<tc>, window_params = [{transform_indices = @transform_0, window_bounds = array<i64: 1, 4, 72, 32>}, {pipeline_mode = #tpu.pipeline_mode<synchronous>, transform_indices = @transform_1, window_bounds = array<i64: 9, 32, 64>}, {pipeline_mode = #tpu.pipeline_mode<synchronous>, transform_indices = @transform_2, window_bounds = array<i64: 1, 64>}, {transform_indices = @transform_3, window_bounds = array<i64: 1, 56, 64>}]} {
    %cst = arith.constant 0.000000e+00 : f32
    %0 = vector.broadcast %cst : f32 to vector<56x64xf32>
    %c0 = arith.constant 0 : index
    %c0_0 = arith.constant 0 : index
    %c0_1 = arith.constant 0 : index
    %c0_2 = arith.constant 0 : index
    %1 = vector.load %arg1[%c0, %c0_0, %c0_1, %c0_2] : memref<1x4x72x32xf32, #tpu.memory_space<vmem>>, vector<1x1x56x32xf32>
    %2 = vector.shape_cast %1 : vector<1x1x56x32xf32> to vector<56x32xf32>
    %c0_3 = arith.constant 0 : index
    %c0_4 = arith.constant 0 : index
    %c0_5 = arith.constant 0 : index
    %3 = vector.load %arg2[%c0_3, %c0_4, %c0_5] : memref<9x32x64xf32, #tpu.memory_space<vmem>>, vector<1x32x64xf32>
    %4 = vector.shape_cast %3 : vector<1x32x64xf32> to vector<32x64xf32>
    %cst_6 = arith.constant dense<0.000000e+00> : vector<56x64xf32>
    %5 = tpu.matmul %2, %4, %cst_6 {dimension_numbers = #tpu.dot_dimension_numbers<[1], [0], [0], [1], [0, 0, 1, 1], [], []>} : vector<56x32xf32>, vector<32x64xf32>, vector<56x64xf32> -> vector<56x64xf32>
    %6 = arith.addf %0, %5 : vector<56x64xf32>
    %c0_7 = arith.constant 0 : index
    %c1 = arith.constant 1 : index
    %c0_8 = arith.constant 0 : index
    %c0_9 = arith.constant 0 : index
    %7 = vector.load %arg1[%c0_7, %c1, %c0_8, %c0_9] : memref<1x4x72x32xf32, #tpu.memory_space<vmem>>, vector<1x1x56x32xf32>
    %8 = vector.shape_cast %7 : vector<1x1x56x32xf32> to vector<56x32xf32>
    %c1_10 = arith.constant 1 : index
    %c0_11 = arith.constant 0 : index
    %c0_12 = arith.constant 0 : index
    %9 = vector.load %arg2[%c1_10, %c0_11, %c0_12] : memref<9x32x64xf32, #tpu.memory_space<vmem>>, vector<1x32x64xf32>
    %10 = vector.shape_cast %9 : vector<1x32x64xf32> to vector<32x64xf32>
    %cst_13 = arith.constant dense<0.000000e+00> : vector<56x64xf32>
    %11 = tpu.matmul %8, %10, %cst_13 {dimension_numbers = #tpu.dot_dimension_numbers<[1], [0], [0], [1], [0, 0, 1, 1], [], []>} : vector<56x32xf32>, vector<32x64xf32>, vector<56x64xf32> -> vector<56x64xf32>
    %12 = arith.addf %6, %11 : vector<56x64xf32>
    %c0_14 = arith.constant 0 : index
    %c0_15 = arith.constant 0 : index
    %c1_16 = arith.constant 1 : index
    %c0_17 = arith.constant 0 : index
    %13 = vector.load %arg1[%c0_14, %c0_15, %c1_16, %c0_17] : memref<1x4x72x32xf32, #tpu.memory_space<vmem>>, vector<1x1x56x32xf32>
    %14 = vector.shape_cast %13 : vector<1x1x56x32xf32> to vector<56x32xf32>
    %c2 = arith.constant 2 : index
    %c0_18 = arith.constant 0 : index
    %c0_19 = arith.constant 0 : index
    %15 = vector.load %arg2[%c2, %c0_18, %c0_19] : memref<9x32x64xf32, #tpu.memory_space<vmem>>, vector<1x32x64xf32>
    %16 = vector.shape_cast %15 : vector<1x32x64xf32> to vector<32x64xf32>
    %cst_20 = arith.constant dense<0.000000e+00> : vector<56x64xf32>
    %17 = tpu.matmul %14, %16, %cst_20 {dimension_numbers = #tpu.dot_dimension_numbers<[1], [0], [0], [1], [0, 0, 1, 1], [], []>} : vector<56x32xf32>, vector<32x64xf32>, vector<56x64xf32> -> vector<56x64xf32>
    %18 = arith.addf %12, %17 : vector<56x64xf32>
    %c0_21 = arith.constant 0 : index
    %c2_22 = arith.constant 2 : index
    %c0_23 = arith.constant 0 : index
    %c0_24 = arith.constant 0 : index
    %19 = vector.load %arg1[%c0_21, %c2_22, %c0_23, %c0_24] : memref<1x4x72x32xf32, #tpu.memory_space<vmem>>, vector<1x1x56x32xf32>
    %20 = vector.shape_cast %19 : vector<1x1x56x32xf32> to vector<56x32xf32>
    %c3 = arith.constant 3 : index
    %c0_25 = arith.constant 0 : index
    %c0_26 = arith.constant 0 : index
    %21 = vector.load %arg2[%c3, %c0_25, %c0_26] : memref<9x32x64xf32, #tpu.memory_space<vmem>>, vector<1x32x64xf32>
    %22 = vector.shape_cast %21 : vector<1x32x64xf32> to vector<32x64xf32>
    %cst_27 = arith.constant dense<0.000000e+00> : vector<56x64xf32>
    %23 = tpu.matmul %20, %22, %cst_27 {dimension_numbers = #tpu.dot_dimension_numbers<[1], [0], [0], [1], [0, 0, 1, 1], [], []>} : vector<56x32xf32>, vector<32x64xf32>, vector<56x64xf32> -> vector<56x64xf32>
    %24 = arith.addf %18, %23 : vector<56x64xf32>
    %c0_28 = arith.constant 0 : index
    %c3_29 = arith.constant 3 : index
    %c0_30 = arith.constant 0 : index
    %c0_31 = arith.constant 0 : index
    %25 = vector.load %arg1[%c0_28, %c3_29, %c0_30, %c0_31] : memref<1x4x72x32xf32, #tpu.memory_space<vmem>>, vector<1x1x56x32xf32>
    %26 = vector.shape_cast %25 : vector<1x1x56x32xf32> to vector<56x32xf32>
    %c4 = arith.constant 4 : index
    %c0_32 = arith.constant 0 : index
    %c0_33 = arith.constant 0 : index
    %27 = vector.load %arg2[%c4, %c0_32, %c0_33] : memref<9x32x64xf32, #tpu.memory_space<vmem>>, vector<1x32x64xf32>
    %28 = vector.shape_cast %27 : vector<1x32x64xf32> to vector<32x64xf32>
    %cst_34 = arith.constant dense<0.000000e+00> : vector<56x64xf32>
    %29 = tpu.matmul %26, %28, %cst_34 {dimension_numbers = #tpu.dot_dimension_numbers<[1], [0], [0], [1], [0, 0, 1, 1], [], []>} : vector<56x32xf32>, vector<32x64xf32>, vector<56x64xf32> -> vector<56x64xf32>
    %30 = arith.addf %24, %29 : vector<56x64xf32>
    %c0_35 = arith.constant 0 : index
    %c2_36 = arith.constant 2 : index
    %c1_37 = arith.constant 1 : index
    %c0_38 = arith.constant 0 : index
    %31 = vector.load %arg1[%c0_35, %c2_36, %c1_37, %c0_38] : memref<1x4x72x32xf32, #tpu.memory_space<vmem>>, vector<1x1x56x32xf32>
    %32 = vector.shape_cast %31 : vector<1x1x56x32xf32> to vector<56x32xf32>
    %c5 = arith.constant 5 : index
    %c0_39 = arith.constant 0 : index
    %c0_40 = arith.constant 0 : index
    %33 = vector.load %arg2[%c5, %c0_39, %c0_40] : memref<9x32x64xf32, #tpu.memory_space<vmem>>, vector<1x32x64xf32>
    %34 = vector.shape_cast %33 : vector<1x32x64xf32> to vector<32x64xf32>
    %cst_41 = arith.constant dense<0.000000e+00> : vector<56x64xf32>
    %35 = tpu.matmul %32, %34, %cst_41 {dimension_numbers = #tpu.dot_dimension_numbers<[1], [0], [0], [1], [0, 0, 1, 1], [], []>} : vector<56x32xf32>, vector<32x64xf32>, vector<56x64xf32> -> vector<56x64xf32>
    %36 = arith.addf %30, %35 : vector<56x64xf32>
    %c0_42 = arith.constant 0 : index
    %c0_43 = arith.constant 0 : index
    %c8 = arith.constant 8 : index
    %c0_44 = arith.constant 0 : index
    %37 = vector.load %arg1[%c0_42, %c0_43, %c8, %c0_44] : memref<1x4x72x32xf32, #tpu.memory_space<vmem>>, vector<1x1x56x32xf32>
    %38 = vector.shape_cast %37 : vector<1x1x56x32xf32> to vector<56x32xf32>
    %c6 = arith.constant 6 : index
    %c0_45 = arith.constant 0 : index
    %c0_46 = arith.constant 0 : index
    %39 = vector.load %arg2[%c6, %c0_45, %c0_46] : memref<9x32x64xf32, #tpu.memory_space<vmem>>, vector<1x32x64xf32>
    %40 = vector.shape_cast %39 : vector<1x32x64xf32> to vector<32x64xf32>
    %cst_47 = arith.constant dense<0.000000e+00> : vector<56x64xf32>
    %41 = tpu.matmul %38, %40, %cst_47 {dimension_numbers = #tpu.dot_dimension_numbers<[1], [0], [0], [1], [0, 0, 1, 1], [], []>} : vector<56x32xf32>, vector<32x64xf32>, vector<56x64xf32> -> vector<56x64xf32>
    %42 = arith.addf %36, %41 : vector<56x64xf32>
    %c0_48 = arith.constant 0 : index
    %c1_49 = arith.constant 1 : index
    %c8_50 = arith.constant 8 : index
    %c0_51 = arith.constant 0 : index
    %43 = vector.load %arg1[%c0_48, %c1_49, %c8_50, %c0_51] : memref<1x4x72x32xf32, #tpu.memory_space<vmem>>, vector<1x1x56x32xf32>
    %44 = vector.shape_cast %43 : vector<1x1x56x32xf32> to vector<56x32xf32>
    %c7 = arith.constant 7 : index
    %c0_52 = arith.constant 0 : index
    %c0_53 = arith.constant 0 : index
    %45 = vector.load %arg2[%c7, %c0_52, %c0_53] : memref<9x32x64xf32, #tpu.memory_space<vmem>>, vector<1x32x64xf32>
    %46 = vector.shape_cast %45 : vector<1x32x64xf32> to vector<32x64xf32>
    %cst_54 = arith.constant dense<0.000000e+00> : vector<56x64xf32>
    %47 = tpu.matmul %44, %46, %cst_54 {dimension_numbers = #tpu.dot_dimension_numbers<[1], [0], [0], [1], [0, 0, 1, 1], [], []>} : vector<56x32xf32>, vector<32x64xf32>, vector<56x64xf32> -> vector<56x64xf32>
    %48 = arith.addf %42, %47 : vector<56x64xf32>
    %c0_55 = arith.constant 0 : index
    %c0_56 = arith.constant 0 : index
    %c9 = arith.constant 9 : index
    %c0_57 = arith.constant 0 : index
    %49 = vector.load %arg1[%c0_55, %c0_56, %c9, %c0_57] : memref<1x4x72x32xf32, #tpu.memory_space<vmem>>, vector<1x1x56x32xf32>
    %50 = vector.shape_cast %49 : vector<1x1x56x32xf32> to vector<56x32xf32>
    %c8_58 = arith.constant 8 : index
    %c0_59 = arith.constant 0 : index
    %c0_60 = arith.constant 0 : index
    %51 = vector.load %arg2[%c8_58, %c0_59, %c0_60] : memref<9x32x64xf32, #tpu.memory_space<vmem>>, vector<1x32x64xf32>
    %52 = vector.shape_cast %51 : vector<1x32x64xf32> to vector<32x64xf32>
    %cst_61 = arith.constant dense<0.000000e+00> : vector<56x64xf32>
    %53 = tpu.matmul %50, %52, %cst_61 {dimension_numbers = #tpu.dot_dimension_numbers<[1], [0], [0], [1], [0, 0, 1, 1], [], []>} : vector<56x32xf32>, vector<32x64xf32>, vector<56x64xf32> -> vector<56x64xf32>
    %54 = arith.addf %48, %53 : vector<56x64xf32>
    %cst_62 = arith.constant 0.000000e+00 : f32
    %55 = vector.broadcast %cst_62 : f32 to vector<56x64xf32>
    %c0_63 = arith.constant 0 : index
    %c1_64 = arith.constant 1 : index
    %c0_65 = arith.constant 0 : index
    %c0_66 = arith.constant 0 : index
    %56 = vector.load %arg1[%c0_63, %c1_64, %c0_65, %c0_66] : memref<1x4x72x32xf32, #tpu.memory_space<vmem>>, vector<1x1x56x32xf32>
    %57 = vector.shape_cast %56 : vector<1x1x56x32xf32> to vector<56x32xf32>
    %c0_67 = arith.constant 0 : index
    %c0_68 = arith.constant 0 : index
    %c0_69 = arith.constant 0 : index
    %58 = vector.load %arg2[%c0_67, %c0_68, %c0_69] : memref<9x32x64xf32, #tpu.memory_space<vmem>>, vector<1x32x64xf32>
    %59 = vector.shape_cast %58 : vector<1x32x64xf32> to vector<32x64xf32>
    %cst_70 = arith.constant dense<0.000000e+00> : vector<56x64xf32>
    %60 = tpu.matmul %57, %59, %cst_70 {dimension_numbers = #tpu.dot_dimension_numbers<[1], [0], [0], [1], [0, 0, 1, 1], [], []>} : vector<56x32xf32>, vector<32x64xf32>, vector<56x64xf32> -> vector<56x64xf32>
    %61 = arith.addf %55, %60 : vector<56x64xf32>
    %c0_71 = arith.constant 0 : index
    %c0_72 = arith.constant 0 : index
    %c1_73 = arith.constant 1 : index
    %c0_74 = arith.constant 0 : index
    %62 = vector.load %arg1[%c0_71, %c0_72, %c1_73, %c0_74] : memref<1x4x72x32xf32, #tpu.memory_space<vmem>>, vector<1x1x56x32xf32>
    %63 = vector.shape_cast %62 : vector<1x1x56x32xf32> to vector<56x32xf32>
    %c1_75 = arith.constant 1 : index
    %c0_76 = arith.constant 0 : index
    %c0_77 = arith.constant 0 : index
    %64 = vector.load %arg2[%c1_75, %c0_76, %c0_77] : memref<9x32x64xf32, #tpu.memory_space<vmem>>, vector<1x32x64xf32>
    %65 = vector.shape_cast %64 : vector<1x32x64xf32> to vector<32x64xf32>
    %cst_78 = arith.constant dense<0.000000e+00> : vector<56x64xf32>
    %66 = tpu.matmul %63, %65, %cst_78 {dimension_numbers = #tpu.dot_dimension_numbers<[1], [0], [0], [1], [0, 0, 1, 1], [], []>} : vector<56x32xf32>, vector<32x64xf32>, vector<56x64xf32> -> vector<56x64xf32>
    %67 = arith.addf %61, %66 : vector<56x64xf32>
    %c0_79 = arith.constant 0 : index
    %c1_80 = arith.constant 1 : index
    %c1_81 = arith.constant 1 : index
    %c0_82 = arith.constant 0 : index
    %68 = vector.load %arg1[%c0_79, %c1_80, %c1_81, %c0_82] : memref<1x4x72x32xf32, #tpu.memory_space<vmem>>, vector<1x1x56x32xf32>
    %69 = vector.shape_cast %68 : vector<1x1x56x32xf32> to vector<56x32xf32>
    %c2_83 = arith.constant 2 : index
    %c0_84 = arith.constant 0 : index
    %c0_85 = arith.constant 0 : index
    %70 = vector.load %arg2[%c2_83, %c0_84, %c0_85] : memref<9x32x64xf32, #tpu.memory_space<vmem>>, vector<1x32x64xf32>
    %71 = vector.shape_cast %70 : vector<1x32x64xf32> to vector<32x64xf32>
    %cst_86 = arith.constant dense<0.000000e+00> : vector<56x64xf32>
    %72 = tpu.matmul %69, %71, %cst_86 {dimension_numbers = #tpu.dot_dimension_numbers<[1], [0], [0], [1], [0, 0, 1, 1], [], []>} : vector<56x32xf32>, vector<32x64xf32>, vector<56x64xf32> -> vector<56x64xf32>
    %73 = arith.addf %67, %72 : vector<56x64xf32>
    %c0_87 = arith.constant 0 : index
    %c3_88 = arith.constant 3 : index
    %c0_89 = arith.constant 0 : index
    %c0_90 = arith.constant 0 : index
    %74 = vector.load %arg1[%c0_87, %c3_88, %c0_89, %c0_90] : memref<1x4x72x32xf32, #tpu.memory_space<vmem>>, vector<1x1x56x32xf32>
    %75 = vector.shape_cast %74 : vector<1x1x56x32xf32> to vector<56x32xf32>
    %c3_91 = arith.constant 3 : index
    %c0_92 = arith.constant 0 : index
    %c0_93 = arith.constant 0 : index
    %76 = vector.load %arg2[%c3_91, %c0_92, %c0_93] : memref<9x32x64xf32, #tpu.memory_space<vmem>>, vector<1x32x64xf32>
    %77 = vector.shape_cast %76 : vector<1x32x64xf32> to vector<32x64xf32>
    %cst_94 = arith.constant dense<0.000000e+00> : vector<56x64xf32>
    %78 = tpu.matmul %75, %77, %cst_94 {dimension_numbers = #tpu.dot_dimension_numbers<[1], [0], [0], [1], [0, 0, 1, 1], [], []>} : vector<56x32xf32>, vector<32x64xf32>, vector<56x64xf32> -> vector<56x64xf32>
    %79 = arith.addf %73, %78 : vector<56x64xf32>
    %c0_95 = arith.constant 0 : index
    %c2_96 = arith.constant 2 : index
    %c1_97 = arith.constant 1 : index
    %c0_98 = arith.constant 0 : index
    %80 = vector.load %arg1[%c0_95, %c2_96, %c1_97, %c0_98] : memref<1x4x72x32xf32, #tpu.memory_space<vmem>>, vector<1x1x56x32xf32>
    %81 = vector.shape_cast %80 : vector<1x1x56x32xf32> to vector<56x32xf32>
    %c4_99 = arith.constant 4 : index
    %c0_100 = arith.constant 0 : index
    %c0_101 = arith.constant 0 : index
    %82 = vector.load %arg2[%c4_99, %c0_100, %c0_101] : memref<9x32x64xf32, #tpu.memory_space<vmem>>, vector<1x32x64xf32>
    %83 = vector.shape_cast %82 : vector<1x32x64xf32> to vector<32x64xf32>
    %cst_102 = arith.constant dense<0.000000e+00> : vector<56x64xf32>
    %84 = tpu.matmul %81, %83, %cst_102 {dimension_numbers = #tpu.dot_dimension_numbers<[1], [0], [0], [1], [0, 0, 1, 1], [], []>} : vector<56x32xf32>, vector<32x64xf32>, vector<56x64xf32> -> vector<56x64xf32>
    %85 = arith.addf %79, %84 : vector<56x64xf32>
    %c0_103 = arith.constant 0 : index
    %c3_104 = arith.constant 3 : index
    %c1_105 = arith.constant 1 : index
    %c0_106 = arith.constant 0 : index
    %86 = vector.load %arg1[%c0_103, %c3_104, %c1_105, %c0_106] : memref<1x4x72x32xf32, #tpu.memory_space<vmem>>, vector<1x1x56x32xf32>
    %87 = vector.shape_cast %86 : vector<1x1x56x32xf32> to vector<56x32xf32>
    %c5_107 = arith.constant 5 : index
    %c0_108 = arith.constant 0 : index
    %c0_109 = arith.constant 0 : index
    %88 = vector.load %arg2[%c5_107, %c0_108, %c0_109] : memref<9x32x64xf32, #tpu.memory_space<vmem>>, vector<1x32x64xf32>
    %89 = vector.shape_cast %88 : vector<1x32x64xf32> to vector<32x64xf32>
    %cst_110 = arith.constant dense<0.000000e+00> : vector<56x64xf32>
    %90 = tpu.matmul %87, %89, %cst_110 {dimension_numbers = #tpu.dot_dimension_numbers<[1], [0], [0], [1], [0, 0, 1, 1], [], []>} : vector<56x32xf32>, vector<32x64xf32>, vector<56x64xf32> -> vector<56x64xf32>
    %91 = arith.addf %85, %90 : vector<56x64xf32>
    %c0_111 = arith.constant 0 : index
    %c1_112 = arith.constant 1 : index
    %c8_113 = arith.constant 8 : index
    %c0_114 = arith.constant 0 : index
    %92 = vector.load %arg1[%c0_111, %c1_112, %c8_113, %c0_114] : memref<1x4x72x32xf32, #tpu.memory_space<vmem>>, vector<1x1x56x32xf32>
    %93 = vector.shape_cast %92 : vector<1x1x56x32xf32> to vector<56x32xf32>
    %c6_115 = arith.constant 6 : index
    %c0_116 = arith.constant 0 : index
    %c0_117 = arith.constant 0 : index
    %94 = vector.load %arg2[%c6_115, %c0_116, %c0_117] : memref<9x32x64xf32, #tpu.memory_space<vmem>>, vector<1x32x64xf32>
    %95 = vector.shape_cast %94 : vector<1x32x64xf32> to vector<32x64xf32>
    %cst_118 = arith.constant dense<0.000000e+00> : vector<56x64xf32>
    %96 = tpu.matmul %93, %95, %cst_118 {dimension_numbers = #tpu.dot_dimension_numbers<[1], [0], [0], [1], [0, 0, 1, 1], [], []>} : vector<56x32xf32>, vector<32x64xf32>, vector<56x64xf32> -> vector<56x64xf32>
    %97 = arith.addf %91, %96 : vector<56x64xf32>
    %c0_119 = arith.constant 0 : index
    %c0_120 = arith.constant 0 : index
    %c9_121 = arith.constant 9 : index
    %c0_122 = arith.constant 0 : index
    %98 = vector.load %arg1[%c0_119, %c0_120, %c9_121, %c0_122] : memref<1x4x72x32xf32, #tpu.memory_space<vmem>>, vector<1x1x56x32xf32>
    %99 = vector.shape_cast %98 : vector<1x1x56x32xf32> to vector<56x32xf32>
    %c7_123 = arith.constant 7 : index
    %c0_124 = arith.constant 0 : index
    %c0_125 = arith.constant 0 : index
    %100 = vector.load %arg2[%c7_123, %c0_124, %c0_125] : memref<9x32x64xf32, #tpu.memory_space<vmem>>, vector<1x32x64xf32>
    %101 = vector.shape_cast %100 : vector<1x32x64xf32> to vector<32x64xf32>
    %cst_126 = arith.constant dense<0.000000e+00> : vector<56x64xf32>
    %102 = tpu.matmul %99, %101, %cst_126 {dimension_numbers = #tpu.dot_dimension_numbers<[1], [0], [0], [1], [0, 0, 1, 1], [], []>} : vector<56x32xf32>, vector<32x64xf32>, vector<56x64xf32> -> vector<56x64xf32>
    %103 = arith.addf %97, %102 : vector<56x64xf32>
    %c0_127 = arith.constant 0 : index
    %c1_128 = arith.constant 1 : index
    %c9_129 = arith.constant 9 : index
    %c0_130 = arith.constant 0 : index
    %104 = vector.load %arg1[%c0_127, %c1_128, %c9_129, %c0_130] : memref<1x4x72x32xf32, #tpu.memory_space<vmem>>, vector<1x1x56x32xf32>
    %105 = vector.shape_cast %104 : vector<1x1x56x32xf32> to vector<56x32xf32>
    %c8_131 = arith.constant 8 : index
    %c0_132 = arith.constant 0 : index
    %c0_133 = arith.constant 0 : index
    %106 = vector.load %arg2[%c8_131, %c0_132, %c0_133] : memref<9x32x64xf32, #tpu.memory_space<vmem>>, vector<1x32x64xf32>
    %107 = vector.shape_cast %106 : vector<1x32x64xf32> to vector<32x64xf32>
    %cst_134 = arith.constant dense<0.000000e+00> : vector<56x64xf32>
    %108 = tpu.matmul %105, %107, %cst_134 {dimension_numbers = #tpu.dot_dimension_numbers<[1], [0], [0], [1], [0, 0, 1, 1], [], []>} : vector<56x32xf32>, vector<32x64xf32>, vector<56x64xf32> -> vector<56x64xf32>
    %109 = arith.addf %103, %108 : vector<56x64xf32>
    %110 = arith.maximumf %54, %109 : vector<56x64xf32>
    %cst_135 = arith.constant 0.000000e+00 : f32
    %111 = vector.broadcast %cst_135 : f32 to vector<56x64xf32>
    %c0_136 = arith.constant 0 : index
    %c2_137 = arith.constant 2 : index
    %c0_138 = arith.constant 0 : index
    %c0_139 = arith.constant 0 : index
    %112 = vector.load %arg1[%c0_136, %c2_137, %c0_138, %c0_139] : memref<1x4x72x32xf32, #tpu.memory_space<vmem>>, vector<1x1x56x32xf32>
    %113 = vector.shape_cast %112 : vector<1x1x56x32xf32> to vector<56x32xf32>
    %c0_140 = arith.constant 0 : index
    %c0_141 = arith.constant 0 : index
    %c0_142 = arith.constant 0 : index
    %114 = vector.load %arg2[%c0_140, %c0_141, %c0_142] : memref<9x32x64xf32, #tpu.memory_space<vmem>>, vector<1x32x64xf32>
    %115 = vector.shape_cast %114 : vector<1x32x64xf32> to vector<32x64xf32>
    %cst_143 = arith.constant dense<0.000000e+00> : vector<56x64xf32>
    %116 = tpu.matmul %113, %115, %cst_143 {dimension_numbers = #tpu.dot_dimension_numbers<[1], [0], [0], [1], [0, 0, 1, 1], [], []>} : vector<56x32xf32>, vector<32x64xf32>, vector<56x64xf32> -> vector<56x64xf32>
    %117 = arith.addf %111, %116 : vector<56x64xf32>
    %c0_144 = arith.constant 0 : index
    %c3_145 = arith.constant 3 : index
    %c0_146 = arith.constant 0 : index
    %c0_147 = arith.constant 0 : index
    %118 = vector.load %arg1[%c0_144, %c3_145, %c0_146, %c0_147] : memref<1x4x72x32xf32, #tpu.memory_space<vmem>>, vector<1x1x56x32xf32>
    %119 = vector.shape_cast %118 : vector<1x1x56x32xf32> to vector<56x32xf32>
    %c1_148 = arith.constant 1 : index
    %c0_149 = arith.constant 0 : index
    %c0_150 = arith.constant 0 : index
    %120 = vector.load %arg2[%c1_148, %c0_149, %c0_150] : memref<9x32x64xf32, #tpu.memory_space<vmem>>, vector<1x32x64xf32>
    %121 = vector.shape_cast %120 : vector<1x32x64xf32> to vector<32x64xf32>
    %cst_151 = arith.constant dense<0.000000e+00> : vector<56x64xf32>
    %122 = tpu.matmul %119, %121, %cst_151 {dimension_numbers = #tpu.dot_dimension_numbers<[1], [0], [0], [1], [0, 0, 1, 1], [], []>} : vector<56x32xf32>, vector<32x64xf32>, vector<56x64xf32> -> vector<56x64xf32>
    %123 = arith.addf %117, %122 : vector<56x64xf32>
    %c0_152 = arith.constant 0 : index
    %c2_153 = arith.constant 2 : index
    %c1_154 = arith.constant 1 : index
    %c0_155 = arith.constant 0 : index
    %124 = vector.load %arg1[%c0_152, %c2_153, %c1_154, %c0_155] : memref<1x4x72x32xf32, #tpu.memory_space<vmem>>, vector<1x1x56x32xf32>
    %125 = vector.shape_cast %124 : vector<1x1x56x32xf32> to vector<56x32xf32>
    %c2_156 = arith.constant 2 : index
    %c0_157 = arith.constant 0 : index
    %c0_158 = arith.constant 0 : index
    %126 = vector.load %arg2[%c2_156, %c0_157, %c0_158] : memref<9x32x64xf32, #tpu.memory_space<vmem>>, vector<1x32x64xf32>
    %127 = vector.shape_cast %126 : vector<1x32x64xf32> to vector<32x64xf32>
    %cst_159 = arith.constant dense<0.000000e+00> : vector<56x64xf32>
    %128 = tpu.matmul %125, %127, %cst_159 {dimension_numbers = #tpu.dot_dimension_numbers<[1], [0], [0], [1], [0, 0, 1, 1], [], []>} : vector<56x32xf32>, vector<32x64xf32>, vector<56x64xf32> -> vector<56x64xf32>
    %129 = arith.addf %123, %128 : vector<56x64xf32>
    %c0_160 = arith.constant 0 : index
    %c0_161 = arith.constant 0 : index
    %c8_162 = arith.constant 8 : index
    %c0_163 = arith.constant 0 : index
    %130 = vector.load %arg1[%c0_160, %c0_161, %c8_162, %c0_163] : memref<1x4x72x32xf32, #tpu.memory_space<vmem>>, vector<1x1x56x32xf32>
    %131 = vector.shape_cast %130 : vector<1x1x56x32xf32> to vector<56x32xf32>
    %c3_164 = arith.constant 3 : index
    %c0_165 = arith.constant 0 : index
    %c0_166 = arith.constant 0 : index
    %132 = vector.load %arg2[%c3_164, %c0_165, %c0_166] : memref<9x32x64xf32, #tpu.memory_space<vmem>>, vector<1x32x64xf32>
    %133 = vector.shape_cast %132 : vector<1x32x64xf32> to vector<32x64xf32>
    %cst_167 = arith.constant dense<0.000000e+00> : vector<56x64xf32>
    %134 = tpu.matmul %131, %133, %cst_167 {dimension_numbers = #tpu.dot_dimension_numbers<[1], [0], [0], [1], [0, 0, 1, 1], [], []>} : vector<56x32xf32>, vector<32x64xf32>, vector<56x64xf32> -> vector<56x64xf32>
    %135 = arith.addf %129, %134 : vector<56x64xf32>
    %c0_168 = arith.constant 0 : index
    %c1_169 = arith.constant 1 : index
    %c8_170 = arith.constant 8 : index
    %c0_171 = arith.constant 0 : index
    %136 = vector.load %arg1[%c0_168, %c1_169, %c8_170, %c0_171] : memref<1x4x72x32xf32, #tpu.memory_space<vmem>>, vector<1x1x56x32xf32>
    %137 = vector.shape_cast %136 : vector<1x1x56x32xf32> to vector<56x32xf32>
    %c4_172 = arith.constant 4 : index
    %c0_173 = arith.constant 0 : index
    %c0_174 = arith.constant 0 : index
    %138 = vector.load %arg2[%c4_172, %c0_173, %c0_174] : memref<9x32x64xf32, #tpu.memory_space<vmem>>, vector<1x32x64xf32>
    %139 = vector.shape_cast %138 : vector<1x32x64xf32> to vector<32x64xf32>
    %cst_175 = arith.constant dense<0.000000e+00> : vector<56x64xf32>
    %140 = tpu.matmul %137, %139, %cst_175 {dimension_numbers = #tpu.dot_dimension_numbers<[1], [0], [0], [1], [0, 0, 1, 1], [], []>} : vector<56x32xf32>, vector<32x64xf32>, vector<56x64xf32> -> vector<56x64xf32>
    %141 = arith.addf %135, %140 : vector<56x64xf32>
    %c0_176 = arith.constant 0 : index
    %c0_177 = arith.constant 0 : index
    %c9_178 = arith.constant 9 : index
    %c0_179 = arith.constant 0 : index
    %142 = vector.load %arg1[%c0_176, %c0_177, %c9_178, %c0_179] : memref<1x4x72x32xf32, #tpu.memory_space<vmem>>, vector<1x1x56x32xf32>
    %143 = vector.shape_cast %142 : vector<1x1x56x32xf32> to vector<56x32xf32>
    %c5_180 = arith.constant 5 : index
    %c0_181 = arith.constant 0 : index
    %c0_182 = arith.constant 0 : index
    %144 = vector.load %arg2[%c5_180, %c0_181, %c0_182] : memref<9x32x64xf32, #tpu.memory_space<vmem>>, vector<1x32x64xf32>
    %145 = vector.shape_cast %144 : vector<1x32x64xf32> to vector<32x64xf32>
    %cst_183 = arith.constant dense<0.000000e+00> : vector<56x64xf32>
    %146 = tpu.matmul %143, %145, %cst_183 {dimension_numbers = #tpu.dot_dimension_numbers<[1], [0], [0], [1], [0, 0, 1, 1], [], []>} : vector<56x32xf32>, vector<32x64xf32>, vector<56x64xf32> -> vector<56x64xf32>
    %147 = arith.addf %141, %146 : vector<56x64xf32>
    %c0_184 = arith.constant 0 : index
    %c2_185 = arith.constant 2 : index
    %c8_186 = arith.constant 8 : index
    %c0_187 = arith.constant 0 : index
    %148 = vector.load %arg1[%c0_184, %c2_185, %c8_186, %c0_187] : memref<1x4x72x32xf32, #tpu.memory_space<vmem>>, vector<1x1x56x32xf32>
    %149 = vector.shape_cast %148 : vector<1x1x56x32xf32> to vector<56x32xf32>
    %c6_188 = arith.constant 6 : index
    %c0_189 = arith.constant 0 : index
    %c0_190 = arith.constant 0 : index
    %150 = vector.load %arg2[%c6_188, %c0_189, %c0_190] : memref<9x32x64xf32, #tpu.memory_space<vmem>>, vector<1x32x64xf32>
    %151 = vector.shape_cast %150 : vector<1x32x64xf32> to vector<32x64xf32>
    %cst_191 = arith.constant dense<0.000000e+00> : vector<56x64xf32>
    %152 = tpu.matmul %149, %151, %cst_191 {dimension_numbers = #tpu.dot_dimension_numbers<[1], [0], [0], [1], [0, 0, 1, 1], [], []>} : vector<56x32xf32>, vector<32x64xf32>, vector<56x64xf32> -> vector<56x64xf32>
    %153 = arith.addf %147, %152 : vector<56x64xf32>
    %c0_192 = arith.constant 0 : index
    %c3_193 = arith.constant 3 : index
    %c8_194 = arith.constant 8 : index
    %c0_195 = arith.constant 0 : index
    %154 = vector.load %arg1[%c0_192, %c3_193, %c8_194, %c0_195] : memref<1x4x72x32xf32, #tpu.memory_space<vmem>>, vector<1x1x56x32xf32>
    %155 = vector.shape_cast %154 : vector<1x1x56x32xf32> to vector<56x32xf32>
    %c7_196 = arith.constant 7 : index
    %c0_197 = arith.constant 0 : index
    %c0_198 = arith.constant 0 : index
    %156 = vector.load %arg2[%c7_196, %c0_197, %c0_198] : memref<9x32x64xf32, #tpu.memory_space<vmem>>, vector<1x32x64xf32>
    %157 = vector.shape_cast %156 : vector<1x32x64xf32> to vector<32x64xf32>
    %cst_199 = arith.constant dense<0.000000e+00> : vector<56x64xf32>
    %158 = tpu.matmul %155, %157, %cst_199 {dimension_numbers = #tpu.dot_dimension_numbers<[1], [0], [0], [1], [0, 0, 1, 1], [], []>} : vector<56x32xf32>, vector<32x64xf32>, vector<56x64xf32> -> vector<56x64xf32>
    %159 = arith.addf %153, %158 : vector<56x64xf32>
    %c0_200 = arith.constant 0 : index
    %c2_201 = arith.constant 2 : index
    %c9_202 = arith.constant 9 : index
    %c0_203 = arith.constant 0 : index
    %160 = vector.load %arg1[%c0_200, %c2_201, %c9_202, %c0_203] : memref<1x4x72x32xf32, #tpu.memory_space<vmem>>, vector<1x1x56x32xf32>
    %161 = vector.shape_cast %160 : vector<1x1x56x32xf32> to vector<56x32xf32>
    %c8_204 = arith.constant 8 : index
    %c0_205 = arith.constant 0 : index
    %c0_206 = arith.constant 0 : index
    %162 = vector.load %arg2[%c8_204, %c0_205, %c0_206] : memref<9x32x64xf32, #tpu.memory_space<vmem>>, vector<1x32x64xf32>
    %163 = vector.shape_cast %162 : vector<1x32x64xf32> to vector<32x64xf32>
    %cst_207 = arith.constant dense<0.000000e+00> : vector<56x64xf32>
    %164 = tpu.matmul %161, %163, %cst_207 {dimension_numbers = #tpu.dot_dimension_numbers<[1], [0], [0], [1], [0, 0, 1, 1], [], []>} : vector<56x32xf32>, vector<32x64xf32>, vector<56x64xf32> -> vector<56x64xf32>
    %165 = arith.addf %159, %164 : vector<56x64xf32>
    %166 = arith.maximumf %110, %165 : vector<56x64xf32>
    %cst_208 = arith.constant 0.000000e+00 : f32
    %167 = vector.broadcast %cst_208 : f32 to vector<56x64xf32>
    %c0_209 = arith.constant 0 : index
    %c3_210 = arith.constant 3 : index
    %c0_211 = arith.constant 0 : index
    %c0_212 = arith.constant 0 : index
    %168 = vector.load %arg1[%c0_209, %c3_210, %c0_211, %c0_212] : memref<1x4x72x32xf32, #tpu.memory_space<vmem>>, vector<1x1x56x32xf32>
    %169 = vector.shape_cast %168 : vector<1x1x56x32xf32> to vector<56x32xf32>
    %c0_213 = arith.constant 0 : index
    %c0_214 = arith.constant 0 : index
    %c0_215 = arith.constant 0 : index
    %170 = vector.load %arg2[%c0_213, %c0_214, %c0_215] : memref<9x32x64xf32, #tpu.memory_space<vmem>>, vector<1x32x64xf32>
    %171 = vector.shape_cast %170 : vector<1x32x64xf32> to vector<32x64xf32>
    %cst_216 = arith.constant dense<0.000000e+00> : vector<56x64xf32>
    %172 = tpu.matmul %169, %171, %cst_216 {dimension_numbers = #tpu.dot_dimension_numbers<[1], [0], [0], [1], [0, 0, 1, 1], [], []>} : vector<56x32xf32>, vector<32x64xf32>, vector<56x64xf32> -> vector<56x64xf32>
    %173 = arith.addf %167, %172 : vector<56x64xf32>
    %c0_217 = arith.constant 0 : index
    %c2_218 = arith.constant 2 : index
    %c1_219 = arith.constant 1 : index
    %c0_220 = arith.constant 0 : index
    %174 = vector.load %arg1[%c0_217, %c2_218, %c1_219, %c0_220] : memref<1x4x72x32xf32, #tpu.memory_space<vmem>>, vector<1x1x56x32xf32>
    %175 = vector.shape_cast %174 : vector<1x1x56x32xf32> to vector<56x32xf32>
    %c1_221 = arith.constant 1 : index
    %c0_222 = arith.constant 0 : index
    %c0_223 = arith.constant 0 : index
    %176 = vector.load %arg2[%c1_221, %c0_222, %c0_223] : memref<9x32x64xf32, #tpu.memory_space<vmem>>, vector<1x32x64xf32>
    %177 = vector.shape_cast %176 : vector<1x32x64xf32> to vector<32x64xf32>
    %cst_224 = arith.constant dense<0.000000e+00> : vector<56x64xf32>
    %178 = tpu.matmul %175, %177, %cst_224 {dimension_numbers = #tpu.dot_dimension_numbers<[1], [0], [0], [1], [0, 0, 1, 1], [], []>} : vector<56x32xf32>, vector<32x64xf32>, vector<56x64xf32> -> vector<56x64xf32>
    %179 = arith.addf %173, %178 : vector<56x64xf32>
    %c0_225 = arith.constant 0 : index
    %c3_226 = arith.constant 3 : index
    %c1_227 = arith.constant 1 : index
    %c0_228 = arith.constant 0 : index
    %180 = vector.load %arg1[%c0_225, %c3_226, %c1_227, %c0_228] : memref<1x4x72x32xf32, #tpu.memory_space<vmem>>, vector<1x1x56x32xf32>
    %181 = vector.shape_cast %180 : vector<1x1x56x32xf32> to vector<56x32xf32>
    %c2_229 = arith.constant 2 : index
    %c0_230 = arith.constant 0 : index
    %c0_231 = arith.constant 0 : index
    %182 = vector.load %arg2[%c2_229, %c0_230, %c0_231] : memref<9x32x64xf32, #tpu.memory_space<vmem>>, vector<1x32x64xf32>
    %183 = vector.shape_cast %182 : vector<1x32x64xf32> to vector<32x64xf32>
    %cst_232 = arith.constant dense<0.000000e+00> : vector<56x64xf32>
    %184 = tpu.matmul %181, %183, %cst_232 {dimension_numbers = #tpu.dot_dimension_numbers<[1], [0], [0], [1], [0, 0, 1, 1], [], []>} : vector<56x32xf32>, vector<32x64xf32>, vector<56x64xf32> -> vector<56x64xf32>
    %185 = arith.addf %179, %184 : vector<56x64xf32>
    %c0_233 = arith.constant 0 : index
    %c1_234 = arith.constant 1 : index
    %c8_235 = arith.constant 8 : index
    %c0_236 = arith.constant 0 : index
    %186 = vector.load %arg1[%c0_233, %c1_234, %c8_235, %c0_236] : memref<1x4x72x32xf32, #tpu.memory_space<vmem>>, vector<1x1x56x32xf32>
    %187 = vector.shape_cast %186 : vector<1x1x56x32xf32> to vector<56x32xf32>
    %c3_237 = arith.constant 3 : index
    %c0_238 = arith.constant 0 : index
    %c0_239 = arith.constant 0 : index
    %188 = vector.load %arg2[%c3_237, %c0_238, %c0_239] : memref<9x32x64xf32, #tpu.memory_space<vmem>>, vector<1x32x64xf32>
    %189 = vector.shape_cast %188 : vector<1x32x64xf32> to vector<32x64xf32>
    %cst_240 = arith.constant dense<0.000000e+00> : vector<56x64xf32>
    %190 = tpu.matmul %187, %189, %cst_240 {dimension_numbers = #tpu.dot_dimension_numbers<[1], [0], [0], [1], [0, 0, 1, 1], [], []>} : vector<56x32xf32>, vector<32x64xf32>, vector<56x64xf32> -> vector<56x64xf32>
    %191 = arith.addf %185, %190 : vector<56x64xf32>
    %c0_241 = arith.constant 0 : index
    %c0_242 = arith.constant 0 : index
    %c9_243 = arith.constant 9 : index
    %c0_244 = arith.constant 0 : index
    %192 = vector.load %arg1[%c0_241, %c0_242, %c9_243, %c0_244] : memref<1x4x72x32xf32, #tpu.memory_space<vmem>>, vector<1x1x56x32xf32>
    %193 = vector.shape_cast %192 : vector<1x1x56x32xf32> to vector<56x32xf32>
    %c4_245 = arith.constant 4 : index
    %c0_246 = arith.constant 0 : index
    %c0_247 = arith.constant 0 : index
    %194 = vector.load %arg2[%c4_245, %c0_246, %c0_247] : memref<9x32x64xf32, #tpu.memory_space<vmem>>, vector<1x32x64xf32>
    %195 = vector.shape_cast %194 : vector<1x32x64xf32> to vector<32x64xf32>
    %cst_248 = arith.constant dense<0.000000e+00> : vector<56x64xf32>
    %196 = tpu.matmul %193, %195, %cst_248 {dimension_numbers = #tpu.dot_dimension_numbers<[1], [0], [0], [1], [0, 0, 1, 1], [], []>} : vector<56x32xf32>, vector<32x64xf32>, vector<56x64xf32> -> vector<56x64xf32>
    %197 = arith.addf %191, %196 : vector<56x64xf32>
    %c0_249 = arith.constant 0 : index
    %c1_250 = arith.constant 1 : index
    %c9_251 = arith.constant 9 : index
    %c0_252 = arith.constant 0 : index
    %198 = vector.load %arg1[%c0_249, %c1_250, %c9_251, %c0_252] : memref<1x4x72x32xf32, #tpu.memory_space<vmem>>, vector<1x1x56x32xf32>
    %199 = vector.shape_cast %198 : vector<1x1x56x32xf32> to vector<56x32xf32>
    %c5_253 = arith.constant 5 : index
    %c0_254 = arith.constant 0 : index
    %c0_255 = arith.constant 0 : index
    %200 = vector.load %arg2[%c5_253, %c0_254, %c0_255] : memref<9x32x64xf32, #tpu.memory_space<vmem>>, vector<1x32x64xf32>
    %201 = vector.shape_cast %200 : vector<1x32x64xf32> to vector<32x64xf32>
    %cst_256 = arith.constant dense<0.000000e+00> : vector<56x64xf32>
    %202 = tpu.matmul %199, %201, %cst_256 {dimension_numbers = #tpu.dot_dimension_numbers<[1], [0], [0], [1], [0, 0, 1, 1], [], []>} : vector<56x32xf32>, vector<32x64xf32>, vector<56x64xf32> -> vector<56x64xf32>
    %203 = arith.addf %197, %202 : vector<56x64xf32>
    %c0_257 = arith.constant 0 : index
    %c3_258 = arith.constant 3 : index
    %c8_259 = arith.constant 8 : index
    %c0_260 = arith.constant 0 : index
    %204 = vector.load %arg1[%c0_257, %c3_258, %c8_259, %c0_260] : memref<1x4x72x32xf32, #tpu.memory_space<vmem>>, vector<1x1x56x32xf32>
    %205 = vector.shape_cast %204 : vector<1x1x56x32xf32> to vector<56x32xf32>
    %c6_261 = arith.constant 6 : index
    %c0_262 = arith.constant 0 : index
    %c0_263 = arith.constant 0 : index
    %206 = vector.load %arg2[%c6_261, %c0_262, %c0_263] : memref<9x32x64xf32, #tpu.memory_space<vmem>>, vector<1x32x64xf32>
    %207 = vector.shape_cast %206 : vector<1x32x64xf32> to vector<32x64xf32>
    %cst_264 = arith.constant dense<0.000000e+00> : vector<56x64xf32>
    %208 = tpu.matmul %205, %207, %cst_264 {dimension_numbers = #tpu.dot_dimension_numbers<[1], [0], [0], [1], [0, 0, 1, 1], [], []>} : vector<56x32xf32>, vector<32x64xf32>, vector<56x64xf32> -> vector<56x64xf32>
    %209 = arith.addf %203, %208 : vector<56x64xf32>
    %c0_265 = arith.constant 0 : index
    %c2_266 = arith.constant 2 : index
    %c9_267 = arith.constant 9 : index
    %c0_268 = arith.constant 0 : index
    %210 = vector.load %arg1[%c0_265, %c2_266, %c9_267, %c0_268] : memref<1x4x72x32xf32, #tpu.memory_space<vmem>>, vector<1x1x56x32xf32>
    %211 = vector.shape_cast %210 : vector<1x1x56x32xf32> to vector<56x32xf32>
    %c7_269 = arith.constant 7 : index
    %c0_270 = arith.constant 0 : index
    %c0_271 = arith.constant 0 : index
    %212 = vector.load %arg2[%c7_269, %c0_270, %c0_271] : memref<9x32x64xf32, #tpu.memory_space<vmem>>, vector<1x32x64xf32>
    %213 = vector.shape_cast %212 : vector<1x32x64xf32> to vector<32x64xf32>
    %cst_272 = arith.constant dense<0.000000e+00> : vector<56x64xf32>
    %214 = tpu.matmul %211, %213, %cst_272 {dimension_numbers = #tpu.dot_dimension_numbers<[1], [0], [0], [1], [0, 0, 1, 1], [], []>} : vector<56x32xf32>, vector<32x64xf32>, vector<56x64xf32> -> vector<56x64xf32>
    %215 = arith.addf %209, %214 : vector<56x64xf32>
    %c0_273 = arith.constant 0 : index
    %c3_274 = arith.constant 3 : index
    %c9_275 = arith.constant 9 : index
    %c0_276 = arith.constant 0 : index
    %216 = vector.load %arg1[%c0_273, %c3_274, %c9_275, %c0_276] : memref<1x4x72x32xf32, #tpu.memory_space<vmem>>, vector<1x1x56x32xf32>
    %217 = vector.shape_cast %216 : vector<1x1x56x32xf32> to vector<56x32xf32>
    %c8_277 = arith.constant 8 : index
    %c0_278 = arith.constant 0 : index
    %c0_279 = arith.constant 0 : index
    %218 = vector.load %arg2[%c8_277, %c0_278, %c0_279] : memref<9x32x64xf32, #tpu.memory_space<vmem>>, vector<1x32x64xf32>
    %219 = vector.shape_cast %218 : vector<1x32x64xf32> to vector<32x64xf32>
    %cst_280 = arith.constant dense<0.000000e+00> : vector<56x64xf32>
    %220 = tpu.matmul %217, %219, %cst_280 {dimension_numbers = #tpu.dot_dimension_numbers<[1], [0], [0], [1], [0, 0, 1, 1], [], []>} : vector<56x32xf32>, vector<32x64xf32>, vector<56x64xf32> -> vector<56x64xf32>
    %221 = arith.addf %215, %220 : vector<56x64xf32>
    %222 = arith.maximumf %166, %221 : vector<56x64xf32>
    %c0_281 = arith.constant 0 : index
    %c0_282 = arith.constant 0 : index
    %223 = vector.load %arg3[%c0_281, %c0_282] : memref<1x64xf32, #tpu.memory_space<vmem>>, vector<1x64xf32>
    %224 = vector.broadcast %223 : vector<1x64xf32> to vector<56x64xf32>
    %225 = arith.addf %222, %224 : vector<56x64xf32>
    %cst_283 = arith.constant 0.000000e+00 : f32
    %226 = vector.broadcast %cst_283 : f32 to vector<56x64xf32>
    %227 = arith.maximumf %225, %226 : vector<56x64xf32>
    %c0_284 = arith.constant 0 : index
    %c0_285 = arith.constant 0 : index
    %c0_286 = arith.constant 0 : index
    %228 = vector.load %arg4[%c0_284, %c0_285, %c0_286] : memref<1x56x64xf32, #tpu.memory_space<vmem>>, vector<1x56x64xf32>
    %229 = vector.shape_cast %228 : vector<1x56x64xf32> to vector<56x64xf32>
    %230 = vector.shape_cast %227 : vector<56x64xf32> to vector<1x56x64xf32>
    tpu.vector_store %arg4[%c0_284, %c0_285, %c0_286], %230 {strides = array<i32>} : memref<1x56x64xf32, #tpu.memory_space<vmem>>, vector<1x56x64xf32>,
    return
  }
  func.func @transform_0(%arg0: i32) -> (i32, i32, i32, i32) {
    %c0_i32 = arith.constant 0 : i32
    %c0_i32_0 = arith.constant 0 : i32
    %c0_i32_1 = arith.constant 0 : i32
    %c0_i32_2 = arith.constant 0 : i32
    return %arg0, %c0_i32, %c0_i32_0, %c0_i32_1 : i32, i32, i32, i32
  }
  func.func @transform_1(%arg0: i32) -> (i32, i32, i32) {
    %c0_i32 = arith.constant 0 : i32
    %c0_i32_0 = arith.constant 0 : i32
    %c0_i32_1 = arith.constant 0 : i32
    %c0_i32_2 = arith.constant 0 : i32
    return %c0_i32, %c0_i32_0, %c0_i32_1 : i32, i32, i32
  }
  func.func @transform_2(%arg0: i32) -> (i32, i32) {
    %c0_i32 = arith.constant 0 : i32
    %c0_i32_0 = arith.constant 0 : i32
    %c0_i32_1 = arith.constant 0 : i32
    return %c0_i32, %c0_i32_0 : i32, i32
  }
  func.func @transform_3(%arg0: i32) -> (i32, i32, i32) {
    %c0_i32 = arith.constant 0 : i32
    %c0_i32_0 = arith.constant 0 : i32
    %c0_i32_1 = arith.constant 0 : i32
    return %arg0, %c0_i32, %c0_i32_0 : i32, i32, i32
  }
}

module attributes {stable_mosaic.version = 11 : i64} {
  func.func @_linear_kernel(%arg0: i32, %arg1: memref<2x3584xf32, #tpu.memory_space<vmem>>, %arg2: memref<3584x128xf32, #tpu.memory_space<vmem>>, %arg3: memref<1x128xf32, #tpu.memory_space<vmem>>, %arg4: memref<2x128xf32, #tpu.memory_space<vmem>>) attributes {dimension_semantics = [#tpu.dimension_semantics<parallel>], iteration_bounds = array<i64: 1>, scalar_prefetch = 0 : i64, scratch_operands = 0 : i64, tpu.core_type = #tpu.core_type<tc>, window_params = [{transform_indices = @transform_0, window_bounds = array<i64: 2, 3584>}, {pipeline_mode = #tpu.pipeline_mode<synchronous>, transform_indices = @transform_1, window_bounds = array<i64: 3584, 128>}, {pipeline_mode = #tpu.pipeline_mode<synchronous>, transform_indices = @transform_2, window_bounds = array<i64: 1, 128>}, {transform_indices = @transform_3, window_bounds = array<i64: 2, 128>}]} {
    %c0 = arith.constant 0 : index
    %c0_0 = arith.constant 0 : index
    %0 = vector.load %arg1[%c0, %c0_0] : memref<2x3584xf32, #tpu.memory_space<vmem>>, vector<2x3584xf32>
    %c0_1 = arith.constant 0 : index
    %c0_2 = arith.constant 0 : index
    %1 = vector.load %arg2[%c0_1, %c0_2] : memref<3584x128xf32, #tpu.memory_space<vmem>>, vector<3584x128xf32>
    %cst = arith.constant dense<0.000000e+00> : vector<2x128xf32>
    %2 = tpu.matmul %0, %1, %cst {dimension_numbers = #tpu.dot_dimension_numbers<[1], [0], [0], [1], [0, 0, 1, 1], [], []>} : vector<2x3584xf32>, vector<3584x128xf32>, vector<2x128xf32> -> vector<2x128xf32>
    %c0_3 = arith.constant 0 : index
    %c0_4 = arith.constant 0 : index
    %3 = vector.load %arg3[%c0_3, %c0_4] : memref<1x128xf32, #tpu.memory_space<vmem>>, vector<1x128xf32>
    %4 = vector.broadcast %3 : vector<1x128xf32> to vector<2x128xf32>
    %5 = arith.addf %2, %4 : vector<2x128xf32>
    %cst_5 = arith.constant 0.000000e+00 : f32
    %6 = vector.broadcast %cst_5 : f32 to vector<2x128xf32>
    %7 = arith.maximumf %5, %6 : vector<2x128xf32>
    %c0_6 = arith.constant 0 : index
    %c0_7 = arith.constant 0 : index
    %8 = vector.load %arg4[%c0_6, %c0_7] : memref<2x128xf32, #tpu.memory_space<vmem>>, vector<2x128xf32>
    tpu.vector_store %arg4[%c0_6, %c0_7], %7 {strides = array<i32>} : memref<2x128xf32, #tpu.memory_space<vmem>>, vector<2x128xf32>,
    return
  }
  func.func @transform_0(%arg0: i32) -> (i32, i32) {
    %c0_i32 = arith.constant 0 : i32
    %c0_i32_0 = arith.constant 0 : i32
    return %arg0, %c0_i32 : i32, i32
  }
  func.func @transform_1(%arg0: i32) -> (i32, i32) {
    %c0_i32 = arith.constant 0 : i32
    %c0_i32_0 = arith.constant 0 : i32
    %c0_i32_1 = arith.constant 0 : i32
    return %c0_i32, %c0_i32_0 : i32, i32
  }
  func.func @transform_2(%arg0: i32) -> (i32, i32) {
    %c0_i32 = arith.constant 0 : i32
    %c0_i32_0 = arith.constant 0 : i32
    %c0_i32_1 = arith.constant 0 : i32
    return %c0_i32, %c0_i32_0 : i32, i32
  }
  func.func @transform_3(%arg0: i32) -> (i32, i32) {
    %c0_i32 = arith.constant 0 : i32
    %c0_i32_0 = arith.constant 0 : i32
    return %arg0, %c0_i32 : i32, i32
  }
}

module attributes {stable_mosaic.version = 11 : i64} {
  func.func @_linear_kernel(%arg0: i32, %arg1: memref<2x128xf32, #tpu.memory_space<vmem>>, %arg2: memref<128x10xf32, #tpu.memory_space<vmem>>, %arg3: memref<1x10xf32, #tpu.memory_space<vmem>>, %arg4: memref<2x10xf32, #tpu.memory_space<vmem>>) attributes {dimension_semantics = [#tpu.dimension_semantics<parallel>], iteration_bounds = array<i64: 1>, scalar_prefetch = 0 : i64, scratch_operands = 0 : i64, tpu.core_type = #tpu.core_type<tc>, window_params = [{transform_indices = @transform_0, window_bounds = array<i64: 2, 128>}, {pipeline_mode = #tpu.pipeline_mode<synchronous>, transform_indices = @transform_1, window_bounds = array<i64: 128, 10>}, {pipeline_mode = #tpu.pipeline_mode<synchronous>, transform_indices = @transform_2, window_bounds = array<i64: 1, 10>}, {transform_indices = @transform_3, window_bounds = array<i64: 2, 10>}]} {
    %c0 = arith.constant 0 : index
    %c0_0 = arith.constant 0 : index
    %0 = vector.load %arg1[%c0, %c0_0] : memref<2x128xf32, #tpu.memory_space<vmem>>, vector<2x128xf32>
    %c0_1 = arith.constant 0 : index
    %c0_2 = arith.constant 0 : index
    %1 = vector.load %arg2[%c0_1, %c0_2] : memref<128x10xf32, #tpu.memory_space<vmem>>, vector<128x10xf32>
    %cst = arith.constant dense<0.000000e+00> : vector<2x10xf32>
    %2 = tpu.matmul %0, %1, %cst {dimension_numbers = #tpu.dot_dimension_numbers<[1], [0], [0], [1], [0, 0, 1, 1], [], []>} : vector<2x128xf32>, vector<128x10xf32>, vector<2x10xf32> -> vector<2x10xf32>
    %c0_3 = arith.constant 0 : index
    %c0_4 = arith.constant 0 : index
    %3 = vector.load %arg3[%c0_3, %c0_4] : memref<1x10xf32, #tpu.memory_space<vmem>>, vector<1x10xf32>
    %4 = vector.broadcast %3 : vector<1x10xf32> to vector<2x10xf32>
    %5 = arith.addf %2, %4 : vector<2x10xf32>
    %c0_5 = arith.constant 0 : index
    %c0_6 = arith.constant 0 : index
    %6 = vector.load %arg4[%c0_5, %c0_6] : memref<2x10xf32, #tpu.memory_space<vmem>>, vector<2x10xf32>
    tpu.vector_store %arg4[%c0_5, %c0_6], %5 {strides = array<i32>} : memref<2x10xf32, #tpu.memory_space<vmem>>, vector<2x10xf32>,
    return
  }
  func.func @transform_0(%arg0: i32) -> (i32, i32) {
    %c0_i32 = arith.constant 0 : i32
    %c0_i32_0 = arith.constant 0 : i32
    return %arg0, %c0_i32 : i32, i32
  }
  func.func @transform_1(%arg0: i32) -> (i32, i32) {
    %c0_i32 = arith.constant 0 : i32
    %c0_i32_0 = arith.constant 0 : i32
    %c0_i32_1 = arith.constant 0 : i32
    return %c0_i32, %c0_i32_0 : i32, i32
  }
  func.func @transform_2(%arg0: i32) -> (i32, i32) {
    %c0_i32 = arith.constant 0 : i32
    %c0_i32_0 = arith.constant 0 : i32
    %c0_i32_1 = arith.constant 0 : i32
    return %c0_i32, %c0_i32_0 : i32, i32
  }
  func.func @transform_3(%arg0: i32) -> (i32, i32) {
    %c0_i32 = arith.constant 0 : i32
    %c0_i32_0 = arith.constant 0 : i32
    return %arg0, %c0_i32 : i32, i32
  }
}

</mosaic_0001>

<llo_original>
// kernel: simple_cnn_forward.7
$region0: #{simple_cnn_forward.7}
  #allocation0 [shape = 'u32[]', space=smem, size = 0x4, offset = 0x4, fixed_abs, tag = 'smem constant byte address 0x4 - core index']
  #allocation1 [shape = 'u32[72,128]{1,0:T(1,128)}', space=vmem, size = 0x9000, scoped, tag = 'internal scratch']
  %s0 = inlined_call_operand.vmem [shape: f32[2,128], index: 0, kind: input, shape index: {}]
  %s1 = inlined_call_operand.vmem [shape: f32[128,10], index: 1, kind: input, shape index: {}]
  %s2 = inlined_call_operand.vmem [shape: f32[1,10], index: 2, kind: input, shape index: {}]
  %s3 = inlined_call_operand.hbm [shape: f32[2,10], index: 3, kind: output, shape index: {}]
  %s4 = sld [smem:[#allocation0]]
  $region22: #{simple_cnn_forward.7} parent=0
    _
  %s6 = ssub.s32 1, %s4
  %s7 = scalar_select 0, %s6, %s4
  $region1: #{simple_cnn_forward.7} parent=0
    #allocation2 [shape = 'u8[1024]{0}', space=vmem, size = 0x400, scoped, tag = 'output window, operand 0, single buffered']
    #allocation3 [shape = 's32[1]{0}', space=sflag, size = 0x4, scoped, tag = 'scoped memory for simple_cnn_forward.7']
    %8 = vsyncpa [#allocation3], 0
    // Predicated region
    $region2: #{simple_cnn_forward.7} parent=1 // pred_check
      _
    $region3: #{simple_cnn_forward.7} parent=1 // pred_check_branch
      %10 = sbr.rel (0) target = $region5
    $region4: #{simple_cnn_forward.7} parent=1 // pred_region
      _
    $region5: #{simple_cnn_forward.7} parent=1 // pred_fallthru
      _
    // Predicated region
    $region6: #{simple_cnn_forward.7} parent=1 // pred_check
      _
    $region7: #{simple_cnn_forward.7} parent=1 // pred_check_branch
      %12 = sbr.rel (0) target = $region9
    $region8: #{simple_cnn_forward.7} parent=1 // pred_region
      _
    $region9: #{simple_cnn_forward.7} parent=1 // pred_fallthru
      _
    // Predicated region
    $region10: #{simple_cnn_forward.7} parent=1 // pred_check
      _
    $region11: #{simple_cnn_forward.7} parent=1 // pred_check_branch
      %14 = sbr.rel (0) target = $region13
    $region12: #{simple_cnn_forward.7} parent=1 // pred_region
      _
    $region13: #{simple_cnn_forward.7} parent=1 // pred_fallthru
      _
    %v15 = vld [vmem:[%s0] sm:$0x3]
    %v16 = vld [vmem:[%s1] sm:$0xff]
    %v17 = vld [vmem:[%s1 + $0x8] sm:$0xff]
    %v18 = vld [vmem:[%s1 + $0x10] sm:$0xff]
    %v19 = vld [vmem:[%s1 + $0x18] sm:$0xff]
    %v20 = vld [vmem:[%s1 + $0x20] sm:$0xff]
    %v21 = vld [vmem:[%s1 + $0x28] sm:$0xff]
    %v22 = vld [vmem:[%s1 + $0x30] sm:$0xff]
    %v23 = vld [vmem:[%s1 + $0x38] sm:$0xff]
    %v24 = vld [vmem:[%s1 + $0x40] sm:$0xff]
    %v25 = vld [vmem:[%s1 + $0x48] sm:$0xff]
    %v26 = vld [vmem:[%s1 + $0x50] sm:$0xff]
    %v27 = vld [vmem:[%s1 + $0x58] sm:$0xff]
    %v28 = vld [vmem:[%s1 + $0x60] sm:$0xff]
    %v29 = vld [vmem:[%s1 + $0x68] sm:$0xff]
    %v30 = vld [vmem:[%s1 + $0x70] sm:$0xff]
    %v31 = vld [vmem:[%s1 + $0x78] sm:$0xff]
    %v32 = vld [vmem:[%s2] sm:$0x1]
    %v34 = vperm.slane %v32, 0
    %36 = vmatpush.msra.mxu0 %v31
    %37 = vmatpush.msra.mxu0 %v30
    %38 = vmatpush.msra.mxu0 %v29
    %39 = vmatpush.msra.mxu0 %v28
    %40 = vmatpush.msra.mxu0 %v27
    %41 = vmatpush.msra.mxu0 %v26
    %42 = vmatpush.msra.mxu0 %v25
    %43 = vmatpush.msra.mxu0 %v24
    %44 = vmatpush.msra.mxu0 %v23
    %45 = vmatpush.msra.mxu0 %v22
    %46 = vmatpush.msra.mxu0 %v21
    %47 = vmatpush.msra.mxu0 %v20
    %48 = vmatpush.msra.mxu0 %v19
    %49 = vmatpush.msra.mxu0 %v18
    %50 = vmatpush.msra.mxu0 %v17
    %51 = vmatpush.msra.mxu0 %v16
    %52 = vmatmul.f32.gmra.mxu0 %v15
    %v53 = vpop.f32.mrf.mxu0
    %v54 = vadd.f32 %v34, %v53
    %55 = vdwg.mxu0
    %vm56 = vcmask 74752
    %57 = vst.msk [vmem:[#allocation2] sm:$0x3] %vm56, %v54
    // Predicated region
    $region14: #{simple_cnn_forward.7} parent=1 // pred_check
      _
    $region15: #{simple_cnn_forward.7} parent=1 // pred_check_branch
      %59 = sbr.rel (0) target = $region17
    $region16: #{simple_cnn_forward.7} parent=1 // pred_region
      %61 = vsyncadd [#allocation3], 0
      %s63 = sshll.u32 [#allocation2], 4
      %s64 = int_to_ptr.vmem [resolvable:$true] %s63
      %s65 = sshll.u32 %s3, 4
      %s66 = int_to_ptr.hbm [resolvable:$true] %s65
      %68 = dma.vmem_to_hbm [thread:$0]  %s64, 32, %s66, [#allocation3]
    $region17: #{simple_cnn_forward.7} parent=1 // pred_fallthru
      _
    // Predicated region
    $region18: #{simple_cnn_forward.7} parent=1 // pred_check
      _
    $region19: #{simple_cnn_forward.7} parent=1 // pred_check_branch
      %70 = sbr.rel (0) target = $region21
    $region20: #{simple_cnn_forward.7} parent=1 // pred_region
      %72 = dma.done [#allocation3], 32
    $region21: #{simple_cnn_forward.7} parent=1 // pred_fallthru
      _
    %73 = vsyncpa [#allocation3], 1

// kernel: simple_cnn_forward.5
$region0: #{simple_cnn_forward.5}
  #allocation0 [shape = 'u32[]', space=smem, size = 0x4, offset = 0x4, fixed_abs, tag = 'smem constant byte address 0x4 - core index']
  #allocation1 [shape = 'u32[72,128]{1,0:T(1,128)}', space=vmem, size = 0x9000, scoped, tag = 'internal scratch']
  %s0 = inlined_call_operand.vmem [shape: f32[2,4,72,32], index: 0, kind: input, shape index: {}]
  %s1 = inlined_call_operand.vmem [shape: f32[9,32,64], index: 1, kind: input, shape index: {}]
  %s2 = inlined_call_operand.vmem [shape: f32[1,64], index: 2, kind: input, shape index: {}]
  %s3 = inlined_call_operand.vmem [shape: f32[2,56,64], index: 3, kind: output, shape index: {}]
  %s4 = sld [smem:[#allocation0]]
  $region45: #{simple_cnn_forward.5} parent=0
    _
  %s6 = ssub.s32 1, %s4
  %s7 = scalar_select 0, %s6, %s4
  loop: start=0, step=1, limit=4
  $region2: #{simple_cnn_forward.5} parent=0 // loop_pre_header
    _
  $region3: #{simple_cnn_forward.5} parent=0 // loop_header
    %s9 = sphi 0, %s13
    %p10 = scmp.ge.s32.totalorder %s9, 4
    %s19 = sphi 0, %s21
    %s22 = sphi 0, %s19
    %s23 = sphi 0, %s22
    %s39 = sphi 0, %s23
    %s43 = sphi 0, %s43
    %s45 = sphi 0, %s43
    %s46 = sphi 0, %s45
    %s60 = sphi 0, %s46
    %s64 = sphi 0, %s64
    %s66 = sphi 0, %s64
    %s67 = sphi 0, %s66
    %s81 = sphi 0, %s67
    %s87 = sphi 0, %s89
    %s90 = sphi 0, %s87
    %s91 = sphi 0, %s90
    %s107 = sphi 0, %s91
  $region4: #{simple_cnn_forward.5} parent=0 // loop_header_branch
    %12 = sbr.rel (%p10) target = $region8
  $region5: #{simple_cnn_forward.5} parent=0 // loop_body
    %s14 = ssub.s32 %s9, 1
    %s15 = ssub.s32 %s9, 2
    %s16 = sadd.s32 %s9, 1
    %s17 = ssub.s32 %s9, %s16
    %p18 = scmp.eq.s32.totalorder %s17, 0
    %s20 = sadd.s32 %s19, 1
    %s21 = scalar_select %p18, %s19, %s20
    %p24 = pneg %p18
    %p25 = scmp.eq.s32.totalorder %s9, 1
    %p26 = por %p24, %p25
    %p27 = scmp.ne.s32.totalorder %s19, %s22
    %p28 = scmp.eq.s32.totalorder %s9, 0
    %p29 = por %p27, %p28
    %p30 = scmp.ne.s32.totalorder %s19, %s22
    %p31 = scmp.eq.s32.totalorder %s14, 1
    %p32 = por %p30, %p31
    %p33 = scmp.ne.s32.totalorder %s22, %s23
    %p34 = scmp.eq.s32.totalorder %s14, 0
    %p35 = por %p33, %p34
    %p36 = scmp.ne.s32.totalorder %s22, %s23
    %p37 = scmp.eq.s32.totalorder %s15, 1
    %p38 = por %p36, %p37
    %p40 = scmp.ne.s32.totalorder %s23, %s39
    %p41 = scmp.eq.s32.totalorder %s15, 0
    %p42 = por %p40, %p41
    %s44 = sadd.s32 %s43, 1
    %p47 = scmp.eq.s32.totalorder %s9, 1
    %p48 = scmp.ne.s32.totalorder %s43, %s45
    %p49 = scmp.eq.s32.totalorder %s9, 0
    %p50 = por %p48, %p49
    %p51 = scmp.ne.s32.totalorder %s43, %s45
    %p52 = scmp.eq.s32.totalorder %s14, 1
    %p53 = por %p51, %p52
    %p54 = scmp.ne.s32.totalorder %s45, %s46
    %p55 = scmp.eq.s32.totalorder %s14, 0
    %p56 = por %p54, %p55
    %p57 = scmp.ne.s32.totalorder %s45, %s46
    %p58 = scmp.eq.s32.totalorder %s15, 1
    %p59 = por %p57, %p58
    %p61 = scmp.ne.s32.totalorder %s46, %s60
    %p62 = scmp.eq.s32.totalorder %s15, 0
    %p63 = por %p61, %p62
    %s65 = sadd.s32 %s64, 1
    %p68 = scmp.eq.s32.totalorder %s9, 1
    %p69 = scmp.ne.s32.totalorder %s64, %s66
    %p70 = scmp.eq.s32.totalorder %s9, 0
    %p71 = por %p69, %p70
    %p72 = scmp.ne.s32.totalorder %s64, %s66
    %p73 = scmp.eq.s32.totalorder %s14, 1
    %p74 = por %p72, %p73
    %p75 = scmp.ne.s32.totalorder %s66, %s67
    %p76 = scmp.eq.s32.totalorder %s14, 0
    %p77 = por %p75, %p76
    %p78 = scmp.ne.s32.totalorder %s66, %s67
    %p79 = scmp.eq.s32.totalorder %s15, 1
    %p80 = por %p78, %p79
    %p82 = scmp.ne.s32.totalorder %s67, %s81
    %p83 = scmp.eq.s32.totalorder %s15, 0
    %p84 = por %p82, %p83
    %s85 = ssub.s32 %s9, %s16
    %p86 = scmp.eq.s32.totalorder %s85, 0
    %s88 = sadd.s32 %s87, 1
    %s89 = scalar_select %p86, %s87, %s88
    %p92 = pneg %p86
    %p93 = scmp.eq.s32.totalorder %s9, 1
    %p94 = por %p92, %p93
    %p95 = scmp.ne.s32.totalorder %s87, %s90
    %p96 = scmp.eq.s32.totalorder %s9, 0
    %p97 = por %p95, %p96
    %p98 = scmp.ne.s32.totalorder %s87, %s90
    %p99 = scmp.eq.s32.totalorder %s14, 1
    %p100 = por %p98, %p99
    %p101 = scmp.ne.s32.totalorder %s90, %s91
    %p102 = scmp.eq.s32.totalorder %s14, 0
    %p103 = por %p101, %p102
    %p104 = scmp.ne.s32.totalorder %s90, %s91
    %p105 = scmp.eq.s32.totalorder %s15, 1
    %p106 = por %p104, %p105
    %p108 = scmp.ne.s32.totalorder %s91, %s107
    %p109 = scmp.eq.s32.totalorder %s15, 0
    %p110 = por %p108, %p109
    %p111 = scmp.le.s32.totalorder 1, %s9
    %p112 = scmp.lt.s32.totalorder %s9, 3
    %p113 = pnand %p111, %p112
    %p114 = pneg %p113
    // Predicated region
    $region9: #{simple_cnn_forward.5} parent=5 // pred_check
      _
    $region10: #{simple_cnn_forward.5} parent=5 // pred_check_branch
      %116 = sbr.rel (%p113) target = $region12
    $region11: #{simple_cnn_forward.5} parent=5 // pred_region
      %s117 = ssub.s32 %s9, 1
      // Predicated region
      $region13: #{simple_cnn_forward.5} parent=11 // pred_check
        %p118 = pneg %p56
      $region14: #{simple_cnn_forward.5} parent=11 // pred_check_branch
        %120 = sbr.rel (%p118) target = $region16
      $region15: #{simple_cnn_forward.5} parent=11 // pred_region
        _
      $region16: #{simple_cnn_forward.5} parent=11 // pred_fallthru
        _
      // Predicated region
      $region17: #{simple_cnn_forward.5} parent=11 // pred_check
        %p121 = pneg %p77
      $region18: #{simple_cnn_forward.5} parent=11 // pred_check_branch
        %123 = sbr.rel (%p121) target = $region20
      $region19: #{simple_cnn_forward.5} parent=11 // pred_region
        _
      $region20: #{simple_cnn_forward.5} parent=11 // pred_fallthru
        _
    $region12: #{simple_cnn_forward.5} parent=5 // pred_fallthru
      _
    %p124 = scmp.lt.s32.totalorder %s9, 2
    // Predicated region
    $region21: #{simple_cnn_forward.5} parent=5 // pred_check
      %p125 = pneg %p124
    $region22: #{simple_cnn_forward.5} parent=5 // pred_check_branch
      %127 = sbr.rel (%p125) target = $region24
    $region23: #{simple_cnn_forward.5} parent=5 // pred_region
      // Predicated region
      $region25: #{simple_cnn_forward.5} parent=23 // pred_check
        %p128 = pneg %p29
      $region26: #{simple_cnn_forward.5} parent=23 // pred_check_branch
        %130 = sbr.rel (%p128) target = $region28
      $region27: #{simple_cnn_forward.5} parent=23 // pred_region
        %p131 = scmp.lt.s32.totalorder %s9, 1
        %s132 = scalar_select %p131, %s9, 1
        %s133 = smul.addr %s132, 36
        %s134 = smul.addr %s133, 8
        %s135 = scalar_lea.vmem %s0, %s134
      $region28: #{simple_cnn_forward.5} parent=23 // pred_fallthru
        _
    $region24: #{simple_cnn_forward.5} parent=5 // pred_fallthru
      _
    %p136 = scmp.le.s32.totalorder 1, %s9
    %p137 = scmp.lt.s32.totalorder %s9, 3
    %p138 = pnand %p136, %p137
    %p139 = pneg %p138
    // Predicated region
    $region29: #{simple_cnn_forward.5} parent=5 // pred_check
      _
    $region30: #{simple_cnn_forward.5} parent=5 // pred_check_branch
      %141 = sbr.rel (%p138) target = $region32
    $region31: #{simple_cnn_forward.5} parent=5 // pred_region
      %s142 = ssub.s32 %s9, 1
      %p143 = scmp.lt.s32.totalorder %s14, 1
      %s144 = scalar_select %p143, %s14, 1
      %s145 = smul.addr %s144, 36
      %s146 = smul.addr %s145, 8
      %s147 = scalar_lea.vmem %s0, %s146
      %p148 = pneg %p35
      %p149 = pneg %p32
      %p150 = pneg %p56
      %p151 = pneg %p53
      %p152 = pneg %p77
      %p153 = pneg %p74
      %p154 = pneg %p103
      %p155 = pneg %p100
      %p156 = scmp.lt.s32.totalorder %s14, 1
      %s157 = scalar_select %p156, %s14, 1
      %s158 = smul.addr %s157, 7
      %s159 = smul.addr %s158, 8
      %s160 = scalar_lea.vmem %s3, %s159
      %p161 = scmp.lt.s32.totalorder %s14, 1
      %s162 = scalar_select %p161, %s14, 1
      %s163 = smul.addr %s162, 36
      %s164 = smul.addr %s163, 8
      %s165 = scalar_lea.vmem %s0, %s164
      %p166 = scmp.lt.s32.totalorder %s14, 1
      %s167 = scalar_select %p166, %s14, 1
      %s168 = smul.addr %s167, 7
      %s169 = smul.addr %s168, 8
      %s170 = scalar_lea.vmem %s3, %s169
      %v171 = vld [vmem:[%s165] sm:$0xff]
      %v172 = vld [vmem:[%s165 + $0x8] sm:$0xff]
      %v173 = vld [vmem:[%s165 + $0x10] sm:$0xff]
      %v174 = vld [vmem:[%s165 + $0x18] sm:$0xff]
      %v175 = vld [vmem:[%s165 + $0x20] sm:$0xff]
      %v176 = vld [vmem:[%s165 + $0x28] sm:$0xff]
      %v177 = vld [vmem:[%s165 + $0x30] sm:$0xff]
      %v178 = vld [vmem:[%s1] sm:$0xff]
      %v179 = vld [vmem:[%s1 + $0x8] sm:$0xff]
      %v180 = vld [vmem:[%s1 + $0x10] sm:$0xff]
      %v181 = vld [vmem:[%s1 + $0x18] sm:$0xff]
      %s182 = scalar_lea.vmem %s165, 72
      %v183 = vld [vmem:[%s182] sm:$0xff]
      %v184 = vld [vmem:[%s182 + $0x8] sm:$0xff]
      %v185 = vld [vmem:[%s182 + $0x10] sm:$0xff]
      %v186 = vld [vmem:[%s182 + $0x18] sm:$0xff]
      %v187 = vld [vmem:[%s182 + $0x20] sm:$0xff]
      %v188 = vld [vmem:[%s182 + $0x28] sm:$0xff]
      %v189 = vld [vmem:[%s182 + $0x30] sm:$0xff]
      %s190 = scalar_lea.vmem %s1, 32
      %v191 = vld [vmem:[%s190] sm:$0xff]
      %v192 = vld [vmem:[%s190 + $0x8] sm:$0xff]
      %v193 = vld [vmem:[%s190 + $0x10] sm:$0xff]
      %v194 = vld [vmem:[%s190 + $0x18] sm:$0xff]
      %vm195 = vcmask 261120
      %v197 = vsel %vm195, %v183, 0
      %v200 = vsel %vm195, %v184, 0
      %v203 = vsel %vm195, %v185, 0
      %v206 = vsel %vm195, %v186, 0
      %v209 = vsel %vm195, %v187, 0
      %v212 = vsel %vm195, %v188, 0
      %v215 = vsel %vm195, %v189, 0
      %217 = vmatpush.msra.mxu0 0.0
      %218 = vmatpush.msra.mxu0 0.0
      %219 = vmatpush.msra.mxu0 0.0
      %220 = vmatpush.msra.mxu0 0.0
      %221 = vmatpush.msra.mxu0 0.0
      %222 = vmatpush.msra.mxu0 0.0
      %223 = vmatpush.msra.mxu0 0.0
      %224 = vmatpush.msra.mxu0 0.0
      %225 = vmatpush.msra.mxu0 0.0
      %226 = vmatpush.msra.mxu0 0.0
      %227 = vmatpush.msra.mxu0 0.0
      %228 = vmatpush.msra.mxu0 0.0
      %229 = vmatpush.msra.mxu0 %v194
      %230 = vmatpush.msra.mxu0 %v193
      %231 = vmatpush.msra.mxu0 %v192
      %232 = vmatpush.msra.mxu0 %v191
      %233 = vmatmul.f32.gmra.mxu0 %v197
      %v234 = vpop.f32.mrf.mxu0
      %v235 = vadd.f32 0.0, %v234
      %236 = vmatmul.f32.gmra.mxu0 %v200
      %v237 = vpop.f32.mrf.mxu0
      %v238 = vadd.f32 0.0, %v237
      %239 = vmatmul.f32.gmra.mxu0 %v203
      %v240 = vpop.f32.mrf.mxu0
      %v241 = vadd.f32 0.0, %v240
      %242 = vmatmul.f32.gmra.mxu0 %v206
      %v243 = vpop.f32.mrf.mxu0
      %v244 = vadd.f32 0.0, %v243
      %245 = vmatmul.f32.gmra.mxu0 %v209
      %v246 = vpop.f32.mrf.mxu0
      %v247 = vadd.f32 0.0, %v246
      %248 = vmatmul.f32.gmra.mxu0 %v212
      %v249 = vpop.f32.mrf.mxu0
      %v250 = vadd.f32 0.0, %v249
      %251 = vmatmul.f32.gmra.mxu0 %v215
      %v252 = vpop.f32.mrf.mxu0
      %v253 = vadd.f32 0.0, %v252
      %254 = vdwg.mxu0
      %v256 = vsel %vm195, %v171, 0
      %v259 = vsel %vm195, %v172, 0
      %v262 = vsel %vm195, %v173, 0
      %v265 = vsel %vm195, %v174, 0
      %v268 = vsel %vm195, %v175, 0
      %v271 = vsel %vm195, %v176, 0
      %v274 = vsel %vm195, %v177, 0
      %276 = vmatpush.msra.mxu0 0.0
      %277 = vmatpush.msra.mxu0 0.0
      %278 = vmatpush.msra.mxu0 0.0
      %279 = vmatpush.msra.mxu0 0.0
      %280 = vmatpush.msra.mxu0 0.0
      %281 = vmatpush.msra.mxu0 0.0
      %282 = vmatpush.msra.mxu0 0.0
      %283 = vmatpush.msra.mxu0 0.0
      %284 = vmatpush.msra.mxu0 0.0
      %285 = vmatpush.msra.mxu0 0.0
      %286 = vmatpush.msra.mxu0 0.0
      %287 = vmatpush.msra.mxu0 0.0
      %288 = vmatpush.msra.mxu0 %v181
      %289 = vmatpush.msra.mxu0 %v180
      %290 = vmatpush.msra.mxu0 %v179
      %291 = vmatpush.msra.mxu0 %v178
      %292 = vmatmul.f32.gmra.mxu0 %v256
      %v293 = vpop.f32.mrf.mxu0
      %v294 = vadd.f32 %v235, %v293
      %295 = vmatmul.f32.gmra.mxu0 %v259
      %v296 = vpop.f32.mrf.mxu0
      %v297 = vadd.f32 %v238, %v296
      %298 = vmatmul.f32.gmra.mxu0 %v262
      %v299 = vpop.f32.mrf.mxu0
      %v300 = vadd.f32 %v241, %v299
      %301 = vmatmul.f32.gmra.mxu0 %v265
      %v302 = vpop.f32.mrf.mxu0
      %v303 = vadd.f32 %v244, %v302
      %304 = vmatmul.f32.gmra.mxu0 %v268
      %v305 = vpop.f32.mrf.mxu0
      %v306 = vadd.f32 %v247, %v305
      %307 = vmatmul.f32.gmra.mxu0 %v271
      %v308 = vpop.f32.mrf.mxu0
      %v309 = vadd.f32 %v250, %v308
      %310 = vmatmul.f32.gmra.mxu0 %v274
      %v311 = vpop.f32.mrf.mxu0
      %v312 = vadd.f32 %v253, %v311
      %313 = vdwg.mxu0
      %v314 = vld [vmem:[%s165 + $0x1] sm:$0xff]
      %v315 = vld [vmem:[%s165 + $0x9] sm:$0xff]
      %v316 = vld [vmem:[%s165 + $0x11] sm:$0xff]
      %v317 = vld [vmem:[%s165 + $0x19] sm:$0xff]
      %v318 = vld [vmem:[%s165 + $0x21] sm:$0xff]
      %v319 = vld [vmem:[%s165 + $0x29] sm:$0xff]
      %v320 = vld [vmem:[%s165 + $0x31] sm:$0xff]
      %s321 = scalar_lea.vmem %s1, 64
      %v322 = vld [vmem:[%s321] sm:$0xff]
      %v323 = vld [vmem:[%s321 + $0x8] sm:$0xff]
      %v324 = vld [vmem:[%s321 + $0x10] sm:$0xff]
      %v325 = vld [vmem:[%s321 + $0x18] sm:$0xff]
      %v327 = vsel %vm195, %v314, 0
      %v330 = vsel %vm195, %v315, 0
      %v333 = vsel %vm195, %v316, 0
      %v336 = vsel %vm195, %v317, 0
      %v339 = vsel %vm195, %v318, 0
      %v342 = vsel %vm195, %v319, 0
      %v345 = vsel %vm195, %v320, 0
      %347 = vmatpush.msra.mxu0 0.0
      %348 = vmatpush.msra.mxu0 0.0
      %349 = vmatpush.msra.mxu0 0.0
      %350 = vmatpush.msra.mxu0 0.0
      %351 = vmatpush.msra.mxu0 0.0
      %352 = vmatpush.msra.mxu0 0.0
      %353 = vmatpush.msra.mxu0 0.0
      %354 = vmatpush.msra.mxu0 0.0
      %355 = vmatpush.msra.mxu0 0.0
      %356 = vmatpush.msra.mxu0 0.0
      %357 = vmatpush.msra.mxu0 0.0
      %358 = vmatpush.msra.mxu0 0.0
      %359 = vmatpush.msra.mxu0 %v325
      %360 = vmatpush.msra.mxu0 %v324
      %361 = vmatpush.msra.mxu0 %v323
      %362 = vmatpush.msra.mxu0 %v322
      %363 = vmatmul.f32.gmra.mxu0 %v327
      %v364 = vpop.f32.mrf.mxu0
      %v365 = vadd.f32 0.0, %v364
      %366 = vmatmul.f32.gmra.mxu0 %v330
      %v367 = vpop.f32.mrf.mxu0
      %v368 = vadd.f32 0.0, %v367
      %369 = vmatmul.f32.gmra.mxu0 %v333
      %v370 = vpop.f32.mrf.mxu0
      %v371 = vadd.f32 0.0, %v370
      %372 = vmatmul.f32.gmra.mxu0 %v336
      %v373 = vpop.f32.mrf.mxu0
      %v374 = vadd.f32 0.0, %v373
      %375 = vmatmul.f32.gmra.mxu0 %v339
      %v376 = vpop.f32.mrf.mxu0
      %v377 = vadd.f32 0.0, %v376
      %378 = vmatmul.f32.gmra.mxu0 %v342
      %v379 = vpop.f32.mrf.mxu0
      %v380 = vadd.f32 0.0, %v379
      %381 = vmatmul.f32.gmra.mxu0 %v345
      %v382 = vpop.f32.mrf.mxu0
      %v383 = vadd.f32 0.0, %v382
      %384 = vdwg.mxu0
      %v385 = vadd.f32 %v294, %v365
      %v386 = vadd.f32 %v297, %v368
      %v387 = vadd.f32 %v300, %v371
      %v388 = vadd.f32 %v303, %v374
      %v389 = vadd.f32 %v306, %v377
      %v390 = vadd.f32 %v309, %v380
      %v391 = vadd.f32 %v312, %v383
      %s392 = scalar_lea.vmem %s165, 144
      %v393 = vld [vmem:[%s392] sm:$0xff]
      %v394 = vld [vmem:[%s392 + $0x8] sm:$0xff]
      %v395 = vld [vmem:[%s392 + $0x10] sm:$0xff]
      %v396 = vld [vmem:[%s392 + $0x18] sm:$0xff]
      %v397 = vld [vmem:[%s392 + $0x20] sm:$0xff]
      %v398 = vld [vmem:[%s392 + $0x28] sm:$0xff]
      %v399 = vld [vmem:[%s392 + $0x30] sm:$0xff]
      %s400 = scalar_lea.vmem %s1, 96
      %v401 = vld [vmem:[%s400] sm:$0xff]
      %v402 = vld [vmem:[%s400 + $0x8] sm:$0xff]
      %v403 = vld [vmem:[%s400 + $0x10] sm:$0xff]
      %v404 = vld [vmem:[%s400 + $0x18] sm:$0xff]
      %v406 = vsel %vm195, %v393, 0
      %v409 = vsel %vm195, %v394, 0
      %v412 = vsel %vm195, %v395, 0
      %v415 = vsel %vm195, %v396, 0
      %v418 = vsel %vm195, %v397, 0
      %v421 = vsel %vm195, %v398, 0
      %v424 = vsel %vm195, %v399, 0
      %426 = vmatpush.msra.mxu0 0.0
      %427 = vmatpush.msra.mxu0 0.0
      %428 = vmatpush.msra.mxu0 0.0
      %429 = vmatpush.msra.mxu0 0.0
      %430 = vmatpush.msra.mxu0 0.0
      %431 = vmatpush.msra.mxu0 0.0
      %432 = vmatpush.msra.mxu0 0.0
      %433 = vmatpush.msra.mxu0 0.0
      %434 = vmatpush.msra.mxu0 0.0
      %435 = vmatpush.msra.mxu0 0.0
      %436 = vmatpush.msra.mxu0 0.0
      %437 = vmatpush.msra.mxu0 0.0
      %438 = vmatpush.msra.mxu0 %v404
      %439 = vmatpush.msra.mxu0 %v403
      %440 = vmatpush.msra.mxu0 %v402
      %441 = vmatpush.msra.mxu0 %v401
      %442 = vmatmul.f32.gmra.mxu0 %v406
      %v443 = vpop.f32.mrf.mxu0
      %v444 = vadd.f32 0.0, %v443
      %445 = vmatmul.f32.gmra.mxu0 %v409
      %v446 = vpop.f32.mrf.mxu0
      %v447 = vadd.f32 0.0, %v446
      %448 = vmatmul.f32.gmra.mxu0 %v412
      %v449 = vpop.f32.mrf.mxu0
      %v450 = vadd.f32 0.0, %v449
      %451 = vmatmul.f32.gmra.mxu0 %v415
      %v452 = vpop.f32.mrf.mxu0
      %v453 = vadd.f32 0.0, %v452
      %454 = vmatmul.f32.gmra.mxu0 %v418
      %v455 = vpop.f32.mrf.mxu0
      %v456 = vadd.f32 0.0, %v455
      %457 = vmatmul.f32.gmra.mxu0 %v421
      %v458 = vpop.f32.mrf.mxu0
      %v459 = vadd.f32 0.0, %v458
      %460 = vmatmul.f32.gmra.mxu0 %v424
      %v461 = vpop.f32.mrf.mxu0
      %v462 = vadd.f32 0.0, %v461
      %463 = vdwg.mxu0
      %v464 = vadd.f32 %v385, %v444
      %v465 = vadd.f32 %v386, %v447
      %v466 = vadd.f32 %v387, %v450
      %v467 = vadd.f32 %v388, %v453
      %v468 = vadd.f32 %v389, %v456
      %v469 = vadd.f32 %v390, %v459
      %v470 = vadd.f32 %v391, %v462
      %s471 = scalar_lea.vmem %s165, 216
      %v472 = vld [vmem:[%s471] sm:$0xff]
      %v473 = vld [vmem:[%s471 + $0x8] sm:$0xff]
      %v474 = vld [vmem:[%s471 + $0x10] sm:$0xff]
      %v475 = vld [vmem:[%s471 + $0x18] sm:$0xff]
      %v476 = vld [vmem:[%s471 + $0x20] sm:$0xff]
      %v477 = vld [vmem:[%s471 + $0x28] sm:$0xff]
      %v478 = vld [vmem:[%s471 + $0x30] sm:$0xff]
      %s479 = scalar_lea.vmem %s1, 128
      %v480 = vld [vmem:[%s479] sm:$0xff]
      %v481 = vld [vmem:[%s479 + $0x8] sm:$0xff]
      %v482 = vld [vmem:[%s479 + $0x10] sm:$0xff]
      %v483 = vld [vmem:[%s479 + $0x18] sm:$0xff]
      %v485 = vsel %vm195, %v472, 0
      %v488 = vsel %vm195, %v473, 0
      %v491 = vsel %vm195, %v474, 0
      %v494 = vsel %vm195, %v475, 0
      %v497 = vsel %vm195, %v476, 0
      %v500 = vsel %vm195, %v477, 0
      %v503 = vsel %vm195, %v478, 0
      %505 = vmatpush.msra.mxu0 0.0
      %506 = vmatpush.msra.mxu0 0.0
      %507 = vmatpush.msra.mxu0 0.0
      %508 = vmatpush.msra.mxu0 0.0
      %509 = vmatpush.msra.mxu0 0.0
      %510 = vmatpush.msra.mxu0 0.0
      %511 = vmatpush.msra.mxu0 0.0
      %512 = vmatpush.msra.mxu0 0.0
      %513 = vmatpush.msra.mxu0 0.0
      %514 = vmatpush.msra.mxu0 0.0
      %515 = vmatpush.msra.mxu0 0.0
      %516 = vmatpush.msra.mxu0 0.0
      %517 = vmatpush.msra.mxu0 %v483
      %518 = vmatpush.msra.mxu0 %v482
      %519 = vmatpush.msra.mxu0 %v481
      %520 = vmatpush.msra.mxu0 %v480
      %521 = vmatmul.f32.gmra.mxu0 %v485
      %v522 = vpop.f32.mrf.mxu0
      %v523 = vadd.f32 0.0, %v522
      %524 = vmatmul.f32.gmra.mxu0 %v488
      %v525 = vpop.f32.mrf.mxu0
      %v526 = vadd.f32 0.0, %v525
      %527 = vmatmul.f32.gmra.mxu0 %v491
      %v528 = vpop.f32.mrf.mxu0
      %v529 = vadd.f32 0.0, %v528
      %530 = vmatmul.f32.gmra.mxu0 %v494
      %v531 = vpop.f32.mrf.mxu0
      %v532 = vadd.f32 0.0, %v531
      %533 = vmatmul.f32.gmra.mxu0 %v497
      %v534 = vpop.f32.mrf.mxu0
      %v535 = vadd.f32 0.0, %v534
      %536 = vmatmul.f32.gmra.mxu0 %v500
      %v537 = vpop.f32.mrf.mxu0
      %v538 = vadd.f32 0.0, %v537
      %539 = vmatmul.f32.gmra.mxu0 %v503
      %v540 = vpop.f32.mrf.mxu0
      %v541 = vadd.f32 0.0, %v540
      %542 = vdwg.mxu0
      %v543 = vadd.f32 %v464, %v523
      %v544 = vadd.f32 %v465, %v526
      %v545 = vadd.f32 %v466, %v529
      %v546 = vadd.f32 %v467, %v532
      %v547 = vadd.f32 %v468, %v535
      %v548 = vadd.f32 %v469, %v538
      %v549 = vadd.f32 %v470, %v541
      %v550 = vld [vmem:[%s392 + $0x1] sm:$0xff]
      %v551 = vld [vmem:[%s392 + $0x9] sm:$0xff]
      %v552 = vld [vmem:[%s392 + $0x11] sm:$0xff]
      %v553 = vld [vmem:[%s392 + $0x19] sm:$0xff]
      %v554 = vld [vmem:[%s392 + $0x21] sm:$0xff]
      %v555 = vld [vmem:[%s392 + $0x29] sm:$0xff]
      %v556 = vld [vmem:[%s392 + $0x31] sm:$0xff]
      %s557 = scalar_lea.vmem %s1, 160
      %v558 = vld [vmem:[%s557] sm:$0xff]
      %v559 = vld [vmem:[%s557 + $0x8] sm:$0xff]
      %v560 = vld [vmem:[%s557 + $0x10] sm:$0xff]
      %v561 = vld [vmem:[%s557 + $0x18] sm:$0xff]
      %v563 = vsel %vm195, %v550, 0
      %v566 = vsel %vm195, %v551, 0
      %v569 = vsel %vm195, %v552, 0
      %v572 = vsel %vm195, %v553, 0
      %v575 = vsel %vm195, %v554, 0
      %v578 = vsel %vm195, %v555, 0
      %v581 = vsel %vm195, %v556, 0
      %583 = vmatpush.msra.mxu0 0.0
      %584 = vmatpush.msra.mxu0 0.0
      %585 = vmatpush.msra.mxu0 0.0
      %586 = vmatpush.msra.mxu0 0.0
      %587 = vmatpush.msra.mxu0 0.0
      %588 = vmatpush.msra.mxu0 0.0
      %589 = vmatpush.msra.mxu0 0.0
      %590 = vmatpush.msra.mxu0 0.0
      %591 = vmatpush.msra.mxu0 0.0
      %592 = vmatpush.msra.mxu0 0.0
      %593 = vmatpush.msra.mxu0 0.0
      %594 = vmatpush.msra.mxu0 0.0
      %595 = vmatpush.msra.mxu0 %v561
      %596 = vmatpush.msra.mxu0 %v560
      %597 = vmatpush.msra.mxu0 %v559
      %598 = vmatpush.msra.mxu0 %v558
      %599 = vmatmul.f32.gmra.mxu0 %v563
      %v600 = vpop.f32.mrf.mxu0
      %v601 = vadd.f32 0.0, %v600
      %602 = vmatmul.f32.gmra.mxu0 %v566
      %v603 = vpop.f32.mrf.mxu0
      %v604 = vadd.f32 0.0, %v603
      %605 = vmatmul.f32.gmra.mxu0 %v569
      %v606 = vpop.f32.mrf.mxu0
      %v607 = vadd.f32 0.0, %v606
      %608 = vmatmul.f32.gmra.mxu0 %v572
      %v609 = vpop.f32.mrf.mxu0
      %v610 = vadd.f32 0.0, %v609
      %611 = vmatmul.f32.gmra.mxu0 %v575
      %v612 = vpop.f32.mrf.mxu0
      %v613 = vadd.f32 0.0, %v612
      %614 = vmatmul.f32.gmra.mxu0 %v578
      %v615 = vpop.f32.mrf.mxu0
      %v616 = vadd.f32 0.0, %v615
      %617 = vmatmul.f32.gmra.mxu0 %v581
      %v618 = vpop.f32.mrf.mxu0
      %v619 = vadd.f32 0.0, %v618
      %620 = vdwg.mxu0
      %v621 = vadd.f32 %v543, %v601
      %v622 = vadd.f32 %v544, %v604
      %v623 = vadd.f32 %v545, %v607
      %v624 = vadd.f32 %v546, %v610
      %v625 = vadd.f32 %v547, %v613
      %v626 = vadd.f32 %v548, %v616
      %v627 = vadd.f32 %v549, %v619
      %v628 = vld [vmem:[%s165 + $0x8] sm:$0xff]
      %v629 = vld [vmem:[%s165 + $0x10] sm:$0xff]
      %v630 = vld [vmem:[%s165 + $0x18] sm:$0xff]
      %v631 = vld [vmem:[%s165 + $0x20] sm:$0xff]
      %v632 = vld [vmem:[%s165 + $0x28] sm:$0xff]
      %v633 = vld [vmem:[%s165 + $0x30] sm:$0xff]
      %v634 = vld [vmem:[%s165 + $0x38] sm:$0xff]
      %s635 = scalar_lea.vmem %s1, 192
      %v636 = vld [vmem:[%s635] sm:$0xff]
      %v637 = vld [vmem:[%s635 + $0x8] sm:$0xff]
      %v638 = vld [vmem:[%s635 + $0x10] sm:$0xff]
      %v639 = vld [vmem:[%s635 + $0x18] sm:$0xff]
      %v641 = vsel %vm195, %v628, 0
      %v644 = vsel %vm195, %v629, 0
      %v647 = vsel %vm195, %v630, 0
      %v650 = vsel %vm195, %v631, 0
      %v653 = vsel %vm195, %v632, 0
      %v656 = vsel %vm195, %v633, 0
      %v659 = vsel %vm195, %v634, 0
      %661 = vmatpush.msra.mxu0 0.0
      %662 = vmatpush.msra.mxu0 0.0
      %663 = vmatpush.msra.mxu0 0.0
      %664 = vmatpush.msra.mxu0 0.0
      %665 = vmatpush.msra.mxu0 0.0
      %666 = vmatpush.msra.mxu0 0.0
      %667 = vmatpush.msra.mxu0 0.0
      %668 = vmatpush.msra.mxu0 0.0
      %669 = vmatpush.msra.mxu0 0.0
      %670 = vmatpush.msra.mxu0 0.0
      %671 = vmatpush.msra.mxu0 0.0
      %672 = vmatpush.msra.mxu0 0.0
      %673 = vmatpush.msra.mxu0 %v639
      %674 = vmatpush.msra.mxu0 %v638
      %675 = vmatpush.msra.mxu0 %v637
      %676 = vmatpush.msra.mxu0 %v636
      %677 = vmatmul.f32.gmra.mxu0 %v641
      %v678 = vpop.f32.mrf.mxu0
      %v679 = vadd.f32 0.0, %v678
      %680 = vmatmul.f32.gmra.mxu0 %v644
      %v681 = vpop.f32.mrf.mxu0
      %v682 = vadd.f32 0.0, %v681
      %683 = vmatmul.f32.gmra.mxu0 %v647
      %v684 = vpop.f32.mrf.mxu0
      %v685 = vadd.f32 0.0, %v684
      %686 = vmatmul.f32.gmra.mxu0 %v650
      %v687 = vpop.f32.mrf.mxu0
      %v688 = vadd.f32 0.0, %v687
      %689 = vmatmul.f32.gmra.mxu0 %v653
      %v690 = vpop.f32.mrf.mxu0
      %v691 = vadd.f32 0.0, %v690
      %692 = vmatmul.f32.gmra.mxu0 %v656
      %v693 = vpop.f32.mrf.mxu0
      %v694 = vadd.f32 0.0, %v693
      %695 = vmatmul.f32.gmra.mxu0 %v659
      %v696 = vpop.f32.mrf.mxu0
      %v697 = vadd.f32 0.0, %v696
      %698 = vdwg.mxu0
      %v699 = vadd.f32 %v621, %v679
      %v700 = vadd.f32 %v622, %v682
      %v701 = vadd.f32 %v623, %v685
      %v702 = vadd.f32 %v624, %v688
      %v703 = vadd.f32 %v625, %v691
      %v704 = vadd.f32 %v626, %v694
      %v705 = vadd.f32 %v627, %v697
      %v706 = vld [vmem:[%s182 + $0x8] sm:$0xff]
      %v707 = vld [vmem:[%s182 + $0x10] sm:$0xff]
      %v708 = vld [vmem:[%s182 + $0x18] sm:$0xff]
      %v709 = vld [vmem:[%s182 + $0x20] sm:$0xff]
      %v710 = vld [vmem:[%s182 + $0x28] sm:$0xff]
      %v711 = vld [vmem:[%s182 + $0x30] sm:$0xff]
      %v712 = vld [vmem:[%s182 + $0x38] sm:$0xff]
      %s713 = scalar_lea.vmem %s1, 224
      %v714 = vld [vmem:[%s713] sm:$0xff]
      %v715 = vld [vmem:[%s713 + $0x8] sm:$0xff]
      %v716 = vld [vmem:[%s713 + $0x10] sm:$0xff]
      %v717 = vld [vmem:[%s713 + $0x18] sm:$0xff]
      %v719 = vsel %vm195, %v706, 0
      %v722 = vsel %vm195, %v707, 0
      %v725 = vsel %vm195, %v708, 0
      %v728 = vsel %vm195, %v709, 0
      %v731 = vsel %vm195, %v710, 0
      %v734 = vsel %vm195, %v711, 0
      %v737 = vsel %vm195, %v712, 0
      %739 = vmatpush.msra.mxu0 0.0
      %740 = vmatpush.msra.mxu0 0.0
      %741 = vmatpush.msra.mxu0 0.0
      %742 = vmatpush.msra.mxu0 0.0
      %743 = vmatpush.msra.mxu0 0.0
      %744 = vmatpush.msra.mxu0 0.0
      %745 = vmatpush.msra.mxu0 0.0
      %746 = vmatpush.msra.mxu0 0.0
      %747 = vmatpush.msra.mxu0 0.0
      %748 = vmatpush.msra.mxu0 0.0
      %749 = vmatpush.msra.mxu0 0.0
      %750 = vmatpush.msra.mxu0 0.0
      %751 = vmatpush.msra.mxu0 %v717
      %752 = vmatpush.msra.mxu0 %v716
      %753 = vmatpush.msra.mxu0 %v715
      %754 = vmatpush.msra.mxu0 %v714
      %755 = vmatmul.f32.gmra.mxu0 %v719
      %v756 = vpop.f32.mrf.mxu0
      %v757 = vadd.f32 0.0, %v756
      %758 = vmatmul.f32.gmra.mxu0 %v722
      %v759 = vpop.f32.mrf.mxu0
      %v760 = vadd.f32 0.0, %v759
      %761 = vmatmul.f32.gmra.mxu0 %v725
      %v762 = vpop.f32.mrf.mxu0
      %v763 = vadd.f32 0.0, %v762
      %764 = vmatmul.f32.gmra.mxu0 %v728
      %v765 = vpop.f32.mrf.mxu0
      %v766 = vadd.f32 0.0, %v765
      %767 = vmatmul.f32.gmra.mxu0 %v731
      %v768 = vpop.f32.mrf.mxu0
      %v769 = vadd.f32 0.0, %v768
      %770 = vmatmul.f32.gmra.mxu0 %v734
      %v771 = vpop.f32.mrf.mxu0
      %v772 = vadd.f32 0.0, %v771
      %773 = vmatmul.f32.gmra.mxu0 %v737
      %v774 = vpop.f32.mrf.mxu0
      %v775 = vadd.f32 0.0, %v774
      %776 = vdwg.mxu0
      %v777 = vadd.f32 %v699, %v757
      %v778 = vadd.f32 %v700, %v760
      %v779 = vadd.f32 %v701, %v763
      %v780 = vadd.f32 %v702, %v766
      %v781 = vadd.f32 %v703, %v769
      %v782 = vadd.f32 %v704, %v772
      %v783 = vadd.f32 %v705, %v775
      %v784 = vld [vmem:[%s165 + $0x9] sm:$0xff]
      %v785 = vld [vmem:[%s165 + $0x11] sm:$0xff]
      %v786 = vld [vmem:[%s165 + $0x19] sm:$0xff]
      %v787 = vld [vmem:[%s165 + $0x21] sm:$0xff]
      %v788 = vld [vmem:[%s165 + $0x29] sm:$0xff]
      %v789 = vld [vmem:[%s165 + $0x31] sm:$0xff]
      %v790 = vld [vmem:[%s165 + $0x39] sm:$0xff]
      %s791 = scalar_lea.vmem %s1, 256
      %v792 = vld [vmem:[%s791] sm:$0xff]
      %v793 = vld [vmem:[%s791 + $0x8] sm:$0xff]
      %v794 = vld [vmem:[%s791 + $0x10] sm:$0xff]
      %v795 = vld [vmem:[%s791 + $0x18] sm:$0xff]
      %v797 = vsel %vm195, %v784, 0
      %v800 = vsel %vm195, %v785, 0
      %v803 = vsel %vm195, %v786, 0
      %v806 = vsel %vm195, %v787, 0
      %v809 = vsel %vm195, %v788, 0
      %v812 = vsel %vm195, %v789, 0
      %v815 = vsel %vm195, %v790, 0
      %817 = vmatpush.msra.mxu0 0.0
      %818 = vmatpush.msra.mxu0 0.0
      %819 = vmatpush.msra.mxu0 0.0
      %820 = vmatpush.msra.mxu0 0.0
      %821 = vmatpush.msra.mxu0 0.0
      %822 = vmatpush.msra.mxu0 0.0
      %823 = vmatpush.msra.mxu0 0.0
      %824 = vmatpush.msra.mxu0 0.0
      %825 = vmatpush.msra.mxu0 0.0
      %826 = vmatpush.msra.mxu0 0.0
      %827 = vmatpush.msra.mxu0 0.0
      %828 = vmatpush.msra.mxu0 0.0
      %829 = vmatpush.msra.mxu0 %v795
      %830 = vmatpush.msra.mxu0 %v794
      %831 = vmatpush.msra.mxu0 %v793
      %832 = vmatpush.msra.mxu0 %v792
      %833 = vmatmul.f32.gmra.mxu0 %v797
      %v834 = vpop.f32.mrf.mxu0
      %v835 = vadd.f32 0.0, %v834
      %836 = vmatmul.f32.gmra.mxu0 %v800
      %v837 = vpop.f32.mrf.mxu0
      %v838 = vadd.f32 0.0, %v837
      %839 = vmatmul.f32.gmra.mxu0 %v803
      %v840 = vpop.f32.mrf.mxu0
      %v841 = vadd.f32 0.0, %v840
      %842 = vmatmul.f32.gmra.mxu0 %v806
      %v843 = vpop.f32.mrf.mxu0
      %v844 = vadd.f32 0.0, %v843
      %845 = vmatmul.f32.gmra.mxu0 %v809
      %v846 = vpop.f32.mrf.mxu0
      %v847 = vadd.f32 0.0, %v846
      %848 = vmatmul.f32.gmra.mxu0 %v812
      %v849 = vpop.f32.mrf.mxu0
      %v850 = vadd.f32 0.0, %v849
      %851 = vmatmul.f32.gmra.mxu0 %v815
      %v852 = vpop.f32.mrf.mxu0
      %v853 = vadd.f32 0.0, %v852
      %854 = vdwg.mxu0
      %v855 = vadd.f32 %v777, %v835
      %v856 = vadd.f32 %v778, %v838
      %v857 = vadd.f32 %v779, %v841
      %v858 = vadd.f32 %v780, %v844
      %v859 = vadd.f32 %v781, %v847
      %v860 = vadd.f32 %v782, %v850
      %v861 = vadd.f32 %v783, %v853
      %862 = vmatpush.msra.mxu0 0.0
      %863 = vmatpush.msra.mxu0 0.0
      %864 = vmatpush.msra.mxu0 0.0
      %865 = vmatpush.msra.mxu0 0.0
      %866 = vmatpush.msra.mxu0 0.0
      %867 = vmatpush.msra.mxu0 0.0
      %868 = vmatpush.msra.mxu0 0.0
      %869 = vmatpush.msra.mxu0 0.0
      %870 = vmatpush.msra.mxu0 0.0
      %871 = vmatpush.msra.mxu0 0.0
      %872 = vmatpush.msra.mxu0 0.0
      %873 = vmatpush.msra.mxu0 0.0
      %874 = vmatpush.msra.mxu0 %v194
      %875 = vmatpush.msra.mxu0 %v193
      %876 = vmatpush.msra.mxu0 %v192
      %877 = vmatpush.msra.mxu0 %v191
      %878 = vmatmul.f32.gmra.mxu0 %v327
      %v879 = vpop.f32.mrf.mxu0
      %v880 = vadd.f32 0.0, %v879
      %881 = vmatmul.f32.gmra.mxu0 %v330
      %v882 = vpop.f32.mrf.mxu0
      %v883 = vadd.f32 0.0, %v882
      %884 = vmatmul.f32.gmra.mxu0 %v333
      %v885 = vpop.f32.mrf.mxu0
      %v886 = vadd.f32 0.0, %v885
      %887 = vmatmul.f32.gmra.mxu0 %v336
      %v888 = vpop.f32.mrf.mxu0
      %v889 = vadd.f32 0.0, %v888
      %890 = vmatmul.f32.gmra.mxu0 %v339
      %v891 = vpop.f32.mrf.mxu0
      %v892 = vadd.f32 0.0, %v891
      %893 = vmatmul.f32.gmra.mxu0 %v342
      %v894 = vpop.f32.mrf.mxu0
      %v895 = vadd.f32 0.0, %v894
      %896 = vmatmul.f32.gmra.mxu0 %v345
      %v897 = vpop.f32.mrf.mxu0
      %v898 = vadd.f32 0.0, %v897
      %899 = vdwg.mxu0
      %900 = vmatpush.msra.mxu0 0.0
      %901 = vmatpush.msra.mxu0 0.0
      %902 = vmatpush.msra.mxu0 0.0
      %903 = vmatpush.msra.mxu0 0.0
      %904 = vmatpush.msra.mxu0 0.0
      %905 = vmatpush.msra.mxu0 0.0
      %906 = vmatpush.msra.mxu0 0.0
      %907 = vmatpush.msra.mxu0 0.0
      %908 = vmatpush.msra.mxu0 0.0
      %909 = vmatpush.msra.mxu0 0.0
      %910 = vmatpush.msra.mxu0 0.0
      %911 = vmatpush.msra.mxu0 0.0
      %912 = vmatpush.msra.mxu0 %v181
      %913 = vmatpush.msra.mxu0 %v180
      %914 = vmatpush.msra.mxu0 %v179
      %915 = vmatpush.msra.mxu0 %v178
      %916 = vmatmul.f32.gmra.mxu0 %v197
      %v917 = vpop.f32.mrf.mxu0
      %v918 = vadd.f32 %v880, %v917
      %919 = vmatmul.f32.gmra.mxu0 %v200
      %v920 = vpop.f32.mrf.mxu0
      %v921 = vadd.f32 %v883, %v920
      %922 = vmatmul.f32.gmra.mxu0 %v203
      %v923 = vpop.f32.mrf.mxu0
      %v924 = vadd.f32 %v886, %v923
      %925 = vmatmul.f32.gmra.mxu0 %v206
      %v926 = vpop.f32.mrf.mxu0
      %v927 = vadd.f32 %v889, %v926
      %928 = vmatmul.f32.gmra.mxu0 %v209
      %v929 = vpop.f32.mrf.mxu0
      %v930 = vadd.f32 %v892, %v929
      %931 = vmatmul.f32.gmra.mxu0 %v212
      %v932 = vpop.f32.mrf.mxu0
      %v933 = vadd.f32 %v895, %v932
      %934 = vmatmul.f32.gmra.mxu0 %v215
      %v935 = vpop.f32.mrf.mxu0
      %v936 = vadd.f32 %v898, %v935
      %937 = vdwg.mxu0
      %v938 = vld [vmem:[%s182 + $0x1] sm:$0xff]
      %v939 = vld [vmem:[%s182 + $0x9] sm:$0xff]
      %v940 = vld [vmem:[%s182 + $0x11] sm:$0xff]
      %v941 = vld [vmem:[%s182 + $0x19] sm:$0xff]
      %v942 = vld [vmem:[%s182 + $0x21] sm:$0xff]
      %v943 = vld [vmem:[%s182 + $0x29] sm:$0xff]
      %v944 = vld [vmem:[%s182 + $0x31] sm:$0xff]
      %v946 = vsel %vm195, %v938, 0
      %v949 = vsel %vm195, %v939, 0
      %v952 = vsel %vm195, %v940, 0
      %v955 = vsel %vm195, %v941, 0
      %v958 = vsel %vm195, %v942, 0
      %v961 = vsel %vm195, %v943, 0
      %v964 = vsel %vm195, %v944, 0
      %966 = vmatpush.msra.mxu0 0.0
      %967 = vmatpush.msra.mxu0 0.0
      %968 = vmatpush.msra.mxu0 0.0
      %969 = vmatpush.msra.mxu0 0.0
      %970 = vmatpush.msra.mxu0 0.0
      %971 = vmatpush.msra.mxu0 0.0
      %972 = vmatpush.msra.mxu0 0.0
      %973 = vmatpush.msra.mxu0 0.0
      %974 = vmatpush.msra.mxu0 0.0
      %975 = vmatpush.msra.mxu0 0.0
      %976 = vmatpush.msra.mxu0 0.0
      %977 = vmatpush.msra.mxu0 0.0
      %978 = vmatpush.msra.mxu0 %v325
      %979 = vmatpush.msra.mxu0 %v324
      %980 = vmatpush.msra.mxu0 %v323
      %981 = vmatpush.msra.mxu0 %v322
      %982 = vmatmul.f32.gmra.mxu0 %v946
      %v983 = vpop.f32.mrf.mxu0
      %v984 = vadd.f32 0.0, %v983
      %985 = vmatmul.f32.gmra.mxu0 %v949
      %v986 = vpop.f32.mrf.mxu0
      %v987 = vadd.f32 0.0, %v986
      %988 = vmatmul.f32.gmra.mxu0 %v952
      %v989 = vpop.f32.mrf.mxu0
      %v990 = vadd.f32 0.0, %v989
      %991 = vmatmul.f32.gmra.mxu0 %v955
      %v992 = vpop.f32.mrf.mxu0
      %v993 = vadd.f32 0.0, %v992
      %994 = vmatmul.f32.gmra.mxu0 %v958
      %v995 = vpop.f32.mrf.mxu0
      %v996 = vadd.f32 0.0, %v995
      %997 = vmatmul.f32.gmra.mxu0 %v961
      %v998 = vpop.f32.mrf.mxu0
      %v999 = vadd.f32 0.0, %v998
      %1000 = vmatmul.f32.gmra.mxu0 %v964
      %v1001 = vpop.f32.mrf.mxu0
      %v1002 = vadd.f32 0.0, %v1001
      %1003 = vdwg.mxu0
      %v1004 = vadd.f32 %v918, %v984
      %v1005 = vadd.f32 %v921, %v987
      %v1006 = vadd.f32 %v924, %v990
      %v1007 = vadd.f32 %v927, %v993
      %v1008 = vadd.f32 %v930, %v996
      %v1009 = vadd.f32 %v933, %v999
      %v1010 = vadd.f32 %v936, %v1002
      %1011 = vmatpush.msra.mxu0 0.0
      %1012 = vmatpush.msra.mxu0 0.0
      %1013 = vmatpush.msra.mxu0 0.0
      %1014 = vmatpush.msra.mxu0 0.0
      %1015 = vmatpush.msra.mxu0 0.0
      %1016 = vmatpush.msra.mxu0 0.0
      %1017 = vmatpush.msra.mxu0 0.0
      %1018 = vmatpush.msra.mxu0 0.0
      %1019 = vmatpush.msra.mxu0 0.0
      %1020 = vmatpush.msra.mxu0 0.0
      %1021 = vmatpush.msra.mxu0 0.0
      %1022 = vmatpush.msra.mxu0 0.0
      %1023 = vmatpush.msra.mxu0 %v404
      %1024 = vmatpush.msra.mxu0 %v403
      %1025 = vmatpush.msra.mxu0 %v402
      %1026 = vmatpush.msra.mxu0 %v401
      %1027 = vmatmul.f32.gmra.mxu0 %v485
      %v1028 = vpop.f32.mrf.mxu0
      %v1029 = vadd.f32 0.0, %v1028
      %1030 = vmatmul.f32.gmra.mxu0 %v488
      %v1031 = vpop.f32.mrf.mxu0
      %v1032 = vadd.f32 0.0, %v1031
      %1033 = vmatmul.f32.gmra.mxu0 %v491
      %v1034 = vpop.f32.mrf.mxu0
      %v1035 = vadd.f32 0.0, %v1034
      %1036 = vmatmul.f32.gmra.mxu0 %v494
      %v1037 = vpop.f32.mrf.mxu0
      %v1038 = vadd.f32 0.0, %v1037
      %1039 = vmatmul.f32.gmra.mxu0 %v497
      %v1040 = vpop.f32.mrf.mxu0
      %v1041 = vadd.f32 0.0, %v1040
      %1042 = vmatmul.f32.gmra.mxu0 %v500
      %v1043 = vpop.f32.mrf.mxu0
      %v1044 = vadd.f32 0.0, %v1043
      %1045 = vmatmul.f32.gmra.mxu0 %v503
      %v1046 = vpop.f32.mrf.mxu0
      %v1047 = vadd.f32 0.0, %v1046
      %1048 = vdwg.mxu0
      %v1049 = vadd.f32 %v1004, %v1029
      %v1050 = vadd.f32 %v1005, %v1032
      %v1051 = vadd.f32 %v1006, %v1035
      %v1052 = vadd.f32 %v1007, %v1038
      %v1053 = vadd.f32 %v1008, %v1041
      %v1054 = vadd.f32 %v1009, %v1044
      %v1055 = vadd.f32 %v1010, %v1047
      %1056 = vmatpush.msra.mxu0 0.0
      %1057 = vmatpush.msra.mxu0 0.0
      %1058 = vmatpush.msra.mxu0 0.0
      %1059 = vmatpush.msra.mxu0 0.0
      %1060 = vmatpush.msra.mxu0 0.0
      %1061 = vmatpush.msra.mxu0 0.0
      %1062 = vmatpush.msra.mxu0 0.0
      %1063 = vmatpush.msra.mxu0 0.0
      %1064 = vmatpush.msra.mxu0 0.0
      %1065 = vmatpush.msra.mxu0 0.0
      %1066 = vmatpush.msra.mxu0 0.0
      %1067 = vmatpush.msra.mxu0 0.0
      %1068 = vmatpush.msra.mxu0 %v483
      %1069 = vmatpush.msra.mxu0 %v482
      %1070 = vmatpush.msra.mxu0 %v481
      %1071 = vmatpush.msra.mxu0 %v480
      %1072 = vmatmul.f32.gmra.mxu0 %v563
      %v1073 = vpop.f32.mrf.mxu0
      %v1074 = vadd.f32 0.0, %v1073
      %1075 = vmatmul.f32.gmra.mxu0 %v566
      %v1076 = vpop.f32.mrf.mxu0
      %v1077 = vadd.f32 0.0, %v1076
      %1078 = vmatmul.f32.gmra.mxu0 %v569
      %v1079 = vpop.f32.mrf.mxu0
      %v1080 = vadd.f32 0.0, %v1079
      %1081 = vmatmul.f32.gmra.mxu0 %v572
      %v1082 = vpop.f32.mrf.mxu0
      %v1083 = vadd.f32 0.0, %v1082
      %1084 = vmatmul.f32.gmra.mxu0 %v575
      %v1085 = vpop.f32.mrf.mxu0
      %v1086 = vadd.f32 0.0, %v1085
      %1087 = vmatmul.f32.gmra.mxu0 %v578
      %v1088 = vpop.f32.mrf.mxu0
      %v1089 = vadd.f32 0.0, %v1088
      %1090 = vmatmul.f32.gmra.mxu0 %v581
      %v1091 = vpop.f32.mrf.mxu0
      %v1092 = vadd.f32 0.0, %v1091
      %1093 = vdwg.mxu0
      %v1094 = vadd.f32 %v1049, %v1074
      %v1095 = vadd.f32 %v1050, %v1077
      %v1096 = vadd.f32 %v1051, %v1080
      %v1097 = vadd.f32 %v1052, %v1083
      %v1098 = vadd.f32 %v1053, %v1086
      %v1099 = vadd.f32 %v1054, %v1089
      %v1100 = vadd.f32 %v1055, %v1092
      %v1101 = vld [vmem:[%s471 + $0x1] sm:$0xff]
      %v1102 = vld [vmem:[%s471 + $0x9] sm:$0xff]
      %v1103 = vld [vmem:[%s471 + $0x11] sm:$0xff]
      %v1104 = vld [vmem:[%s471 + $0x19] sm:$0xff]
      %v1105 = vld [vmem:[%s471 + $0x21] sm:$0xff]
      %v1106 = vld [vmem:[%s471 + $0x29] sm:$0xff]
      %v1107 = vld [vmem:[%s471 + $0x31] sm:$0xff]
      %v1109 = vsel %vm195, %v1101, 0
      %v1112 = vsel %vm195, %v1102, 0
      %v1115 = vsel %vm195, %v1103, 0
      %v1118 = vsel %vm195, %v1104, 0
      %v1121 = vsel %vm195, %v1105, 0
      %v1124 = vsel %vm195, %v1106, 0
      %v1127 = vsel %vm195, %v1107, 0
      %1129 = vmatpush.msra.mxu0 0.0
      %1130 = vmatpush.msra.mxu0 0.0
      %1131 = vmatpush.msra.mxu0 0.0
      %1132 = vmatpush.msra.mxu0 0.0
      %1133 = vmatpush.msra.mxu0 0.0
      %1134 = vmatpush.msra.mxu0 0.0
      %1135 = vmatpush.msra.mxu0 0.0
      %1136 = vmatpush.msra.mxu0 0.0
      %1137 = vmatpush.msra.mxu0 0.0
      %1138 = vmatpush.msra.mxu0 0.0
      %1139 = vmatpush.msra.mxu0 0.0
      %1140 = vmatpush.msra.mxu0 0.0
      %1141 = vmatpush.msra.mxu0 %v561
      %1142 = vmatpush.msra.mxu0 %v560
      %1143 = vmatpush.msra.mxu0 %v559
      %1144 = vmatpush.msra.mxu0 %v558
      %1145 = vmatmul.f32.gmra.mxu0 %v1109
      %v1146 = vpop.f32.mrf.mxu0
      %v1147 = vadd.f32 0.0, %v1146
      %1148 = vmatmul.f32.gmra.mxu0 %v1112
      %v1149 = vpop.f32.mrf.mxu0
      %v1150 = vadd.f32 0.0, %v1149
      %1151 = vmatmul.f32.gmra.mxu0 %v1115
      %v1152 = vpop.f32.mrf.mxu0
      %v1153 = vadd.f32 0.0, %v1152
      %1154 = vmatmul.f32.gmra.mxu0 %v1118
      %v1155 = vpop.f32.mrf.mxu0
      %v1156 = vadd.f32 0.0, %v1155
      %1157 = vmatmul.f32.gmra.mxu0 %v1121
      %v1158 = vpop.f32.mrf.mxu0
      %v1159 = vadd.f32 0.0, %v1158
      %1160 = vmatmul.f32.gmra.mxu0 %v1124
      %v1161 = vpop.f32.mrf.mxu0
      %v1162 = vadd.f32 0.0, %v1161
      %1163 = vmatmul.f32.gmra.mxu0 %v1127
      %v1164 = vpop.f32.mrf.mxu0
      %v1165 = vadd.f32 0.0, %v1164
      %1166 = vdwg.mxu0
      %v1167 = vadd.f32 %v1094, %v1147
      %v1168 = vadd.f32 %v1095, %v1150
      %v1169 = vadd.f32 %v1096, %v1153
      %v1170 = vadd.f32 %v1097, %v1156
      %v1171 = vadd.f32 %v1098, %v1159
      %v1172 = vadd.f32 %v1099, %v1162
      %v1173 = vadd.f32 %v1100, %v1165
      %1174 = vmatpush.msra.mxu0 0.0
      %1175 = vmatpush.msra.mxu0 0.0
      %1176 = vmatpush.msra.mxu0 0.0
      %1177 = vmatpush.msra.mxu0 0.0
      %1178 = vmatpush.msra.mxu0 0.0
      %1179 = vmatpush.msra.mxu0 0.0
      %1180 = vmatpush.msra.mxu0 0.0
      %1181 = vmatpush.msra.mxu0 0.0
      %1182 = vmatpush.msra.mxu0 0.0
      %1183 = vmatpush.msra.mxu0 0.0
      %1184 = vmatpush.msra.mxu0 0.0
      %1185 = vmatpush.msra.mxu0 0.0
      %1186 = vmatpush.msra.mxu0 %v639
      %1187 = vmatpush.msra.mxu0 %v638
      %1188 = vmatpush.msra.mxu0 %v637
      %1189 = vmatpush.msra.mxu0 %v636
      %1190 = vmatmul.f32.gmra.mxu0 %v719
      %v1191 = vpop.f32.mrf.mxu0
      %v1192 = vadd.f32 0.0, %v1191
      %1193 = vmatmul.f32.gmra.mxu0 %v722
      %v1194 = vpop.f32.mrf.mxu0
      %v1195 = vadd.f32 0.0, %v1194
      %1196 = vmatmul.f32.gmra.mxu0 %v725
      %v1197 = vpop.f32.mrf.mxu0
      %v1198 = vadd.f32 0.0, %v1197
      %1199 = vmatmul.f32.gmra.mxu0 %v728
      %v1200 = vpop.f32.mrf.mxu0
      %v1201 = vadd.f32 0.0, %v1200
      %1202 = vmatmul.f32.gmra.mxu0 %v731
      %v1203 = vpop.f32.mrf.mxu0
      %v1204 = vadd.f32 0.0, %v1203
      %1205 = vmatmul.f32.gmra.mxu0 %v734
      %v1206 = vpop.f32.mrf.mxu0
      %v1207 = vadd.f32 0.0, %v1206
      %1208 = vmatmul.f32.gmra.mxu0 %v737
      %v1209 = vpop.f32.mrf.mxu0
      %v1210 = vadd.f32 0.0, %v1209
      %1211 = vdwg.mxu0
      %v1212 = vadd.f32 %v1167, %v1192
      %v1213 = vadd.f32 %v1168, %v1195
      %v1214 = vadd.f32 %v1169, %v1198
      %v1215 = vadd.f32 %v1170, %v1201
      %v1216 = vadd.f32 %v1171, %v1204
      %v1217 = vadd.f32 %v1172, %v1207
      %v1218 = vadd.f32 %v1173, %v1210
      %1219 = vmatpush.msra.mxu0 0.0
      %1220 = vmatpush.msra.mxu0 0.0
      %1221 = vmatpush.msra.mxu0 0.0
      %1222 = vmatpush.msra.mxu0 0.0
      %1223 = vmatpush.msra.mxu0 0.0
      %1224 = vmatpush.msra.mxu0 0.0
      %1225 = vmatpush.msra.mxu0 0.0
      %1226 = vmatpush.msra.mxu0 0.0
      %1227 = vmatpush.msra.mxu0 0.0
      %1228 = vmatpush.msra.mxu0 0.0
      %1229 = vmatpush.msra.mxu0 0.0
      %1230 = vmatpush.msra.mxu0 0.0
      %1231 = vmatpush.msra.mxu0 %v717
      %1232 = vmatpush.msra.mxu0 %v716
      %1233 = vmatpush.msra.mxu0 %v715
      %1234 = vmatpush.msra.mxu0 %v714
      %1235 = vmatmul.f32.gmra.mxu0 %v797
      %v1236 = vpop.f32.mrf.mxu0
      %v1237 = vadd.f32 0.0, %v1236
      %1238 = vmatmul.f32.gmra.mxu0 %v800
      %v1239 = vpop.f32.mrf.mxu0
      %v1240 = vadd.f32 0.0, %v1239
      %1241 = vmatmul.f32.gmra.mxu0 %v803
      %v1242 = vpop.f32.mrf.mxu0
      %v1243 = vadd.f32 0.0, %v1242
      %1244 = vmatmul.f32.gmra.mxu0 %v806
      %v1245 = vpop.f32.mrf.mxu0
      %v1246 = vadd.f32 0.0, %v1245
      %1247 = vmatmul.f32.gmra.mxu0 %v809
      %v1248 = vpop.f32.mrf.mxu0
      %v1249 = vadd.f32 0.0, %v1248
      %1250 = vmatmul.f32.gmra.mxu0 %v812
      %v1251 = vpop.f32.mrf.mxu0
      %v1252 = vadd.f32 0.0, %v1251
      %1253 = vmatmul.f32.gmra.mxu0 %v815
      %v1254 = vpop.f32.mrf.mxu0
      %v1255 = vadd.f32 0.0, %v1254
      %1256 = vdwg.mxu0
      %v1257 = vadd.f32 %v1212, %v1237
      %v1258 = vadd.f32 %v1213, %v1240
      %v1259 = vadd.f32 %v1214, %v1243
      %v1260 = vadd.f32 %v1215, %v1246
      %v1261 = vadd.f32 %v1216, %v1249
      %v1262 = vadd.f32 %v1217, %v1252
      %v1263 = vadd.f32 %v1218, %v1255
      %v1264 = vld [vmem:[%s182 + $0x9] sm:$0xff]
      %v1265 = vld [vmem:[%s182 + $0x11] sm:$0xff]
      %v1266 = vld [vmem:[%s182 + $0x19] sm:$0xff]
      %v1267 = vld [vmem:[%s182 + $0x21] sm:$0xff]
      %v1268 = vld [vmem:[%s182 + $0x29] sm:$0xff]
      %v1269 = vld [vmem:[%s182 + $0x31] sm:$0xff]
      %v1270 = vld [vmem:[%s182 + $0x39] sm:$0xff]
      %v1272 = vsel %vm195, %v1264, 0
      %v1275 = vsel %vm195, %v1265, 0
      %v1278 = vsel %vm195, %v1266, 0
      %v1281 = vsel %vm195, %v1267, 0
      %v1284 = vsel %vm195, %v1268, 0
      %v1287 = vsel %vm195, %v1269, 0
      %v1290 = vsel %vm195, %v1270, 0
      %1292 = vmatpush.msra.mxu0 0.0
      %1293 = vmatpush.msra.mxu0 0.0
      %1294 = vmatpush.msra.mxu0 0.0
      %1295 = vmatpush.msra.mxu0 0.0
      %1296 = vmatpush.msra.mxu0 0.0
      %1297 = vmatpush.msra.mxu0 0.0
      %1298 = vmatpush.msra.mxu0 0.0
      %1299 = vmatpush.msra.mxu0 0.0
      %1300 = vmatpush.msra.mxu0 0.0
      %1301 = vmatpush.msra.mxu0 0.0
      %1302 = vmatpush.msra.mxu0 0.0
      %1303 = vmatpush.msra.mxu0 0.0
      %1304 = vmatpush.msra.mxu0 %v795
      %1305 = vmatpush.msra.mxu0 %v794
      %1306 = vmatpush.msra.mxu0 %v793
      %1307 = vmatpush.msra.mxu0 %v792
      %1308 = vmatmul.f32.gmra.mxu0 %v1272
      %v1309 = vpop.f32.mrf.mxu0
      %v1310 = vadd.f32 0.0, %v1309
      %1311 = vmatmul.f32.gmra.mxu0 %v1275
      %v1312 = vpop.f32.mrf.mxu0
      %v1313 = vadd.f32 0.0, %v1312
      %1314 = vmatmul.f32.gmra.mxu0 %v1278
      %v1315 = vpop.f32.mrf.mxu0
      %v1316 = vadd.f32 0.0, %v1315
      %1317 = vmatmul.f32.gmra.mxu0 %v1281
      %v1318 = vpop.f32.mrf.mxu0
      %v1319 = vadd.f32 0.0, %v1318
      %1320 = vmatmul.f32.gmra.mxu0 %v1284
      %v1321 = vpop.f32.mrf.mxu0
      %v1322 = vadd.f32 0.0, %v1321
      %1323 = vmatmul.f32.gmra.mxu0 %v1287
      %v1324 = vpop.f32.mrf.mxu0
      %v1325 = vadd.f32 0.0, %v1324
      %1326 = vmatmul.f32.gmra.mxu0 %v1290
      %v1327 = vpop.f32.mrf.mxu0
      %v1328 = vadd.f32 0.0, %v1327
      %1329 = vdwg.mxu0
      %v1330 = vadd.f32 %v1257, %v1310
      %v1331 = vadd.f32 %v1258, %v1313
      %v1332 = vadd.f32 %v1259, %v1316
      %v1333 = vadd.f32 %v1260, %v1319
      %v1334 = vadd.f32 %v1261, %v1322
      %v1335 = vadd.f32 %v1262, %v1325
      %v1336 = vadd.f32 %v1263, %v1328
      %v1337 = vmax.f32 %v855, %v1330
      %v1338 = vmax.f32 %v856, %v1331
      %v1339 = vmax.f32 %v857, %v1332
      %v1340 = vmax.f32 %v858, %v1333
      %v1341 = vmax.f32 %v859, %v1334
      %v1342 = vmax.f32 %v860, %v1335
      %v1343 = vmax.f32 %v861, %v1336
      %1344 = vmatpush.msra.mxu0 0.0
      %1345 = vmatpush.msra.mxu0 0.0
      %1346 = vmatpush.msra.mxu0 0.0
      %1347 = vmatpush.msra.mxu0 0.0
      %1348 = vmatpush.msra.mxu0 0.0
      %1349 = vmatpush.msra.mxu0 0.0
      %1350 = vmatpush.msra.mxu0 0.0
      %1351 = vmatpush.msra.mxu0 0.0
      %1352 = vmatpush.msra.mxu0 0.0
      %1353 = vmatpush.msra.mxu0 0.0
      %1354 = vmatpush.msra.mxu0 0.0
      %1355 = vmatpush.msra.mxu0 0.0
      %1356 = vmatpush.msra.mxu0 %v194
      %1357 = vmatpush.msra.mxu0 %v193
      %1358 = vmatpush.msra.mxu0 %v192
      %1359 = vmatpush.msra.mxu0 %v191
      %1360 = vmatmul.f32.gmra.mxu0 %v485
      %v1361 = vpop.f32.mrf.mxu0
      %v1362 = vadd.f32 0.0, %v1361
      %1363 = vmatmul.f32.gmra.mxu0 %v488
      %v1364 = vpop.f32.mrf.mxu0
      %v1365 = vadd.f32 0.0, %v1364
      %1366 = vmatmul.f32.gmra.mxu0 %v491
      %v1367 = vpop.f32.mrf.mxu0
      %v1368 = vadd.f32 0.0, %v1367
      %1369 = vmatmul.f32.gmra.mxu0 %v494
      %v1370 = vpop.f32.mrf.mxu0
      %v1371 = vadd.f32 0.0, %v1370
      %1372 = vmatmul.f32.gmra.mxu0 %v497
      %v1373 = vpop.f32.mrf.mxu0
      %v1374 = vadd.f32 0.0, %v1373
      %1375 = vmatmul.f32.gmra.mxu0 %v500
      %v1376 = vpop.f32.mrf.mxu0
      %v1377 = vadd.f32 0.0, %v1376
      %1378 = vmatmul.f32.gmra.mxu0 %v503
      %v1379 = vpop.f32.mrf.mxu0
      %v1380 = vadd.f32 0.0, %v1379
      %1381 = vdwg.mxu0
      %1382 = vmatpush.msra.mxu0 0.0
      %1383 = vmatpush.msra.mxu0 0.0
      %1384 = vmatpush.msra.mxu0 0.0
      %1385 = vmatpush.msra.mxu0 0.0
      %1386 = vmatpush.msra.mxu0 0.0
      %1387 = vmatpush.msra.mxu0 0.0
      %1388 = vmatpush.msra.mxu0 0.0
      %1389 = vmatpush.msra.mxu0 0.0
      %1390 = vmatpush.msra.mxu0 0.0
      %1391 = vmatpush.msra.mxu0 0.0
      %1392 = vmatpush.msra.mxu0 0.0
      %1393 = vmatpush.msra.mxu0 0.0
      %1394 = vmatpush.msra.mxu0 %v181
      %1395 = vmatpush.msra.mxu0 %v180
      %1396 = vmatpush.msra.mxu0 %v179
      %1397 = vmatpush.msra.mxu0 %v178
      %1398 = vmatmul.f32.gmra.mxu0 %v406
      %v1399 = vpop.f32.mrf.mxu0
      %v1400 = vadd.f32 %v1362, %v1399
      %1401 = vmatmul.f32.gmra.mxu0 %v409
      %v1402 = vpop.f32.mrf.mxu0
      %v1403 = vadd.f32 %v1365, %v1402
      %1404 = vmatmul.f32.gmra.mxu0 %v412
      %v1405 = vpop.f32.mrf.mxu0
      %v1406 = vadd.f32 %v1368, %v1405
      %1407 = vmatmul.f32.gmra.mxu0 %v415
      %v1408 = vpop.f32.mrf.mxu0
      %v1409 = vadd.f32 %v1371, %v1408
      %1410 = vmatmul.f32.gmra.mxu0 %v418
      %v1411 = vpop.f32.mrf.mxu0
      %v1412 = vadd.f32 %v1374, %v1411
      %1413 = vmatmul.f32.gmra.mxu0 %v421
      %v1414 = vpop.f32.mrf.mxu0
      %v1415 = vadd.f32 %v1377, %v1414
      %1416 = vmatmul.f32.gmra.mxu0 %v424
      %v1417 = vpop.f32.mrf.mxu0
      %v1418 = vadd.f32 %v1380, %v1417
      %1419 = vdwg.mxu0
      %1420 = vmatpush.msra.mxu0 0.0
      %1421 = vmatpush.msra.mxu0 0.0
      %1422 = vmatpush.msra.mxu0 0.0
      %1423 = vmatpush.msra.mxu0 0.0
      %1424 = vmatpush.msra.mxu0 0.0
      %1425 = vmatpush.msra.mxu0 0.0
      %1426 = vmatpush.msra.mxu0 0.0
      %1427 = vmatpush.msra.mxu0 0.0
      %1428 = vmatpush.msra.mxu0 0.0
      %1429 = vmatpush.msra.mxu0 0.0
      %1430 = vmatpush.msra.mxu0 0.0
      %1431 = vmatpush.msra.mxu0 0.0
      %1432 = vmatpush.msra.mxu0 %v325
      %1433 = vmatpush.msra.mxu0 %v324
      %1434 = vmatpush.msra.mxu0 %v323
      %1435 = vmatpush.msra.mxu0 %v322
      %1436 = vmatmul.f32.gmra.mxu0 %v563
      %v1437 = vpop.f32.mrf.mxu0
      %v1438 = vadd.f32 0.0, %v1437
      %1439 = vmatmul.f32.gmra.mxu0 %v566
      %v1440 = vpop.f32.mrf.mxu0
      %v1441 = vadd.f32 0.0, %v1440
      %1442 = vmatmul.f32.gmra.mxu0 %v569
      %v1443 = vpop.f32.mrf.mxu0
      %v1444 = vadd.f32 0.0, %v1443
      %1445 = vmatmul.f32.gmra.mxu0 %v572
      %v1446 = vpop.f32.mrf.mxu0
      %v1447 = vadd.f32 0.0, %v1446
      %1448 = vmatmul.f32.gmra.mxu0 %v575
      %v1449 = vpop.f32.mrf.mxu0
      %v1450 = vadd.f32 0.0, %v1449
      %1451 = vmatmul.f32.gmra.mxu0 %v578
      %v1452 = vpop.f32.mrf.mxu0
      %v1453 = vadd.f32 0.0, %v1452
      %1454 = vmatmul.f32.gmra.mxu0 %v581
      %v1455 = vpop.f32.mrf.mxu0
      %v1456 = vadd.f32 0.0, %v1455
      %1457 = vdwg.mxu0
      %v1458 = vadd.f32 %v1400, %v1438
      %v1459 = vadd.f32 %v1403, %v1441
      %v1460 = vadd.f32 %v1406, %v1444
      %v1461 = vadd.f32 %v1409, %v1447
      %v1462 = vadd.f32 %v1412, %v1450
      %v1463 = vadd.f32 %v1415, %v1453
      %v1464 = vadd.f32 %v1418, %v1456
      %1465 = vmatpush.msra.mxu0 0.0
      %1466 = vmatpush.msra.mxu0 0.0
      %1467 = vmatpush.msra.mxu0 0.0
      %1468 = vmatpush.msra.mxu0 0.0
      %1469 = vmatpush.msra.mxu0 0.0
      %1470 = vmatpush.msra.mxu0 0.0
      %1471 = vmatpush.msra.mxu0 0.0
      %1472 = vmatpush.msra.mxu0 0.0
      %1473 = vmatpush.msra.mxu0 0.0
      %1474 = vmatpush.msra.mxu0 0.0
      %1475 = vmatpush.msra.mxu0 0.0
      %1476 = vmatpush.msra.mxu0 0.0
      %1477 = vmatpush.msra.mxu0 %v404
      %1478 = vmatpush.msra.mxu0 %v403
      %1479 = vmatpush.msra.mxu0 %v402
      %1480 = vmatpush.msra.mxu0 %v401
      %1481 = vmatmul.f32.gmra.mxu0 %v641
      %v1482 = vpop.f32.mrf.mxu0
      %v1483 = vadd.f32 0.0, %v1482
      %1484 = vmatmul.f32.gmra.mxu0 %v644
      %v1485 = vpop.f32.mrf.mxu0
      %v1486 = vadd.f32 0.0, %v1485
      %1487 = vmatmul.f32.gmra.mxu0 %v647
      %v1488 = vpop.f32.mrf.mxu0
      %v1489 = vadd.f32 0.0, %v1488
      %1490 = vmatmul.f32.gmra.mxu0 %v650
      %v1491 = vpop.f32.mrf.mxu0
      %v1492 = vadd.f32 0.0, %v1491
      %1493 = vmatmul.f32.gmra.mxu0 %v653
      %v1494 = vpop.f32.mrf.mxu0
      %v1495 = vadd.f32 0.0, %v1494
      %1496 = vmatmul.f32.gmra.mxu0 %v656
      %v1497 = vpop.f32.mrf.mxu0
      %v1498 = vadd.f32 0.0, %v1497
      %1499 = vmatmul.f32.gmra.mxu0 %v659
      %v1500 = vpop.f32.mrf.mxu0
      %v1501 = vadd.f32 0.0, %v1500
      %1502 = vdwg.mxu0
      %v1503 = vadd.f32 %v1458, %v1483
      %v1504 = vadd.f32 %v1459, %v1486
      %v1505 = vadd.f32 %v1460, %v1489
      %v1506 = vadd.f32 %v1461, %v1492
      %v1507 = vadd.f32 %v1462, %v1495
      %v1508 = vadd.f32 %v1463, %v1498
      %v1509 = vadd.f32 %v1464, %v1501
      %1510 = vmatpush.msra.mxu0 0.0
      %1511 = vmatpush.msra.mxu0 0.0
      %1512 = vmatpush.msra.mxu0 0.0
      %1513 = vmatpush.msra.mxu0 0.0
      %1514 = vmatpush.msra.mxu0 0.0
      %1515 = vmatpush.msra.mxu0 0.0
      %1516 = vmatpush.msra.mxu0 0.0
      %1517 = vmatpush.msra.mxu0 0.0
      %1518 = vmatpush.msra.mxu0 0.0
      %1519 = vmatpush.msra.mxu0 0.0
      %1520 = vmatpush.msra.mxu0 0.0
      %1521 = vmatpush.msra.mxu0 0.0
      %1522 = vmatpush.msra.mxu0 %v483
      %1523 = vmatpush.msra.mxu0 %v482
      %1524 = vmatpush.msra.mxu0 %v481
      %1525 = vmatpush.msra.mxu0 %v480
      %1526 = vmatmul.f32.gmra.mxu0 %v719
      %v1527 = vpop.f32.mrf.mxu0
      %v1528 = vadd.f32 0.0, %v1527
      %1529 = vmatmul.f32.gmra.mxu0 %v722
      %v1530 = vpop.f32.mrf.mxu0
      %v1531 = vadd.f32 0.0, %v1530
      %1532 = vmatmul.f32.gmra.mxu0 %v725
      %v1533 = vpop.f32.mrf.mxu0
      %v1534 = vadd.f32 0.0, %v1533
      %1535 = vmatmul.f32.gmra.mxu0 %v728
      %v1536 = vpop.f32.mrf.mxu0
      %v1537 = vadd.f32 0.0, %v1536
      %1538 = vmatmul.f32.gmra.mxu0 %v731
      %v1539 = vpop.f32.mrf.mxu0
      %v1540 = vadd.f32 0.0, %v1539
      %1541 = vmatmul.f32.gmra.mxu0 %v734
      %v1542 = vpop.f32.mrf.mxu0
      %v1543 = vadd.f32 0.0, %v1542
      %1544 = vmatmul.f32.gmra.mxu0 %v737
      %v1545 = vpop.f32.mrf.mxu0
      %v1546 = vadd.f32 0.0, %v1545
      %1547 = vdwg.mxu0
      %v1548 = vadd.f32 %v1503, %v1528
      %v1549 = vadd.f32 %v1504, %v1531
      %v1550 = vadd.f32 %v1505, %v1534
      %v1551 = vadd.f32 %v1506, %v1537
      %v1552 = vadd.f32 %v1507, %v1540
      %v1553 = vadd.f32 %v1508, %v1543
      %v1554 = vadd.f32 %v1509, %v1546
      %1555 = vmatpush.msra.mxu0 0.0
      %1556 = vmatpush.msra.mxu0 0.0
      %1557 = vmatpush.msra.mxu0 0.0
      %1558 = vmatpush.msra.mxu0 0.0
      %1559 = vmatpush.msra.mxu0 0.0
      %1560 = vmatpush.msra.mxu0 0.0
      %1561 = vmatpush.msra.mxu0 0.0
      %1562 = vmatpush.msra.mxu0 0.0
      %1563 = vmatpush.msra.mxu0 0.0
      %1564 = vmatpush.msra.mxu0 0.0
      %1565 = vmatpush.msra.mxu0 0.0
      %1566 = vmatpush.msra.mxu0 0.0
      %1567 = vmatpush.msra.mxu0 %v561
      %1568 = vmatpush.msra.mxu0 %v560
      %1569 = vmatpush.msra.mxu0 %v559
      %1570 = vmatpush.msra.mxu0 %v558
      %1571 = vmatmul.f32.gmra.mxu0 %v797
      %v1572 = vpop.f32.mrf.mxu0
      %v1573 = vadd.f32 0.0, %v1572
      %1574 = vmatmul.f32.gmra.mxu0 %v800
      %v1575 = vpop.f32.mrf.mxu0
      %v1576 = vadd.f32 0.0, %v1575
      %1577 = vmatmul.f32.gmra.mxu0 %v803
      %v1578 = vpop.f32.mrf.mxu0
      %v1579 = vadd.f32 0.0, %v1578
      %1580 = vmatmul.f32.gmra.mxu0 %v806
      %v1581 = vpop.f32.mrf.mxu0
      %v1582 = vadd.f32 0.0, %v1581
      %1583 = vmatmul.f32.gmra.mxu0 %v809
      %v1584 = vpop.f32.mrf.mxu0
      %v1585 = vadd.f32 0.0, %v1584
      %1586 = vmatmul.f32.gmra.mxu0 %v812
      %v1587 = vpop.f32.mrf.mxu0
      %v1588 = vadd.f32 0.0, %v1587
      %1589 = vmatmul.f32.gmra.mxu0 %v815
      %v1590 = vpop.f32.mrf.mxu0
      %v1591 = vadd.f32 0.0, %v1590
      %1592 = vdwg.mxu0
      %v1593 = vadd.f32 %v1548, %v1573
      %v1594 = vadd.f32 %v1549, %v1576
      %v1595 = vadd.f32 %v1550, %v1579
      %v1596 = vadd.f32 %v1551, %v1582
      %v1597 = vadd.f32 %v1552, %v1585
      %v1598 = vadd.f32 %v1553, %v1588
      %v1599 = vadd.f32 %v1554, %v1591
      %v1600 = vld [vmem:[%s392 + $0x8] sm:$0xff]
      %v1601 = vld [vmem:[%s392 + $0x10] sm:$0xff]
      %v1602 = vld [vmem:[%s392 + $0x18] sm:$0xff]
      %v1603 = vld [vmem:[%s392 + $0x20] sm:$0xff]
      %v1604 = vld [vmem:[%s392 + $0x28] sm:$0xff]
      %v1605 = vld [vmem:[%s392 + $0x30] sm:$0xff]
      %v1606 = vld [vmem:[%s392 + $0x38] sm:$0xff]
      %v1608 = vsel %vm195, %v1600, 0
      %v1611 = vsel %vm195, %v1601, 0
      %v1614 = vsel %vm195, %v1602, 0
      %v1617 = vsel %vm195, %v1603, 0
      %v1620 = vsel %vm195, %v1604, 0
      %v1623 = vsel %vm195, %v1605, 0
      %v1626 = vsel %vm195, %v1606, 0
      %1628 = vmatpush.msra.mxu0 0.0
      %1629 = vmatpush.msra.mxu0 0.0
      %1630 = vmatpush.msra.mxu0 0.0
      %1631 = vmatpush.msra.mxu0 0.0
      %1632 = vmatpush.msra.mxu0 0.0
      %1633 = vmatpush.msra.mxu0 0.0
      %1634 = vmatpush.msra.mxu0 0.0
      %1635 = vmatpush.msra.mxu0 0.0
      %1636 = vmatpush.msra.mxu0 0.0
      %1637 = vmatpush.msra.mxu0 0.0
      %1638 = vmatpush.msra.mxu0 0.0
      %1639 = vmatpush.msra.mxu0 0.0
      %1640 = vmatpush.msra.mxu0 %v639
      %1641 = vmatpush.msra.mxu0 %v638
      %1642 = vmatpush.msra.mxu0 %v637
      %1643 = vmatpush.msra.mxu0 %v636
      %1644 = vmatmul.f32.gmra.mxu0 %v1608
      %v1645 = vpop.f32.mrf.mxu0
      %v1646 = vadd.f32 0.0, %v1645
      %1647 = vmatmul.f32.gmra.mxu0 %v1611
      %v1648 = vpop.f32.mrf.mxu0
      %v1649 = vadd.f32 0.0, %v1648
      %1650 = vmatmul.f32.gmra.mxu0 %v1614
      %v1651 = vpop.f32.mrf.mxu0
      %v1652 = vadd.f32 0.0, %v1651
      %1653 = vmatmul.f32.gmra.mxu0 %v1617
      %v1654 = vpop.f32.mrf.mxu0
      %v1655 = vadd.f32 0.0, %v1654
      %1656 = vmatmul.f32.gmra.mxu0 %v1620
      %v1657 = vpop.f32.mrf.mxu0
      %v1658 = vadd.f32 0.0, %v1657
      %1659 = vmatmul.f32.gmra.mxu0 %v1623
      %v1660 = vpop.f32.mrf.mxu0
      %v1661 = vadd.f32 0.0, %v1660
      %1662 = vmatmul.f32.gmra.mxu0 %v1626
      %v1663 = vpop.f32.mrf.mxu0
      %v1664 = vadd.f32 0.0, %v1663
      %1665 = vdwg.mxu0
      %v1666 = vadd.f32 %v1593, %v1646
      %v1667 = vadd.f32 %v1594, %v1649
      %v1668 = vadd.f32 %v1595, %v1652
      %v1669 = vadd.f32 %v1596, %v1655
      %v1670 = vadd.f32 %v1597, %v1658
      %v1671 = vadd.f32 %v1598, %v1661
      %v1672 = vadd.f32 %v1599, %v1664
      %v1673 = vld [vmem:[%s471 + $0x8] sm:$0xff]
      %v1674 = vld [vmem:[%s471 + $0x10] sm:$0xff]
      %v1675 = vld [vmem:[%s471 + $0x18] sm:$0xff]
      %v1676 = vld [vmem:[%s471 + $0x20] sm:$0xff]
      %v1677 = vld [vmem:[%s471 + $0x28] sm:$0xff]
      %v1678 = vld [vmem:[%s471 + $0x30] sm:$0xff]
      %v1679 = vld [vmem:[%s471 + $0x38] sm:$0xff]
      %v1681 = vsel %vm195, %v1673, 0
      %v1684 = vsel %vm195, %v1674, 0
      %v1687 = vsel %vm195, %v1675, 0
      %v1690 = vsel %vm195, %v1676, 0
      %v1693 = vsel %vm195, %v1677, 0
      %v1696 = vsel %vm195, %v1678, 0
      %v1699 = vsel %vm195, %v1679, 0
      %1701 = vmatpush.msra.mxu0 0.0
      %1702 = vmatpush.msra.mxu0 0.0
      %1703 = vmatpush.msra.mxu0 0.0
      %1704 = vmatpush.msra.mxu0 0.0
      %1705 = vmatpush.msra.mxu0 0.0
      %1706 = vmatpush.msra.mxu0 0.0
      %1707 = vmatpush.msra.mxu0 0.0
      %1708 = vmatpush.msra.mxu0 0.0
      %1709 = vmatpush.msra.mxu0 0.0
      %1710 = vmatpush.msra.mxu0 0.0
      %1711 = vmatpush.msra.mxu0 0.0
      %1712 = vmatpush.msra.mxu0 0.0
      %1713 = vmatpush.msra.mxu0 %v717
      %1714 = vmatpush.msra.mxu0 %v716
      %1715 = vmatpush.msra.mxu0 %v715
      %1716 = vmatpush.msra.mxu0 %v714
      %1717 = vmatmul.f32.gmra.mxu0 %v1681
      %v1718 = vpop.f32.mrf.mxu0
      %v1719 = vadd.f32 0.0, %v1718
      %1720 = vmatmul.f32.gmra.mxu0 %v1684
      %v1721 = vpop.f32.mrf.mxu0
      %v1722 = vadd.f32 0.0, %v1721
      %1723 = vmatmul.f32.gmra.mxu0 %v1687
      %v1724 = vpop.f32.mrf.mxu0
      %v1725 = vadd.f32 0.0, %v1724
      %1726 = vmatmul.f32.gmra.mxu0 %v1690
      %v1727 = vpop.f32.mrf.mxu0
      %v1728 = vadd.f32 0.0, %v1727
      %1729 = vmatmul.f32.gmra.mxu0 %v1693
      %v1730 = vpop.f32.mrf.mxu0
      %v1731 = vadd.f32 0.0, %v1730
      %1732 = vmatmul.f32.gmra.mxu0 %v1696
      %v1733 = vpop.f32.mrf.mxu0
      %v1734 = vadd.f32 0.0, %v1733
      %1735 = vmatmul.f32.gmra.mxu0 %v1699
      %v1736 = vpop.f32.mrf.mxu0
      %v1737 = vadd.f32 0.0, %v1736
      %1738 = vdwg.mxu0
      %v1739 = vadd.f32 %v1666, %v1719
      %v1740 = vadd.f32 %v1667, %v1722
      %v1741 = vadd.f32 %v1668, %v1725
      %v1742 = vadd.f32 %v1669, %v1728
      %v1743 = vadd.f32 %v1670, %v1731
      %v1744 = vadd.f32 %v1671, %v1734
      %v1745 = vadd.f32 %v1672, %v1737
      %v1746 = vld [vmem:[%s392 + $0x9] sm:$0xff]
      %v1747 = vld [vmem:[%s392 + $0x11] sm:$0xff]
      %v1748 = vld [vmem:[%s392 + $0x19] sm:$0xff]
      %v1749 = vld [vmem:[%s392 + $0x21] sm:$0xff]
      %v1750 = vld [vmem:[%s392 + $0x29] sm:$0xff]
      %v1751 = vld [vmem:[%s392 + $0x31] sm:$0xff]
      %v1752 = vld [vmem:[%s392 + $0x39] sm:$0xff]
      %v1754 = vsel %vm195, %v1746, 0
      %v1757 = vsel %vm195, %v1747, 0
      %v1760 = vsel %vm195, %v1748, 0
      %v1763 = vsel %vm195, %v1749, 0
      %v1766 = vsel %vm195, %v1750, 0
      %v1769 = vsel %vm195, %v1751, 0
      %v1772 = vsel %vm195, %v1752, 0
      %1774 = vmatpush.msra.mxu0 0.0
      %1775 = vmatpush.msra.mxu0 0.0
      %1776 = vmatpush.msra.mxu0 0.0
      %1777 = vmatpush.msra.mxu0 0.0
      %1778 = vmatpush.msra.mxu0 0.0
      %1779 = vmatpush.msra.mxu0 0.0
      %1780 = vmatpush.msra.mxu0 0.0
      %1781 = vmatpush.msra.mxu0 0.0
      %1782 = vmatpush.msra.mxu0 0.0
      %1783 = vmatpush.msra.mxu0 0.0
      %1784 = vmatpush.msra.mxu0 0.0
      %1785 = vmatpush.msra.mxu0 0.0
      %1786 = vmatpush.msra.mxu0 %v795
      %1787 = vmatpush.msra.mxu0 %v794
      %1788 = vmatpush.msra.mxu0 %v793
      %1789 = vmatpush.msra.mxu0 %v792
      %1790 = vmatmul.f32.gmra.mxu0 %v1754
      %v1791 = vpop.f32.mrf.mxu0
      %v1792 = vadd.f32 0.0, %v1791
      %1793 = vmatmul.f32.gmra.mxu0 %v1757
      %v1794 = vpop.f32.mrf.mxu0
      %v1795 = vadd.f32 0.0, %v1794
      %1796 = vmatmul.f32.gmra.mxu0 %v1760
      %v1797 = vpop.f32.mrf.mxu0
      %v1798 = vadd.f32 0.0, %v1797
      %1799 = vmatmul.f32.gmra.mxu0 %v1763
      %v1800 = vpop.f32.mrf.mxu0
      %v1801 = vadd.f32 0.0, %v1800
      %1802 = vmatmul.f32.gmra.mxu0 %v1766
      %v1803 = vpop.f32.mrf.mxu0
      %v1804 = vadd.f32 0.0, %v1803
      %1805 = vmatmul.f32.gmra.mxu0 %v1769
      %v1806 = vpop.f32.mrf.mxu0
      %v1807 = vadd.f32 0.0, %v1806
      %1808 = vmatmul.f32.gmra.mxu0 %v1772
      %v1809 = vpop.f32.mrf.mxu0
      %v1810 = vadd.f32 0.0, %v1809
      %1811 = vdwg.mxu0
      %v1812 = vadd.f32 %v1739, %v1792
      %v1813 = vadd.f32 %v1740, %v1795
      %v1814 = vadd.f32 %v1741, %v1798
      %v1815 = vadd.f32 %v1742, %v1801
      %v1816 = vadd.f32 %v1743, %v1804
      %v1817 = vadd.f32 %v1744, %v1807
      %v1818 = vadd.f32 %v1745, %v1810
      %v1819 = vmax.f32 %v1337, %v1812
      %v1820 = vmax.f32 %v1338, %v1813
      %v1821 = vmax.f32 %v1339, %v1814
      %v1822 = vmax.f32 %v1340, %v1815
      %v1823 = vmax.f32 %v1341, %v1816
      %v1824 = vmax.f32 %v1342, %v1817
      %v1825 = vmax.f32 %v1343, %v1818
      %1826 = vmatpush.msra.mxu0 0.0
      %1827 = vmatpush.msra.mxu0 0.0
      %1828 = vmatpush.msra.mxu0 0.0
      %1829 = vmatpush.msra.mxu0 0.0
      %1830 = vmatpush.msra.mxu0 0.0
      %1831 = vmatpush.msra.mxu0 0.0
      %1832 = vmatpush.msra.mxu0 0.0
      %1833 = vmatpush.msra.mxu0 0.0
      %1834 = vmatpush.msra.mxu0 0.0
      %1835 = vmatpush.msra.mxu0 0.0
      %1836 = vmatpush.msra.mxu0 0.0
      %1837 = vmatpush.msra.mxu0 0.0
      %1838 = vmatpush.msra.mxu0 %v194
      %1839 = vmatpush.msra.mxu0 %v193
      %1840 = vmatpush.msra.mxu0 %v192
      %1841 = vmatpush.msra.mxu0 %v191
      %1842 = vmatmul.f32.gmra.mxu0 %v563
      %v1843 = vpop.f32.mrf.mxu0
      %v1844 = vadd.f32 0.0, %v1843
      %1845 = vmatmul.f32.gmra.mxu0 %v566
      %v1846 = vpop.f32.mrf.mxu0
      %v1847 = vadd.f32 0.0, %v1846
      %1848 = vmatmul.f32.gmra.mxu0 %v569
      %v1849 = vpop.f32.mrf.mxu0
      %v1850 = vadd.f32 0.0, %v1849
      %1851 = vmatmul.f32.gmra.mxu0 %v572
      %v1852 = vpop.f32.mrf.mxu0
      %v1853 = vadd.f32 0.0, %v1852
      %1854 = vmatmul.f32.gmra.mxu0 %v575
      %v1855 = vpop.f32.mrf.mxu0
      %v1856 = vadd.f32 0.0, %v1855
      %1857 = vmatmul.f32.gmra.mxu0 %v578
      %v1858 = vpop.f32.mrf.mxu0
      %v1859 = vadd.f32 0.0, %v1858
      %1860 = vmatmul.f32.gmra.mxu0 %v581
      %v1861 = vpop.f32.mrf.mxu0
      %v1862 = vadd.f32 0.0, %v1861
      %1863 = vdwg.mxu0
      %1864 = vmatpush.msra.mxu0 0.0
      %1865 = vmatpush.msra.mxu0 0.0
      %1866 = vmatpush.msra.mxu0 0.0
      %1867 = vmatpush.msra.mxu0 0.0
      %1868 = vmatpush.msra.mxu0 0.0
      %1869 = vmatpush.msra.mxu0 0.0
      %1870 = vmatpush.msra.mxu0 0.0
      %1871 = vmatpush.msra.mxu0 0.0
      %1872 = vmatpush.msra.mxu0 0.0
      %1873 = vmatpush.msra.mxu0 0.0
      %1874 = vmatpush.msra.mxu0 0.0
      %1875 = vmatpush.msra.mxu0 0.0
      %1876 = vmatpush.msra.mxu0 %v181
      %1877 = vmatpush.msra.mxu0 %v180
      %1878 = vmatpush.msra.mxu0 %v179
      %1879 = vmatpush.msra.mxu0 %v178
      %1880 = vmatmul.f32.gmra.mxu0 %v485
      %v1881 = vpop.f32.mrf.mxu0
      %v1882 = vadd.f32 %v1844, %v1881
      %1883 = vmatmul.f32.gmra.mxu0 %v488
      %v1884 = vpop.f32.mrf.mxu0
      %v1885 = vadd.f32 %v1847, %v1884
      %1886 = vmatmul.f32.gmra.mxu0 %v491
      %v1887 = vpop.f32.mrf.mxu0
      %v1888 = vadd.f32 %v1850, %v1887
      %1889 = vmatmul.f32.gmra.mxu0 %v494
      %v1890 = vpop.f32.mrf.mxu0
      %v1891 = vadd.f32 %v1853, %v1890
      %1892 = vmatmul.f32.gmra.mxu0 %v497
      %v1893 = vpop.f32.mrf.mxu0
      %v1894 = vadd.f32 %v1856, %v1893
      %1895 = vmatmul.f32.gmra.mxu0 %v500
      %v1896 = vpop.f32.mrf.mxu0
      %v1897 = vadd.f32 %v1859, %v1896
      %1898 = vmatmul.f32.gmra.mxu0 %v503
      %v1899 = vpop.f32.mrf.mxu0
      %v1900 = vadd.f32 %v1862, %v1899
      %1901 = vdwg.mxu0
      %1902 = vmatpush.msra.mxu0 0.0
      %1903 = vmatpush.msra.mxu0 0.0
      %1904 = vmatpush.msra.mxu0 0.0
      %1905 = vmatpush.msra.mxu0 0.0
      %1906 = vmatpush.msra.mxu0 0.0
      %1907 = vmatpush.msra.mxu0 0.0
      %1908 = vmatpush.msra.mxu0 0.0
      %1909 = vmatpush.msra.mxu0 0.0
      %1910 = vmatpush.msra.mxu0 0.0
      %1911 = vmatpush.msra.mxu0 0.0
      %1912 = vmatpush.msra.mxu0 0.0
      %1913 = vmatpush.msra.mxu0 0.0
      %1914 = vmatpush.msra.mxu0 %v325
      %1915 = vmatpush.msra.mxu0 %v324
      %1916 = vmatpush.msra.mxu0 %v323
      %1917 = vmatpush.msra.mxu0 %v322
      %1918 = vmatmul.f32.gmra.mxu0 %v1109
      %v1919 = vpop.f32.mrf.mxu0
      %v1920 = vadd.f32 0.0, %v1919
      %1921 = vmatmul.f32.gmra.mxu0 %v1112
      %v1922 = vpop.f32.mrf.mxu0
      %v1923 = vadd.f32 0.0, %v1922
      %1924 = vmatmul.f32.gmra.mxu0 %v1115
      %v1925 = vpop.f32.mrf.mxu0
      %v1926 = vadd.f32 0.0, %v1925
      %1927 = vmatmul.f32.gmra.mxu0 %v1118
      %v1928 = vpop.f32.mrf.mxu0
      %v1929 = vadd.f32 0.0, %v1928
      %1930 = vmatmul.f32.gmra.mxu0 %v1121
      %v1931 = vpop.f32.mrf.mxu0
      %v1932 = vadd.f32 0.0, %v1931
      %1933 = vmatmul.f32.gmra.mxu0 %v1124
      %v1934 = vpop.f32.mrf.mxu0
      %v1935 = vadd.f32 0.0, %v1934
      %1936 = vmatmul.f32.gmra.mxu0 %v1127
      %v1937 = vpop.f32.mrf.mxu0
      %v1938 = vadd.f32 0.0, %v1937
      %1939 = vdwg.mxu0
      %v1940 = vadd.f32 %v1882, %v1920
      %v1941 = vadd.f32 %v1885, %v1923
      %v1942 = vadd.f32 %v1888, %v1926
      %v1943 = vadd.f32 %v1891, %v1929
      %v1944 = vadd.f32 %v1894, %v1932
      %v1945 = vadd.f32 %v1897, %v1935
      %v1946 = vadd.f32 %v1900, %v1938
      %1947 = vmatpush.msra.mxu0 0.0
      %1948 = vmatpush.msra.mxu0 0.0
      %1949 = vmatpush.msra.mxu0 0.0
      %1950 = vmatpush.msra.mxu0 0.0
      %1951 = vmatpush.msra.mxu0 0.0
      %1952 = vmatpush.msra.mxu0 0.0
      %1953 = vmatpush.msra.mxu0 0.0
      %1954 = vmatpush.msra.mxu0 0.0
      %1955 = vmatpush.msra.mxu0 0.0
      %1956 = vmatpush.msra.mxu0 0.0
      %1957 = vmatpush.msra.mxu0 0.0
      %1958 = vmatpush.msra.mxu0 0.0
      %1959 = vmatpush.msra.mxu0 %v404
      %1960 = vmatpush.msra.mxu0 %v403
      %1961 = vmatpush.msra.mxu0 %v402
      %1962 = vmatpush.msra.mxu0 %v401
      %1963 = vmatmul.f32.gmra.mxu0 %v719
      %v1964 = vpop.f32.mrf.mxu0
      %v1965 = vadd.f32 0.0, %v1964
      %1966 = vmatmul.f32.gmra.mxu0 %v722
      %v1967 = vpop.f32.mrf.mxu0
      %v1968 = vadd.f32 0.0, %v1967
      %1969 = vmatmul.f32.gmra.mxu0 %v725
      %v1970 = vpop.f32.mrf.mxu0
      %v1971 = vadd.f32 0.0, %v1970
      %1972 = vmatmul.f32.gmra.mxu0 %v728
      %v1973 = vpop.f32.mrf.mxu0
      %v1974 = vadd.f32 0.0, %v1973
      %1975 = vmatmul.f32.gmra.mxu0 %v731
      %v1976 = vpop.f32.mrf.mxu0
      %v1977 = vadd.f32 0.0, %v1976
      %1978 = vmatmul.f32.gmra.mxu0 %v734
      %v1979 = vpop.f32.mrf.mxu0
      %v1980 = vadd.f32 0.0, %v1979
      %1981 = vmatmul.f32.gmra.mxu0 %v737
      %v1982 = vpop.f32.mrf.mxu0
      %v1983 = vadd.f32 0.0, %v1982
      %1984 = vdwg.mxu0
      %v1985 = vadd.f32 %v1940, %v1965
      %v1986 = vadd.f32 %v1941, %v1968
      %v1987 = vadd.f32 %v1942, %v1971
      %v1988 = vadd.f32 %v1943, %v1974
      %v1989 = vadd.f32 %v1944, %v1977
      %v1990 = vadd.f32 %v1945, %v1980
      %v1991 = vadd.f32 %v1946, %v1983
      %1992 = vmatpush.msra.mxu0 0.0
      %1993 = vmatpush.msra.mxu0 0.0
      %1994 = vmatpush.msra.mxu0 0.0
      %1995 = vmatpush.msra.mxu0 0.0
      %1996 = vmatpush.msra.mxu0 0.0
      %1997 = vmatpush.msra.mxu0 0.0
      %1998 = vmatpush.msra.mxu0 0.0
      %1999 = vmatpush.msra.mxu0 0.0
      %2000 = vmatpush.msra.mxu0 0.0
      %2001 = vmatpush.msra.mxu0 0.0
      %2002 = vmatpush.msra.mxu0 0.0
      %2003 = vmatpush.msra.mxu0 0.0
      %2004 = vmatpush.msra.mxu0 %v483
      %2005 = vmatpush.msra.mxu0 %v482
      %2006 = vmatpush.msra.mxu0 %v481
      %2007 = vmatpush.msra.mxu0 %v480
      %2008 = vmatmul.f32.gmra.mxu0 %v797
      %v2009 = vpop.f32.mrf.mxu0
      %v2010 = vadd.f32 0.0, %v2009
      %2011 = vmatmul.f32.gmra.mxu0 %v800
      %v2012 = vpop.f32.mrf.mxu0
      %v2013 = vadd.f32 0.0, %v2012
      %2014 = vmatmul.f32.gmra.mxu0 %v803
      %v2015 = vpop.f32.mrf.mxu0
      %v2016 = vadd.f32 0.0, %v2015
      %2017 = vmatmul.f32.gmra.mxu0 %v806
      %v2018 = vpop.f32.mrf.mxu0
      %v2019 = vadd.f32 0.0, %v2018
      %2020 = vmatmul.f32.gmra.mxu0 %v809
      %v2021 = vpop.f32.mrf.mxu0
      %v2022 = vadd.f32 0.0, %v2021
      %2023 = vmatmul.f32.gmra.mxu0 %v812
      %v2024 = vpop.f32.mrf.mxu0
      %v2025 = vadd.f32 0.0, %v2024
      %2026 = vmatmul.f32.gmra.mxu0 %v815
      %v2027 = vpop.f32.mrf.mxu0
      %v2028 = vadd.f32 0.0, %v2027
      %2029 = vdwg.mxu0
      %v2030 = vadd.f32 %v1985, %v2010
      %v2031 = vadd.f32 %v1986, %v2013
      %v2032 = vadd.f32 %v1987, %v2016
      %v2033 = vadd.f32 %v1988, %v2019
      %v2034 = vadd.f32 %v1989, %v2022
      %v2035 = vadd.f32 %v1990, %v2025
      %v2036 = vadd.f32 %v1991, %v2028
      %2037 = vmatpush.msra.mxu0 0.0
      %2038 = vmatpush.msra.mxu0 0.0
      %2039 = vmatpush.msra.mxu0 0.0
      %2040 = vmatpush.msra.mxu0 0.0
      %2041 = vmatpush.msra.mxu0 0.0
      %2042 = vmatpush.msra.mxu0 0.0
      %2043 = vmatpush.msra.mxu0 0.0
      %2044 = vmatpush.msra.mxu0 0.0
      %2045 = vmatpush.msra.mxu0 0.0
      %2046 = vmatpush.msra.mxu0 0.0
      %2047 = vmatpush.msra.mxu0 0.0
      %2048 = vmatpush.msra.mxu0 0.0
      %2049 = vmatpush.msra.mxu0 %v561
      %2050 = vmatpush.msra.mxu0 %v560
      %2051 = vmatpush.msra.mxu0 %v559
      %2052 = vmatpush.msra.mxu0 %v558
      %2053 = vmatmul.f32.gmra.mxu0 %v1272
      %v2054 = vpop.f32.mrf.mxu0
      %v2055 = vadd.f32 0.0, %v2054
      %2056 = vmatmul.f32.gmra.mxu0 %v1275
      %v2057 = vpop.f32.mrf.mxu0
      %v2058 = vadd.f32 0.0, %v2057
      %2059 = vmatmul.f32.gmra.mxu0 %v1278
      %v2060 = vpop.f32.mrf.mxu0
      %v2061 = vadd.f32 0.0, %v2060
      %2062 = vmatmul.f32.gmra.mxu0 %v1281
      %v2063 = vpop.f32.mrf.mxu0
      %v2064 = vadd.f32 0.0, %v2063
      %2065 = vmatmul.f32.gmra.mxu0 %v1284
      %v2066 = vpop.f32.mrf.mxu0
      %v2067 = vadd.f32 0.0, %v2066
      %2068 = vmatmul.f32.gmra.mxu0 %v1287
      %v2069 = vpop.f32.mrf.mxu0
      %v2070 = vadd.f32 0.0, %v2069
      %2071 = vmatmul.f32.gmra.mxu0 %v1290
      %v2072 = vpop.f32.mrf.mxu0
      %v2073 = vadd.f32 0.0, %v2072
      %2074 = vdwg.mxu0
      %v2075 = vadd.f32 %v2030, %v2055
      %v2076 = vadd.f32 %v2031, %v2058
      %v2077 = vadd.f32 %v2032, %v2061
      %v2078 = vadd.f32 %v2033, %v2064
      %v2079 = vadd.f32 %v2034, %v2067
      %v2080 = vadd.f32 %v2035, %v2070
      %v2081 = vadd.f32 %v2036, %v2073
      %2082 = vmatpush.msra.mxu0 0.0
      %2083 = vmatpush.msra.mxu0 0.0
      %2084 = vmatpush.msra.mxu0 0.0
      %2085 = vmatpush.msra.mxu0 0.0
      %2086 = vmatpush.msra.mxu0 0.0
      %2087 = vmatpush.msra.mxu0 0.0
      %2088 = vmatpush.msra.mxu0 0.0
      %2089 = vmatpush.msra.mxu0 0.0
      %2090 = vmatpush.msra.mxu0 0.0
      %2091 = vmatpush.msra.mxu0 0.0
      %2092 = vmatpush.msra.mxu0 0.0
      %2093 = vmatpush.msra.mxu0 0.0
      %2094 = vmatpush.msra.mxu0 %v639
      %2095 = vmatpush.msra.mxu0 %v638
      %2096 = vmatpush.msra.mxu0 %v637
      %2097 = vmatpush.msra.mxu0 %v636
      %2098 = vmatmul.f32.gmra.mxu0 %v1681
      %v2099 = vpop.f32.mrf.mxu0
      %v2100 = vadd.f32 0.0, %v2099
      %2101 = vmatmul.f32.gmra.mxu0 %v1684
      %v2102 = vpop.f32.mrf.mxu0
      %v2103 = vadd.f32 0.0, %v2102
      %2104 = vmatmul.f32.gmra.mxu0 %v1687
      %v2105 = vpop.f32.mrf.mxu0
      %v2106 = vadd.f32 0.0, %v2105
      %2107 = vmatmul.f32.gmra.mxu0 %v1690
      %v2108 = vpop.f32.mrf.mxu0
      %v2109 = vadd.f32 0.0, %v2108
      %2110 = vmatmul.f32.gmra.mxu0 %v1693
      %v2111 = vpop.f32.mrf.mxu0
      %v2112 = vadd.f32 0.0, %v2111
      %2113 = vmatmul.f32.gmra.mxu0 %v1696
      %v2114 = vpop.f32.mrf.mxu0
      %v2115 = vadd.f32 0.0, %v2114
      %2116 = vmatmul.f32.gmra.mxu0 %v1699
      %v2117 = vpop.f32.mrf.mxu0
      %v2118 = vadd.f32 0.0, %v2117
      %2119 = vdwg.mxu0
      %v2120 = vadd.f32 %v2075, %v2100
      %v2121 = vadd.f32 %v2076, %v2103
      %v2122 = vadd.f32 %v2077, %v2106
      %v2123 = vadd.f32 %v2078, %v2109
      %v2124 = vadd.f32 %v2079, %v2112
      %v2125 = vadd.f32 %v2080, %v2115
      %v2126 = vadd.f32 %v2081, %v2118
      %2127 = vmatpush.msra.mxu0 0.0
      %2128 = vmatpush.msra.mxu0 0.0
      %2129 = vmatpush.msra.mxu0 0.0
      %2130 = vmatpush.msra.mxu0 0.0
      %2131 = vmatpush.msra.mxu0 0.0
      %2132 = vmatpush.msra.mxu0 0.0
      %2133 = vmatpush.msra.mxu0 0.0
      %2134 = vmatpush.msra.mxu0 0.0
      %2135 = vmatpush.msra.mxu0 0.0
      %2136 = vmatpush.msra.mxu0 0.0
      %2137 = vmatpush.msra.mxu0 0.0
      %2138 = vmatpush.msra.mxu0 0.0
      %2139 = vmatpush.msra.mxu0 %v717
      %2140 = vmatpush.msra.mxu0 %v716
      %2141 = vmatpush.msra.mxu0 %v715
      %2142 = vmatpush.msra.mxu0 %v714
      %2143 = vmatmul.f32.gmra.mxu0 %v1754
      %v2144 = vpop.f32.mrf.mxu0
      %v2145 = vadd.f32 0.0, %v2144
      %2146 = vmatmul.f32.gmra.mxu0 %v1757
      %v2147 = vpop.f32.mrf.mxu0
      %v2148 = vadd.f32 0.0, %v2147
      %2149 = vmatmul.f32.gmra.mxu0 %v1760
      %v2150 = vpop.f32.mrf.mxu0
      %v2151 = vadd.f32 0.0, %v2150
      %2152 = vmatmul.f32.gmra.mxu0 %v1763
      %v2153 = vpop.f32.mrf.mxu0
      %v2154 = vadd.f32 0.0, %v2153
      %2155 = vmatmul.f32.gmra.mxu0 %v1766
      %v2156 = vpop.f32.mrf.mxu0
      %v2157 = vadd.f32 0.0, %v2156
      %2158 = vmatmul.f32.gmra.mxu0 %v1769
      %v2159 = vpop.f32.mrf.mxu0
      %v2160 = vadd.f32 0.0, %v2159
      %2161 = vmatmul.f32.gmra.mxu0 %v1772
      %v2162 = vpop.f32.mrf.mxu0
      %v2163 = vadd.f32 0.0, %v2162
      %2164 = vdwg.mxu0
      %v2165 = vadd.f32 %v2120, %v2145
      %v2166 = vadd.f32 %v2121, %v2148
      %v2167 = vadd.f32 %v2122, %v2151
      %v2168 = vadd.f32 %v2123, %v2154
      %v2169 = vadd.f32 %v2124, %v2157
      %v2170 = vadd.f32 %v2125, %v2160
      %v2171 = vadd.f32 %v2126, %v2163
      %v2172 = vld [vmem:[%s471 + $0x9] sm:$0xff]
      %v2173 = vld [vmem:[%s471 + $0x11] sm:$0xff]
      %v2174 = vld [vmem:[%s471 + $0x19] sm:$0xff]
      %v2175 = vld [vmem:[%s471 + $0x21] sm:$0xff]
      %v2176 = vld [vmem:[%s471 + $0x29] sm:$0xff]
      %v2177 = vld [vmem:[%s471 + $0x31] sm:$0xff]
      %v2178 = vld [vmem:[%s471 + $0x39] sm:$0xff]
      %v2180 = vsel %vm195, %v2172, 0
      %v2183 = vsel %vm195, %v2173, 0
      %v2186 = vsel %vm195, %v2174, 0
      %v2189 = vsel %vm195, %v2175, 0
      %v2192 = vsel %vm195, %v2176, 0
      %v2195 = vsel %vm195, %v2177, 0
      %v2198 = vsel %vm195, %v2178, 0
      %2200 = vmatpush.msra.mxu0 0.0
      %2201 = vmatpush.msra.mxu0 0.0
      %2202 = vmatpush.msra.mxu0 0.0
      %2203 = vmatpush.msra.mxu0 0.0
      %2204 = vmatpush.msra.mxu0 0.0
      %2205 = vmatpush.msra.mxu0 0.0
      %2206 = vmatpush.msra.mxu0 0.0
      %2207 = vmatpush.msra.mxu0 0.0
      %2208 = vmatpush.msra.mxu0 0.0
      %2209 = vmatpush.msra.mxu0 0.0
      %2210 = vmatpush.msra.mxu0 0.0
      %2211 = vmatpush.msra.mxu0 0.0
      %2212 = vmatpush.msra.mxu0 %v795
      %2213 = vmatpush.msra.mxu0 %v794
      %2214 = vmatpush.msra.mxu0 %v793
      %2215 = vmatpush.msra.mxu0 %v792
      %2216 = vmatmul.f32.gmra.mxu0 %v2180
      %v2217 = vpop.f32.mrf.mxu0
      %v2218 = vadd.f32 0.0, %v2217
      %2219 = vmatmul.f32.gmra.mxu0 %v2183
      %v2220 = vpop.f32.mrf.mxu0
      %v2221 = vadd.f32 0.0, %v2220
      %2222 = vmatmul.f32.gmra.mxu0 %v2186
      %v2223 = vpop.f32.mrf.mxu0
      %v2224 = vadd.f32 0.0, %v2223
      %2225 = vmatmul.f32.gmra.mxu0 %v2189
      %v2226 = vpop.f32.mrf.mxu0
      %v2227 = vadd.f32 0.0, %v2226
      %2228 = vmatmul.f32.gmra.mxu0 %v2192
      %v2229 = vpop.f32.mrf.mxu0
      %v2230 = vadd.f32 0.0, %v2229
      %2231 = vmatmul.f32.gmra.mxu0 %v2195
      %v2232 = vpop.f32.mrf.mxu0
      %v2233 = vadd.f32 0.0, %v2232
      %2234 = vmatmul.f32.gmra.mxu0 %v2198
      %v2235 = vpop.f32.mrf.mxu0
      %v2236 = vadd.f32 0.0, %v2235
      %2237 = vdwg.mxu0
      %v2238 = vadd.f32 %v2165, %v2218
      %v2239 = vadd.f32 %v2166, %v2221
      %v2240 = vadd.f32 %v2167, %v2224
      %v2241 = vadd.f32 %v2168, %v2227
      %v2242 = vadd.f32 %v2169, %v2230
      %v2243 = vadd.f32 %v2170, %v2233
      %v2244 = vadd.f32 %v2171, %v2236
      %v2245 = vmax.f32 %v1819, %v2238
      %v2246 = vmax.f32 %v1820, %v2239
      %v2247 = vmax.f32 %v1821, %v2240
      %v2248 = vmax.f32 %v1822, %v2241
      %v2249 = vmax.f32 %v1823, %v2242
      %v2250 = vmax.f32 %v1824, %v2243
      %v2251 = vmax.f32 %v1825, %v2244
      %v2252 = vld [vmem:[%s2] sm:$0x1]
      %v2254 = vperm.slane %v2252, 0
      %v2256 = vadd.f32 %v2245, %v2254
      %v2257 = vadd.f32 %v2246, %v2254
      %v2258 = vadd.f32 %v2247, %v2254
      %v2259 = vadd.f32 %v2248, %v2254
      %v2260 = vadd.f32 %v2249, %v2254
      %v2261 = vadd.f32 %v2250, %v2254
      %v2262 = vadd.f32 %v2251, %v2254
      %v2263 = vmax.f32 %v2256, 0.0
      %v2264 = vmax.f32 %v2257, 0.0
      %v2265 = vmax.f32 %v2258, 0.0
      %v2266 = vmax.f32 %v2259, 0.0
      %v2267 = vmax.f32 %v2260, 0.0
      %v2268 = vmax.f32 %v2261, 0.0
      %v2269 = vmax.f32 %v2262, 0.0
      %vm2270 = vcmask 523264
      %2271 = vst.msk [vmem:[%s170] sm:$0xff] %vm2270, %v2263
      %2272 = vst.msk [vmem:[%s170 + $0x8] sm:$0xff] %vm2270, %v2264
      %2273 = vst.msk [vmem:[%s170 + $0x10] sm:$0xff] %vm2270, %v2265
      %2274 = vst.msk [vmem:[%s170 + $0x18] sm:$0xff] %vm2270, %v2266
      %2275 = vst.msk [vmem:[%s170 + $0x20] sm:$0xff] %vm2270, %v2267
      %2276 = vst.msk [vmem:[%s170 + $0x28] sm:$0xff] %vm2270, %v2268
      %2277 = vst.msk [vmem:[%s170 + $0x30] sm:$0xff] %vm2270, %v2269
      %p2278 = scmp.lt.s32.totalorder %s14, 1
      %s2279 = scalar_select %p2278, %s14, 1
      %s2280 = smul.addr %s2279, 7
      %s2281 = smul.addr %s2280, 8
      %s2282 = scalar_lea.vmem %s3, %s2281
      // Predicated region
      $region33: #{simple_cnn_forward.5} parent=31 // pred_check
        %p2283 = pneg %p100
      $region34: #{simple_cnn_forward.5} parent=31 // pred_check_branch
        %2285 = sbr.rel (%p2283) target = $region36
      $region35: #{simple_cnn_forward.5} parent=31 // pred_region
        _
      $region36: #{simple_cnn_forward.5} parent=31 // pred_fallthru
        _
    $region32: #{simple_cnn_forward.5} parent=5 // pred_fallthru
      _
    %p2286 = scmp.le.s32.totalorder 2, %s9
    // Predicated region
    $region37: #{simple_cnn_forward.5} parent=5 // pred_check
      %p2287 = pneg %p2286
    $region38: #{simple_cnn_forward.5} parent=5 // pred_check_branch
      %2289 = sbr.rel (%p2287) target = $region40
    $region39: #{simple_cnn_forward.5} parent=5 // pred_region
      %s2290 = ssub.s32 %s9, 2
      // Predicated region
      $region41: #{simple_cnn_forward.5} parent=39 // pred_check
        %p2291 = pneg %p106
      $region42: #{simple_cnn_forward.5} parent=39 // pred_check_branch
        %2293 = sbr.rel (%p2291) target = $region44
      $region43: #{simple_cnn_forward.5} parent=39 // pred_region
        %p2294 = scmp.lt.s32.totalorder %s15, 1
        %s2295 = scalar_select %p2294, %s15, 1
        %s2296 = smul.addr %s2295, 7
        %s2297 = smul.addr %s2296, 8
        %s2298 = scalar_lea.vmem %s3, %s2297
      $region44: #{simple_cnn_forward.5} parent=39 // pred_fallthru
        _
    $region40: #{simple_cnn_forward.5} parent=5 // pred_fallthru
      _
  $region6: #{simple_cnn_forward.5} parent=0 // loop_footer
    %s13 = sadd.s32 1, %s9
  $region7: #{simple_cnn_forward.5} parent=0 // loop_footer_branch
    %8 = sbr.rel target = $region3
  $region8: #{simple_cnn_forward.5} parent=0 // loop_exit
    _

// kernel: simple_cnn_forward.6
$region0: #{simple_cnn_forward.6}
  #allocation0 [shape = 'u32[]', space=smem, size = 0x4, offset = 0x4, fixed_abs, tag = 'smem constant byte address 0x4 - core index']
  #allocation1 [shape = 'u32[72,128]{1,0:T(1,128)}', space=vmem, size = 0x9000, scoped, tag = 'internal scratch']
  %s0 = inlined_call_operand.vmem [shape: f32[2,3584], index: 0, kind: input, shape index: {}]
  %s1 = inlined_call_operand.vmem [shape: f32[3584,128], index: 1, kind: input, shape index: {}]
  %s2 = inlined_call_operand.vmem [shape: f32[1,128], index: 2, kind: input, shape index: {}]
  %s3 = inlined_call_operand.vmem [shape: f32[2,128], index: 3, kind: output, shape index: {}]
  %s4 = sld [smem:[#allocation0]]
  $region22: #{simple_cnn_forward.6} parent=0
    _
  %s6 = ssub.s32 1, %s4
  %s7 = scalar_select 0, %s6, %s4
  // Predicated region
  $region2: #{simple_cnn_forward.6} parent=0 // pred_check
    _
  $region3: #{simple_cnn_forward.6} parent=0 // pred_check_branch
    %9 = sbr.rel (0) target = $region5
  $region4: #{simple_cnn_forward.6} parent=0 // pred_region
    _
  $region5: #{simple_cnn_forward.6} parent=0 // pred_fallthru
    _
  // Predicated region
  $region6: #{simple_cnn_forward.6} parent=0 // pred_check
    _
  $region7: #{simple_cnn_forward.6} parent=0 // pred_check_branch
    %11 = sbr.rel (0) target = $region9
  $region8: #{simple_cnn_forward.6} parent=0 // pred_region
    _
  $region9: #{simple_cnn_forward.6} parent=0 // pred_fallthru
    _
  // Predicated region
  $region10: #{simple_cnn_forward.6} parent=0 // pred_check
    _
  $region11: #{simple_cnn_forward.6} parent=0 // pred_check_branch
    %13 = sbr.rel (0) target = $region13
  $region12: #{simple_cnn_forward.6} parent=0 // pred_region
    _
  $region13: #{simple_cnn_forward.6} parent=0 // pred_fallthru
    _
  %v14 = vld [vmem:[%s0] sm:$0xff]
  %v15 = vld [vmem:[%s0 + $0x8] sm:$0xff]
  %v16 = vld [vmem:[%s0 + $0x10] sm:$0xff]
  %v17 = vld [vmem:[%s0 + $0x18] sm:$0xff]
  %v18 = vld [vmem:[%s0 + $0x20] sm:$0xff]
  %v19 = vld [vmem:[%s0 + $0x28] sm:$0xff]
  %v20 = vld [vmem:[%s0 + $0x30] sm:$0xff]
  %v21 = vld [vmem:[%s1] sm:$0xff]
  %v22 = vld [vmem:[%s1 + $0x8] sm:$0xff]
  %v23 = vld [vmem:[%s1 + $0x10] sm:$0xff]
  %v24 = vld [vmem:[%s1 + $0x18] sm:$0xff]
  %v25 = vld [vmem:[%s1 + $0x20] sm:$0xff]
  %v26 = vld [vmem:[%s1 + $0x28] sm:$0xff]
  %v27 = vld [vmem:[%s1 + $0x30] sm:$0xff]
  %v28 = vld [vmem:[%s1 + $0x38] sm:$0xff]
  %v29 = vld [vmem:[%s1 + $0x40] sm:$0xff]
  %v30 = vld [vmem:[%s1 + $0x48] sm:$0xff]
  %v31 = vld [vmem:[%s1 + $0x50] sm:$0xff]
  %v32 = vld [vmem:[%s1 + $0x58] sm:$0xff]
  %v33 = vld [vmem:[%s1 + $0x60] sm:$0xff]
  %v34 = vld [vmem:[%s1 + $0x68] sm:$0xff]
  %v35 = vld [vmem:[%s1 + $0x70] sm:$0xff]
  %v36 = vld [vmem:[%s1 + $0x78] sm:$0xff]
  %v37 = vld [vmem:[%s1 + $0x80] sm:$0xff]
  %v38 = vld [vmem:[%s1 + $0x88] sm:$0xff]
  %v39 = vld [vmem:[%s1 + $0x90] sm:$0xff]
  %v40 = vld [vmem:[%s1 + $0x98] sm:$0xff]
  %v41 = vld [vmem:[%s1 + $0xa0] sm:$0xff]
  %v42 = vld [vmem:[%s1 + $0xa8] sm:$0xff]
  %v43 = vld [vmem:[%s1 + $0xb0] sm:$0xff]
  %v44 = vld [vmem:[%s1 + $0xb8] sm:$0xff]
  %v45 = vld [vmem:[%s1 + $0xc0] sm:$0xff]
  %v46 = vld [vmem:[%s1 + $0xc8] sm:$0xff]
  %v47 = vld [vmem:[%s1 + $0xd0] sm:$0xff]
  %v48 = vld [vmem:[%s1 + $0xd8] sm:$0xff]
  %v49 = vld [vmem:[%s1 + $0xe0] sm:$0xff]
  %v50 = vld [vmem:[%s1 + $0xe8] sm:$0xff]
  %v51 = vld [vmem:[%s1 + $0xf0] sm:$0xff]
  %v52 = vld [vmem:[%s1 + $0xf8] sm:$0xff]
  %v53 = vld [vmem:[%s1 + $0x100] sm:$0xff]
  %v54 = vld [vmem:[%s1 + $0x108] sm:$0xff]
  %v55 = vld [vmem:[%s1 + $0x110] sm:$0xff]
  %v56 = vld [vmem:[%s1 + $0x118] sm:$0xff]
  %v57 = vld [vmem:[%s1 + $0x120] sm:$0xff]
  %v58 = vld [vmem:[%s1 + $0x128] sm:$0xff]
  %v59 = vld [vmem:[%s1 + $0x130] sm:$0xff]
  %v60 = vld [vmem:[%s1 + $0x138] sm:$0xff]
  %v61 = vld [vmem:[%s1 + $0x140] sm:$0xff]
  %v62 = vld [vmem:[%s1 + $0x148] sm:$0xff]
  %v63 = vld [vmem:[%s1 + $0x150] sm:$0xff]
  %v64 = vld [vmem:[%s1 + $0x158] sm:$0xff]
  %v65 = vld [vmem:[%s1 + $0x160] sm:$0xff]
  %v66 = vld [vmem:[%s1 + $0x168] sm:$0xff]
  %v67 = vld [vmem:[%s1 + $0x170] sm:$0xff]
  %v68 = vld [vmem:[%s1 + $0x178] sm:$0xff]
  %v69 = vld [vmem:[%s1 + $0x180] sm:$0xff]
  %v70 = vld [vmem:[%s1 + $0x188] sm:$0xff]
  %v71 = vld [vmem:[%s1 + $0x190] sm:$0xff]
  %v72 = vld [vmem:[%s1 + $0x198] sm:$0xff]
  %v73 = vld [vmem:[%s1 + $0x1a0] sm:$0xff]
  %v74 = vld [vmem:[%s1 + $0x1a8] sm:$0xff]
  %v75 = vld [vmem:[%s1 + $0x1b0] sm:$0xff]
  %v76 = vld [vmem:[%s1 + $0x1b8] sm:$0xff]
  %v77 = vld [vmem:[%s1 + $0x1c0] sm:$0xff]
  %v78 = vld [vmem:[%s1 + $0x1c8] sm:$0xff]
  %v79 = vld [vmem:[%s1 + $0x1d0] sm:$0xff]
  %v80 = vld [vmem:[%s1 + $0x1d8] sm:$0xff]
  %v81 = vld [vmem:[%s1 + $0x1e0] sm:$0xff]
  %v82 = vld [vmem:[%s1 + $0x1e8] sm:$0xff]
  %v83 = vld [vmem:[%s1 + $0x1f0] sm:$0xff]
  %v84 = vld [vmem:[%s1 + $0x1f8] sm:$0xff]
  %v85 = vld [vmem:[%s1 + $0x200] sm:$0xff]
  %v86 = vld [vmem:[%s1 + $0x208] sm:$0xff]
  %v87 = vld [vmem:[%s1 + $0x210] sm:$0xff]
  %v88 = vld [vmem:[%s1 + $0x218] sm:$0xff]
  %v89 = vld [vmem:[%s1 + $0x220] sm:$0xff]
  %v90 = vld [vmem:[%s1 + $0x228] sm:$0xff]
  %v91 = vld [vmem:[%s1 + $0x230] sm:$0xff]
  %v92 = vld [vmem:[%s1 + $0x238] sm:$0xff]
  %v93 = vld [vmem:[%s1 + $0x240] sm:$0xff]
  %v94 = vld [vmem:[%s1 + $0x248] sm:$0xff]
  %v95 = vld [vmem:[%s1 + $0x250] sm:$0xff]
  %v96 = vld [vmem:[%s1 + $0x258] sm:$0xff]
  %v97 = vld [vmem:[%s1 + $0x260] sm:$0xff]
  %v98 = vld [vmem:[%s1 + $0x268] sm:$0xff]
  %v99 = vld [vmem:[%s1 + $0x270] sm:$0xff]
  %v100 = vld [vmem:[%s1 + $0x278] sm:$0xff]
  %v101 = vld [vmem:[%s1 + $0x280] sm:$0xff]
  %v102 = vld [vmem:[%s1 + $0x288] sm:$0xff]
  %v103 = vld [vmem:[%s1 + $0x290] sm:$0xff]
  %v104 = vld [vmem:[%s1 + $0x298] sm:$0xff]
  %v105 = vld [vmem:[%s1 + $0x2a0] sm:$0xff]
  %v106 = vld [vmem:[%s1 + $0x2a8] sm:$0xff]
  %v107 = vld [vmem:[%s1 + $0x2b0] sm:$0xff]
  %v108 = vld [vmem:[%s1 + $0x2b8] sm:$0xff]
  %v109 = vld [vmem:[%s1 + $0x2c0] sm:$0xff]
  %v110 = vld [vmem:[%s1 + $0x2c8] sm:$0xff]
  %v111 = vld [vmem:[%s1 + $0x2d0] sm:$0xff]
  %v112 = vld [vmem:[%s1 + $0x2d8] sm:$0xff]
  %v113 = vld [vmem:[%s1 + $0x2e0] sm:$0xff]
  %v114 = vld [vmem:[%s1 + $0x2e8] sm:$0xff]
  %v115 = vld [vmem:[%s1 + $0x2f0] sm:$0xff]
  %v116 = vld [vmem:[%s1 + $0x2f8] sm:$0xff]
  %v117 = vld [vmem:[%s1 + $0x300] sm:$0xff]
  %v118 = vld [vmem:[%s1 + $0x308] sm:$0xff]
  %v119 = vld [vmem:[%s1 + $0x310] sm:$0xff]
  %v120 = vld [vmem:[%s1 + $0x318] sm:$0xff]
  %v121 = vld [vmem:[%s1 + $0x320] sm:$0xff]
  %v122 = vld [vmem:[%s1 + $0x328] sm:$0xff]
  %v123 = vld [vmem:[%s1 + $0x330] sm:$0xff]
  %v124 = vld [vmem:[%s1 + $0x338] sm:$0xff]
  %v125 = vld [vmem:[%s1 + $0x340] sm:$0xff]
  %v126 = vld [vmem:[%s1 + $0x348] sm:$0xff]
  %v127 = vld [vmem:[%s1 + $0x350] sm:$0xff]
  %v128 = vld [vmem:[%s1 + $0x358] sm:$0xff]
  %v129 = vld [vmem:[%s1 + $0x360] sm:$0xff]
  %v130 = vld [vmem:[%s1 + $0x368] sm:$0xff]
  %v131 = vld [vmem:[%s1 + $0x370] sm:$0xff]
  %v132 = vld [vmem:[%s1 + $0x378] sm:$0xff]
  %v133 = vld [vmem:[%s1 + $0x380] sm:$0xff]
  %v134 = vld [vmem:[%s1 + $0x388] sm:$0xff]
  %v135 = vld [vmem:[%s1 + $0x390] sm:$0xff]
  %v136 = vld [vmem:[%s1 + $0x398] sm:$0xff]
  %v137 = vld [vmem:[%s1 + $0x3a0] sm:$0xff]
  %v138 = vld [vmem:[%s1 + $0x3a8] sm:$0xff]
  %v139 = vld [vmem:[%s1 + $0x3b0] sm:$0xff]
  %v140 = vld [vmem:[%s1 + $0x3b8] sm:$0xff]
  %v141 = vld [vmem:[%s1 + $0x3c0] sm:$0xff]
  %v142 = vld [vmem:[%s1 + $0x3c8] sm:$0xff]
  %v143 = vld [vmem:[%s1 + $0x3d0] sm:$0xff]
  %v144 = vld [vmem:[%s1 + $0x3d8] sm:$0xff]
  %v145 = vld [vmem:[%s1 + $0x3e0] sm:$0xff]
  %v146 = vld [vmem:[%s1 + $0x3e8] sm:$0xff]
  %v147 = vld [vmem:[%s1 + $0x3f0] sm:$0xff]
  %v148 = vld [vmem:[%s1 + $0x3f8] sm:$0xff]
  %v149 = vld [vmem:[%s1 + $0x400] sm:$0xff]
  %v150 = vld [vmem:[%s1 + $0x408] sm:$0xff]
  %v151 = vld [vmem:[%s1 + $0x410] sm:$0xff]
  %v152 = vld [vmem:[%s1 + $0x418] sm:$0xff]
  %v153 = vld [vmem:[%s1 + $0x420] sm:$0xff]
  %v154 = vld [vmem:[%s1 + $0x428] sm:$0xff]
  %v155 = vld [vmem:[%s1 + $0x430] sm:$0xff]
  %v156 = vld [vmem:[%s1 + $0x438] sm:$0xff]
  %v157 = vld [vmem:[%s1 + $0x440] sm:$0xff]
  %v158 = vld [vmem:[%s1 + $0x448] sm:$0xff]
  %v159 = vld [vmem:[%s1 + $0x450] sm:$0xff]
  %v160 = vld [vmem:[%s1 + $0x458] sm:$0xff]
  %v161 = vld [vmem:[%s1 + $0x460] sm:$0xff]
  %v162 = vld [vmem:[%s1 + $0x468] sm:$0xff]
  %v163 = vld [vmem:[%s1 + $0x470] sm:$0xff]
  %v164 = vld [vmem:[%s1 + $0x478] sm:$0xff]
  %v165 = vld [vmem:[%s1 + $0x480] sm:$0xff]
  %v166 = vld [vmem:[%s1 + $0x488] sm:$0xff]
  %v167 = vld [vmem:[%s1 + $0x490] sm:$0xff]
  %v168 = vld [vmem:[%s1 + $0x498] sm:$0xff]
  %v169 = vld [vmem:[%s1 + $0x4a0] sm:$0xff]
  %v170 = vld [vmem:[%s1 + $0x4a8] sm:$0xff]
  %v171 = vld [vmem:[%s1 + $0x4b0] sm:$0xff]
  %v172 = vld [vmem:[%s1 + $0x4b8] sm:$0xff]
  %v173 = vld [vmem:[%s1 + $0x4c0] sm:$0xff]
  %v174 = vld [vmem:[%s1 + $0x4c8] sm:$0xff]
  %v175 = vld [vmem:[%s1 + $0x4d0] sm:$0xff]
  %v176 = vld [vmem:[%s1 + $0x4d8] sm:$0xff]
  %v177 = vld [vmem:[%s1 + $0x4e0] sm:$0xff]
  %v178 = vld [vmem:[%s1 + $0x4e8] sm:$0xff]
  %v179 = vld [vmem:[%s1 + $0x4f0] sm:$0xff]
  %v180 = vld [vmem:[%s1 + $0x4f8] sm:$0xff]
  %v181 = vld [vmem:[%s1 + $0x500] sm:$0xff]
  %v182 = vld [vmem:[%s1 + $0x508] sm:$0xff]
  %v183 = vld [vmem:[%s1 + $0x510] sm:$0xff]
  %v184 = vld [vmem:[%s1 + $0x518] sm:$0xff]
  %v185 = vld [vmem:[%s1 + $0x520] sm:$0xff]
  %v186 = vld [vmem:[%s1 + $0x528] sm:$0xff]
  %v187 = vld [vmem:[%s1 + $0x530] sm:$0xff]
  %v188 = vld [vmem:[%s1 + $0x538] sm:$0xff]
  %v189 = vld [vmem:[%s1 + $0x540] sm:$0xff]
  %v190 = vld [vmem:[%s1 + $0x548] sm:$0xff]
  %v191 = vld [vmem:[%s1 + $0x550] sm:$0xff]
  %v192 = vld [vmem:[%s1 + $0x558] sm:$0xff]
  %v193 = vld [vmem:[%s1 + $0x560] sm:$0xff]
  %v194 = vld [vmem:[%s1 + $0x568] sm:$0xff]
  %v195 = vld [vmem:[%s1 + $0x570] sm:$0xff]
  %v196 = vld [vmem:[%s1 + $0x578] sm:$0xff]
  %v197 = vld [vmem:[%s1 + $0x580] sm:$0xff]
  %v198 = vld [vmem:[%s1 + $0x588] sm:$0xff]
  %v199 = vld [vmem:[%s1 + $0x590] sm:$0xff]
  %v200 = vld [vmem:[%s1 + $0x598] sm:$0xff]
  %v201 = vld [vmem:[%s1 + $0x5a0] sm:$0xff]
  %v202 = vld [vmem:[%s1 + $0x5a8] sm:$0xff]
  %v203 = vld [vmem:[%s1 + $0x5b0] sm:$0xff]
  %v204 = vld [vmem:[%s1 + $0x5b8] sm:$0xff]
  %v205 = vld [vmem:[%s1 + $0x5c0] sm:$0xff]
  %v206 = vld [vmem:[%s1 + $0x5c8] sm:$0xff]
  %v207 = vld [vmem:[%s1 + $0x5d0] sm:$0xff]
  %v208 = vld [vmem:[%s1 + $0x5d8] sm:$0xff]
  %v209 = vld [vmem:[%s1 + $0x5e0] sm:$0xff]
  %v210 = vld [vmem:[%s1 + $0x5e8] sm:$0xff]
  %v211 = vld [vmem:[%s1 + $0x5f0] sm:$0xff]
  %v212 = vld [vmem:[%s1 + $0x5f8] sm:$0xff]
  %v213 = vld [vmem:[%s1 + $0x600] sm:$0xff]
  %v214 = vld [vmem:[%s1 + $0x608] sm:$0xff]
  %v215 = vld [vmem:[%s1 + $0x610] sm:$0xff]
  %v216 = vld [vmem:[%s1 + $0x618] sm:$0xff]
  %v217 = vld [vmem:[%s1 + $0x620] sm:$0xff]
  %v218 = vld [vmem:[%s1 + $0x628] sm:$0xff]
  %v219 = vld [vmem:[%s1 + $0x630] sm:$0xff]
  %v220 = vld [vmem:[%s1 + $0x638] sm:$0xff]
  %v221 = vld [vmem:[%s1 + $0x640] sm:$0xff]
  %v222 = vld [vmem:[%s1 + $0x648] sm:$0xff]
  %v223 = vld [vmem:[%s1 + $0x650] sm:$0xff]
  %v224 = vld [vmem:[%s1 + $0x658] sm:$0xff]
  %v225 = vld [vmem:[%s1 + $0x660] sm:$0xff]
  %v226 = vld [vmem:[%s1 + $0x668] sm:$0xff]
  %v227 = vld [vmem:[%s1 + $0x670] sm:$0xff]
  %v228 = vld [vmem:[%s1 + $0x678] sm:$0xff]
  %v229 = vld [vmem:[%s1 + $0x680] sm:$0xff]
  %v230 = vld [vmem:[%s1 + $0x688] sm:$0xff]
  %v231 = vld [vmem:[%s1 + $0x690] sm:$0xff]
  %v232 = vld [vmem:[%s1 + $0x698] sm:$0xff]
  %v233 = vld [vmem:[%s1 + $0x6a0] sm:$0xff]
  %v234 = vld [vmem:[%s1 + $0x6a8] sm:$0xff]
  %v235 = vld [vmem:[%s1 + $0x6b0] sm:$0xff]
  %v236 = vld [vmem:[%s1 + $0x6b8] sm:$0xff]
  %v237 = vld [vmem:[%s1 + $0x6c0] sm:$0xff]
  %v238 = vld [vmem:[%s1 + $0x6c8] sm:$0xff]
  %v239 = vld [vmem:[%s1 + $0x6d0] sm:$0xff]
  %v240 = vld [vmem:[%s1 + $0x6d8] sm:$0xff]
  %v241 = vld [vmem:[%s1 + $0x6e0] sm:$0xff]
  %v242 = vld [vmem:[%s1 + $0x6e8] sm:$0xff]
  %v243 = vld [vmem:[%s1 + $0x6f0] sm:$0xff]
  %v244 = vld [vmem:[%s1 + $0x6f8] sm:$0xff]
  %v245 = vld [vmem:[%s1 + $0x700] sm:$0xff]
  %v246 = vld [vmem:[%s1 + $0x708] sm:$0xff]
  %v247 = vld [vmem:[%s1 + $0x710] sm:$0xff]
  %v248 = vld [vmem:[%s1 + $0x718] sm:$0xff]
  %v249 = vld [vmem:[%s1 + $0x720] sm:$0xff]
  %v250 = vld [vmem:[%s1 + $0x728] sm:$0xff]
  %v251 = vld [vmem:[%s1 + $0x730] sm:$0xff]
  %v252 = vld [vmem:[%s1 + $0x738] sm:$0xff]
  %v253 = vld [vmem:[%s1 + $0x740] sm:$0xff]
  %v254 = vld [vmem:[%s1 + $0x748] sm:$0xff]
  %v255 = vld [vmem:[%s1 + $0x750] sm:$0xff]
  %v256 = vld [vmem:[%s1 + $0x758] sm:$0xff]
  %v257 = vld [vmem:[%s1 + $0x760] sm:$0xff]
  %v258 = vld [vmem:[%s1 + $0x768] sm:$0xff]
  %v259 = vld [vmem:[%s1 + $0x770] sm:$0xff]
  %v260 = vld [vmem:[%s1 + $0x778] sm:$0xff]
  %v261 = vld [vmem:[%s1 + $0x780] sm:$0xff]
  %v262 = vld [vmem:[%s1 + $0x788] sm:$0xff]
  %v263 = vld [vmem:[%s1 + $0x790] sm:$0xff]
  %v264 = vld [vmem:[%s1 + $0x798] sm:$0xff]
  %v265 = vld [vmem:[%s1 + $0x7a0] sm:$0xff]
  %v266 = vld [vmem:[%s1 + $0x7a8] sm:$0xff]
  %v267 = vld [vmem:[%s1 + $0x7b0] sm:$0xff]
  %v268 = vld [vmem:[%s1 + $0x7b8] sm:$0xff]
  %v269 = vld [vmem:[%s1 + $0x7c0] sm:$0xff]
  %v270 = vld [vmem:[%s1 + $0x7c8] sm:$0xff]
  %v271 = vld [vmem:[%s1 + $0x7d0] sm:$0xff]
  %v272 = vld [vmem:[%s1 + $0x7d8] sm:$0xff]
  %v273 = vld [vmem:[%s1 + $0x7e0] sm:$0xff]
  %v274 = vld [vmem:[%s1 + $0x7e8] sm:$0xff]
  %v275 = vld [vmem:[%s1 + $0x7f0] sm:$0xff]
  %v276 = vld [vmem:[%s1 + $0x7f8] sm:$0xff]
  %v277 = vld [vmem:[%s1 + $0x800] sm:$0xff]
  %v278 = vld [vmem:[%s1 + $0x808] sm:$0xff]
  %v279 = vld [vmem:[%s1 + $0x810] sm:$0xff]
  %v280 = vld [vmem:[%s1 + $0x818] sm:$0xff]
  %v281 = vld [vmem:[%s1 + $0x820] sm:$0xff]
  %v282 = vld [vmem:[%s1 + $0x828] sm:$0xff]
  %v283 = vld [vmem:[%s1 + $0x830] sm:$0xff]
  %v284 = vld [vmem:[%s1 + $0x838] sm:$0xff]
  %v285 = vld [vmem:[%s1 + $0x840] sm:$0xff]
  %v286 = vld [vmem:[%s1 + $0x848] sm:$0xff]
  %v287 = vld [vmem:[%s1 + $0x850] sm:$0xff]
  %v288 = vld [vmem:[%s1 + $0x858] sm:$0xff]
  %v289 = vld [vmem:[%s1 + $0x860] sm:$0xff]
  %v290 = vld [vmem:[%s1 + $0x868] sm:$0xff]
  %v291 = vld [vmem:[%s1 + $0x870] sm:$0xff]
  %v292 = vld [vmem:[%s1 + $0x878] sm:$0xff]
  %v293 = vld [vmem:[%s1 + $0x880] sm:$0xff]
  %v294 = vld [vmem:[%s1 + $0x888] sm:$0xff]
  %v295 = vld [vmem:[%s1 + $0x890] sm:$0xff]
  %v296 = vld [vmem:[%s1 + $0x898] sm:$0xff]
  %v297 = vld [vmem:[%s1 + $0x8a0] sm:$0xff]
  %v298 = vld [vmem:[%s1 + $0x8a8] sm:$0xff]
  %v299 = vld [vmem:[%s1 + $0x8b0] sm:$0xff]
  %v300 = vld [vmem:[%s1 + $0x8b8] sm:$0xff]
  %v301 = vld [vmem:[%s1 + $0x8c0] sm:$0xff]
  %v302 = vld [vmem:[%s1 + $0x8c8] sm:$0xff]
  %v303 = vld [vmem:[%s1 + $0x8d0] sm:$0xff]
  %v304 = vld [vmem:[%s1 + $0x8d8] sm:$0xff]
  %v305 = vld [vmem:[%s1 + $0x8e0] sm:$0xff]
  %v306 = vld [vmem:[%s1 + $0x8e8] sm:$0xff]
  %v307 = vld [vmem:[%s1 + $0x8f0] sm:$0xff]
  %v308 = vld [vmem:[%s1 + $0x8f8] sm:$0xff]
  %v309 = vld [vmem:[%s1 + $0x900] sm:$0xff]
  %v310 = vld [vmem:[%s1 + $0x908] sm:$0xff]
  %v311 = vld [vmem:[%s1 + $0x910] sm:$0xff]
  %v312 = vld [vmem:[%s1 + $0x918] sm:$0xff]
  %v313 = vld [vmem:[%s1 + $0x920] sm:$0xff]
  %v314 = vld [vmem:[%s1 + $0x928] sm:$0xff]
  %v315 = vld [vmem:[%s1 + $0x930] sm:$0xff]
  %v316 = vld [vmem:[%s1 + $0x938] sm:$0xff]
  %v317 = vld [vmem:[%s1 + $0x940] sm:$0xff]
  %v318 = vld [vmem:[%s1 + $0x948] sm:$0xff]
  %v319 = vld [vmem:[%s1 + $0x950] sm:$0xff]
  %v320 = vld [vmem:[%s1 + $0x958] sm:$0xff]
  %v321 = vld [vmem:[%s1 + $0x960] sm:$0xff]
  %v322 = vld [vmem:[%s1 + $0x968] sm:$0xff]
  %v323 = vld [vmem:[%s1 + $0x970] sm:$0xff]
  %v324 = vld [vmem:[%s1 + $0x978] sm:$0xff]
  %v325 = vld [vmem:[%s1 + $0x980] sm:$0xff]
  %v326 = vld [vmem:[%s1 + $0x988] sm:$0xff]
  %v327 = vld [vmem:[%s1 + $0x990] sm:$0xff]
  %v328 = vld [vmem:[%s1 + $0x998] sm:$0xff]
  %v329 = vld [vmem:[%s1 + $0x9a0] sm:$0xff]
  %v330 = vld [vmem:[%s1 + $0x9a8] sm:$0xff]
  %v331 = vld [vmem:[%s1 + $0x9b0] sm:$0xff]
  %v332 = vld [vmem:[%s1 + $0x9b8] sm:$0xff]
  %v333 = vld [vmem:[%s1 + $0x9c0] sm:$0xff]
  %v334 = vld [vmem:[%s1 + $0x9c8] sm:$0xff]
  %v335 = vld [vmem:[%s1 + $0x9d0] sm:$0xff]
  %v336 = vld [vmem:[%s1 + $0x9d8] sm:$0xff]
  %v337 = vld [vmem:[%s1 + $0x9e0] sm:$0xff]
  %v338 = vld [vmem:[%s1 + $0x9e8] sm:$0xff]
  %v339 = vld [vmem:[%s1 + $0x9f0] sm:$0xff]
  %v340 = vld [vmem:[%s1 + $0x9f8] sm:$0xff]
  %v341 = vld [vmem:[%s1 + $0xa00] sm:$0xff]
  %v342 = vld [vmem:[%s1 + $0xa08] sm:$0xff]
  %v343 = vld [vmem:[%s1 + $0xa10] sm:$0xff]
  %v344 = vld [vmem:[%s1 + $0xa18] sm:$0xff]
  %v345 = vld [vmem:[%s1 + $0xa20] sm:$0xff]
  %v346 = vld [vmem:[%s1 + $0xa28] sm:$0xff]
  %v347 = vld [vmem:[%s1 + $0xa30] sm:$0xff]
  %v348 = vld [vmem:[%s1 + $0xa38] sm:$0xff]
  %v349 = vld [vmem:[%s1 + $0xa40] sm:$0xff]
  %v350 = vld [vmem:[%s1 + $0xa48] sm:$0xff]
  %v351 = vld [vmem:[%s1 + $0xa50] sm:$0xff]
  %v352 = vld [vmem:[%s1 + $0xa58] sm:$0xff]
  %v353 = vld [vmem:[%s1 + $0xa60] sm:$0xff]
  %v354 = vld [vmem:[%s1 + $0xa68] sm:$0xff]
  %v355 = vld [vmem:[%s1 + $0xa70] sm:$0xff]
  %v356 = vld [vmem:[%s1 + $0xa78] sm:$0xff]
  %v357 = vld [vmem:[%s1 + $0xa80] sm:$0xff]
  %v358 = vld [vmem:[%s1 + $0xa88] sm:$0xff]
  %v359 = vld [vmem:[%s1 + $0xa90] sm:$0xff]
  %v360 = vld [vmem:[%s1 + $0xa98] sm:$0xff]
  %v361 = vld [vmem:[%s1 + $0xaa0] sm:$0xff]
  %v362 = vld [vmem:[%s1 + $0xaa8] sm:$0xff]
  %v363 = vld [vmem:[%s1 + $0xab0] sm:$0xff]
  %v364 = vld [vmem:[%s1 + $0xab8] sm:$0xff]
  %v365 = vld [vmem:[%s1 + $0xac0] sm:$0xff]
  %v366 = vld [vmem:[%s1 + $0xac8] sm:$0xff]
  %v367 = vld [vmem:[%s1 + $0xad0] sm:$0xff]
  %v368 = vld [vmem:[%s1 + $0xad8] sm:$0xff]
  %v369 = vld [vmem:[%s1 + $0xae0] sm:$0xff]
  %v370 = vld [vmem:[%s1 + $0xae8] sm:$0xff]
  %v371 = vld [vmem:[%s1 + $0xaf0] sm:$0xff]
  %v372 = vld [vmem:[%s1 + $0xaf8] sm:$0xff]
  %v373 = vld [vmem:[%s1 + $0xb00] sm:$0xff]
  %v374 = vld [vmem:[%s1 + $0xb08] sm:$0xff]
  %v375 = vld [vmem:[%s1 + $0xb10] sm:$0xff]
  %v376 = vld [vmem:[%s1 + $0xb18] sm:$0xff]
  %v377 = vld [vmem:[%s1 + $0xb20] sm:$0xff]
  %v378 = vld [vmem:[%s1 + $0xb28] sm:$0xff]
  %v379 = vld [vmem:[%s1 + $0xb30] sm:$0xff]
  %v380 = vld [vmem:[%s1 + $0xb38] sm:$0xff]
  %v381 = vld [vmem:[%s1 + $0xb40] sm:$0xff]
  %v382 = vld [vmem:[%s1 + $0xb48] sm:$0xff]
  %v383 = vld [vmem:[%s1 + $0xb50] sm:$0xff]
  %v384 = vld [vmem:[%s1 + $0xb58] sm:$0xff]
  %v385 = vld [vmem:[%s1 + $0xb60] sm:$0xff]
  %v386 = vld [vmem:[%s1 + $0xb68] sm:$0xff]
  %v387 = vld [vmem:[%s1 + $0xb70] sm:$0xff]
  %v388 = vld [vmem:[%s1 + $0xb78] sm:$0xff]
  %v389 = vld [vmem:[%s1 + $0xb80] sm:$0xff]
  %v390 = vld [vmem:[%s1 + $0xb88] sm:$0xff]
  %v391 = vld [vmem:[%s1 + $0xb90] sm:$0xff]
  %v392 = vld [vmem:[%s1 + $0xb98] sm:$0xff]
  %v393 = vld [vmem:[%s1 + $0xba0] sm:$0xff]
  %v394 = vld [vmem:[%s1 + $0xba8] sm:$0xff]
  %v395 = vld [vmem:[%s1 + $0xbb0] sm:$0xff]
  %v396 = vld [vmem:[%s1 + $0xbb8] sm:$0xff]
  %v397 = vld [vmem:[%s1 + $0xbc0] sm:$0xff]
  %v398 = vld [vmem:[%s1 + $0xbc8] sm:$0xff]
  %v399 = vld [vmem:[%s1 + $0xbd0] sm:$0xff]
  %v400 = vld [vmem:[%s1 + $0xbd8] sm:$0xff]
  %v401 = vld [vmem:[%s1 + $0xbe0] sm:$0xff]
  %v402 = vld [vmem:[%s1 + $0xbe8] sm:$0xff]
  %v403 = vld [vmem:[%s1 + $0xbf0] sm:$0xff]
  %v404 = vld [vmem:[%s1 + $0xbf8] sm:$0xff]
  %v405 = vld [vmem:[%s1 + $0xc00] sm:$0xff]
  %v406 = vld [vmem:[%s1 + $0xc08] sm:$0xff]
  %v407 = vld [vmem:[%s1 + $0xc10] sm:$0xff]
  %v408 = vld [vmem:[%s1 + $0xc18] sm:$0xff]
  %v409 = vld [vmem:[%s1 + $0xc20] sm:$0xff]
  %v410 = vld [vmem:[%s1 + $0xc28] sm:$0xff]
  %v411 = vld [vmem:[%s1 + $0xc30] sm:$0xff]
  %v412 = vld [vmem:[%s1 + $0xc38] sm:$0xff]
  %v413 = vld [vmem:[%s1 + $0xc40] sm:$0xff]
  %v414 = vld [vmem:[%s1 + $0xc48] sm:$0xff]
  %v415 = vld [vmem:[%s1 + $0xc50] sm:$0xff]
  %v416 = vld [vmem:[%s1 + $0xc58] sm:$0xff]
  %v417 = vld [vmem:[%s1 + $0xc60] sm:$0xff]
  %v418 = vld [vmem:[%s1 + $0xc68] sm:$0xff]
  %v419 = vld [vmem:[%s1 + $0xc70] sm:$0xff]
  %v420 = vld [vmem:[%s1 + $0xc78] sm:$0xff]
  %v421 = vld [vmem:[%s1 + $0xc80] sm:$0xff]
  %v422 = vld [vmem:[%s1 + $0xc88] sm:$0xff]
  %v423 = vld [vmem:[%s1 + $0xc90] sm:$0xff]
  %v424 = vld [vmem:[%s1 + $0xc98] sm:$0xff]
  %v425 = vld [vmem:[%s1 + $0xca0] sm:$0xff]
  %v426 = vld [vmem:[%s1 + $0xca8] sm:$0xff]
  %v427 = vld [vmem:[%s1 + $0xcb0] sm:$0xff]
  %v428 = vld [vmem:[%s1 + $0xcb8] sm:$0xff]
  %v429 = vld [vmem:[%s1 + $0xcc0] sm:$0xff]
  %v430 = vld [vmem:[%s1 + $0xcc8] sm:$0xff]
  %v431 = vld [vmem:[%s1 + $0xcd0] sm:$0xff]
  %v432 = vld [vmem:[%s1 + $0xcd8] sm:$0xff]
  %v433 = vld [vmem:[%s1 + $0xce0] sm:$0xff]
  %v434 = vld [vmem:[%s1 + $0xce8] sm:$0xff]
  %v435 = vld [vmem:[%s1 + $0xcf0] sm:$0xff]
  %v436 = vld [vmem:[%s1 + $0xcf8] sm:$0xff]
  %v437 = vld [vmem:[%s1 + $0xd00] sm:$0xff]
  %v438 = vld [vmem:[%s1 + $0xd08] sm:$0xff]
  %v439 = vld [vmem:[%s1 + $0xd10] sm:$0xff]
  %v440 = vld [vmem:[%s1 + $0xd18] sm:$0xff]
  %v441 = vld [vmem:[%s1 + $0xd20] sm:$0xff]
  %v442 = vld [vmem:[%s1 + $0xd28] sm:$0xff]
  %v443 = vld [vmem:[%s1 + $0xd30] sm:$0xff]
  %v444 = vld [vmem:[%s1 + $0xd38] sm:$0xff]
  %v445 = vld [vmem:[%s1 + $0xd40] sm:$0xff]
  %v446 = vld [vmem:[%s1 + $0xd48] sm:$0xff]
  %v447 = vld [vmem:[%s1 + $0xd50] sm:$0xff]
  %v448 = vld [vmem:[%s1 + $0xd58] sm:$0xff]
  %v449 = vld [vmem:[%s1 + $0xd60] sm:$0xff]
  %v450 = vld [vmem:[%s1 + $0xd68] sm:$0xff]
  %v451 = vld [vmem:[%s1 + $0xd70] sm:$0xff]
  %v452 = vld [vmem:[%s1 + $0xd78] sm:$0xff]
  %v453 = vld [vmem:[%s1 + $0xd80] sm:$0xff]
  %v454 = vld [vmem:[%s1 + $0xd88] sm:$0xff]
  %v455 = vld [vmem:[%s1 + $0xd90] sm:$0xff]
  %v456 = vld [vmem:[%s1 + $0xd98] sm:$0xff]
  %v457 = vld [vmem:[%s1 + $0xda0] sm:$0xff]
  %v458 = vld [vmem:[%s1 + $0xda8] sm:$0xff]
  %v459 = vld [vmem:[%s1 + $0xdb0] sm:$0xff]
  %v460 = vld [vmem:[%s1 + $0xdb8] sm:$0xff]
  %v461 = vld [vmem:[%s1 + $0xdc0] sm:$0xff]
  %v462 = vld [vmem:[%s1 + $0xdc8] sm:$0xff]
  %v463 = vld [vmem:[%s1 + $0xdd0] sm:$0xff]
  %v464 = vld [vmem:[%s1 + $0xdd8] sm:$0xff]
  %v465 = vld [vmem:[%s1 + $0xde0] sm:$0xff]
  %v466 = vld [vmem:[%s1 + $0xde8] sm:$0xff]
  %v467 = vld [vmem:[%s1 + $0xdf0] sm:$0xff]
  %v468 = vld [vmem:[%s1 + $0xdf8] sm:$0xff]
  %v469 = vld [vmem:[%s2] sm:$0x1]
  %v471 = vperm.slane %v469, 0
  %480 = vst [vmem:[#allocation1] ss:$4 sm:$0xff] %v14
  %s481 = scalar_lea.vmem [#allocation1], 32
  %482 = vst [vmem:[%s481] ss:$4 sm:$0xff] %v15
  %v483 = vld.sshfl [vmem:[#allocation1] sm:$0xff pattern:$0x73625140]
  %v484 = vld.sshfl [vmem:[#allocation1 + $0x8] sm:$0xff pattern:$0x73625140]
  %v485 = vld.sshfl [vmem:[#allocation1 + $0x10] sm:$0xff pattern:$0x73625140]
  %v486 = vld.sshfl [vmem:[#allocation1 + $0x18] sm:$0xff pattern:$0x73625140]
  %v487 = vld.sshfl [vmem:[#allocation1 + $0x20] sm:$0xff pattern:$0x73625140]
  %v488 = vld.sshfl [vmem:[#allocation1 + $0x28] sm:$0xff pattern:$0x73625140]
  %v489 = vld.sshfl [vmem:[#allocation1 + $0x30] sm:$0xff pattern:$0x73625140]
  %v490 = vld.sshfl [vmem:[#allocation1 + $0x38] sm:$0xff pattern:$0x73625140]
  %491 = vst [vmem:[#allocation1] ss:$4 sm:$0xff] %v16
  %492 = vst [vmem:[%s481] ss:$4 sm:$0xff] %v17
  %v493 = vld.sshfl [vmem:[#allocation1] sm:$0xff pattern:$0x73625140]
  %v494 = vld.sshfl [vmem:[#allocation1 + $0x8] sm:$0xff pattern:$0x73625140]
  %v495 = vld.sshfl [vmem:[#allocation1 + $0x10] sm:$0xff pattern:$0x73625140]
  %v496 = vld.sshfl [vmem:[#allocation1 + $0x18] sm:$0xff pattern:$0x73625140]
  %v497 = vld.sshfl [vmem:[#allocation1 + $0x20] sm:$0xff pattern:$0x73625140]
  %v498 = vld.sshfl [vmem:[#allocation1 + $0x28] sm:$0xff pattern:$0x73625140]
  %v499 = vld.sshfl [vmem:[#allocation1 + $0x30] sm:$0xff pattern:$0x73625140]
  %v500 = vld.sshfl [vmem:[#allocation1 + $0x38] sm:$0xff pattern:$0x73625140]
  %501 = vst [vmem:[#allocation1] ss:$4 sm:$0xff] %v18
  %502 = vst [vmem:[%s481] ss:$4 sm:$0xff] %v19
  %v503 = vld.sshfl [vmem:[#allocation1] sm:$0xff pattern:$0x73625140]
  %v504 = vld.sshfl [vmem:[#allocation1 + $0x8] sm:$0xff pattern:$0x73625140]
  %v505 = vld.sshfl [vmem:[#allocation1 + $0x10] sm:$0xff pattern:$0x73625140]
  %v506 = vld.sshfl [vmem:[#allocation1 + $0x18] sm:$0xff pattern:$0x73625140]
  %v507 = vld.sshfl [vmem:[#allocation1 + $0x20] sm:$0xff pattern:$0x73625140]
  %v508 = vld.sshfl [vmem:[#allocation1 + $0x28] sm:$0xff pattern:$0x73625140]
  %v509 = vld.sshfl [vmem:[#allocation1 + $0x30] sm:$0xff pattern:$0x73625140]
  %v510 = vld.sshfl [vmem:[#allocation1 + $0x38] sm:$0xff pattern:$0x73625140]
  %511 = vst [vmem:[#allocation1] ss:$4 sm:$0xff] %v20
  %v512 = vld.sshfl [vmem:[#allocation1] sm:$0xff pattern:$0x73625140]
  %v513 = vld.sshfl [vmem:[#allocation1 + $0x8] sm:$0xff pattern:$0x73625140]
  %v514 = vld.sshfl [vmem:[#allocation1 + $0x10] sm:$0xff pattern:$0x73625140]
  %v515 = vld.sshfl [vmem:[#allocation1 + $0x18] sm:$0xff pattern:$0x73625140]
  %544 = vmatpush.msra.mxu0 %v36
  %545 = vmatpush.msra.mxu0 %v35
  %546 = vmatpush.msra.mxu0 %v34
  %547 = vmatpush.msra.mxu0 %v33
  %548 = vmatpush.msra.mxu0 %v32
  %549 = vmatpush.msra.mxu0 %v31
  %550 = vmatpush.msra.mxu0 %v30
  %551 = vmatpush.msra.mxu0 %v29
  %552 = vmatpush.msra.mxu0 %v28
  %553 = vmatpush.msra.mxu0 %v27
  %554 = vmatpush.msra.mxu0 %v26
  %555 = vmatpush.msra.mxu0 %v25
  %556 = vmatpush.msra.mxu0 %v24
  %557 = vmatpush.msra.mxu0 %v23
  %558 = vmatpush.msra.mxu0 %v22
  %559 = vmatpush.msra.mxu0 %v21
  %560 = vmatmul.f32.gmra.mxu0 %v483
  %v561 = vpop.f32.mrf.mxu0
  %v562 = vadd.f32 %v471, %v561
  %563 = vdwg.mxu0
  %564 = vmatpush.msra.mxu0 %v52
  %565 = vmatpush.msra.mxu0 %v51
  %566 = vmatpush.msra.mxu0 %v50
  %567 = vmatpush.msra.mxu0 %v49
  %568 = vmatpush.msra.mxu0 %v48
  %569 = vmatpush.msra.mxu0 %v47
  %570 = vmatpush.msra.mxu0 %v46
  %571 = vmatpush.msra.mxu0 %v45
  %572 = vmatpush.msra.mxu0 %v44
  %573 = vmatpush.msra.mxu0 %v43
  %574 = vmatpush.msra.mxu0 %v42
  %575 = vmatpush.msra.mxu0 %v41
  %576 = vmatpush.msra.mxu0 %v40
  %577 = vmatpush.msra.mxu0 %v39
  %578 = vmatpush.msra.mxu0 %v38
  %579 = vmatpush.msra.mxu0 %v37
  %580 = vmatmul.f32.gmra.mxu0 %v484
  %v581 = vpop.f32.mrf.mxu0
  %v582 = vadd.f32 %v562, %v581
  %583 = vdwg.mxu0
  %584 = vmatpush.msra.mxu0 %v68
  %585 = vmatpush.msra.mxu0 %v67
  %586 = vmatpush.msra.mxu0 %v66
  %587 = vmatpush.msra.mxu0 %v65
  %588 = vmatpush.msra.mxu0 %v64
  %589 = vmatpush.msra.mxu0 %v63
  %590 = vmatpush.msra.mxu0 %v62
  %591 = vmatpush.msra.mxu0 %v61
  %592 = vmatpush.msra.mxu0 %v60
  %593 = vmatpush.msra.mxu0 %v59
  %594 = vmatpush.msra.mxu0 %v58
  %595 = vmatpush.msra.mxu0 %v57
  %596 = vmatpush.msra.mxu0 %v56
  %597 = vmatpush.msra.mxu0 %v55
  %598 = vmatpush.msra.mxu0 %v54
  %599 = vmatpush.msra.mxu0 %v53
  %600 = vmatmul.f32.gmra.mxu0 %v485
  %v601 = vpop.f32.mrf.mxu0
  %v602 = vadd.f32 %v582, %v601
  %603 = vdwg.mxu0
  %604 = vmatpush.msra.mxu0 %v84
  %605 = vmatpush.msra.mxu0 %v83
  %606 = vmatpush.msra.mxu0 %v82
  %607 = vmatpush.msra.mxu0 %v81
  %608 = vmatpush.msra.mxu0 %v80
  %609 = vmatpush.msra.mxu0 %v79
  %610 = vmatpush.msra.mxu0 %v78
  %611 = vmatpush.msra.mxu0 %v77
  %612 = vmatpush.msra.mxu0 %v76
  %613 = vmatpush.msra.mxu0 %v75
  %614 = vmatpush.msra.mxu0 %v74
  %615 = vmatpush.msra.mxu0 %v73
  %616 = vmatpush.msra.mxu0 %v72
  %617 = vmatpush.msra.mxu0 %v71
  %618 = vmatpush.msra.mxu0 %v70
  %619 = vmatpush.msra.mxu0 %v69
  %620 = vmatmul.f32.gmra.mxu0 %v486
  %v621 = vpop.f32.mrf.mxu0
  %v622 = vadd.f32 %v602, %v621
  %623 = vdwg.mxu0
  %624 = vmatpush.msra.mxu0 %v100
  %625 = vmatpush.msra.mxu0 %v99
  %626 = vmatpush.msra.mxu0 %v98
  %627 = vmatpush.msra.mxu0 %v97
  %628 = vmatpush.msra.mxu0 %v96
  %629 = vmatpush.msra.mxu0 %v95
  %630 = vmatpush.msra.mxu0 %v94
  %631 = vmatpush.msra.mxu0 %v93
  %632 = vmatpush.msra.mxu0 %v92
  %633 = vmatpush.msra.mxu0 %v91
  %634 = vmatpush.msra.mxu0 %v90
  %635 = vmatpush.msra.mxu0 %v89
  %636 = vmatpush.msra.mxu0 %v88
  %637 = vmatpush.msra.mxu0 %v87
  %638 = vmatpush.msra.mxu0 %v86
  %639 = vmatpush.msra.mxu0 %v85
  %640 = vmatmul.f32.gmra.mxu0 %v487
  %v641 = vpop.f32.mrf.mxu0
  %v642 = vadd.f32 %v622, %v641
  %643 = vdwg.mxu0
  %644 = vmatpush.msra.mxu0 %v116
  %645 = vmatpush.msra.mxu0 %v115
  %646 = vmatpush.msra.mxu0 %v114
  %647 = vmatpush.msra.mxu0 %v113
  %648 = vmatpush.msra.mxu0 %v112
  %649 = vmatpush.msra.mxu0 %v111
  %650 = vmatpush.msra.mxu0 %v110
  %651 = vmatpush.msra.mxu0 %v109
  %652 = vmatpush.msra.mxu0 %v108
  %653 = vmatpush.msra.mxu0 %v107
  %654 = vmatpush.msra.mxu0 %v106
  %655 = vmatpush.msra.mxu0 %v105
  %656 = vmatpush.msra.mxu0 %v104
  %657 = vmatpush.msra.mxu0 %v103
  %658 = vmatpush.msra.mxu0 %v102
  %659 = vmatpush.msra.mxu0 %v101
  %660 = vmatmul.f32.gmra.mxu0 %v488
  %v661 = vpop.f32.mrf.mxu0
  %v662 = vadd.f32 %v642, %v661
  %663 = vdwg.mxu0
  %664 = vmatpush.msra.mxu0 %v132
  %665 = vmatpush.msra.mxu0 %v131
  %666 = vmatpush.msra.mxu0 %v130
  %667 = vmatpush.msra.mxu0 %v129
  %668 = vmatpush.msra.mxu0 %v128
  %669 = vmatpush.msra.mxu0 %v127
  %670 = vmatpush.msra.mxu0 %v126
  %671 = vmatpush.msra.mxu0 %v125
  %672 = vmatpush.msra.mxu0 %v124
  %673 = vmatpush.msra.mxu0 %v123
  %674 = vmatpush.msra.mxu0 %v122
  %675 = vmatpush.msra.mxu0 %v121
  %676 = vmatpush.msra.mxu0 %v120
  %677 = vmatpush.msra.mxu0 %v119
  %678 = vmatpush.msra.mxu0 %v118
  %679 = vmatpush.msra.mxu0 %v117
  %680 = vmatmul.f32.gmra.mxu0 %v489
  %v681 = vpop.f32.mrf.mxu0
  %v682 = vadd.f32 %v662, %v681
  %683 = vdwg.mxu0
  %684 = vmatpush.msra.mxu0 %v148
  %685 = vmatpush.msra.mxu0 %v147
  %686 = vmatpush.msra.mxu0 %v146
  %687 = vmatpush.msra.mxu0 %v145
  %688 = vmatpush.msra.mxu0 %v144
  %689 = vmatpush.msra.mxu0 %v143
  %690 = vmatpush.msra.mxu0 %v142
  %691 = vmatpush.msra.mxu0 %v141
  %692 = vmatpush.msra.mxu0 %v140
  %693 = vmatpush.msra.mxu0 %v139
  %694 = vmatpush.msra.mxu0 %v138
  %695 = vmatpush.msra.mxu0 %v137
  %696 = vmatpush.msra.mxu0 %v136
  %697 = vmatpush.msra.mxu0 %v135
  %698 = vmatpush.msra.mxu0 %v134
  %699 = vmatpush.msra.mxu0 %v133
  %700 = vmatmul.f32.gmra.mxu0 %v490
  %v701 = vpop.f32.mrf.mxu0
  %v702 = vadd.f32 %v682, %v701
  %703 = vdwg.mxu0
  %704 = vmatpush.msra.mxu0 %v164
  %705 = vmatpush.msra.mxu0 %v163
  %706 = vmatpush.msra.mxu0 %v162
  %707 = vmatpush.msra.mxu0 %v161
  %708 = vmatpush.msra.mxu0 %v160
  %709 = vmatpush.msra.mxu0 %v159
  %710 = vmatpush.msra.mxu0 %v158
  %711 = vmatpush.msra.mxu0 %v157
  %712 = vmatpush.msra.mxu0 %v156
  %713 = vmatpush.msra.mxu0 %v155
  %714 = vmatpush.msra.mxu0 %v154
  %715 = vmatpush.msra.mxu0 %v153
  %716 = vmatpush.msra.mxu0 %v152
  %717 = vmatpush.msra.mxu0 %v151
  %718 = vmatpush.msra.mxu0 %v150
  %719 = vmatpush.msra.mxu0 %v149
  %720 = vmatmul.f32.gmra.mxu0 %v493
  %v721 = vpop.f32.mrf.mxu0
  %v722 = vadd.f32 %v702, %v721
  %723 = vdwg.mxu0
  %724 = vmatpush.msra.mxu0 %v180
  %725 = vmatpush.msra.mxu0 %v179
  %726 = vmatpush.msra.mxu0 %v178
  %727 = vmatpush.msra.mxu0 %v177
  %728 = vmatpush.msra.mxu0 %v176
  %729 = vmatpush.msra.mxu0 %v175
  %730 = vmatpush.msra.mxu0 %v174
  %731 = vmatpush.msra.mxu0 %v173
  %732 = vmatpush.msra.mxu0 %v172
  %733 = vmatpush.msra.mxu0 %v171
  %734 = vmatpush.msra.mxu0 %v170
  %735 = vmatpush.msra.mxu0 %v169
  %736 = vmatpush.msra.mxu0 %v168
  %737 = vmatpush.msra.mxu0 %v167
  %738 = vmatpush.msra.mxu0 %v166
  %739 = vmatpush.msra.mxu0 %v165
  %740 = vmatmul.f32.gmra.mxu0 %v494
  %v741 = vpop.f32.mrf.mxu0
  %v742 = vadd.f32 %v722, %v741
  %743 = vdwg.mxu0
  %744 = vmatpush.msra.mxu0 %v196
  %745 = vmatpush.msra.mxu0 %v195
  %746 = vmatpush.msra.mxu0 %v194
  %747 = vmatpush.msra.mxu0 %v193
  %748 = vmatpush.msra.mxu0 %v192
  %749 = vmatpush.msra.mxu0 %v191
  %750 = vmatpush.msra.mxu0 %v190
  %751 = vmatpush.msra.mxu0 %v189
  %752 = vmatpush.msra.mxu0 %v188
  %753 = vmatpush.msra.mxu0 %v187
  %754 = vmatpush.msra.mxu0 %v186
  %755 = vmatpush.msra.mxu0 %v185
  %756 = vmatpush.msra.mxu0 %v184
  %757 = vmatpush.msra.mxu0 %v183
  %758 = vmatpush.msra.mxu0 %v182
  %759 = vmatpush.msra.mxu0 %v181
  %760 = vmatmul.f32.gmra.mxu0 %v495
  %v761 = vpop.f32.mrf.mxu0
  %v762 = vadd.f32 %v742, %v761
  %763 = vdwg.mxu0
  %764 = vmatpush.msra.mxu0 %v212
  %765 = vmatpush.msra.mxu0 %v211
  %766 = vmatpush.msra.mxu0 %v210
  %767 = vmatpush.msra.mxu0 %v209
  %768 = vmatpush.msra.mxu0 %v208
  %769 = vmatpush.msra.mxu0 %v207
  %770 = vmatpush.msra.mxu0 %v206
  %771 = vmatpush.msra.mxu0 %v205
  %772 = vmatpush.msra.mxu0 %v204
  %773 = vmatpush.msra.mxu0 %v203
  %774 = vmatpush.msra.mxu0 %v202
  %775 = vmatpush.msra.mxu0 %v201
  %776 = vmatpush.msra.mxu0 %v200
  %777 = vmatpush.msra.mxu0 %v199
  %778 = vmatpush.msra.mxu0 %v198
  %779 = vmatpush.msra.mxu0 %v197
  %780 = vmatmul.f32.gmra.mxu0 %v496
  %v781 = vpop.f32.mrf.mxu0
  %v782 = vadd.f32 %v762, %v781
  %783 = vdwg.mxu0
  %784 = vmatpush.msra.mxu0 %v228
  %785 = vmatpush.msra.mxu0 %v227
  %786 = vmatpush.msra.mxu0 %v226
  %787 = vmatpush.msra.mxu0 %v225
  %788 = vmatpush.msra.mxu0 %v224
  %789 = vmatpush.msra.mxu0 %v223
  %790 = vmatpush.msra.mxu0 %v222
  %791 = vmatpush.msra.mxu0 %v221
  %792 = vmatpush.msra.mxu0 %v220
  %793 = vmatpush.msra.mxu0 %v219
  %794 = vmatpush.msra.mxu0 %v218
  %795 = vmatpush.msra.mxu0 %v217
  %796 = vmatpush.msra.mxu0 %v216
  %797 = vmatpush.msra.mxu0 %v215
  %798 = vmatpush.msra.mxu0 %v214
  %799 = vmatpush.msra.mxu0 %v213
  %800 = vmatmul.f32.gmra.mxu0 %v497
  %v801 = vpop.f32.mrf.mxu0
  %v802 = vadd.f32 %v782, %v801
  %803 = vdwg.mxu0
  %804 = vmatpush.msra.mxu0 %v244
  %805 = vmatpush.msra.mxu0 %v243
  %806 = vmatpush.msra.mxu0 %v242
  %807 = vmatpush.msra.mxu0 %v241
  %808 = vmatpush.msra.mxu0 %v240
  %809 = vmatpush.msra.mxu0 %v239
  %810 = vmatpush.msra.mxu0 %v238
  %811 = vmatpush.msra.mxu0 %v237
  %812 = vmatpush.msra.mxu0 %v236
  %813 = vmatpush.msra.mxu0 %v235
  %814 = vmatpush.msra.mxu0 %v234
  %815 = vmatpush.msra.mxu0 %v233
  %816 = vmatpush.msra.mxu0 %v232
  %817 = vmatpush.msra.mxu0 %v231
  %818 = vmatpush.msra.mxu0 %v230
  %819 = vmatpush.msra.mxu0 %v229
  %820 = vmatmul.f32.gmra.mxu0 %v498
  %v821 = vpop.f32.mrf.mxu0
  %v822 = vadd.f32 %v802, %v821
  %823 = vdwg.mxu0
  %824 = vmatpush.msra.mxu0 %v260
  %825 = vmatpush.msra.mxu0 %v259
  %826 = vmatpush.msra.mxu0 %v258
  %827 = vmatpush.msra.mxu0 %v257
  %828 = vmatpush.msra.mxu0 %v256
  %829 = vmatpush.msra.mxu0 %v255
  %830 = vmatpush.msra.mxu0 %v254
  %831 = vmatpush.msra.mxu0 %v253
  %832 = vmatpush.msra.mxu0 %v252
  %833 = vmatpush.msra.mxu0 %v251
  %834 = vmatpush.msra.mxu0 %v250
  %835 = vmatpush.msra.mxu0 %v249
  %836 = vmatpush.msra.mxu0 %v248
  %837 = vmatpush.msra.mxu0 %v247
  %838 = vmatpush.msra.mxu0 %v246
  %839 = vmatpush.msra.mxu0 %v245
  %840 = vmatmul.f32.gmra.mxu0 %v499
  %v841 = vpop.f32.mrf.mxu0
  %v842 = vadd.f32 %v822, %v841
  %843 = vdwg.mxu0
  %844 = vmatpush.msra.mxu0 %v276
  %845 = vmatpush.msra.mxu0 %v275
  %846 = vmatpush.msra.mxu0 %v274
  %847 = vmatpush.msra.mxu0 %v273
  %848 = vmatpush.msra.mxu0 %v272
  %849 = vmatpush.msra.mxu0 %v271
  %850 = vmatpush.msra.mxu0 %v270
  %851 = vmatpush.msra.mxu0 %v269
  %852 = vmatpush.msra.mxu0 %v268
  %853 = vmatpush.msra.mxu0 %v267
  %854 = vmatpush.msra.mxu0 %v266
  %855 = vmatpush.msra.mxu0 %v265
  %856 = vmatpush.msra.mxu0 %v264
  %857 = vmatpush.msra.mxu0 %v263
  %858 = vmatpush.msra.mxu0 %v262
  %859 = vmatpush.msra.mxu0 %v261
  %860 = vmatmul.f32.gmra.mxu0 %v500
  %v861 = vpop.f32.mrf.mxu0
  %v862 = vadd.f32 %v842, %v861
  %863 = vdwg.mxu0
  %864 = vmatpush.msra.mxu0 %v292
  %865 = vmatpush.msra.mxu0 %v291
  %866 = vmatpush.msra.mxu0 %v290
  %867 = vmatpush.msra.mxu0 %v289
  %868 = vmatpush.msra.mxu0 %v288
  %869 = vmatpush.msra.mxu0 %v287
  %870 = vmatpush.msra.mxu0 %v286
  %871 = vmatpush.msra.mxu0 %v285
  %872 = vmatpush.msra.mxu0 %v284
  %873 = vmatpush.msra.mxu0 %v283
  %874 = vmatpush.msra.mxu0 %v282
  %875 = vmatpush.msra.mxu0 %v281
  %876 = vmatpush.msra.mxu0 %v280
  %877 = vmatpush.msra.mxu0 %v279
  %878 = vmatpush.msra.mxu0 %v278
  %879 = vmatpush.msra.mxu0 %v277
  %880 = vmatmul.f32.gmra.mxu0 %v503
  %v881 = vpop.f32.mrf.mxu0
  %v882 = vadd.f32 %v862, %v881
  %883 = vdwg.mxu0
  %884 = vmatpush.msra.mxu0 %v308
  %885 = vmatpush.msra.mxu0 %v307
  %886 = vmatpush.msra.mxu0 %v306
  %887 = vmatpush.msra.mxu0 %v305
  %888 = vmatpush.msra.mxu0 %v304
  %889 = vmatpush.msra.mxu0 %v303
  %890 = vmatpush.msra.mxu0 %v302
  %891 = vmatpush.msra.mxu0 %v301
  %892 = vmatpush.msra.mxu0 %v300
  %893 = vmatpush.msra.mxu0 %v299
  %894 = vmatpush.msra.mxu0 %v298
  %895 = vmatpush.msra.mxu0 %v297
  %896 = vmatpush.msra.mxu0 %v296
  %897 = vmatpush.msra.mxu0 %v295
  %898 = vmatpush.msra.mxu0 %v294
  %899 = vmatpush.msra.mxu0 %v293
  %900 = vmatmul.f32.gmra.mxu0 %v504
  %v901 = vpop.f32.mrf.mxu0
  %v902 = vadd.f32 %v882, %v901
  %903 = vdwg.mxu0
  %904 = vmatpush.msra.mxu0 %v324
  %905 = vmatpush.msra.mxu0 %v323
  %906 = vmatpush.msra.mxu0 %v322
  %907 = vmatpush.msra.mxu0 %v321
  %908 = vmatpush.msra.mxu0 %v320
  %909 = vmatpush.msra.mxu0 %v319
  %910 = vmatpush.msra.mxu0 %v318
  %911 = vmatpush.msra.mxu0 %v317
  %912 = vmatpush.msra.mxu0 %v316
  %913 = vmatpush.msra.mxu0 %v315
  %914 = vmatpush.msra.mxu0 %v314
  %915 = vmatpush.msra.mxu0 %v313
  %916 = vmatpush.msra.mxu0 %v312
  %917 = vmatpush.msra.mxu0 %v311
  %918 = vmatpush.msra.mxu0 %v310
  %919 = vmatpush.msra.mxu0 %v309
  %920 = vmatmul.f32.gmra.mxu0 %v505
  %v921 = vpop.f32.mrf.mxu0
  %v922 = vadd.f32 %v902, %v921
  %923 = vdwg.mxu0
  %924 = vmatpush.msra.mxu0 %v340
  %925 = vmatpush.msra.mxu0 %v339
  %926 = vmatpush.msra.mxu0 %v338
  %927 = vmatpush.msra.mxu0 %v337
  %928 = vmatpush.msra.mxu0 %v336
  %929 = vmatpush.msra.mxu0 %v335
  %930 = vmatpush.msra.mxu0 %v334
  %931 = vmatpush.msra.mxu0 %v333
  %932 = vmatpush.msra.mxu0 %v332
  %933 = vmatpush.msra.mxu0 %v331
  %934 = vmatpush.msra.mxu0 %v330
  %935 = vmatpush.msra.mxu0 %v329
  %936 = vmatpush.msra.mxu0 %v328
  %937 = vmatpush.msra.mxu0 %v327
  %938 = vmatpush.msra.mxu0 %v326
  %939 = vmatpush.msra.mxu0 %v325
  %940 = vmatmul.f32.gmra.mxu0 %v506
  %v941 = vpop.f32.mrf.mxu0
  %v942 = vadd.f32 %v922, %v941
  %943 = vdwg.mxu0
  %944 = vmatpush.msra.mxu0 %v356
  %945 = vmatpush.msra.mxu0 %v355
  %946 = vmatpush.msra.mxu0 %v354
  %947 = vmatpush.msra.mxu0 %v353
  %948 = vmatpush.msra.mxu0 %v352
  %949 = vmatpush.msra.mxu0 %v351
  %950 = vmatpush.msra.mxu0 %v350
  %951 = vmatpush.msra.mxu0 %v349
  %952 = vmatpush.msra.mxu0 %v348
  %953 = vmatpush.msra.mxu0 %v347
  %954 = vmatpush.msra.mxu0 %v346
  %955 = vmatpush.msra.mxu0 %v345
  %956 = vmatpush.msra.mxu0 %v344
  %957 = vmatpush.msra.mxu0 %v343
  %958 = vmatpush.msra.mxu0 %v342
  %959 = vmatpush.msra.mxu0 %v341
  %960 = vmatmul.f32.gmra.mxu0 %v507
  %v961 = vpop.f32.mrf.mxu0
  %v962 = vadd.f32 %v942, %v961
  %963 = vdwg.mxu0
  %964 = vmatpush.msra.mxu0 %v372
  %965 = vmatpush.msra.mxu0 %v371
  %966 = vmatpush.msra.mxu0 %v370
  %967 = vmatpush.msra.mxu0 %v369
  %968 = vmatpush.msra.mxu0 %v368
  %969 = vmatpush.msra.mxu0 %v367
  %970 = vmatpush.msra.mxu0 %v366
  %971 = vmatpush.msra.mxu0 %v365
  %972 = vmatpush.msra.mxu0 %v364
  %973 = vmatpush.msra.mxu0 %v363
  %974 = vmatpush.msra.mxu0 %v362
  %975 = vmatpush.msra.mxu0 %v361
  %976 = vmatpush.msra.mxu0 %v360
  %977 = vmatpush.msra.mxu0 %v359
  %978 = vmatpush.msra.mxu0 %v358
  %979 = vmatpush.msra.mxu0 %v357
  %980 = vmatmul.f32.gmra.mxu0 %v508
  %v981 = vpop.f32.mrf.mxu0
  %v982 = vadd.f32 %v962, %v981
  %983 = vdwg.mxu0
  %984 = vmatpush.msra.mxu0 %v388
  %985 = vmatpush.msra.mxu0 %v387
  %986 = vmatpush.msra.mxu0 %v386
  %987 = vmatpush.msra.mxu0 %v385
  %988 = vmatpush.msra.mxu0 %v384
  %989 = vmatpush.msra.mxu0 %v383
  %990 = vmatpush.msra.mxu0 %v382
  %991 = vmatpush.msra.mxu0 %v381
  %992 = vmatpush.msra.mxu0 %v380
  %993 = vmatpush.msra.mxu0 %v379
  %994 = vmatpush.msra.mxu0 %v378
  %995 = vmatpush.msra.mxu0 %v377
  %996 = vmatpush.msra.mxu0 %v376
  %997 = vmatpush.msra.mxu0 %v375
  %998 = vmatpush.msra.mxu0 %v374
  %999 = vmatpush.msra.mxu0 %v373
  %1000 = vmatmul.f32.gmra.mxu0 %v509
  %v1001 = vpop.f32.mrf.mxu0
  %v1002 = vadd.f32 %v982, %v1001
  %1003 = vdwg.mxu0
  %1004 = vmatpush.msra.mxu0 %v404
  %1005 = vmatpush.msra.mxu0 %v403
  %1006 = vmatpush.msra.mxu0 %v402
  %1007 = vmatpush.msra.mxu0 %v401
  %1008 = vmatpush.msra.mxu0 %v400
  %1009 = vmatpush.msra.mxu0 %v399
  %1010 = vmatpush.msra.mxu0 %v398
  %1011 = vmatpush.msra.mxu0 %v397
  %1012 = vmatpush.msra.mxu0 %v396
  %1013 = vmatpush.msra.mxu0 %v395
  %1014 = vmatpush.msra.mxu0 %v394
  %1015 = vmatpush.msra.mxu0 %v393
  %1016 = vmatpush.msra.mxu0 %v392
  %1017 = vmatpush.msra.mxu0 %v391
  %1018 = vmatpush.msra.mxu0 %v390
  %1019 = vmatpush.msra.mxu0 %v389
  %1020 = vmatmul.f32.gmra.mxu0 %v510
  %v1021 = vpop.f32.mrf.mxu0
  %v1022 = vadd.f32 %v1002, %v1021
  %1023 = vdwg.mxu0
  %1024 = vmatpush.msra.mxu0 %v420
  %1025 = vmatpush.msra.mxu0 %v419
  %1026 = vmatpush.msra.mxu0 %v418
  %1027 = vmatpush.msra.mxu0 %v417
  %1028 = vmatpush.msra.mxu0 %v416
  %1029 = vmatpush.msra.mxu0 %v415
  %1030 = vmatpush.msra.mxu0 %v414
  %1031 = vmatpush.msra.mxu0 %v413
  %1032 = vmatpush.msra.mxu0 %v412
  %1033 = vmatpush.msra.mxu0 %v411
  %1034 = vmatpush.msra.mxu0 %v410
  %1035 = vmatpush.msra.mxu0 %v409
  %1036 = vmatpush.msra.mxu0 %v408
  %1037 = vmatpush.msra.mxu0 %v407
  %1038 = vmatpush.msra.mxu0 %v406
  %1039 = vmatpush.msra.mxu0 %v405
  %1040 = vmatmul.f32.gmra.mxu0 %v512
  %v1041 = vpop.f32.mrf.mxu0
  %v1042 = vadd.f32 %v1022, %v1041
  %1043 = vdwg.mxu0
  %1044 = vmatpush.msra.mxu0 %v436
  %1045 = vmatpush.msra.mxu0 %v435
  %1046 = vmatpush.msra.mxu0 %v434
  %1047 = vmatpush.msra.mxu0 %v433
  %1048 = vmatpush.msra.mxu0 %v432
  %1049 = vmatpush.msra.mxu0 %v431
  %1050 = vmatpush.msra.mxu0 %v430
  %1051 = vmatpush.msra.mxu0 %v429
  %1052 = vmatpush.msra.mxu0 %v428
  %1053 = vmatpush.msra.mxu0 %v427
  %1054 = vmatpush.msra.mxu0 %v426
  %1055 = vmatpush.msra.mxu0 %v425
  %1056 = vmatpush.msra.mxu0 %v424
  %1057 = vmatpush.msra.mxu0 %v423
  %1058 = vmatpush.msra.mxu0 %v422
  %1059 = vmatpush.msra.mxu0 %v421
  %1060 = vmatmul.f32.gmra.mxu0 %v513
  %v1061 = vpop.f32.mrf.mxu0
  %v1062 = vadd.f32 %v1042, %v1061
  %1063 = vdwg.mxu0
  %1064 = vmatpush.msra.mxu0 %v452
  %1065 = vmatpush.msra.mxu0 %v451
  %1066 = vmatpush.msra.mxu0 %v450
  %1067 = vmatpush.msra.mxu0 %v449
  %1068 = vmatpush.msra.mxu0 %v448
  %1069 = vmatpush.msra.mxu0 %v447
  %1070 = vmatpush.msra.mxu0 %v446
  %1071 = vmatpush.msra.mxu0 %v445
  %1072 = vmatpush.msra.mxu0 %v444
  %1073 = vmatpush.msra.mxu0 %v443
  %1074 = vmatpush.msra.mxu0 %v442
  %1075 = vmatpush.msra.mxu0 %v441
  %1076 = vmatpush.msra.mxu0 %v440
  %1077 = vmatpush.msra.mxu0 %v439
  %1078 = vmatpush.msra.mxu0 %v438
  %1079 = vmatpush.msra.mxu0 %v437
  %1080 = vmatmul.f32.gmra.mxu0 %v514
  %v1081 = vpop.f32.mrf.mxu0
  %v1082 = vadd.f32 %v1062, %v1081
  %1083 = vdwg.mxu0
  %1084 = vmatpush.msra.mxu0 %v468
  %1085 = vmatpush.msra.mxu0 %v467
  %1086 = vmatpush.msra.mxu0 %v466
  %1087 = vmatpush.msra.mxu0 %v465
  %1088 = vmatpush.msra.mxu0 %v464
  %1089 = vmatpush.msra.mxu0 %v463
  %1090 = vmatpush.msra.mxu0 %v462
  %1091 = vmatpush.msra.mxu0 %v461
  %1092 = vmatpush.msra.mxu0 %v460
  %1093 = vmatpush.msra.mxu0 %v459
  %1094 = vmatpush.msra.mxu0 %v458
  %1095 = vmatpush.msra.mxu0 %v457
  %1096 = vmatpush.msra.mxu0 %v456
  %1097 = vmatpush.msra.mxu0 %v455
  %1098 = vmatpush.msra.mxu0 %v454
  %1099 = vmatpush.msra.mxu0 %v453
  %1100 = vmatmul.f32.gmra.mxu0 %v515
  %v1101 = vpop.f32.mrf.mxu0
  %v1102 = vadd.f32 %v1082, %v1101
  %1103 = vdwg.mxu0
  %v1104 = vmax.f32 %v1102, 0.0
  %1105 = vst [vmem:[%s3] sm:$0x3] %v1104
  // Predicated region
  $region14: #{simple_cnn_forward.6} parent=0 // pred_check
    _
  $region15: #{simple_cnn_forward.6} parent=0 // pred_check_branch
    %1107 = sbr.rel (0) target = $region17
  $region16: #{simple_cnn_forward.6} parent=0 // pred_region
    _
  $region17: #{simple_cnn_forward.6} parent=0 // pred_fallthru
    _
  // Predicated region
  $region18: #{simple_cnn_forward.6} parent=0 // pred_check
    _
  $region19: #{simple_cnn_forward.6} parent=0 // pred_check_branch
    %1109 = sbr.rel (0) target = $region21
  $region20: #{simple_cnn_forward.6} parent=0 // pred_region
    _
  $region21: #{simple_cnn_forward.6} parent=0 // pred_fallthru
    _

// kernel: simple_cnn_forward.4
$region0: #{simple_cnn_forward.4}
  #allocation0 [shape = 'u32[]', space=smem, size = 0x4, offset = 0x4, fixed_abs, tag = 'smem constant byte address 0x4 - core index']
  #allocation1 [shape = 'u32[72,128]{1,0:T(1,128)}', space=vmem, size = 0x9000, scoped, tag = 'internal scratch']
  %s0 = inlined_call_operand.vmem [shape: f32[2,4,240,1], index: 0, kind: input, shape index: {}]
  %s1 = inlined_call_operand.vmem [shape: f32[9,1,32], index: 1, kind: input, shape index: {}]
  %s2 = inlined_call_operand.vmem [shape: f32[1,32], index: 2, kind: input, shape index: {}]
  %s3 = inlined_call_operand.vmem [shape: f32[2,210,32], index: 3, kind: output, shape index: {}]
  %s4 = sld [smem:[#allocation0]]
  $region45: #{simple_cnn_forward.4} parent=0
    _
  %s6 = ssub.s32 1, %s4
  %s7 = scalar_select 0, %s6, %s4
  loop: start=0, step=1, limit=4
  $region2: #{simple_cnn_forward.4} parent=0 // loop_pre_header
    _
  $region3: #{simple_cnn_forward.4} parent=0 // loop_header
    %s9 = sphi 0, %s13
    %p10 = scmp.ge.s32.totalorder %s9, 4
    %s19 = sphi 0, %s21
    %s22 = sphi 0, %s19
    %s23 = sphi 0, %s22
    %s39 = sphi 0, %s23
    %s43 = sphi 0, %s43
    %s45 = sphi 0, %s43
    %s46 = sphi 0, %s45
    %s60 = sphi 0, %s46
    %s64 = sphi 0, %s64
    %s66 = sphi 0, %s64
    %s67 = sphi 0, %s66
    %s81 = sphi 0, %s67
    %s87 = sphi 0, %s89
    %s90 = sphi 0, %s87
    %s91 = sphi 0, %s90
    %s107 = sphi 0, %s91
  $region4: #{simple_cnn_forward.4} parent=0 // loop_header_branch
    %12 = sbr.rel (%p10) target = $region8
  $region5: #{simple_cnn_forward.4} parent=0 // loop_body
    %s14 = ssub.s32 %s9, 1
    %s15 = ssub.s32 %s9, 2
    %s16 = sadd.s32 %s9, 1
    %s17 = ssub.s32 %s9, %s16
    %p18 = scmp.eq.s32.totalorder %s17, 0
    %s20 = sadd.s32 %s19, 1
    %s21 = scalar_select %p18, %s19, %s20
    %p24 = pneg %p18
    %p25 = scmp.eq.s32.totalorder %s9, 1
    %p26 = por %p24, %p25
    %p27 = scmp.ne.s32.totalorder %s19, %s22
    %p28 = scmp.eq.s32.totalorder %s9, 0
    %p29 = por %p27, %p28
    %p30 = scmp.ne.s32.totalorder %s19, %s22
    %p31 = scmp.eq.s32.totalorder %s14, 1
    %p32 = por %p30, %p31
    %p33 = scmp.ne.s32.totalorder %s22, %s23
    %p34 = scmp.eq.s32.totalorder %s14, 0
    %p35 = por %p33, %p34
    %p36 = scmp.ne.s32.totalorder %s22, %s23
    %p37 = scmp.eq.s32.totalorder %s15, 1
    %p38 = por %p36, %p37
    %p40 = scmp.ne.s32.totalorder %s23, %s39
    %p41 = scmp.eq.s32.totalorder %s15, 0
    %p42 = por %p40, %p41
    %s44 = sadd.s32 %s43, 1
    %p47 = scmp.eq.s32.totalorder %s9, 1
    %p48 = scmp.ne.s32.totalorder %s43, %s45
    %p49 = scmp.eq.s32.totalorder %s9, 0
    %p50 = por %p48, %p49
    %p51 = scmp.ne.s32.totalorder %s43, %s45
    %p52 = scmp.eq.s32.totalorder %s14, 1
    %p53 = por %p51, %p52
    %p54 = scmp.ne.s32.totalorder %s45, %s46
    %p55 = scmp.eq.s32.totalorder %s14, 0
    %p56 = por %p54, %p55
    %p57 = scmp.ne.s32.totalorder %s45, %s46
    %p58 = scmp.eq.s32.totalorder %s15, 1
    %p59 = por %p57, %p58
    %p61 = scmp.ne.s32.totalorder %s46, %s60
    %p62 = scmp.eq.s32.totalorder %s15, 0
    %p63 = por %p61, %p62
    %s65 = sadd.s32 %s64, 1
    %p68 = scmp.eq.s32.totalorder %s9, 1
    %p69 = scmp.ne.s32.totalorder %s64, %s66
    %p70 = scmp.eq.s32.totalorder %s9, 0
    %p71 = por %p69, %p70
    %p72 = scmp.ne.s32.totalorder %s64, %s66
    %p73 = scmp.eq.s32.totalorder %s14, 1
    %p74 = por %p72, %p73
    %p75 = scmp.ne.s32.totalorder %s66, %s67
    %p76 = scmp.eq.s32.totalorder %s14, 0
    %p77 = por %p75, %p76
    %p78 = scmp.ne.s32.totalorder %s66, %s67
    %p79 = scmp.eq.s32.totalorder %s15, 1
    %p80 = por %p78, %p79
    %p82 = scmp.ne.s32.totalorder %s67, %s81
    %p83 = scmp.eq.s32.totalorder %s15, 0
    %p84 = por %p82, %p83
    %s85 = ssub.s32 %s9, %s16
    %p86 = scmp.eq.s32.totalorder %s85, 0
    %s88 = sadd.s32 %s87, 1
    %s89 = scalar_select %p86, %s87, %s88
    %p92 = pneg %p86
    %p93 = scmp.eq.s32.totalorder %s9, 1
    %p94 = por %p92, %p93
    %p95 = scmp.ne.s32.totalorder %s87, %s90
    %p96 = scmp.eq.s32.totalorder %s9, 0
    %p97 = por %p95, %p96
    %p98 = scmp.ne.s32.totalorder %s87, %s90
    %p99 = scmp.eq.s32.totalorder %s14, 1
    %p100 = por %p98, %p99
    %p101 = scmp.ne.s32.totalorder %s90, %s91
    %p102 = scmp.eq.s32.totalorder %s14, 0
    %p103 = por %p101, %p102
    %p104 = scmp.ne.s32.totalorder %s90, %s91
    %p105 = scmp.eq.s32.totalorder %s15, 1
    %p106 = por %p104, %p105
    %p108 = scmp.ne.s32.totalorder %s91, %s107
    %p109 = scmp.eq.s32.totalorder %s15, 0
    %p110 = por %p108, %p109
    %p111 = scmp.le.s32.totalorder 1, %s9
    %p112 = scmp.lt.s32.totalorder %s9, 3
    %p113 = pnand %p111, %p112
    %p114 = pneg %p113
    // Predicated region
    $region9: #{simple_cnn_forward.4} parent=5 // pred_check
      _
    $region10: #{simple_cnn_forward.4} parent=5 // pred_check_branch
      %116 = sbr.rel (%p113) target = $region12
    $region11: #{simple_cnn_forward.4} parent=5 // pred_region
      %s117 = ssub.s32 %s9, 1
      // Predicated region
      $region13: #{simple_cnn_forward.4} parent=11 // pred_check
        %p118 = pneg %p56
      $region14: #{simple_cnn_forward.4} parent=11 // pred_check_branch
        %120 = sbr.rel (%p118) target = $region16
      $region15: #{simple_cnn_forward.4} parent=11 // pred_region
        _
      $region16: #{simple_cnn_forward.4} parent=11 // pred_fallthru
        _
      // Predicated region
      $region17: #{simple_cnn_forward.4} parent=11 // pred_check
        %p121 = pneg %p77
      $region18: #{simple_cnn_forward.4} parent=11 // pred_check_branch
        %123 = sbr.rel (%p121) target = $region20
      $region19: #{simple_cnn_forward.4} parent=11 // pred_region
        _
      $region20: #{simple_cnn_forward.4} parent=11 // pred_fallthru
        _
    $region12: #{simple_cnn_forward.4} parent=5 // pred_fallthru
      _
    %p124 = scmp.lt.s32.totalorder %s9, 2
    // Predicated region
    $region21: #{simple_cnn_forward.4} parent=5 // pred_check
      %p125 = pneg %p124
    $region22: #{simple_cnn_forward.4} parent=5 // pred_check_branch
      %127 = sbr.rel (%p125) target = $region24
    $region23: #{simple_cnn_forward.4} parent=5 // pred_region
      // Predicated region
      $region25: #{simple_cnn_forward.4} parent=23 // pred_check
        %p128 = pneg %p29
      $region26: #{simple_cnn_forward.4} parent=23 // pred_check_branch
        %130 = sbr.rel (%p128) target = $region28
      $region27: #{simple_cnn_forward.4} parent=23 // pred_region
        %p131 = scmp.lt.s32.totalorder %s9, 1
        %s132 = scalar_select %p131, %s9, 1
        %s133 = smul.addr %s132, 120
        %s134 = smul.addr %s133, 8
        %s135 = scalar_lea.vmem %s0, %s134
      $region28: #{simple_cnn_forward.4} parent=23 // pred_fallthru
        _
    $region24: #{simple_cnn_forward.4} parent=5 // pred_fallthru
      _
    %p136 = scmp.le.s32.totalorder 1, %s9
    %p137 = scmp.lt.s32.totalorder %s9, 3
    %p138 = pnand %p136, %p137
    %p139 = pneg %p138
    // Predicated region
    $region29: #{simple_cnn_forward.4} parent=5 // pred_check
      _
    $region30: #{simple_cnn_forward.4} parent=5 // pred_check_branch
      %141 = sbr.rel (%p138) target = $region32
    $region31: #{simple_cnn_forward.4} parent=5 // pred_region
      %s142 = ssub.s32 %s9, 1
      %p143 = scmp.lt.s32.totalorder %s14, 1
      %s144 = scalar_select %p143, %s14, 1
      %s145 = smul.addr %s144, 120
      %s146 = smul.addr %s145, 8
      %s147 = scalar_lea.vmem %s0, %s146
      %p148 = pneg %p35
      %p149 = pneg %p32
      %p150 = pneg %p56
      %p151 = pneg %p53
      %p152 = pneg %p77
      %p153 = pneg %p74
      %p154 = pneg %p103
      %p155 = pneg %p100
      %p156 = scmp.lt.s32.totalorder %s14, 1
      %s157 = scalar_select %p156, %s14, 1
      %s158 = smul.addr %s157, 27
      %s159 = smul.addr %s158, 8
      %s160 = scalar_lea.vmem %s3, %s159
      %p161 = scmp.lt.s32.totalorder %s14, 1
      %s162 = scalar_select %p161, %s14, 1
      %s163 = smul.addr %s162, 120
      %s164 = smul.addr %s163, 8
      %s165 = scalar_lea.vmem %s0, %s164
      %p166 = scmp.lt.s32.totalorder %s14, 1
      %s167 = scalar_select %p166, %s14, 1
      %s168 = smul.addr %s167, 27
      %s169 = smul.addr %s168, 8
      %s170 = scalar_lea.vmem %s3, %s169
      %v171 = vld [vmem:[%s165] sm:$0xff]
      %v172 = vld [vmem:[%s165 + $0x8] sm:$0xff]
      %v173 = vld [vmem:[%s165 + $0x10] sm:$0xff]
      %v174 = vld [vmem:[%s165 + $0x18] sm:$0xff]
      %v175 = vld [vmem:[%s165 + $0x20] sm:$0xff]
      %v176 = vld [vmem:[%s165 + $0x28] sm:$0xff]
      %v177 = vld [vmem:[%s165 + $0x30] sm:$0xff]
      %v178 = vld [vmem:[%s165 + $0x38] sm:$0xff]
      %v179 = vld [vmem:[%s165 + $0x40] sm:$0xff]
      %v180 = vld [vmem:[%s165 + $0x48] sm:$0xff]
      %v181 = vld [vmem:[%s165 + $0x50] sm:$0xff]
      %v182 = vld [vmem:[%s165 + $0x58] sm:$0xff]
      %v183 = vld [vmem:[%s165 + $0x60] sm:$0xff]
      %v184 = vld [vmem:[%s165 + $0x68] sm:$0xff]
      %v185 = vld [vmem:[%s165 + $0x70] sm:$0xff]
      %v186 = vld [vmem:[%s165 + $0x78] sm:$0xff]
      %v187 = vld [vmem:[%s165 + $0x80] sm:$0xff]
      %v188 = vld [vmem:[%s165 + $0x88] sm:$0xff]
      %v189 = vld [vmem:[%s165 + $0x90] sm:$0xff]
      %v190 = vld [vmem:[%s165 + $0x98] sm:$0xff]
      %v191 = vld [vmem:[%s165 + $0xa0] sm:$0xff]
      %v192 = vld [vmem:[%s165 + $0xa8] sm:$0xff]
      %v193 = vld [vmem:[%s165 + $0xb0] sm:$0xff]
      %v194 = vld [vmem:[%s165 + $0xb8] sm:$0xff]
      %v195 = vld [vmem:[%s165 + $0xc0] sm:$0xff]
      %v196 = vld [vmem:[%s165 + $0xc8] sm:$0xff]
      %v197 = vld [vmem:[%s165 + $0xd0] sm:$0x3]
      %v198 = vld [vmem:[%s1] sm:$0x1]
      %200 = vset.pattern.permute.xlu0 0
      %201 = vperm.xlu0 %200, %v171
      %v202 = vpop.permute.xlu0 %201
      %205 = vset.pattern.permute.xlu0 0
      %206 = vperm.xlu0 %205, %v172
      %v207 = vpop.permute.xlu0 %206
      %210 = vset.pattern.permute.xlu0 0
      %211 = vperm.xlu0 %210, %v173
      %v212 = vpop.permute.xlu0 %211
      %215 = vset.pattern.permute.xlu0 0
      %216 = vperm.xlu0 %215, %v174
      %v217 = vpop.permute.xlu0 %216
      %220 = vset.pattern.permute.xlu0 0
      %221 = vperm.xlu0 %220, %v175
      %v222 = vpop.permute.xlu0 %221
      %225 = vset.pattern.permute.xlu0 0
      %226 = vperm.xlu0 %225, %v176
      %v227 = vpop.permute.xlu0 %226
      %230 = vset.pattern.permute.xlu0 0
      %231 = vperm.xlu0 %230, %v177
      %v232 = vpop.permute.xlu0 %231
      %235 = vset.pattern.permute.xlu0 0
      %236 = vperm.xlu0 %235, %v178
      %v237 = vpop.permute.xlu0 %236
      %240 = vset.pattern.permute.xlu0 0
      %241 = vperm.xlu0 %240, %v179
      %v242 = vpop.permute.xlu0 %241
      %245 = vset.pattern.permute.xlu0 0
      %246 = vperm.xlu0 %245, %v180
      %v247 = vpop.permute.xlu0 %246
      %250 = vset.pattern.permute.xlu0 0
      %251 = vperm.xlu0 %250, %v181
      %v252 = vpop.permute.xlu0 %251
      %255 = vset.pattern.permute.xlu0 0
      %256 = vperm.xlu0 %255, %v182
      %v257 = vpop.permute.xlu0 %256
      %260 = vset.pattern.permute.xlu0 0
      %261 = vperm.xlu0 %260, %v183
      %v262 = vpop.permute.xlu0 %261
      %265 = vset.pattern.permute.xlu0 0
      %266 = vperm.xlu0 %265, %v184
      %v267 = vpop.permute.xlu0 %266
      %270 = vset.pattern.permute.xlu0 0
      %271 = vperm.xlu0 %270, %v185
      %v272 = vpop.permute.xlu0 %271
      %275 = vset.pattern.permute.xlu0 0
      %276 = vperm.xlu0 %275, %v186
      %v277 = vpop.permute.xlu0 %276
      %280 = vset.pattern.permute.xlu0 0
      %281 = vperm.xlu0 %280, %v187
      %v282 = vpop.permute.xlu0 %281
      %285 = vset.pattern.permute.xlu0 0
      %286 = vperm.xlu0 %285, %v188
      %v287 = vpop.permute.xlu0 %286
      %290 = vset.pattern.permute.xlu0 0
      %291 = vperm.xlu0 %290, %v189
      %v292 = vpop.permute.xlu0 %291
      %295 = vset.pattern.permute.xlu0 0
      %296 = vperm.xlu0 %295, %v190
      %v297 = vpop.permute.xlu0 %296
      %300 = vset.pattern.permute.xlu0 0
      %301 = vperm.xlu0 %300, %v191
      %v302 = vpop.permute.xlu0 %301
      %305 = vset.pattern.permute.xlu0 0
      %306 = vperm.xlu0 %305, %v192
      %v307 = vpop.permute.xlu0 %306
      %310 = vset.pattern.permute.xlu0 0
      %311 = vperm.xlu0 %310, %v193
      %v312 = vpop.permute.xlu0 %311
      %315 = vset.pattern.permute.xlu0 0
      %316 = vperm.xlu0 %315, %v194
      %v317 = vpop.permute.xlu0 %316
      %320 = vset.pattern.permute.xlu0 0
      %321 = vperm.xlu0 %320, %v195
      %v322 = vpop.permute.xlu0 %321
      %325 = vset.pattern.permute.xlu0 0
      %326 = vperm.xlu0 %325, %v196
      %v327 = vpop.permute.xlu0 %326
      %330 = vset.pattern.permute.xlu0 0
      %331 = vperm.xlu0 %330, %v197
      %v332 = vpop.permute.xlu0 %331
      %v335 = vperm.slane %v198, 0
      %v337 = vmul.f32 %v202, %v335
      %v338 = vmul.f32 %v207, %v335
      %v339 = vmul.f32 %v212, %v335
      %v340 = vmul.f32 %v217, %v335
      %v341 = vmul.f32 %v222, %v335
      %v342 = vmul.f32 %v227, %v335
      %v343 = vmul.f32 %v232, %v335
      %v344 = vmul.f32 %v237, %v335
      %v345 = vmul.f32 %v242, %v335
      %v346 = vmul.f32 %v247, %v335
      %v347 = vmul.f32 %v252, %v335
      %v348 = vmul.f32 %v257, %v335
      %v349 = vmul.f32 %v262, %v335
      %v350 = vmul.f32 %v267, %v335
      %v351 = vmul.f32 %v272, %v335
      %v352 = vmul.f32 %v277, %v335
      %v353 = vmul.f32 %v282, %v335
      %v354 = vmul.f32 %v287, %v335
      %v355 = vmul.f32 %v292, %v335
      %v356 = vmul.f32 %v297, %v335
      %v357 = vmul.f32 %v302, %v335
      %v358 = vmul.f32 %v307, %v335
      %v359 = vmul.f32 %v312, %v335
      %v360 = vmul.f32 %v317, %v335
      %v361 = vmul.f32 %v322, %v335
      %v362 = vmul.f32 %v327, %v335
      %v363 = vmul.f32 %v332, %v335
      %v364 = vadd.f32 %v337, 0.0
      %v365 = vadd.f32 %v338, 0.0
      %v366 = vadd.f32 %v339, 0.0
      %v367 = vadd.f32 %v340, 0.0
      %v368 = vadd.f32 %v341, 0.0
      %v369 = vadd.f32 %v342, 0.0
      %v370 = vadd.f32 %v343, 0.0
      %v371 = vadd.f32 %v344, 0.0
      %v372 = vadd.f32 %v345, 0.0
      %v373 = vadd.f32 %v346, 0.0
      %v374 = vadd.f32 %v347, 0.0
      %v375 = vadd.f32 %v348, 0.0
      %v376 = vadd.f32 %v349, 0.0
      %v377 = vadd.f32 %v350, 0.0
      %v378 = vadd.f32 %v351, 0.0
      %v379 = vadd.f32 %v352, 0.0
      %v380 = vadd.f32 %v353, 0.0
      %v381 = vadd.f32 %v354, 0.0
      %v382 = vadd.f32 %v355, 0.0
      %v383 = vadd.f32 %v356, 0.0
      %v384 = vadd.f32 %v357, 0.0
      %v385 = vadd.f32 %v358, 0.0
      %v386 = vadd.f32 %v359, 0.0
      %v387 = vadd.f32 %v360, 0.0
      %v388 = vadd.f32 %v361, 0.0
      %v389 = vadd.f32 %v362, 0.0
      %v390 = vadd.f32 %v363, 0.0
      %s391 = scalar_lea.vmem %s165, 240
      %v392 = vld [vmem:[%s391] sm:$0xff]
      %v393 = vld [vmem:[%s391 + $0x8] sm:$0xff]
      %v394 = vld [vmem:[%s391 + $0x10] sm:$0xff]
      %v395 = vld [vmem:[%s391 + $0x18] sm:$0xff]
      %v396 = vld [vmem:[%s391 + $0x20] sm:$0xff]
      %v397 = vld [vmem:[%s391 + $0x28] sm:$0xff]
      %v398 = vld [vmem:[%s391 + $0x30] sm:$0xff]
      %v399 = vld [vmem:[%s391 + $0x38] sm:$0xff]
      %v400 = vld [vmem:[%s391 + $0x40] sm:$0xff]
      %v401 = vld [vmem:[%s391 + $0x48] sm:$0xff]
      %v402 = vld [vmem:[%s391 + $0x50] sm:$0xff]
      %v403 = vld [vmem:[%s391 + $0x58] sm:$0xff]
      %v404 = vld [vmem:[%s391 + $0x60] sm:$0xff]
      %v405 = vld [vmem:[%s391 + $0x68] sm:$0xff]
      %v406 = vld [vmem:[%s391 + $0x70] sm:$0xff]
      %v407 = vld [vmem:[%s391 + $0x78] sm:$0xff]
      %v408 = vld [vmem:[%s391 + $0x80] sm:$0xff]
      %v409 = vld [vmem:[%s391 + $0x88] sm:$0xff]
      %v410 = vld [vmem:[%s391 + $0x90] sm:$0xff]
      %v411 = vld [vmem:[%s391 + $0x98] sm:$0xff]
      %v412 = vld [vmem:[%s391 + $0xa0] sm:$0xff]
      %v413 = vld [vmem:[%s391 + $0xa8] sm:$0xff]
      %v414 = vld [vmem:[%s391 + $0xb0] sm:$0xff]
      %v415 = vld [vmem:[%s391 + $0xb8] sm:$0xff]
      %v416 = vld [vmem:[%s391 + $0xc0] sm:$0xff]
      %v417 = vld [vmem:[%s391 + $0xc8] sm:$0xff]
      %v418 = vld [vmem:[%s391 + $0xd0] sm:$0x3]
      %s419 = scalar_lea.vmem %s1, 1
      %v420 = vld [vmem:[%s419] sm:$0x1]
      %422 = vset.pattern.permute.xlu0 0
      %423 = vperm.xlu0 %422, %v392
      %v424 = vpop.permute.xlu0 %423
      %427 = vset.pattern.permute.xlu0 0
      %428 = vperm.xlu0 %427, %v393
      %v429 = vpop.permute.xlu0 %428
      %432 = vset.pattern.permute.xlu0 0
      %433 = vperm.xlu0 %432, %v394
      %v434 = vpop.permute.xlu0 %433
      %437 = vset.pattern.permute.xlu0 0
      %438 = vperm.xlu0 %437, %v395
      %v439 = vpop.permute.xlu0 %438
      %442 = vset.pattern.permute.xlu0 0
      %443 = vperm.xlu0 %442, %v396
      %v444 = vpop.permute.xlu0 %443
      %447 = vset.pattern.permute.xlu0 0
      %448 = vperm.xlu0 %447, %v397
      %v449 = vpop.permute.xlu0 %448
      %452 = vset.pattern.permute.xlu0 0
      %453 = vperm.xlu0 %452, %v398
      %v454 = vpop.permute.xlu0 %453
      %457 = vset.pattern.permute.xlu0 0
      %458 = vperm.xlu0 %457, %v399
      %v459 = vpop.permute.xlu0 %458
      %462 = vset.pattern.permute.xlu0 0
      %463 = vperm.xlu0 %462, %v400
      %v464 = vpop.permute.xlu0 %463
      %467 = vset.pattern.permute.xlu0 0
      %468 = vperm.xlu0 %467, %v401
      %v469 = vpop.permute.xlu0 %468
      %472 = vset.pattern.permute.xlu0 0
      %473 = vperm.xlu0 %472, %v402
      %v474 = vpop.permute.xlu0 %473
      %477 = vset.pattern.permute.xlu0 0
      %478 = vperm.xlu0 %477, %v403
      %v479 = vpop.permute.xlu0 %478
      %482 = vset.pattern.permute.xlu0 0
      %483 = vperm.xlu0 %482, %v404
      %v484 = vpop.permute.xlu0 %483
      %487 = vset.pattern.permute.xlu0 0
      %488 = vperm.xlu0 %487, %v405
      %v489 = vpop.permute.xlu0 %488
      %492 = vset.pattern.permute.xlu0 0
      %493 = vperm.xlu0 %492, %v406
      %v494 = vpop.permute.xlu0 %493
      %497 = vset.pattern.permute.xlu0 0
      %498 = vperm.xlu0 %497, %v407
      %v499 = vpop.permute.xlu0 %498
      %502 = vset.pattern.permute.xlu0 0
      %503 = vperm.xlu0 %502, %v408
      %v504 = vpop.permute.xlu0 %503
      %507 = vset.pattern.permute.xlu0 0
      %508 = vperm.xlu0 %507, %v409
      %v509 = vpop.permute.xlu0 %508
      %512 = vset.pattern.permute.xlu0 0
      %513 = vperm.xlu0 %512, %v410
      %v514 = vpop.permute.xlu0 %513
      %517 = vset.pattern.permute.xlu0 0
      %518 = vperm.xlu0 %517, %v411
      %v519 = vpop.permute.xlu0 %518
      %522 = vset.pattern.permute.xlu0 0
      %523 = vperm.xlu0 %522, %v412
      %v524 = vpop.permute.xlu0 %523
      %527 = vset.pattern.permute.xlu0 0
      %528 = vperm.xlu0 %527, %v413
      %v529 = vpop.permute.xlu0 %528
      %532 = vset.pattern.permute.xlu0 0
      %533 = vperm.xlu0 %532, %v414
      %v534 = vpop.permute.xlu0 %533
      %537 = vset.pattern.permute.xlu0 0
      %538 = vperm.xlu0 %537, %v415
      %v539 = vpop.permute.xlu0 %538
      %542 = vset.pattern.permute.xlu0 0
      %543 = vperm.xlu0 %542, %v416
      %v544 = vpop.permute.xlu0 %543
      %547 = vset.pattern.permute.xlu0 0
      %548 = vperm.xlu0 %547, %v417
      %v549 = vpop.permute.xlu0 %548
      %552 = vset.pattern.permute.xlu0 0
      %553 = vperm.xlu0 %552, %v418
      %v554 = vpop.permute.xlu0 %553
      %v557 = vperm.slane %v420, 0
      %v559 = vmul.f32 %v424, %v557
      %v560 = vmul.f32 %v429, %v557
      %v561 = vmul.f32 %v434, %v557
      %v562 = vmul.f32 %v439, %v557
      %v563 = vmul.f32 %v444, %v557
      %v564 = vmul.f32 %v449, %v557
      %v565 = vmul.f32 %v454, %v557
      %v566 = vmul.f32 %v459, %v557
      %v567 = vmul.f32 %v464, %v557
      %v568 = vmul.f32 %v469, %v557
      %v569 = vmul.f32 %v474, %v557
      %v570 = vmul.f32 %v479, %v557
      %v571 = vmul.f32 %v484, %v557
      %v572 = vmul.f32 %v489, %v557
      %v573 = vmul.f32 %v494, %v557
      %v574 = vmul.f32 %v499, %v557
      %v575 = vmul.f32 %v504, %v557
      %v576 = vmul.f32 %v509, %v557
      %v577 = vmul.f32 %v514, %v557
      %v578 = vmul.f32 %v519, %v557
      %v579 = vmul.f32 %v524, %v557
      %v580 = vmul.f32 %v529, %v557
      %v581 = vmul.f32 %v534, %v557
      %v582 = vmul.f32 %v539, %v557
      %v583 = vmul.f32 %v544, %v557
      %v584 = vmul.f32 %v549, %v557
      %v585 = vmul.f32 %v554, %v557
      %v586 = vadd.f32 %v364, %v559
      %v587 = vadd.f32 %v365, %v560
      %v588 = vadd.f32 %v366, %v561
      %v589 = vadd.f32 %v367, %v562
      %v590 = vadd.f32 %v368, %v563
      %v591 = vadd.f32 %v369, %v564
      %v592 = vadd.f32 %v370, %v565
      %v593 = vadd.f32 %v371, %v566
      %v594 = vadd.f32 %v372, %v567
      %v595 = vadd.f32 %v373, %v568
      %v596 = vadd.f32 %v374, %v569
      %v597 = vadd.f32 %v375, %v570
      %v598 = vadd.f32 %v376, %v571
      %v599 = vadd.f32 %v377, %v572
      %v600 = vadd.f32 %v378, %v573
      %v601 = vadd.f32 %v379, %v574
      %v602 = vadd.f32 %v380, %v575
      %v603 = vadd.f32 %v381, %v576
      %v604 = vadd.f32 %v382, %v577
      %v605 = vadd.f32 %v383, %v578
      %v606 = vadd.f32 %v384, %v579
      %v607 = vadd.f32 %v385, %v580
      %v608 = vadd.f32 %v386, %v581
      %v609 = vadd.f32 %v387, %v582
      %v610 = vadd.f32 %v388, %v583
      %v611 = vadd.f32 %v389, %v584
      %v612 = vadd.f32 %v390, %v585
      %v613 = vld [vmem:[%s165 + $0x1] sm:$0xff]
      %v614 = vld [vmem:[%s165 + $0x9] sm:$0xff]
      %v615 = vld [vmem:[%s165 + $0x11] sm:$0xff]
      %v616 = vld [vmem:[%s165 + $0x19] sm:$0xff]
      %v617 = vld [vmem:[%s165 + $0x21] sm:$0xff]
      %v618 = vld [vmem:[%s165 + $0x29] sm:$0xff]
      %v619 = vld [vmem:[%s165 + $0x31] sm:$0xff]
      %v620 = vld [vmem:[%s165 + $0x39] sm:$0xff]
      %v621 = vld [vmem:[%s165 + $0x41] sm:$0xff]
      %v622 = vld [vmem:[%s165 + $0x49] sm:$0xff]
      %v623 = vld [vmem:[%s165 + $0x51] sm:$0xff]
      %v624 = vld [vmem:[%s165 + $0x59] sm:$0xff]
      %v625 = vld [vmem:[%s165 + $0x61] sm:$0xff]
      %v626 = vld [vmem:[%s165 + $0x69] sm:$0xff]
      %v627 = vld [vmem:[%s165 + $0x71] sm:$0xff]
      %v628 = vld [vmem:[%s165 + $0x79] sm:$0xff]
      %v629 = vld [vmem:[%s165 + $0x81] sm:$0xff]
      %v630 = vld [vmem:[%s165 + $0x89] sm:$0xff]
      %v631 = vld [vmem:[%s165 + $0x91] sm:$0xff]
      %v632 = vld [vmem:[%s165 + $0x99] sm:$0xff]
      %v633 = vld [vmem:[%s165 + $0xa1] sm:$0xff]
      %v634 = vld [vmem:[%s165 + $0xa9] sm:$0xff]
      %v635 = vld [vmem:[%s165 + $0xb1] sm:$0xff]
      %v636 = vld [vmem:[%s165 + $0xb9] sm:$0xff]
      %v637 = vld [vmem:[%s165 + $0xc1] sm:$0xff]
      %v638 = vld [vmem:[%s165 + $0xc9] sm:$0xff]
      %v639 = vld [vmem:[%s165 + $0xd1] sm:$0x3]
      %s640 = scalar_lea.vmem %s1, 2
      %v641 = vld [vmem:[%s640] sm:$0x1]
      %643 = vset.pattern.permute.xlu0 0
      %644 = vperm.xlu0 %643, %v613
      %v645 = vpop.permute.xlu0 %644
      %648 = vset.pattern.permute.xlu0 0
      %649 = vperm.xlu0 %648, %v614
      %v650 = vpop.permute.xlu0 %649
      %653 = vset.pattern.permute.xlu0 0
      %654 = vperm.xlu0 %653, %v615
      %v655 = vpop.permute.xlu0 %654
      %658 = vset.pattern.permute.xlu0 0
      %659 = vperm.xlu0 %658, %v616
      %v660 = vpop.permute.xlu0 %659
      %663 = vset.pattern.permute.xlu0 0
      %664 = vperm.xlu0 %663, %v617
      %v665 = vpop.permute.xlu0 %664
      %668 = vset.pattern.permute.xlu0 0
      %669 = vperm.xlu0 %668, %v618
      %v670 = vpop.permute.xlu0 %669
      %673 = vset.pattern.permute.xlu0 0
      %674 = vperm.xlu0 %673, %v619
      %v675 = vpop.permute.xlu0 %674
      %678 = vset.pattern.permute.xlu0 0
      %679 = vperm.xlu0 %678, %v620
      %v680 = vpop.permute.xlu0 %679
      %683 = vset.pattern.permute.xlu0 0
      %684 = vperm.xlu0 %683, %v621
      %v685 = vpop.permute.xlu0 %684
      %688 = vset.pattern.permute.xlu0 0
      %689 = vperm.xlu0 %688, %v622
      %v690 = vpop.permute.xlu0 %689
      %693 = vset.pattern.permute.xlu0 0
      %694 = vperm.xlu0 %693, %v623
      %v695 = vpop.permute.xlu0 %694
      %698 = vset.pattern.permute.xlu0 0
      %699 = vperm.xlu0 %698, %v624
      %v700 = vpop.permute.xlu0 %699
      %703 = vset.pattern.permute.xlu0 0
      %704 = vperm.xlu0 %703, %v625
      %v705 = vpop.permute.xlu0 %704
      %708 = vset.pattern.permute.xlu0 0
      %709 = vperm.xlu0 %708, %v626
      %v710 = vpop.permute.xlu0 %709
      %713 = vset.pattern.permute.xlu0 0
      %714 = vperm.xlu0 %713, %v627
      %v715 = vpop.permute.xlu0 %714
      %718 = vset.pattern.permute.xlu0 0
      %719 = vperm.xlu0 %718, %v628
      %v720 = vpop.permute.xlu0 %719
      %723 = vset.pattern.permute.xlu0 0
      %724 = vperm.xlu0 %723, %v629
      %v725 = vpop.permute.xlu0 %724
      %728 = vset.pattern.permute.xlu0 0
      %729 = vperm.xlu0 %728, %v630
      %v730 = vpop.permute.xlu0 %729
      %733 = vset.pattern.permute.xlu0 0
      %734 = vperm.xlu0 %733, %v631
      %v735 = vpop.permute.xlu0 %734
      %738 = vset.pattern.permute.xlu0 0
      %739 = vperm.xlu0 %738, %v632
      %v740 = vpop.permute.xlu0 %739
      %743 = vset.pattern.permute.xlu0 0
      %744 = vperm.xlu0 %743, %v633
      %v745 = vpop.permute.xlu0 %744
      %748 = vset.pattern.permute.xlu0 0
      %749 = vperm.xlu0 %748, %v634
      %v750 = vpop.permute.xlu0 %749
      %753 = vset.pattern.permute.xlu0 0
      %754 = vperm.xlu0 %753, %v635
      %v755 = vpop.permute.xlu0 %754
      %758 = vset.pattern.permute.xlu0 0
      %759 = vperm.xlu0 %758, %v636
      %v760 = vpop.permute.xlu0 %759
      %763 = vset.pattern.permute.xlu0 0
      %764 = vperm.xlu0 %763, %v637
      %v765 = vpop.permute.xlu0 %764
      %768 = vset.pattern.permute.xlu0 0
      %769 = vperm.xlu0 %768, %v638
      %v770 = vpop.permute.xlu0 %769
      %773 = vset.pattern.permute.xlu0 0
      %774 = vperm.xlu0 %773, %v639
      %v775 = vpop.permute.xlu0 %774
      %v778 = vperm.slane %v641, 0
      %v780 = vmul.f32 %v645, %v778
      %v781 = vmul.f32 %v650, %v778
      %v782 = vmul.f32 %v655, %v778
      %v783 = vmul.f32 %v660, %v778
      %v784 = vmul.f32 %v665, %v778
      %v785 = vmul.f32 %v670, %v778
      %v786 = vmul.f32 %v675, %v778
      %v787 = vmul.f32 %v680, %v778
      %v788 = vmul.f32 %v685, %v778
      %v789 = vmul.f32 %v690, %v778
      %v790 = vmul.f32 %v695, %v778
      %v791 = vmul.f32 %v700, %v778
      %v792 = vmul.f32 %v705, %v778
      %v793 = vmul.f32 %v710, %v778
      %v794 = vmul.f32 %v715, %v778
      %v795 = vmul.f32 %v720, %v778
      %v796 = vmul.f32 %v725, %v778
      %v797 = vmul.f32 %v730, %v778
      %v798 = vmul.f32 %v735, %v778
      %v799 = vmul.f32 %v740, %v778
      %v800 = vmul.f32 %v745, %v778
      %v801 = vmul.f32 %v750, %v778
      %v802 = vmul.f32 %v755, %v778
      %v803 = vmul.f32 %v760, %v778
      %v804 = vmul.f32 %v765, %v778
      %v805 = vmul.f32 %v770, %v778
      %v806 = vmul.f32 %v775, %v778
      %v807 = vadd.f32 %v586, %v780
      %v808 = vadd.f32 %v587, %v781
      %v809 = vadd.f32 %v588, %v782
      %v810 = vadd.f32 %v589, %v783
      %v811 = vadd.f32 %v590, %v784
      %v812 = vadd.f32 %v591, %v785
      %v813 = vadd.f32 %v592, %v786
      %v814 = vadd.f32 %v593, %v787
      %v815 = vadd.f32 %v594, %v788
      %v816 = vadd.f32 %v595, %v789
      %v817 = vadd.f32 %v596, %v790
      %v818 = vadd.f32 %v597, %v791
      %v819 = vadd.f32 %v598, %v792
      %v820 = vadd.f32 %v599, %v793
      %v821 = vadd.f32 %v600, %v794
      %v822 = vadd.f32 %v601, %v795
      %v823 = vadd.f32 %v602, %v796
      %v824 = vadd.f32 %v603, %v797
      %v825 = vadd.f32 %v604, %v798
      %v826 = vadd.f32 %v605, %v799
      %v827 = vadd.f32 %v606, %v800
      %v828 = vadd.f32 %v607, %v801
      %v829 = vadd.f32 %v608, %v802
      %v830 = vadd.f32 %v609, %v803
      %v831 = vadd.f32 %v610, %v804
      %v832 = vadd.f32 %v611, %v805
      %v833 = vadd.f32 %v612, %v806
      %s834 = scalar_lea.vmem %s165, 480
      %v835 = vld [vmem:[%s834] sm:$0xff]
      %v836 = vld [vmem:[%s834 + $0x8] sm:$0xff]
      %v837 = vld [vmem:[%s834 + $0x10] sm:$0xff]
      %v838 = vld [vmem:[%s834 + $0x18] sm:$0xff]
      %v839 = vld [vmem:[%s834 + $0x20] sm:$0xff]
      %v840 = vld [vmem:[%s834 + $0x28] sm:$0xff]
      %v841 = vld [vmem:[%s834 + $0x30] sm:$0xff]
      %v842 = vld [vmem:[%s834 + $0x38] sm:$0xff]
      %v843 = vld [vmem:[%s834 + $0x40] sm:$0xff]
      %v844 = vld [vmem:[%s834 + $0x48] sm:$0xff]
      %v845 = vld [vmem:[%s834 + $0x50] sm:$0xff]
      %v846 = vld [vmem:[%s834 + $0x58] sm:$0xff]
      %v847 = vld [vmem:[%s834 + $0x60] sm:$0xff]
      %v848 = vld [vmem:[%s834 + $0x68] sm:$0xff]
      %v849 = vld [vmem:[%s834 + $0x70] sm:$0xff]
      %v850 = vld [vmem:[%s834 + $0x78] sm:$0xff]
      %v851 = vld [vmem:[%s834 + $0x80] sm:$0xff]
      %v852 = vld [vmem:[%s834 + $0x88] sm:$0xff]
      %v853 = vld [vmem:[%s834 + $0x90] sm:$0xff]
      %v854 = vld [vmem:[%s834 + $0x98] sm:$0xff]
      %v855 = vld [vmem:[%s834 + $0xa0] sm:$0xff]
      %v856 = vld [vmem:[%s834 + $0xa8] sm:$0xff]
      %v857 = vld [vmem:[%s834 + $0xb0] sm:$0xff]
      %v858 = vld [vmem:[%s834 + $0xb8] sm:$0xff]
      %v859 = vld [vmem:[%s834 + $0xc0] sm:$0xff]
      %v860 = vld [vmem:[%s834 + $0xc8] sm:$0xff]
      %v861 = vld [vmem:[%s834 + $0xd0] sm:$0x3]
      %s862 = scalar_lea.vmem %s1, 3
      %v863 = vld [vmem:[%s862] sm:$0x1]
      %865 = vset.pattern.permute.xlu0 0
      %866 = vperm.xlu0 %865, %v835
      %v867 = vpop.permute.xlu0 %866
      %870 = vset.pattern.permute.xlu0 0
      %871 = vperm.xlu0 %870, %v836
      %v872 = vpop.permute.xlu0 %871
      %875 = vset.pattern.permute.xlu0 0
      %876 = vperm.xlu0 %875, %v837
      %v877 = vpop.permute.xlu0 %876
      %880 = vset.pattern.permute.xlu0 0
      %881 = vperm.xlu0 %880, %v838
      %v882 = vpop.permute.xlu0 %881
      %885 = vset.pattern.permute.xlu0 0
      %886 = vperm.xlu0 %885, %v839
      %v887 = vpop.permute.xlu0 %886
      %890 = vset.pattern.permute.xlu0 0
      %891 = vperm.xlu0 %890, %v840
      %v892 = vpop.permute.xlu0 %891
      %895 = vset.pattern.permute.xlu0 0
      %896 = vperm.xlu0 %895, %v841
      %v897 = vpop.permute.xlu0 %896
      %900 = vset.pattern.permute.xlu0 0
      %901 = vperm.xlu0 %900, %v842
      %v902 = vpop.permute.xlu0 %901
      %905 = vset.pattern.permute.xlu0 0
      %906 = vperm.xlu0 %905, %v843
      %v907 = vpop.permute.xlu0 %906
      %910 = vset.pattern.permute.xlu0 0
      %911 = vperm.xlu0 %910, %v844
      %v912 = vpop.permute.xlu0 %911
      %915 = vset.pattern.permute.xlu0 0
      %916 = vperm.xlu0 %915, %v845
      %v917 = vpop.permute.xlu0 %916
      %920 = vset.pattern.permute.xlu0 0
      %921 = vperm.xlu0 %920, %v846
      %v922 = vpop.permute.xlu0 %921
      %925 = vset.pattern.permute.xlu0 0
      %926 = vperm.xlu0 %925, %v847
      %v927 = vpop.permute.xlu0 %926
      %930 = vset.pattern.permute.xlu0 0
      %931 = vperm.xlu0 %930, %v848
      %v932 = vpop.permute.xlu0 %931
      %935 = vset.pattern.permute.xlu0 0
      %936 = vperm.xlu0 %935, %v849
      %v937 = vpop.permute.xlu0 %936
      %940 = vset.pattern.permute.xlu0 0
      %941 = vperm.xlu0 %940, %v850
      %v942 = vpop.permute.xlu0 %941
      %945 = vset.pattern.permute.xlu0 0
      %946 = vperm.xlu0 %945, %v851
      %v947 = vpop.permute.xlu0 %946
      %950 = vset.pattern.permute.xlu0 0
      %951 = vperm.xlu0 %950, %v852
      %v952 = vpop.permute.xlu0 %951
      %955 = vset.pattern.permute.xlu0 0
      %956 = vperm.xlu0 %955, %v853
      %v957 = vpop.permute.xlu0 %956
      %960 = vset.pattern.permute.xlu0 0
      %961 = vperm.xlu0 %960, %v854
      %v962 = vpop.permute.xlu0 %961
      %965 = vset.pattern.permute.xlu0 0
      %966 = vperm.xlu0 %965, %v855
      %v967 = vpop.permute.xlu0 %966
      %970 = vset.pattern.permute.xlu0 0
      %971 = vperm.xlu0 %970, %v856
      %v972 = vpop.permute.xlu0 %971
      %975 = vset.pattern.permute.xlu0 0
      %976 = vperm.xlu0 %975, %v857
      %v977 = vpop.permute.xlu0 %976
      %980 = vset.pattern.permute.xlu0 0
      %981 = vperm.xlu0 %980, %v858
      %v982 = vpop.permute.xlu0 %981
      %985 = vset.pattern.permute.xlu0 0
      %986 = vperm.xlu0 %985, %v859
      %v987 = vpop.permute.xlu0 %986
      %990 = vset.pattern.permute.xlu0 0
      %991 = vperm.xlu0 %990, %v860
      %v992 = vpop.permute.xlu0 %991
      %995 = vset.pattern.permute.xlu0 0
      %996 = vperm.xlu0 %995, %v861
      %v997 = vpop.permute.xlu0 %996
      %v1000 = vperm.slane %v863, 0
      %v1002 = vmul.f32 %v867, %v1000
      %v1003 = vmul.f32 %v872, %v1000
      %v1004 = vmul.f32 %v877, %v1000
      %v1005 = vmul.f32 %v882, %v1000
      %v1006 = vmul.f32 %v887, %v1000
      %v1007 = vmul.f32 %v892, %v1000
      %v1008 = vmul.f32 %v897, %v1000
      %v1009 = vmul.f32 %v902, %v1000
      %v1010 = vmul.f32 %v907, %v1000
      %v1011 = vmul.f32 %v912, %v1000
      %v1012 = vmul.f32 %v917, %v1000
      %v1013 = vmul.f32 %v922, %v1000
      %v1014 = vmul.f32 %v927, %v1000
      %v1015 = vmul.f32 %v932, %v1000
      %v1016 = vmul.f32 %v937, %v1000
      %v1017 = vmul.f32 %v942, %v1000
      %v1018 = vmul.f32 %v947, %v1000
      %v1019 = vmul.f32 %v952, %v1000
      %v1020 = vmul.f32 %v957, %v1000
      %v1021 = vmul.f32 %v962, %v1000
      %v1022 = vmul.f32 %v967, %v1000
      %v1023 = vmul.f32 %v972, %v1000
      %v1024 = vmul.f32 %v977, %v1000
      %v1025 = vmul.f32 %v982, %v1000
      %v1026 = vmul.f32 %v987, %v1000
      %v1027 = vmul.f32 %v992, %v1000
      %v1028 = vmul.f32 %v997, %v1000
      %v1029 = vadd.f32 %v807, %v1002
      %v1030 = vadd.f32 %v808, %v1003
      %v1031 = vadd.f32 %v809, %v1004
      %v1032 = vadd.f32 %v810, %v1005
      %v1033 = vadd.f32 %v811, %v1006
      %v1034 = vadd.f32 %v812, %v1007
      %v1035 = vadd.f32 %v813, %v1008
      %v1036 = vadd.f32 %v814, %v1009
      %v1037 = vadd.f32 %v815, %v1010
      %v1038 = vadd.f32 %v816, %v1011
      %v1039 = vadd.f32 %v817, %v1012
      %v1040 = vadd.f32 %v818, %v1013
      %v1041 = vadd.f32 %v819, %v1014
      %v1042 = vadd.f32 %v820, %v1015
      %v1043 = vadd.f32 %v821, %v1016
      %v1044 = vadd.f32 %v822, %v1017
      %v1045 = vadd.f32 %v823, %v1018
      %v1046 = vadd.f32 %v824, %v1019
      %v1047 = vadd.f32 %v825, %v1020
      %v1048 = vadd.f32 %v826, %v1021
      %v1049 = vadd.f32 %v827, %v1022
      %v1050 = vadd.f32 %v828, %v1023
      %v1051 = vadd.f32 %v829, %v1024
      %v1052 = vadd.f32 %v830, %v1025
      %v1053 = vadd.f32 %v831, %v1026
      %v1054 = vadd.f32 %v832, %v1027
      %v1055 = vadd.f32 %v833, %v1028
      %s1056 = scalar_lea.vmem %s165, 720
      %v1057 = vld [vmem:[%s1056] sm:$0xff]
      %v1058 = vld [vmem:[%s1056 + $0x8] sm:$0xff]
      %v1059 = vld [vmem:[%s1056 + $0x10] sm:$0xff]
      %v1060 = vld [vmem:[%s1056 + $0x18] sm:$0xff]
      %v1061 = vld [vmem:[%s1056 + $0x20] sm:$0xff]
      %v1062 = vld [vmem:[%s1056 + $0x28] sm:$0xff]
      %v1063 = vld [vmem:[%s1056 + $0x30] sm:$0xff]
      %v1064 = vld [vmem:[%s1056 + $0x38] sm:$0xff]
      %v1065 = vld [vmem:[%s1056 + $0x40] sm:$0xff]
      %v1066 = vld [vmem:[%s1056 + $0x48] sm:$0xff]
      %v1067 = vld [vmem:[%s1056 + $0x50] sm:$0xff]
      %v1068 = vld [vmem:[%s1056 + $0x58] sm:$0xff]
      %v1069 = vld [vmem:[%s1056 + $0x60] sm:$0xff]
      %v1070 = vld [vmem:[%s1056 + $0x68] sm:$0xff]
      %v1071 = vld [vmem:[%s1056 + $0x70] sm:$0xff]
      %v1072 = vld [vmem:[%s1056 + $0x78] sm:$0xff]
      %v1073 = vld [vmem:[%s1056 + $0x80] sm:$0xff]
      %v1074 = vld [vmem:[%s1056 + $0x88] sm:$0xff]
      %v1075 = vld [vmem:[%s1056 + $0x90] sm:$0xff]
      %v1076 = vld [vmem:[%s1056 + $0x98] sm:$0xff]
      %v1077 = vld [vmem:[%s1056 + $0xa0] sm:$0xff]
      %v1078 = vld [vmem:[%s1056 + $0xa8] sm:$0xff]
      %v1079 = vld [vmem:[%s1056 + $0xb0] sm:$0xff]
      %v1080 = vld [vmem:[%s1056 + $0xb8] sm:$0xff]
      %v1081 = vld [vmem:[%s1056 + $0xc0] sm:$0xff]
      %v1082 = vld [vmem:[%s1056 + $0xc8] sm:$0xff]
      %v1083 = vld [vmem:[%s1056 + $0xd0] sm:$0x3]
      %s1084 = scalar_lea.vmem %s1, 4
      %v1085 = vld [vmem:[%s1084] sm:$0x1]
      %1087 = vset.pattern.permute.xlu0 0
      %1088 = vperm.xlu0 %1087, %v1057
      %v1089 = vpop.permute.xlu0 %1088
      %1092 = vset.pattern.permute.xlu0 0
      %1093 = vperm.xlu0 %1092, %v1058
      %v1094 = vpop.permute.xlu0 %1093
      %1097 = vset.pattern.permute.xlu0 0
      %1098 = vperm.xlu0 %1097, %v1059
      %v1099 = vpop.permute.xlu0 %1098
      %1102 = vset.pattern.permute.xlu0 0
      %1103 = vperm.xlu0 %1102, %v1060
      %v1104 = vpop.permute.xlu0 %1103
      %1107 = vset.pattern.permute.xlu0 0
      %1108 = vperm.xlu0 %1107, %v1061
      %v1109 = vpop.permute.xlu0 %1108
      %1112 = vset.pattern.permute.xlu0 0
      %1113 = vperm.xlu0 %1112, %v1062
      %v1114 = vpop.permute.xlu0 %1113
      %1117 = vset.pattern.permute.xlu0 0
      %1118 = vperm.xlu0 %1117, %v1063
      %v1119 = vpop.permute.xlu0 %1118
      %1122 = vset.pattern.permute.xlu0 0
      %1123 = vperm.xlu0 %1122, %v1064
      %v1124 = vpop.permute.xlu0 %1123
      %1127 = vset.pattern.permute.xlu0 0
      %1128 = vperm.xlu0 %1127, %v1065
      %v1129 = vpop.permute.xlu0 %1128
      %1132 = vset.pattern.permute.xlu0 0
      %1133 = vperm.xlu0 %1132, %v1066
      %v1134 = vpop.permute.xlu0 %1133
      %1137 = vset.pattern.permute.xlu0 0
      %1138 = vperm.xlu0 %1137, %v1067
      %v1139 = vpop.permute.xlu0 %1138
      %1142 = vset.pattern.permute.xlu0 0
      %1143 = vperm.xlu0 %1142, %v1068
      %v1144 = vpop.permute.xlu0 %1143
      %1147 = vset.pattern.permute.xlu0 0
      %1148 = vperm.xlu0 %1147, %v1069
      %v1149 = vpop.permute.xlu0 %1148
      %1152 = vset.pattern.permute.xlu0 0
      %1153 = vperm.xlu0 %1152, %v1070
      %v1154 = vpop.permute.xlu0 %1153
      %1157 = vset.pattern.permute.xlu0 0
      %1158 = vperm.xlu0 %1157, %v1071
      %v1159 = vpop.permute.xlu0 %1158
      %1162 = vset.pattern.permute.xlu0 0
      %1163 = vperm.xlu0 %1162, %v1072
      %v1164 = vpop.permute.xlu0 %1163
      %1167 = vset.pattern.permute.xlu0 0
      %1168 = vperm.xlu0 %1167, %v1073
      %v1169 = vpop.permute.xlu0 %1168
      %1172 = vset.pattern.permute.xlu0 0
      %1173 = vperm.xlu0 %1172, %v1074
      %v1174 = vpop.permute.xlu0 %1173
      %1177 = vset.pattern.permute.xlu0 0
      %1178 = vperm.xlu0 %1177, %v1075
      %v1179 = vpop.permute.xlu0 %1178
      %1182 = vset.pattern.permute.xlu0 0
      %1183 = vperm.xlu0 %1182, %v1076
      %v1184 = vpop.permute.xlu0 %1183
      %1187 = vset.pattern.permute.xlu0 0
      %1188 = vperm.xlu0 %1187, %v1077
      %v1189 = vpop.permute.xlu0 %1188
      %1192 = vset.pattern.permute.xlu0 0
      %1193 = vperm.xlu0 %1192, %v1078
      %v1194 = vpop.permute.xlu0 %1193
      %1197 = vset.pattern.permute.xlu0 0
      %1198 = vperm.xlu0 %1197, %v1079
      %v1199 = vpop.permute.xlu0 %1198
      %1202 = vset.pattern.permute.xlu0 0
      %1203 = vperm.xlu0 %1202, %v1080
      %v1204 = vpop.permute.xlu0 %1203
      %1207 = vset.pattern.permute.xlu0 0
      %1208 = vperm.xlu0 %1207, %v1081
      %v1209 = vpop.permute.xlu0 %1208
      %1212 = vset.pattern.permute.xlu0 0
      %1213 = vperm.xlu0 %1212, %v1082
      %v1214 = vpop.permute.xlu0 %1213
      %1217 = vset.pattern.permute.xlu0 0
      %1218 = vperm.xlu0 %1217, %v1083
      %v1219 = vpop.permute.xlu0 %1218
      %v1222 = vperm.slane %v1085, 0
      %v1224 = vmul.f32 %v1089, %v1222
      %v1225 = vmul.f32 %v1094, %v1222
      %v1226 = vmul.f32 %v1099, %v1222
      %v1227 = vmul.f32 %v1104, %v1222
      %v1228 = vmul.f32 %v1109, %v1222
      %v1229 = vmul.f32 %v1114, %v1222
      %v1230 = vmul.f32 %v1119, %v1222
      %v1231 = vmul.f32 %v1124, %v1222
      %v1232 = vmul.f32 %v1129, %v1222
      %v1233 = vmul.f32 %v1134, %v1222
      %v1234 = vmul.f32 %v1139, %v1222
      %v1235 = vmul.f32 %v1144, %v1222
      %v1236 = vmul.f32 %v1149, %v1222
      %v1237 = vmul.f32 %v1154, %v1222
      %v1238 = vmul.f32 %v1159, %v1222
      %v1239 = vmul.f32 %v1164, %v1222
      %v1240 = vmul.f32 %v1169, %v1222
      %v1241 = vmul.f32 %v1174, %v1222
      %v1242 = vmul.f32 %v1179, %v1222
      %v1243 = vmul.f32 %v1184, %v1222
      %v1244 = vmul.f32 %v1189, %v1222
      %v1245 = vmul.f32 %v1194, %v1222
      %v1246 = vmul.f32 %v1199, %v1222
      %v1247 = vmul.f32 %v1204, %v1222
      %v1248 = vmul.f32 %v1209, %v1222
      %v1249 = vmul.f32 %v1214, %v1222
      %v1250 = vmul.f32 %v1219, %v1222
      %v1251 = vadd.f32 %v1029, %v1224
      %v1252 = vadd.f32 %v1030, %v1225
      %v1253 = vadd.f32 %v1031, %v1226
      %v1254 = vadd.f32 %v1032, %v1227
      %v1255 = vadd.f32 %v1033, %v1228
      %v1256 = vadd.f32 %v1034, %v1229
      %v1257 = vadd.f32 %v1035, %v1230
      %v1258 = vadd.f32 %v1036, %v1231
      %v1259 = vadd.f32 %v1037, %v1232
      %v1260 = vadd.f32 %v1038, %v1233
      %v1261 = vadd.f32 %v1039, %v1234
      %v1262 = vadd.f32 %v1040, %v1235
      %v1263 = vadd.f32 %v1041, %v1236
      %v1264 = vadd.f32 %v1042, %v1237
      %v1265 = vadd.f32 %v1043, %v1238
      %v1266 = vadd.f32 %v1044, %v1239
      %v1267 = vadd.f32 %v1045, %v1240
      %v1268 = vadd.f32 %v1046, %v1241
      %v1269 = vadd.f32 %v1047, %v1242
      %v1270 = vadd.f32 %v1048, %v1243
      %v1271 = vadd.f32 %v1049, %v1244
      %v1272 = vadd.f32 %v1050, %v1245
      %v1273 = vadd.f32 %v1051, %v1246
      %v1274 = vadd.f32 %v1052, %v1247
      %v1275 = vadd.f32 %v1053, %v1248
      %v1276 = vadd.f32 %v1054, %v1249
      %v1277 = vadd.f32 %v1055, %v1250
      %v1278 = vld [vmem:[%s834 + $0x1] sm:$0xff]
      %v1279 = vld [vmem:[%s834 + $0x9] sm:$0xff]
      %v1280 = vld [vmem:[%s834 + $0x11] sm:$0xff]
      %v1281 = vld [vmem:[%s834 + $0x19] sm:$0xff]
      %v1282 = vld [vmem:[%s834 + $0x21] sm:$0xff]
      %v1283 = vld [vmem:[%s834 + $0x29] sm:$0xff]
      %v1284 = vld [vmem:[%s834 + $0x31] sm:$0xff]
      %v1285 = vld [vmem:[%s834 + $0x39] sm:$0xff]
      %v1286 = vld [vmem:[%s834 + $0x41] sm:$0xff]
      %v1287 = vld [vmem:[%s834 + $0x49] sm:$0xff]
      %v1288 = vld [vmem:[%s834 + $0x51] sm:$0xff]
      %v1289 = vld [vmem:[%s834 + $0x59] sm:$0xff]
      %v1290 = vld [vmem:[%s834 + $0x61] sm:$0xff]
      %v1291 = vld [vmem:[%s834 + $0x69] sm:$0xff]
      %v1292 = vld [vmem:[%s834 + $0x71] sm:$0xff]
      %v1293 = vld [vmem:[%s834 + $0x79] sm:$0xff]
      %v1294 = vld [vmem:[%s834 + $0x81] sm:$0xff]
      %v1295 = vld [vmem:[%s834 + $0x89] sm:$0xff]
      %v1296 = vld [vmem:[%s834 + $0x91] sm:$0xff]
      %v1297 = vld [vmem:[%s834 + $0x99] sm:$0xff]
      %v1298 = vld [vmem:[%s834 + $0xa1] sm:$0xff]
      %v1299 = vld [vmem:[%s834 + $0xa9] sm:$0xff]
      %v1300 = vld [vmem:[%s834 + $0xb1] sm:$0xff]
      %v1301 = vld [vmem:[%s834 + $0xb9] sm:$0xff]
      %v1302 = vld [vmem:[%s834 + $0xc1] sm:$0xff]
      %v1303 = vld [vmem:[%s834 + $0xc9] sm:$0xff]
      %v1304 = vld [vmem:[%s834 + $0xd1] sm:$0x3]
      %s1305 = scalar_lea.vmem %s1, 5
      %v1306 = vld [vmem:[%s1305] sm:$0x1]
      %1308 = vset.pattern.permute.xlu0 0
      %1309 = vperm.xlu0 %1308, %v1278
      %v1310 = vpop.permute.xlu0 %1309
      %1313 = vset.pattern.permute.xlu0 0
      %1314 = vperm.xlu0 %1313, %v1279
      %v1315 = vpop.permute.xlu0 %1314
      %1318 = vset.pattern.permute.xlu0 0
      %1319 = vperm.xlu0 %1318, %v1280
      %v1320 = vpop.permute.xlu0 %1319
      %1323 = vset.pattern.permute.xlu0 0
      %1324 = vperm.xlu0 %1323, %v1281
      %v1325 = vpop.permute.xlu0 %1324
      %1328 = vset.pattern.permute.xlu0 0
      %1329 = vperm.xlu0 %1328, %v1282
      %v1330 = vpop.permute.xlu0 %1329
      %1333 = vset.pattern.permute.xlu0 0
      %1334 = vperm.xlu0 %1333, %v1283
      %v1335 = vpop.permute.xlu0 %1334
      %1338 = vset.pattern.permute.xlu0 0
      %1339 = vperm.xlu0 %1338, %v1284
      %v1340 = vpop.permute.xlu0 %1339
      %1343 = vset.pattern.permute.xlu0 0
      %1344 = vperm.xlu0 %1343, %v1285
      %v1345 = vpop.permute.xlu0 %1344
      %1348 = vset.pattern.permute.xlu0 0
      %1349 = vperm.xlu0 %1348, %v1286
      %v1350 = vpop.permute.xlu0 %1349
      %1353 = vset.pattern.permute.xlu0 0
      %1354 = vperm.xlu0 %1353, %v1287
      %v1355 = vpop.permute.xlu0 %1354
      %1358 = vset.pattern.permute.xlu0 0
      %1359 = vperm.xlu0 %1358, %v1288
      %v1360 = vpop.permute.xlu0 %1359
      %1363 = vset.pattern.permute.xlu0 0
      %1364 = vperm.xlu0 %1363, %v1289
      %v1365 = vpop.permute.xlu0 %1364
      %1368 = vset.pattern.permute.xlu0 0
      %1369 = vperm.xlu0 %1368, %v1290
      %v1370 = vpop.permute.xlu0 %1369
      %1373 = vset.pattern.permute.xlu0 0
      %1374 = vperm.xlu0 %1373, %v1291
      %v1375 = vpop.permute.xlu0 %1374
      %1378 = vset.pattern.permute.xlu0 0
      %1379 = vperm.xlu0 %1378, %v1292
      %v1380 = vpop.permute.xlu0 %1379
      %1383 = vset.pattern.permute.xlu0 0
      %1384 = vperm.xlu0 %1383, %v1293
      %v1385 = vpop.permute.xlu0 %1384
      %1388 = vset.pattern.permute.xlu0 0
      %1389 = vperm.xlu0 %1388, %v1294
      %v1390 = vpop.permute.xlu0 %1389
      %1393 = vset.pattern.permute.xlu0 0
      %1394 = vperm.xlu0 %1393, %v1295
      %v1395 = vpop.permute.xlu0 %1394
      %1398 = vset.pattern.permute.xlu0 0
      %1399 = vperm.xlu0 %1398, %v1296
      %v1400 = vpop.permute.xlu0 %1399
      %1403 = vset.pattern.permute.xlu0 0
      %1404 = vperm.xlu0 %1403, %v1297
      %v1405 = vpop.permute.xlu0 %1404
      %1408 = vset.pattern.permute.xlu0 0
      %1409 = vperm.xlu0 %1408, %v1298
      %v1410 = vpop.permute.xlu0 %1409
      %1413 = vset.pattern.permute.xlu0 0
      %1414 = vperm.xlu0 %1413, %v1299
      %v1415 = vpop.permute.xlu0 %1414
      %1418 = vset.pattern.permute.xlu0 0
      %1419 = vperm.xlu0 %1418, %v1300
      %v1420 = vpop.permute.xlu0 %1419
      %1423 = vset.pattern.permute.xlu0 0
      %1424 = vperm.xlu0 %1423, %v1301
      %v1425 = vpop.permute.xlu0 %1424
      %1428 = vset.pattern.permute.xlu0 0
      %1429 = vperm.xlu0 %1428, %v1302
      %v1430 = vpop.permute.xlu0 %1429
      %1433 = vset.pattern.permute.xlu0 0
      %1434 = vperm.xlu0 %1433, %v1303
      %v1435 = vpop.permute.xlu0 %1434
      %1438 = vset.pattern.permute.xlu0 0
      %1439 = vperm.xlu0 %1438, %v1304
      %v1440 = vpop.permute.xlu0 %1439
      %v1443 = vperm.slane %v1306, 0
      %v1445 = vmul.f32 %v1310, %v1443
      %v1446 = vmul.f32 %v1315, %v1443
      %v1447 = vmul.f32 %v1320, %v1443
      %v1448 = vmul.f32 %v1325, %v1443
      %v1449 = vmul.f32 %v1330, %v1443
      %v1450 = vmul.f32 %v1335, %v1443
      %v1451 = vmul.f32 %v1340, %v1443
      %v1452 = vmul.f32 %v1345, %v1443
      %v1453 = vmul.f32 %v1350, %v1443
      %v1454 = vmul.f32 %v1355, %v1443
      %v1455 = vmul.f32 %v1360, %v1443
      %v1456 = vmul.f32 %v1365, %v1443
      %v1457 = vmul.f32 %v1370, %v1443
      %v1458 = vmul.f32 %v1375, %v1443
      %v1459 = vmul.f32 %v1380, %v1443
      %v1460 = vmul.f32 %v1385, %v1443
      %v1461 = vmul.f32 %v1390, %v1443
      %v1462 = vmul.f32 %v1395, %v1443
      %v1463 = vmul.f32 %v1400, %v1443
      %v1464 = vmul.f32 %v1405, %v1443
      %v1465 = vmul.f32 %v1410, %v1443
      %v1466 = vmul.f32 %v1415, %v1443
      %v1467 = vmul.f32 %v1420, %v1443
      %v1468 = vmul.f32 %v1425, %v1443
      %v1469 = vmul.f32 %v1430, %v1443
      %v1470 = vmul.f32 %v1435, %v1443
      %v1471 = vmul.f32 %v1440, %v1443
      %v1472 = vadd.f32 %v1251, %v1445
      %v1473 = vadd.f32 %v1252, %v1446
      %v1474 = vadd.f32 %v1253, %v1447
      %v1475 = vadd.f32 %v1254, %v1448
      %v1476 = vadd.f32 %v1255, %v1449
      %v1477 = vadd.f32 %v1256, %v1450
      %v1478 = vadd.f32 %v1257, %v1451
      %v1479 = vadd.f32 %v1258, %v1452
      %v1480 = vadd.f32 %v1259, %v1453
      %v1481 = vadd.f32 %v1260, %v1454
      %v1482 = vadd.f32 %v1261, %v1455
      %v1483 = vadd.f32 %v1262, %v1456
      %v1484 = vadd.f32 %v1263, %v1457
      %v1485 = vadd.f32 %v1264, %v1458
      %v1486 = vadd.f32 %v1265, %v1459
      %v1487 = vadd.f32 %v1266, %v1460
      %v1488 = vadd.f32 %v1267, %v1461
      %v1489 = vadd.f32 %v1268, %v1462
      %v1490 = vadd.f32 %v1269, %v1463
      %v1491 = vadd.f32 %v1270, %v1464
      %v1492 = vadd.f32 %v1271, %v1465
      %v1493 = vadd.f32 %v1272, %v1466
      %v1494 = vadd.f32 %v1273, %v1467
      %v1495 = vadd.f32 %v1274, %v1468
      %v1496 = vadd.f32 %v1275, %v1469
      %v1497 = vadd.f32 %v1276, %v1470
      %v1498 = vadd.f32 %v1277, %v1471
      %v1499 = vld [vmem:[%s165 + $0xf] sm:$0xff]
      %v1500 = vld [vmem:[%s165 + $0x17] sm:$0xff]
      %v1501 = vld [vmem:[%s165 + $0x1f] sm:$0xff]
      %v1502 = vld [vmem:[%s165 + $0x27] sm:$0xff]
      %v1503 = vld [vmem:[%s165 + $0x2f] sm:$0xff]
      %v1504 = vld [vmem:[%s165 + $0x37] sm:$0xff]
      %v1505 = vld [vmem:[%s165 + $0x3f] sm:$0xff]
      %v1506 = vld [vmem:[%s165 + $0x47] sm:$0xff]
      %v1507 = vld [vmem:[%s165 + $0x4f] sm:$0xff]
      %v1508 = vld [vmem:[%s165 + $0x57] sm:$0xff]
      %v1509 = vld [vmem:[%s165 + $0x5f] sm:$0xff]
      %v1510 = vld [vmem:[%s165 + $0x67] sm:$0xff]
      %v1511 = vld [vmem:[%s165 + $0x6f] sm:$0xff]
      %v1512 = vld [vmem:[%s165 + $0x77] sm:$0xff]
      %v1513 = vld [vmem:[%s165 + $0x7f] sm:$0xff]
      %v1514 = vld [vmem:[%s165 + $0x87] sm:$0xff]
      %v1515 = vld [vmem:[%s165 + $0x8f] sm:$0xff]
      %v1516 = vld [vmem:[%s165 + $0x97] sm:$0xff]
      %v1517 = vld [vmem:[%s165 + $0x9f] sm:$0xff]
      %v1518 = vld [vmem:[%s165 + $0xa7] sm:$0xff]
      %v1519 = vld [vmem:[%s165 + $0xaf] sm:$0xff]
      %v1520 = vld [vmem:[%s165 + $0xb7] sm:$0xff]
      %v1521 = vld [vmem:[%s165 + $0xbf] sm:$0xff]
      %v1522 = vld [vmem:[%s165 + $0xc7] sm:$0xff]
      %v1523 = vld [vmem:[%s165 + $0xcf] sm:$0xff]
      %v1524 = vld [vmem:[%s165 + $0xd7] sm:$0xff]
      %v1525 = vld [vmem:[%s165 + $0xdf] sm:$0x3]
      %s1526 = scalar_lea.vmem %s1, 6
      %v1527 = vld [vmem:[%s1526] sm:$0x1]
      %1529 = vset.pattern.permute.xlu0 0
      %1530 = vperm.xlu0 %1529, %v1499
      %v1531 = vpop.permute.xlu0 %1530
      %1534 = vset.pattern.permute.xlu0 0
      %1535 = vperm.xlu0 %1534, %v1500
      %v1536 = vpop.permute.xlu0 %1535
      %1539 = vset.pattern.permute.xlu0 0
      %1540 = vperm.xlu0 %1539, %v1501
      %v1541 = vpop.permute.xlu0 %1540
      %1544 = vset.pattern.permute.xlu0 0
      %1545 = vperm.xlu0 %1544, %v1502
      %v1546 = vpop.permute.xlu0 %1545
      %1549 = vset.pattern.permute.xlu0 0
      %1550 = vperm.xlu0 %1549, %v1503
      %v1551 = vpop.permute.xlu0 %1550
      %1554 = vset.pattern.permute.xlu0 0
      %1555 = vperm.xlu0 %1554, %v1504
      %v1556 = vpop.permute.xlu0 %1555
      %1559 = vset.pattern.permute.xlu0 0
      %1560 = vperm.xlu0 %1559, %v1505
      %v1561 = vpop.permute.xlu0 %1560
      %1564 = vset.pattern.permute.xlu0 0
      %1565 = vperm.xlu0 %1564, %v1506
      %v1566 = vpop.permute.xlu0 %1565
      %1569 = vset.pattern.permute.xlu0 0
      %1570 = vperm.xlu0 %1569, %v1507
      %v1571 = vpop.permute.xlu0 %1570
      %1574 = vset.pattern.permute.xlu0 0
      %1575 = vperm.xlu0 %1574, %v1508
      %v1576 = vpop.permute.xlu0 %1575
      %1579 = vset.pattern.permute.xlu0 0
      %1580 = vperm.xlu0 %1579, %v1509
      %v1581 = vpop.permute.xlu0 %1580
      %1584 = vset.pattern.permute.xlu0 0
      %1585 = vperm.xlu0 %1584, %v1510
      %v1586 = vpop.permute.xlu0 %1585
      %1589 = vset.pattern.permute.xlu0 0
      %1590 = vperm.xlu0 %1589, %v1511
      %v1591 = vpop.permute.xlu0 %1590
      %1594 = vset.pattern.permute.xlu0 0
      %1595 = vperm.xlu0 %1594, %v1512
      %v1596 = vpop.permute.xlu0 %1595
      %1599 = vset.pattern.permute.xlu0 0
      %1600 = vperm.xlu0 %1599, %v1513
      %v1601 = vpop.permute.xlu0 %1600
      %1604 = vset.pattern.permute.xlu0 0
      %1605 = vperm.xlu0 %1604, %v1514
      %v1606 = vpop.permute.xlu0 %1605
      %1609 = vset.pattern.permute.xlu0 0
      %1610 = vperm.xlu0 %1609, %v1515
      %v1611 = vpop.permute.xlu0 %1610
      %1614 = vset.pattern.permute.xlu0 0
      %1615 = vperm.xlu0 %1614, %v1516
      %v1616 = vpop.permute.xlu0 %1615
      %1619 = vset.pattern.permute.xlu0 0
      %1620 = vperm.xlu0 %1619, %v1517
      %v1621 = vpop.permute.xlu0 %1620
      %1624 = vset.pattern.permute.xlu0 0
      %1625 = vperm.xlu0 %1624, %v1518
      %v1626 = vpop.permute.xlu0 %1625
      %1629 = vset.pattern.permute.xlu0 0
      %1630 = vperm.xlu0 %1629, %v1519
      %v1631 = vpop.permute.xlu0 %1630
      %1634 = vset.pattern.permute.xlu0 0
      %1635 = vperm.xlu0 %1634, %v1520
      %v1636 = vpop.permute.xlu0 %1635
      %1639 = vset.pattern.permute.xlu0 0
      %1640 = vperm.xlu0 %1639, %v1521
      %v1641 = vpop.permute.xlu0 %1640
      %1644 = vset.pattern.permute.xlu0 0
      %1645 = vperm.xlu0 %1644, %v1522
      %v1646 = vpop.permute.xlu0 %1645
      %1649 = vset.pattern.permute.xlu0 0
      %1650 = vperm.xlu0 %1649, %v1523
      %v1651 = vpop.permute.xlu0 %1650
      %1654 = vset.pattern.permute.xlu0 0
      %1655 = vperm.xlu0 %1654, %v1524
      %v1656 = vpop.permute.xlu0 %1655
      %1659 = vset.pattern.permute.xlu0 0
      %1660 = vperm.xlu0 %1659, %v1525
      %v1661 = vpop.permute.xlu0 %1660
      %v1664 = vperm.slane %v1527, 0
      %v1666 = vmul.f32 %v1531, %v1664
      %v1667 = vmul.f32 %v1536, %v1664
      %v1668 = vmul.f32 %v1541, %v1664
      %v1669 = vmul.f32 %v1546, %v1664
      %v1670 = vmul.f32 %v1551, %v1664
      %v1671 = vmul.f32 %v1556, %v1664
      %v1672 = vmul.f32 %v1561, %v1664
      %v1673 = vmul.f32 %v1566, %v1664
      %v1674 = vmul.f32 %v1571, %v1664
      %v1675 = vmul.f32 %v1576, %v1664
      %v1676 = vmul.f32 %v1581, %v1664
      %v1677 = vmul.f32 %v1586, %v1664
      %v1678 = vmul.f32 %v1591, %v1664
      %v1679 = vmul.f32 %v1596, %v1664
      %v1680 = vmul.f32 %v1601, %v1664
      %v1681 = vmul.f32 %v1606, %v1664
      %v1682 = vmul.f32 %v1611, %v1664
      %v1683 = vmul.f32 %v1616, %v1664
      %v1684 = vmul.f32 %v1621, %v1664
      %v1685 = vmul.f32 %v1626, %v1664
      %v1686 = vmul.f32 %v1631, %v1664
      %v1687 = vmul.f32 %v1636, %v1664
      %v1688 = vmul.f32 %v1641, %v1664
      %v1689 = vmul.f32 %v1646, %v1664
      %v1690 = vmul.f32 %v1651, %v1664
      %v1691 = vmul.f32 %v1656, %v1664
      %v1692 = vmul.f32 %v1661, %v1664
      %v1693 = vadd.f32 %v1472, %v1666
      %v1694 = vadd.f32 %v1473, %v1667
      %v1695 = vadd.f32 %v1474, %v1668
      %v1696 = vadd.f32 %v1475, %v1669
      %v1697 = vadd.f32 %v1476, %v1670
      %v1698 = vadd.f32 %v1477, %v1671
      %v1699 = vadd.f32 %v1478, %v1672
      %v1700 = vadd.f32 %v1479, %v1673
      %v1701 = vadd.f32 %v1480, %v1674
      %v1702 = vadd.f32 %v1481, %v1675
      %v1703 = vadd.f32 %v1482, %v1676
      %v1704 = vadd.f32 %v1483, %v1677
      %v1705 = vadd.f32 %v1484, %v1678
      %v1706 = vadd.f32 %v1485, %v1679
      %v1707 = vadd.f32 %v1486, %v1680
      %v1708 = vadd.f32 %v1487, %v1681
      %v1709 = vadd.f32 %v1488, %v1682
      %v1710 = vadd.f32 %v1489, %v1683
      %v1711 = vadd.f32 %v1490, %v1684
      %v1712 = vadd.f32 %v1491, %v1685
      %v1713 = vadd.f32 %v1492, %v1686
      %v1714 = vadd.f32 %v1493, %v1687
      %v1715 = vadd.f32 %v1494, %v1688
      %v1716 = vadd.f32 %v1495, %v1689
      %v1717 = vadd.f32 %v1496, %v1690
      %v1718 = vadd.f32 %v1497, %v1691
      %v1719 = vadd.f32 %v1498, %v1692
      %v1720 = vld [vmem:[%s391 + $0xf] sm:$0xff]
      %v1721 = vld [vmem:[%s391 + $0x17] sm:$0xff]
      %v1722 = vld [vmem:[%s391 + $0x1f] sm:$0xff]
      %v1723 = vld [vmem:[%s391 + $0x27] sm:$0xff]
      %v1724 = vld [vmem:[%s391 + $0x2f] sm:$0xff]
      %v1725 = vld [vmem:[%s391 + $0x37] sm:$0xff]
      %v1726 = vld [vmem:[%s391 + $0x3f] sm:$0xff]
      %v1727 = vld [vmem:[%s391 + $0x47] sm:$0xff]
      %v1728 = vld [vmem:[%s391 + $0x4f] sm:$0xff]
      %v1729 = vld [vmem:[%s391 + $0x57] sm:$0xff]
      %v1730 = vld [vmem:[%s391 + $0x5f] sm:$0xff]
      %v1731 = vld [vmem:[%s391 + $0x67] sm:$0xff]
      %v1732 = vld [vmem:[%s391 + $0x6f] sm:$0xff]
      %v1733 = vld [vmem:[%s391 + $0x77] sm:$0xff]
      %v1734 = vld [vmem:[%s391 + $0x7f] sm:$0xff]
      %v1735 = vld [vmem:[%s391 + $0x87] sm:$0xff]
      %v1736 = vld [vmem:[%s391 + $0x8f] sm:$0xff]
      %v1737 = vld [vmem:[%s391 + $0x97] sm:$0xff]
      %v1738 = vld [vmem:[%s391 + $0x9f] sm:$0xff]
      %v1739 = vld [vmem:[%s391 + $0xa7] sm:$0xff]
      %v1740 = vld [vmem:[%s391 + $0xaf] sm:$0xff]
      %v1741 = vld [vmem:[%s391 + $0xb7] sm:$0xff]
      %v1742 = vld [vmem:[%s391 + $0xbf] sm:$0xff]
      %v1743 = vld [vmem:[%s391 + $0xc7] sm:$0xff]
      %v1744 = vld [vmem:[%s391 + $0xcf] sm:$0xff]
      %v1745 = vld [vmem:[%s391 + $0xd7] sm:$0xff]
      %v1746 = vld [vmem:[%s391 + $0xdf] sm:$0x3]
      %s1747 = scalar_lea.vmem %s1, 7
      %v1748 = vld [vmem:[%s1747] sm:$0x1]
      %1750 = vset.pattern.permute.xlu0 0
      %1751 = vperm.xlu0 %1750, %v1720
      %v1752 = vpop.permute.xlu0 %1751
      %1755 = vset.pattern.permute.xlu0 0
      %1756 = vperm.xlu0 %1755, %v1721
      %v1757 = vpop.permute.xlu0 %1756
      %1760 = vset.pattern.permute.xlu0 0
      %1761 = vperm.xlu0 %1760, %v1722
      %v1762 = vpop.permute.xlu0 %1761
      %1765 = vset.pattern.permute.xlu0 0
      %1766 = vperm.xlu0 %1765, %v1723
      %v1767 = vpop.permute.xlu0 %1766
      %1770 = vset.pattern.permute.xlu0 0
      %1771 = vperm.xlu0 %1770, %v1724
      %v1772 = vpop.permute.xlu0 %1771
      %1775 = vset.pattern.permute.xlu0 0
      %1776 = vperm.xlu0 %1775, %v1725
      %v1777 = vpop.permute.xlu0 %1776
      %1780 = vset.pattern.permute.xlu0 0
      %1781 = vperm.xlu0 %1780, %v1726
      %v1782 = vpop.permute.xlu0 %1781
      %1785 = vset.pattern.permute.xlu0 0
      %1786 = vperm.xlu0 %1785, %v1727
      %v1787 = vpop.permute.xlu0 %1786
      %1790 = vset.pattern.permute.xlu0 0
      %1791 = vperm.xlu0 %1790, %v1728
      %v1792 = vpop.permute.xlu0 %1791
      %1795 = vset.pattern.permute.xlu0 0
      %1796 = vperm.xlu0 %1795, %v1729
      %v1797 = vpop.permute.xlu0 %1796
      %1800 = vset.pattern.permute.xlu0 0
      %1801 = vperm.xlu0 %1800, %v1730
      %v1802 = vpop.permute.xlu0 %1801
      %1805 = vset.pattern.permute.xlu0 0
      %1806 = vperm.xlu0 %1805, %v1731
      %v1807 = vpop.permute.xlu0 %1806
      %1810 = vset.pattern.permute.xlu0 0
      %1811 = vperm.xlu0 %1810, %v1732
      %v1812 = vpop.permute.xlu0 %1811
      %1815 = vset.pattern.permute.xlu0 0
      %1816 = vperm.xlu0 %1815, %v1733
      %v1817 = vpop.permute.xlu0 %1816
      %1820 = vset.pattern.permute.xlu0 0
      %1821 = vperm.xlu0 %1820, %v1734
      %v1822 = vpop.permute.xlu0 %1821
      %1825 = vset.pattern.permute.xlu0 0
      %1826 = vperm.xlu0 %1825, %v1735
      %v1827 = vpop.permute.xlu0 %1826
      %1830 = vset.pattern.permute.xlu0 0
      %1831 = vperm.xlu0 %1830, %v1736
      %v1832 = vpop.permute.xlu0 %1831
      %1835 = vset.pattern.permute.xlu0 0
      %1836 = vperm.xlu0 %1835, %v1737
      %v1837 = vpop.permute.xlu0 %1836
      %1840 = vset.pattern.permute.xlu0 0
      %1841 = vperm.xlu0 %1840, %v1738
      %v1842 = vpop.permute.xlu0 %1841
      %1845 = vset.pattern.permute.xlu0 0
      %1846 = vperm.xlu0 %1845, %v1739
      %v1847 = vpop.permute.xlu0 %1846
      %1850 = vset.pattern.permute.xlu0 0
      %1851 = vperm.xlu0 %1850, %v1740
      %v1852 = vpop.permute.xlu0 %1851
      %1855 = vset.pattern.permute.xlu0 0
      %1856 = vperm.xlu0 %1855, %v1741
      %v1857 = vpop.permute.xlu0 %1856
      %1860 = vset.pattern.permute.xlu0 0
      %1861 = vperm.xlu0 %1860, %v1742
      %v1862 = vpop.permute.xlu0 %1861
      %1865 = vset.pattern.permute.xlu0 0
      %1866 = vperm.xlu0 %1865, %v1743
      %v1867 = vpop.permute.xlu0 %1866
      %1870 = vset.pattern.permute.xlu0 0
      %1871 = vperm.xlu0 %1870, %v1744
      %v1872 = vpop.permute.xlu0 %1871
      %1875 = vset.pattern.permute.xlu0 0
      %1876 = vperm.xlu0 %1875, %v1745
      %v1877 = vpop.permute.xlu0 %1876
      %1880 = vset.pattern.permute.xlu0 0
      %1881 = vperm.xlu0 %1880, %v1746
      %v1882 = vpop.permute.xlu0 %1881
      %v1885 = vperm.slane %v1748, 0
      %v1887 = vmul.f32 %v1752, %v1885
      %v1888 = vmul.f32 %v1757, %v1885
      %v1889 = vmul.f32 %v1762, %v1885
      %v1890 = vmul.f32 %v1767, %v1885
      %v1891 = vmul.f32 %v1772, %v1885
      %v1892 = vmul.f32 %v1777, %v1885
      %v1893 = vmul.f32 %v1782, %v1885
      %v1894 = vmul.f32 %v1787, %v1885
      %v1895 = vmul.f32 %v1792, %v1885
      %v1896 = vmul.f32 %v1797, %v1885
      %v1897 = vmul.f32 %v1802, %v1885
      %v1898 = vmul.f32 %v1807, %v1885
      %v1899 = vmul.f32 %v1812, %v1885
      %v1900 = vmul.f32 %v1817, %v1885
      %v1901 = vmul.f32 %v1822, %v1885
      %v1902 = vmul.f32 %v1827, %v1885
      %v1903 = vmul.f32 %v1832, %v1885
      %v1904 = vmul.f32 %v1837, %v1885
      %v1905 = vmul.f32 %v1842, %v1885
      %v1906 = vmul.f32 %v1847, %v1885
      %v1907 = vmul.f32 %v1852, %v1885
      %v1908 = vmul.f32 %v1857, %v1885
      %v1909 = vmul.f32 %v1862, %v1885
      %v1910 = vmul.f32 %v1867, %v1885
      %v1911 = vmul.f32 %v1872, %v1885
      %v1912 = vmul.f32 %v1877, %v1885
      %v1913 = vmul.f32 %v1882, %v1885
      %v1914 = vadd.f32 %v1693, %v1887
      %v1915 = vadd.f32 %v1694, %v1888
      %v1916 = vadd.f32 %v1695, %v1889
      %v1917 = vadd.f32 %v1696, %v1890
      %v1918 = vadd.f32 %v1697, %v1891
      %v1919 = vadd.f32 %v1698, %v1892
      %v1920 = vadd.f32 %v1699, %v1893
      %v1921 = vadd.f32 %v1700, %v1894
      %v1922 = vadd.f32 %v1701, %v1895
      %v1923 = vadd.f32 %v1702, %v1896
      %v1924 = vadd.f32 %v1703, %v1897
      %v1925 = vadd.f32 %v1704, %v1898
      %v1926 = vadd.f32 %v1705, %v1899
      %v1927 = vadd.f32 %v1706, %v1900
      %v1928 = vadd.f32 %v1707, %v1901
      %v1929 = vadd.f32 %v1708, %v1902
      %v1930 = vadd.f32 %v1709, %v1903
      %v1931 = vadd.f32 %v1710, %v1904
      %v1932 = vadd.f32 %v1711, %v1905
      %v1933 = vadd.f32 %v1712, %v1906
      %v1934 = vadd.f32 %v1713, %v1907
      %v1935 = vadd.f32 %v1714, %v1908
      %v1936 = vadd.f32 %v1715, %v1909
      %v1937 = vadd.f32 %v1716, %v1910
      %v1938 = vadd.f32 %v1717, %v1911
      %v1939 = vadd.f32 %v1718, %v1912
      %v1940 = vadd.f32 %v1719, %v1913
      %v1941 = vld [vmem:[%s165 + $0x10] sm:$0xff]
      %v1942 = vld [vmem:[%s165 + $0x18] sm:$0xff]
      %v1943 = vld [vmem:[%s165 + $0x20] sm:$0xff]
      %v1944 = vld [vmem:[%s165 + $0x28] sm:$0xff]
      %v1945 = vld [vmem:[%s165 + $0x30] sm:$0xff]
      %v1946 = vld [vmem:[%s165 + $0x38] sm:$0xff]
      %v1947 = vld [vmem:[%s165 + $0x40] sm:$0xff]
      %v1948 = vld [vmem:[%s165 + $0x48] sm:$0xff]
      %v1949 = vld [vmem:[%s165 + $0x50] sm:$0xff]
      %v1950 = vld [vmem:[%s165 + $0x58] sm:$0xff]
      %v1951 = vld [vmem:[%s165 + $0x60] sm:$0xff]
      %v1952 = vld [vmem:[%s165 + $0x68] sm:$0xff]
      %v1953 = vld [vmem:[%s165 + $0x70] sm:$0xff]
      %v1954 = vld [vmem:[%s165 + $0x78] sm:$0xff]
      %v1955 = vld [vmem:[%s165 + $0x80] sm:$0xff]
      %v1956 = vld [vmem:[%s165 + $0x88] sm:$0xff]
      %v1957 = vld [vmem:[%s165 + $0x90] sm:$0xff]
      %v1958 = vld [vmem:[%s165 + $0x98] sm:$0xff]
      %v1959 = vld [vmem:[%s165 + $0xa0] sm:$0xff]
      %v1960 = vld [vmem:[%s165 + $0xa8] sm:$0xff]
      %v1961 = vld [vmem:[%s165 + $0xb0] sm:$0xff]
      %v1962 = vld [vmem:[%s165 + $0xb8] sm:$0xff]
      %v1963 = vld [vmem:[%s165 + $0xc0] sm:$0xff]
      %v1964 = vld [vmem:[%s165 + $0xc8] sm:$0xff]
      %v1965 = vld [vmem:[%s165 + $0xd0] sm:$0xff]
      %v1966 = vld [vmem:[%s165 + $0xd8] sm:$0xff]
      %v1967 = vld [vmem:[%s165 + $0xe0] sm:$0x3]
      %s1968 = scalar_lea.vmem %s1, 8
      %v1969 = vld [vmem:[%s1968] sm:$0x1]
      %1971 = vset.pattern.permute.xlu0 0
      %1972 = vperm.xlu0 %1971, %v1941
      %v1973 = vpop.permute.xlu0 %1972
      %1976 = vset.pattern.permute.xlu0 0
      %1977 = vperm.xlu0 %1976, %v1942
      %v1978 = vpop.permute.xlu0 %1977
      %1981 = vset.pattern.permute.xlu0 0
      %1982 = vperm.xlu0 %1981, %v1943
      %v1983 = vpop.permute.xlu0 %1982
      %1986 = vset.pattern.permute.xlu0 0
      %1987 = vperm.xlu0 %1986, %v1944
      %v1988 = vpop.permute.xlu0 %1987
      %1991 = vset.pattern.permute.xlu0 0
      %1992 = vperm.xlu0 %1991, %v1945
      %v1993 = vpop.permute.xlu0 %1992
      %1996 = vset.pattern.permute.xlu0 0
      %1997 = vperm.xlu0 %1996, %v1946
      %v1998 = vpop.permute.xlu0 %1997
      %2001 = vset.pattern.permute.xlu0 0
      %2002 = vperm.xlu0 %2001, %v1947
      %v2003 = vpop.permute.xlu0 %2002
      %2006 = vset.pattern.permute.xlu0 0
      %2007 = vperm.xlu0 %2006, %v1948
      %v2008 = vpop.permute.xlu0 %2007
      %2011 = vset.pattern.permute.xlu0 0
      %2012 = vperm.xlu0 %2011, %v1949
      %v2013 = vpop.permute.xlu0 %2012
      %2016 = vset.pattern.permute.xlu0 0
      %2017 = vperm.xlu0 %2016, %v1950
      %v2018 = vpop.permute.xlu0 %2017
      %2021 = vset.pattern.permute.xlu0 0
      %2022 = vperm.xlu0 %2021, %v1951
      %v2023 = vpop.permute.xlu0 %2022
      %2026 = vset.pattern.permute.xlu0 0
      %2027 = vperm.xlu0 %2026, %v1952
      %v2028 = vpop.permute.xlu0 %2027
      %2031 = vset.pattern.permute.xlu0 0
      %2032 = vperm.xlu0 %2031, %v1953
      %v2033 = vpop.permute.xlu0 %2032
      %2036 = vset.pattern.permute.xlu0 0
      %2037 = vperm.xlu0 %2036, %v1954
      %v2038 = vpop.permute.xlu0 %2037
      %2041 = vset.pattern.permute.xlu0 0
      %2042 = vperm.xlu0 %2041, %v1955
      %v2043 = vpop.permute.xlu0 %2042
      %2046 = vset.pattern.permute.xlu0 0
      %2047 = vperm.xlu0 %2046, %v1956
      %v2048 = vpop.permute.xlu0 %2047
      %2051 = vset.pattern.permute.xlu0 0
      %2052 = vperm.xlu0 %2051, %v1957
      %v2053 = vpop.permute.xlu0 %2052
      %2056 = vset.pattern.permute.xlu0 0
      %2057 = vperm.xlu0 %2056, %v1958
      %v2058 = vpop.permute.xlu0 %2057
      %2061 = vset.pattern.permute.xlu0 0
      %2062 = vperm.xlu0 %2061, %v1959
      %v2063 = vpop.permute.xlu0 %2062
      %2066 = vset.pattern.permute.xlu0 0
      %2067 = vperm.xlu0 %2066, %v1960
      %v2068 = vpop.permute.xlu0 %2067
      %2071 = vset.pattern.permute.xlu0 0
      %2072 = vperm.xlu0 %2071, %v1961
      %v2073 = vpop.permute.xlu0 %2072
      %2076 = vset.pattern.permute.xlu0 0
      %2077 = vperm.xlu0 %2076, %v1962
      %v2078 = vpop.permute.xlu0 %2077
      %2081 = vset.pattern.permute.xlu0 0
      %2082 = vperm.xlu0 %2081, %v1963
      %v2083 = vpop.permute.xlu0 %2082
      %2086 = vset.pattern.permute.xlu0 0
      %2087 = vperm.xlu0 %2086, %v1964
      %v2088 = vpop.permute.xlu0 %2087
      %2091 = vset.pattern.permute.xlu0 0
      %2092 = vperm.xlu0 %2091, %v1965
      %v2093 = vpop.permute.xlu0 %2092
      %2096 = vset.pattern.permute.xlu0 0
      %2097 = vperm.xlu0 %2096, %v1966
      %v2098 = vpop.permute.xlu0 %2097
      %2101 = vset.pattern.permute.xlu0 0
      %2102 = vperm.xlu0 %2101, %v1967
      %v2103 = vpop.permute.xlu0 %2102
      %v2106 = vperm.slane %v1969, 0
      %v2108 = vmul.f32 %v1973, %v2106
      %v2109 = vmul.f32 %v1978, %v2106
      %v2110 = vmul.f32 %v1983, %v2106
      %v2111 = vmul.f32 %v1988, %v2106
      %v2112 = vmul.f32 %v1993, %v2106
      %v2113 = vmul.f32 %v1998, %v2106
      %v2114 = vmul.f32 %v2003, %v2106
      %v2115 = vmul.f32 %v2008, %v2106
      %v2116 = vmul.f32 %v2013, %v2106
      %v2117 = vmul.f32 %v2018, %v2106
      %v2118 = vmul.f32 %v2023, %v2106
      %v2119 = vmul.f32 %v2028, %v2106
      %v2120 = vmul.f32 %v2033, %v2106
      %v2121 = vmul.f32 %v2038, %v2106
      %v2122 = vmul.f32 %v2043, %v2106
      %v2123 = vmul.f32 %v2048, %v2106
      %v2124 = vmul.f32 %v2053, %v2106
      %v2125 = vmul.f32 %v2058, %v2106
      %v2126 = vmul.f32 %v2063, %v2106
      %v2127 = vmul.f32 %v2068, %v2106
      %v2128 = vmul.f32 %v2073, %v2106
      %v2129 = vmul.f32 %v2078, %v2106
      %v2130 = vmul.f32 %v2083, %v2106
      %v2131 = vmul.f32 %v2088, %v2106
      %v2132 = vmul.f32 %v2093, %v2106
      %v2133 = vmul.f32 %v2098, %v2106
      %v2134 = vmul.f32 %v2103, %v2106
      %v2135 = vadd.f32 %v1914, %v2108
      %v2136 = vadd.f32 %v1915, %v2109
      %v2137 = vadd.f32 %v1916, %v2110
      %v2138 = vadd.f32 %v1917, %v2111
      %v2139 = vadd.f32 %v1918, %v2112
      %v2140 = vadd.f32 %v1919, %v2113
      %v2141 = vadd.f32 %v1920, %v2114
      %v2142 = vadd.f32 %v1921, %v2115
      %v2143 = vadd.f32 %v1922, %v2116
      %v2144 = vadd.f32 %v1923, %v2117
      %v2145 = vadd.f32 %v1924, %v2118
      %v2146 = vadd.f32 %v1925, %v2119
      %v2147 = vadd.f32 %v1926, %v2120
      %v2148 = vadd.f32 %v1927, %v2121
      %v2149 = vadd.f32 %v1928, %v2122
      %v2150 = vadd.f32 %v1929, %v2123
      %v2151 = vadd.f32 %v1930, %v2124
      %v2152 = vadd.f32 %v1931, %v2125
      %v2153 = vadd.f32 %v1932, %v2126
      %v2154 = vadd.f32 %v1933, %v2127
      %v2155 = vadd.f32 %v1934, %v2128
      %v2156 = vadd.f32 %v1935, %v2129
      %v2157 = vadd.f32 %v1936, %v2130
      %v2158 = vadd.f32 %v1937, %v2131
      %v2159 = vadd.f32 %v1938, %v2132
      %v2160 = vadd.f32 %v1939, %v2133
      %v2161 = vadd.f32 %v1940, %v2134
      %v2162 = vmul.f32 %v424, %v335
      %v2163 = vmul.f32 %v429, %v335
      %v2164 = vmul.f32 %v434, %v335
      %v2165 = vmul.f32 %v439, %v335
      %v2166 = vmul.f32 %v444, %v335
      %v2167 = vmul.f32 %v449, %v335
      %v2168 = vmul.f32 %v454, %v335
      %v2169 = vmul.f32 %v459, %v335
      %v2170 = vmul.f32 %v464, %v335
      %v2171 = vmul.f32 %v469, %v335
      %v2172 = vmul.f32 %v474, %v335
      %v2173 = vmul.f32 %v479, %v335
      %v2174 = vmul.f32 %v484, %v335
      %v2175 = vmul.f32 %v489, %v335
      %v2176 = vmul.f32 %v494, %v335
      %v2177 = vmul.f32 %v499, %v335
      %v2178 = vmul.f32 %v504, %v335
      %v2179 = vmul.f32 %v509, %v335
      %v2180 = vmul.f32 %v514, %v335
      %v2181 = vmul.f32 %v519, %v335
      %v2182 = vmul.f32 %v524, %v335
      %v2183 = vmul.f32 %v529, %v335
      %v2184 = vmul.f32 %v534, %v335
      %v2185 = vmul.f32 %v539, %v335
      %v2186 = vmul.f32 %v544, %v335
      %v2187 = vmul.f32 %v549, %v335
      %v2188 = vmul.f32 %v554, %v335
      %v2189 = vadd.f32 %v2162, 0.0
      %v2190 = vadd.f32 %v2163, 0.0
      %v2191 = vadd.f32 %v2164, 0.0
      %v2192 = vadd.f32 %v2165, 0.0
      %v2193 = vadd.f32 %v2166, 0.0
      %v2194 = vadd.f32 %v2167, 0.0
      %v2195 = vadd.f32 %v2168, 0.0
      %v2196 = vadd.f32 %v2169, 0.0
      %v2197 = vadd.f32 %v2170, 0.0
      %v2198 = vadd.f32 %v2171, 0.0
      %v2199 = vadd.f32 %v2172, 0.0
      %v2200 = vadd.f32 %v2173, 0.0
      %v2201 = vadd.f32 %v2174, 0.0
      %v2202 = vadd.f32 %v2175, 0.0
      %v2203 = vadd.f32 %v2176, 0.0
      %v2204 = vadd.f32 %v2177, 0.0
      %v2205 = vadd.f32 %v2178, 0.0
      %v2206 = vadd.f32 %v2179, 0.0
      %v2207 = vadd.f32 %v2180, 0.0
      %v2208 = vadd.f32 %v2181, 0.0
      %v2209 = vadd.f32 %v2182, 0.0
      %v2210 = vadd.f32 %v2183, 0.0
      %v2211 = vadd.f32 %v2184, 0.0
      %v2212 = vadd.f32 %v2185, 0.0
      %v2213 = vadd.f32 %v2186, 0.0
      %v2214 = vadd.f32 %v2187, 0.0
      %v2215 = vadd.f32 %v2188, 0.0
      %v2216 = vmul.f32 %v645, %v557
      %v2217 = vmul.f32 %v650, %v557
      %v2218 = vmul.f32 %v655, %v557
      %v2219 = vmul.f32 %v660, %v557
      %v2220 = vmul.f32 %v665, %v557
      %v2221 = vmul.f32 %v670, %v557
      %v2222 = vmul.f32 %v675, %v557
      %v2223 = vmul.f32 %v680, %v557
      %v2224 = vmul.f32 %v685, %v557
      %v2225 = vmul.f32 %v690, %v557
      %v2226 = vmul.f32 %v695, %v557
      %v2227 = vmul.f32 %v700, %v557
      %v2228 = vmul.f32 %v705, %v557
      %v2229 = vmul.f32 %v710, %v557
      %v2230 = vmul.f32 %v715, %v557
      %v2231 = vmul.f32 %v720, %v557
      %v2232 = vmul.f32 %v725, %v557
      %v2233 = vmul.f32 %v730, %v557
      %v2234 = vmul.f32 %v735, %v557
      %v2235 = vmul.f32 %v740, %v557
      %v2236 = vmul.f32 %v745, %v557
      %v2237 = vmul.f32 %v750, %v557
      %v2238 = vmul.f32 %v755, %v557
      %v2239 = vmul.f32 %v760, %v557
      %v2240 = vmul.f32 %v765, %v557
      %v2241 = vmul.f32 %v770, %v557
      %v2242 = vmul.f32 %v775, %v557
      %v2243 = vadd.f32 %v2189, %v2216
      %v2244 = vadd.f32 %v2190, %v2217
      %v2245 = vadd.f32 %v2191, %v2218
      %v2246 = vadd.f32 %v2192, %v2219
      %v2247 = vadd.f32 %v2193, %v2220
      %v2248 = vadd.f32 %v2194, %v2221
      %v2249 = vadd.f32 %v2195, %v2222
      %v2250 = vadd.f32 %v2196, %v2223
      %v2251 = vadd.f32 %v2197, %v2224
      %v2252 = vadd.f32 %v2198, %v2225
      %v2253 = vadd.f32 %v2199, %v2226
      %v2254 = vadd.f32 %v2200, %v2227
      %v2255 = vadd.f32 %v2201, %v2228
      %v2256 = vadd.f32 %v2202, %v2229
      %v2257 = vadd.f32 %v2203, %v2230
      %v2258 = vadd.f32 %v2204, %v2231
      %v2259 = vadd.f32 %v2205, %v2232
      %v2260 = vadd.f32 %v2206, %v2233
      %v2261 = vadd.f32 %v2207, %v2234
      %v2262 = vadd.f32 %v2208, %v2235
      %v2263 = vadd.f32 %v2209, %v2236
      %v2264 = vadd.f32 %v2210, %v2237
      %v2265 = vadd.f32 %v2211, %v2238
      %v2266 = vadd.f32 %v2212, %v2239
      %v2267 = vadd.f32 %v2213, %v2240
      %v2268 = vadd.f32 %v2214, %v2241
      %v2269 = vadd.f32 %v2215, %v2242
      %v2270 = vld [vmem:[%s391 + $0x1] sm:$0xff]
      %v2271 = vld [vmem:[%s391 + $0x9] sm:$0xff]
      %v2272 = vld [vmem:[%s391 + $0x11] sm:$0xff]
      %v2273 = vld [vmem:[%s391 + $0x19] sm:$0xff]
      %v2274 = vld [vmem:[%s391 + $0x21] sm:$0xff]
      %v2275 = vld [vmem:[%s391 + $0x29] sm:$0xff]
      %v2276 = vld [vmem:[%s391 + $0x31] sm:$0xff]
      %v2277 = vld [vmem:[%s391 + $0x39] sm:$0xff]
      %v2278 = vld [vmem:[%s391 + $0x41] sm:$0xff]
      %v2279 = vld [vmem:[%s391 + $0x49] sm:$0xff]
      %v2280 = vld [vmem:[%s391 + $0x51] sm:$0xff]
      %v2281 = vld [vmem:[%s391 + $0x59] sm:$0xff]
      %v2282 = vld [vmem:[%s391 + $0x61] sm:$0xff]
      %v2283 = vld [vmem:[%s391 + $0x69] sm:$0xff]
      %v2284 = vld [vmem:[%s391 + $0x71] sm:$0xff]
      %v2285 = vld [vmem:[%s391 + $0x79] sm:$0xff]
      %v2286 = vld [vmem:[%s391 + $0x81] sm:$0xff]
      %v2287 = vld [vmem:[%s391 + $0x89] sm:$0xff]
      %v2288 = vld [vmem:[%s391 + $0x91] sm:$0xff]
      %v2289 = vld [vmem:[%s391 + $0x99] sm:$0xff]
      %v2290 = vld [vmem:[%s391 + $0xa1] sm:$0xff]
      %v2291 = vld [vmem:[%s391 + $0xa9] sm:$0xff]
      %v2292 = vld [vmem:[%s391 + $0xb1] sm:$0xff]
      %v2293 = vld [vmem:[%s391 + $0xb9] sm:$0xff]
      %v2294 = vld [vmem:[%s391 + $0xc1] sm:$0xff]
      %v2295 = vld [vmem:[%s391 + $0xc9] sm:$0xff]
      %v2296 = vld [vmem:[%s391 + $0xd1] sm:$0x3]
      %2298 = vset.pattern.permute.xlu0 0
      %2299 = vperm.xlu0 %2298, %v2270
      %v2300 = vpop.permute.xlu0 %2299
      %2303 = vset.pattern.permute.xlu0 0
      %2304 = vperm.xlu0 %2303, %v2271
      %v2305 = vpop.permute.xlu0 %2304
      %2308 = vset.pattern.permute.xlu0 0
      %2309 = vperm.xlu0 %2308, %v2272
      %v2310 = vpop.permute.xlu0 %2309
      %2313 = vset.pattern.permute.xlu0 0
      %2314 = vperm.xlu0 %2313, %v2273
      %v2315 = vpop.permute.xlu0 %2314
      %2318 = vset.pattern.permute.xlu0 0
      %2319 = vperm.xlu0 %2318, %v2274
      %v2320 = vpop.permute.xlu0 %2319
      %2323 = vset.pattern.permute.xlu0 0
      %2324 = vperm.xlu0 %2323, %v2275
      %v2325 = vpop.permute.xlu0 %2324
      %2328 = vset.pattern.permute.xlu0 0
      %2329 = vperm.xlu0 %2328, %v2276
      %v2330 = vpop.permute.xlu0 %2329
      %2333 = vset.pattern.permute.xlu0 0
      %2334 = vperm.xlu0 %2333, %v2277
      %v2335 = vpop.permute.xlu0 %2334
      %2338 = vset.pattern.permute.xlu0 0
      %2339 = vperm.xlu0 %2338, %v2278
      %v2340 = vpop.permute.xlu0 %2339
      %2343 = vset.pattern.permute.xlu0 0
      %2344 = vperm.xlu0 %2343, %v2279
      %v2345 = vpop.permute.xlu0 %2344
      %2348 = vset.pattern.permute.xlu0 0
      %2349 = vperm.xlu0 %2348, %v2280
      %v2350 = vpop.permute.xlu0 %2349
      %2353 = vset.pattern.permute.xlu0 0
      %2354 = vperm.xlu0 %2353, %v2281
      %v2355 = vpop.permute.xlu0 %2354
      %2358 = vset.pattern.permute.xlu0 0
      %2359 = vperm.xlu0 %2358, %v2282
      %v2360 = vpop.permute.xlu0 %2359
      %2363 = vset.pattern.permute.xlu0 0
      %2364 = vperm.xlu0 %2363, %v2283
      %v2365 = vpop.permute.xlu0 %2364
      %2368 = vset.pattern.permute.xlu0 0
      %2369 = vperm.xlu0 %2368, %v2284
      %v2370 = vpop.permute.xlu0 %2369
      %2373 = vset.pattern.permute.xlu0 0
      %2374 = vperm.xlu0 %2373, %v2285
      %v2375 = vpop.permute.xlu0 %2374
      %2378 = vset.pattern.permute.xlu0 0
      %2379 = vperm.xlu0 %2378, %v2286
      %v2380 = vpop.permute.xlu0 %2379
      %2383 = vset.pattern.permute.xlu0 0
      %2384 = vperm.xlu0 %2383, %v2287
      %v2385 = vpop.permute.xlu0 %2384
      %2388 = vset.pattern.permute.xlu0 0
      %2389 = vperm.xlu0 %2388, %v2288
      %v2390 = vpop.permute.xlu0 %2389
      %2393 = vset.pattern.permute.xlu0 0
      %2394 = vperm.xlu0 %2393, %v2289
      %v2395 = vpop.permute.xlu0 %2394
      %2398 = vset.pattern.permute.xlu0 0
      %2399 = vperm.xlu0 %2398, %v2290
      %v2400 = vpop.permute.xlu0 %2399
      %2403 = vset.pattern.permute.xlu0 0
      %2404 = vperm.xlu0 %2403, %v2291
      %v2405 = vpop.permute.xlu0 %2404
      %2408 = vset.pattern.permute.xlu0 0
      %2409 = vperm.xlu0 %2408, %v2292
      %v2410 = vpop.permute.xlu0 %2409
      %2413 = vset.pattern.permute.xlu0 0
      %2414 = vperm.xlu0 %2413, %v2293
      %v2415 = vpop.permute.xlu0 %2414
      %2418 = vset.pattern.permute.xlu0 0
      %2419 = vperm.xlu0 %2418, %v2294
      %v2420 = vpop.permute.xlu0 %2419
      %2423 = vset.pattern.permute.xlu0 0
      %2424 = vperm.xlu0 %2423, %v2295
      %v2425 = vpop.permute.xlu0 %2424
      %2428 = vset.pattern.permute.xlu0 0
      %2429 = vperm.xlu0 %2428, %v2296
      %v2430 = vpop.permute.xlu0 %2429
      %v2432 = vmul.f32 %v2300, %v778
      %v2433 = vmul.f32 %v2305, %v778
      %v2434 = vmul.f32 %v2310, %v778
      %v2435 = vmul.f32 %v2315, %v778
      %v2436 = vmul.f32 %v2320, %v778
      %v2437 = vmul.f32 %v2325, %v778
      %v2438 = vmul.f32 %v2330, %v778
      %v2439 = vmul.f32 %v2335, %v778
      %v2440 = vmul.f32 %v2340, %v778
      %v2441 = vmul.f32 %v2345, %v778
      %v2442 = vmul.f32 %v2350, %v778
      %v2443 = vmul.f32 %v2355, %v778
      %v2444 = vmul.f32 %v2360, %v778
      %v2445 = vmul.f32 %v2365, %v778
      %v2446 = vmul.f32 %v2370, %v778
      %v2447 = vmul.f32 %v2375, %v778
      %v2448 = vmul.f32 %v2380, %v778
      %v2449 = vmul.f32 %v2385, %v778
      %v2450 = vmul.f32 %v2390, %v778
      %v2451 = vmul.f32 %v2395, %v778
      %v2452 = vmul.f32 %v2400, %v778
      %v2453 = vmul.f32 %v2405, %v778
      %v2454 = vmul.f32 %v2410, %v778
      %v2455 = vmul.f32 %v2415, %v778
      %v2456 = vmul.f32 %v2420, %v778
      %v2457 = vmul.f32 %v2425, %v778
      %v2458 = vmul.f32 %v2430, %v778
      %v2459 = vadd.f32 %v2243, %v2432
      %v2460 = vadd.f32 %v2244, %v2433
      %v2461 = vadd.f32 %v2245, %v2434
      %v2462 = vadd.f32 %v2246, %v2435
      %v2463 = vadd.f32 %v2247, %v2436
      %v2464 = vadd.f32 %v2248, %v2437
      %v2465 = vadd.f32 %v2249, %v2438
      %v2466 = vadd.f32 %v2250, %v2439
      %v2467 = vadd.f32 %v2251, %v2440
      %v2468 = vadd.f32 %v2252, %v2441
      %v2469 = vadd.f32 %v2253, %v2442
      %v2470 = vadd.f32 %v2254, %v2443
      %v2471 = vadd.f32 %v2255, %v2444
      %v2472 = vadd.f32 %v2256, %v2445
      %v2473 = vadd.f32 %v2257, %v2446
      %v2474 = vadd.f32 %v2258, %v2447
      %v2475 = vadd.f32 %v2259, %v2448
      %v2476 = vadd.f32 %v2260, %v2449
      %v2477 = vadd.f32 %v2261, %v2450
      %v2478 = vadd.f32 %v2262, %v2451
      %v2479 = vadd.f32 %v2263, %v2452
      %v2480 = vadd.f32 %v2264, %v2453
      %v2481 = vadd.f32 %v2265, %v2454
      %v2482 = vadd.f32 %v2266, %v2455
      %v2483 = vadd.f32 %v2267, %v2456
      %v2484 = vadd.f32 %v2268, %v2457
      %v2485 = vadd.f32 %v2269, %v2458
      %v2486 = vmul.f32 %v1089, %v1000
      %v2487 = vmul.f32 %v1094, %v1000
      %v2488 = vmul.f32 %v1099, %v1000
      %v2489 = vmul.f32 %v1104, %v1000
      %v2490 = vmul.f32 %v1109, %v1000
      %v2491 = vmul.f32 %v1114, %v1000
      %v2492 = vmul.f32 %v1119, %v1000
      %v2493 = vmul.f32 %v1124, %v1000
      %v2494 = vmul.f32 %v1129, %v1000
      %v2495 = vmul.f32 %v1134, %v1000
      %v2496 = vmul.f32 %v1139, %v1000
      %v2497 = vmul.f32 %v1144, %v1000
      %v2498 = vmul.f32 %v1149, %v1000
      %v2499 = vmul.f32 %v1154, %v1000
      %v2500 = vmul.f32 %v1159, %v1000
      %v2501 = vmul.f32 %v1164, %v1000
      %v2502 = vmul.f32 %v1169, %v1000
      %v2503 = vmul.f32 %v1174, %v1000
      %v2504 = vmul.f32 %v1179, %v1000
      %v2505 = vmul.f32 %v1184, %v1000
      %v2506 = vmul.f32 %v1189, %v1000
      %v2507 = vmul.f32 %v1194, %v1000
      %v2508 = vmul.f32 %v1199, %v1000
      %v2509 = vmul.f32 %v1204, %v1000
      %v2510 = vmul.f32 %v1209, %v1000
      %v2511 = vmul.f32 %v1214, %v1000
      %v2512 = vmul.f32 %v1219, %v1000
      %v2513 = vadd.f32 %v2459, %v2486
      %v2514 = vadd.f32 %v2460, %v2487
      %v2515 = vadd.f32 %v2461, %v2488
      %v2516 = vadd.f32 %v2462, %v2489
      %v2517 = vadd.f32 %v2463, %v2490
      %v2518 = vadd.f32 %v2464, %v2491
      %v2519 = vadd.f32 %v2465, %v2492
      %v2520 = vadd.f32 %v2466, %v2493
      %v2521 = vadd.f32 %v2467, %v2494
      %v2522 = vadd.f32 %v2468, %v2495
      %v2523 = vadd.f32 %v2469, %v2496
      %v2524 = vadd.f32 %v2470, %v2497
      %v2525 = vadd.f32 %v2471, %v2498
      %v2526 = vadd.f32 %v2472, %v2499
      %v2527 = vadd.f32 %v2473, %v2500
      %v2528 = vadd.f32 %v2474, %v2501
      %v2529 = vadd.f32 %v2475, %v2502
      %v2530 = vadd.f32 %v2476, %v2503
      %v2531 = vadd.f32 %v2477, %v2504
      %v2532 = vadd.f32 %v2478, %v2505
      %v2533 = vadd.f32 %v2479, %v2506
      %v2534 = vadd.f32 %v2480, %v2507
      %v2535 = vadd.f32 %v2481, %v2508
      %v2536 = vadd.f32 %v2482, %v2509
      %v2537 = vadd.f32 %v2483, %v2510
      %v2538 = vadd.f32 %v2484, %v2511
      %v2539 = vadd.f32 %v2485, %v2512
      %v2540 = vmul.f32 %v1310, %v1222
      %v2541 = vmul.f32 %v1315, %v1222
      %v2542 = vmul.f32 %v1320, %v1222
      %v2543 = vmul.f32 %v1325, %v1222
      %v2544 = vmul.f32 %v1330, %v1222
      %v2545 = vmul.f32 %v1335, %v1222
      %v2546 = vmul.f32 %v1340, %v1222
      %v2547 = vmul.f32 %v1345, %v1222
      %v2548 = vmul.f32 %v1350, %v1222
      %v2549 = vmul.f32 %v1355, %v1222
      %v2550 = vmul.f32 %v1360, %v1222
      %v2551 = vmul.f32 %v1365, %v1222
      %v2552 = vmul.f32 %v1370, %v1222
      %v2553 = vmul.f32 %v1375, %v1222
      %v2554 = vmul.f32 %v1380, %v1222
      %v2555 = vmul.f32 %v1385, %v1222
      %v2556 = vmul.f32 %v1390, %v1222
      %v2557 = vmul.f32 %v1395, %v1222
      %v2558 = vmul.f32 %v1400, %v1222
      %v2559 = vmul.f32 %v1405, %v1222
      %v2560 = vmul.f32 %v1410, %v1222
      %v2561 = vmul.f32 %v1415, %v1222
      %v2562 = vmul.f32 %v1420, %v1222
      %v2563 = vmul.f32 %v1425, %v1222
      %v2564 = vmul.f32 %v1430, %v1222
      %v2565 = vmul.f32 %v1435, %v1222
      %v2566 = vmul.f32 %v1440, %v1222
      %v2567 = vadd.f32 %v2513, %v2540
      %v2568 = vadd.f32 %v2514, %v2541
      %v2569 = vadd.f32 %v2515, %v2542
      %v2570 = vadd.f32 %v2516, %v2543
      %v2571 = vadd.f32 %v2517, %v2544
      %v2572 = vadd.f32 %v2518, %v2545
      %v2573 = vadd.f32 %v2519, %v2546
      %v2574 = vadd.f32 %v2520, %v2547
      %v2575 = vadd.f32 %v2521, %v2548
      %v2576 = vadd.f32 %v2522, %v2549
      %v2577 = vadd.f32 %v2523, %v2550
      %v2578 = vadd.f32 %v2524, %v2551
      %v2579 = vadd.f32 %v2525, %v2552
      %v2580 = vadd.f32 %v2526, %v2553
      %v2581 = vadd.f32 %v2527, %v2554
      %v2582 = vadd.f32 %v2528, %v2555
      %v2583 = vadd.f32 %v2529, %v2556
      %v2584 = vadd.f32 %v2530, %v2557
      %v2585 = vadd.f32 %v2531, %v2558
      %v2586 = vadd.f32 %v2532, %v2559
      %v2587 = vadd.f32 %v2533, %v2560
      %v2588 = vadd.f32 %v2534, %v2561
      %v2589 = vadd.f32 %v2535, %v2562
      %v2590 = vadd.f32 %v2536, %v2563
      %v2591 = vadd.f32 %v2537, %v2564
      %v2592 = vadd.f32 %v2538, %v2565
      %v2593 = vadd.f32 %v2539, %v2566
      %v2594 = vld [vmem:[%s1056 + $0x1] sm:$0xff]
      %v2595 = vld [vmem:[%s1056 + $0x9] sm:$0xff]
      %v2596 = vld [vmem:[%s1056 + $0x11] sm:$0xff]
      %v2597 = vld [vmem:[%s1056 + $0x19] sm:$0xff]
      %v2598 = vld [vmem:[%s1056 + $0x21] sm:$0xff]
      %v2599 = vld [vmem:[%s1056 + $0x29] sm:$0xff]
      %v2600 = vld [vmem:[%s1056 + $0x31] sm:$0xff]
      %v2601 = vld [vmem:[%s1056 + $0x39] sm:$0xff]
      %v2602 = vld [vmem:[%s1056 + $0x41] sm:$0xff]
      %v2603 = vld [vmem:[%s1056 + $0x49] sm:$0xff]
      %v2604 = vld [vmem:[%s1056 + $0x51] sm:$0xff]
      %v2605 = vld [vmem:[%s1056 + $0x59] sm:$0xff]
      %v2606 = vld [vmem:[%s1056 + $0x61] sm:$0xff]
      %v2607 = vld [vmem:[%s1056 + $0x69] sm:$0xff]
      %v2608 = vld [vmem:[%s1056 + $0x71] sm:$0xff]
      %v2609 = vld [vmem:[%s1056 + $0x79] sm:$0xff]
      %v2610 = vld [vmem:[%s1056 + $0x81] sm:$0xff]
      %v2611 = vld [vmem:[%s1056 + $0x89] sm:$0xff]
      %v2612 = vld [vmem:[%s1056 + $0x91] sm:$0xff]
      %v2613 = vld [vmem:[%s1056 + $0x99] sm:$0xff]
      %v2614 = vld [vmem:[%s1056 + $0xa1] sm:$0xff]
      %v2615 = vld [vmem:[%s1056 + $0xa9] sm:$0xff]
      %v2616 = vld [vmem:[%s1056 + $0xb1] sm:$0xff]
      %v2617 = vld [vmem:[%s1056 + $0xb9] sm:$0xff]
      %v2618 = vld [vmem:[%s1056 + $0xc1] sm:$0xff]
      %v2619 = vld [vmem:[%s1056 + $0xc9] sm:$0xff]
      %v2620 = vld [vmem:[%s1056 + $0xd1] sm:$0x3]
      %2622 = vset.pattern.permute.xlu0 0
      %2623 = vperm.xlu0 %2622, %v2594
      %v2624 = vpop.permute.xlu0 %2623
      %2627 = vset.pattern.permute.xlu0 0
      %2628 = vperm.xlu0 %2627, %v2595
      %v2629 = vpop.permute.xlu0 %2628
      %2632 = vset.pattern.permute.xlu0 0
      %2633 = vperm.xlu0 %2632, %v2596
      %v2634 = vpop.permute.xlu0 %2633
      %2637 = vset.pattern.permute.xlu0 0
      %2638 = vperm.xlu0 %2637, %v2597
      %v2639 = vpop.permute.xlu0 %2638
      %2642 = vset.pattern.permute.xlu0 0
      %2643 = vperm.xlu0 %2642, %v2598
      %v2644 = vpop.permute.xlu0 %2643
      %2647 = vset.pattern.permute.xlu0 0
      %2648 = vperm.xlu0 %2647, %v2599
      %v2649 = vpop.permute.xlu0 %2648
      %2652 = vset.pattern.permute.xlu0 0
      %2653 = vperm.xlu0 %2652, %v2600
      %v2654 = vpop.permute.xlu0 %2653
      %2657 = vset.pattern.permute.xlu0 0
      %2658 = vperm.xlu0 %2657, %v2601
      %v2659 = vpop.permute.xlu0 %2658
      %2662 = vset.pattern.permute.xlu0 0
      %2663 = vperm.xlu0 %2662, %v2602
      %v2664 = vpop.permute.xlu0 %2663
      %2667 = vset.pattern.permute.xlu0 0
      %2668 = vperm.xlu0 %2667, %v2603
      %v2669 = vpop.permute.xlu0 %2668
      %2672 = vset.pattern.permute.xlu0 0
      %2673 = vperm.xlu0 %2672, %v2604
      %v2674 = vpop.permute.xlu0 %2673
      %2677 = vset.pattern.permute.xlu0 0
      %2678 = vperm.xlu0 %2677, %v2605
      %v2679 = vpop.permute.xlu0 %2678
      %2682 = vset.pattern.permute.xlu0 0
      %2683 = vperm.xlu0 %2682, %v2606
      %v2684 = vpop.permute.xlu0 %2683
      %2687 = vset.pattern.permute.xlu0 0
      %2688 = vperm.xlu0 %2687, %v2607
      %v2689 = vpop.permute.xlu0 %2688
      %2692 = vset.pattern.permute.xlu0 0
      %2693 = vperm.xlu0 %2692, %v2608
      %v2694 = vpop.permute.xlu0 %2693
      %2697 = vset.pattern.permute.xlu0 0
      %2698 = vperm.xlu0 %2697, %v2609
      %v2699 = vpop.permute.xlu0 %2698
      %2702 = vset.pattern.permute.xlu0 0
      %2703 = vperm.xlu0 %2702, %v2610
      %v2704 = vpop.permute.xlu0 %2703
      %2707 = vset.pattern.permute.xlu0 0
      %2708 = vperm.xlu0 %2707, %v2611
      %v2709 = vpop.permute.xlu0 %2708
      %2712 = vset.pattern.permute.xlu0 0
      %2713 = vperm.xlu0 %2712, %v2612
      %v2714 = vpop.permute.xlu0 %2713
      %2717 = vset.pattern.permute.xlu0 0
      %2718 = vperm.xlu0 %2717, %v2613
      %v2719 = vpop.permute.xlu0 %2718
      %2722 = vset.pattern.permute.xlu0 0
      %2723 = vperm.xlu0 %2722, %v2614
      %v2724 = vpop.permute.xlu0 %2723
      %2727 = vset.pattern.permute.xlu0 0
      %2728 = vperm.xlu0 %2727, %v2615
      %v2729 = vpop.permute.xlu0 %2728
      %2732 = vset.pattern.permute.xlu0 0
      %2733 = vperm.xlu0 %2732, %v2616
      %v2734 = vpop.permute.xlu0 %2733
      %2737 = vset.pattern.permute.xlu0 0
      %2738 = vperm.xlu0 %2737, %v2617
      %v2739 = vpop.permute.xlu0 %2738
      %2742 = vset.pattern.permute.xlu0 0
      %2743 = vperm.xlu0 %2742, %v2618
      %v2744 = vpop.permute.xlu0 %2743
      %2747 = vset.pattern.permute.xlu0 0
      %2748 = vperm.xlu0 %2747, %v2619
      %v2749 = vpop.permute.xlu0 %2748
      %2752 = vset.pattern.permute.xlu0 0
      %2753 = vperm.xlu0 %2752, %v2620
      %v2754 = vpop.permute.xlu0 %2753
      %v2756 = vmul.f32 %v2624, %v1443
      %v2757 = vmul.f32 %v2629, %v1443
      %v2758 = vmul.f32 %v2634, %v1443
      %v2759 = vmul.f32 %v2639, %v1443
      %v2760 = vmul.f32 %v2644, %v1443
      %v2761 = vmul.f32 %v2649, %v1443
      %v2762 = vmul.f32 %v2654, %v1443
      %v2763 = vmul.f32 %v2659, %v1443
      %v2764 = vmul.f32 %v2664, %v1443
      %v2765 = vmul.f32 %v2669, %v1443
      %v2766 = vmul.f32 %v2674, %v1443
      %v2767 = vmul.f32 %v2679, %v1443
      %v2768 = vmul.f32 %v2684, %v1443
      %v2769 = vmul.f32 %v2689, %v1443
      %v2770 = vmul.f32 %v2694, %v1443
      %v2771 = vmul.f32 %v2699, %v1443
      %v2772 = vmul.f32 %v2704, %v1443
      %v2773 = vmul.f32 %v2709, %v1443
      %v2774 = vmul.f32 %v2714, %v1443
      %v2775 = vmul.f32 %v2719, %v1443
      %v2776 = vmul.f32 %v2724, %v1443
      %v2777 = vmul.f32 %v2729, %v1443
      %v2778 = vmul.f32 %v2734, %v1443
      %v2779 = vmul.f32 %v2739, %v1443
      %v2780 = vmul.f32 %v2744, %v1443
      %v2781 = vmul.f32 %v2749, %v1443
      %v2782 = vmul.f32 %v2754, %v1443
      %v2783 = vadd.f32 %v2567, %v2756
      %v2784 = vadd.f32 %v2568, %v2757
      %v2785 = vadd.f32 %v2569, %v2758
      %v2786 = vadd.f32 %v2570, %v2759
      %v2787 = vadd.f32 %v2571, %v2760
      %v2788 = vadd.f32 %v2572, %v2761
      %v2789 = vadd.f32 %v2573, %v2762
      %v2790 = vadd.f32 %v2574, %v2763
      %v2791 = vadd.f32 %v2575, %v2764
      %v2792 = vadd.f32 %v2576, %v2765
      %v2793 = vadd.f32 %v2577, %v2766
      %v2794 = vadd.f32 %v2578, %v2767
      %v2795 = vadd.f32 %v2579, %v2768
      %v2796 = vadd.f32 %v2580, %v2769
      %v2797 = vadd.f32 %v2581, %v2770
      %v2798 = vadd.f32 %v2582, %v2771
      %v2799 = vadd.f32 %v2583, %v2772
      %v2800 = vadd.f32 %v2584, %v2773
      %v2801 = vadd.f32 %v2585, %v2774
      %v2802 = vadd.f32 %v2586, %v2775
      %v2803 = vadd.f32 %v2587, %v2776
      %v2804 = vadd.f32 %v2588, %v2777
      %v2805 = vadd.f32 %v2589, %v2778
      %v2806 = vadd.f32 %v2590, %v2779
      %v2807 = vadd.f32 %v2591, %v2780
      %v2808 = vadd.f32 %v2592, %v2781
      %v2809 = vadd.f32 %v2593, %v2782
      %v2810 = vmul.f32 %v1752, %v1664
      %v2811 = vmul.f32 %v1757, %v1664
      %v2812 = vmul.f32 %v1762, %v1664
      %v2813 = vmul.f32 %v1767, %v1664
      %v2814 = vmul.f32 %v1772, %v1664
      %v2815 = vmul.f32 %v1777, %v1664
      %v2816 = vmul.f32 %v1782, %v1664
      %v2817 = vmul.f32 %v1787, %v1664
      %v2818 = vmul.f32 %v1792, %v1664
      %v2819 = vmul.f32 %v1797, %v1664
      %v2820 = vmul.f32 %v1802, %v1664
      %v2821 = vmul.f32 %v1807, %v1664
      %v2822 = vmul.f32 %v1812, %v1664
      %v2823 = vmul.f32 %v1817, %v1664
      %v2824 = vmul.f32 %v1822, %v1664
      %v2825 = vmul.f32 %v1827, %v1664
      %v2826 = vmul.f32 %v1832, %v1664
      %v2827 = vmul.f32 %v1837, %v1664
      %v2828 = vmul.f32 %v1842, %v1664
      %v2829 = vmul.f32 %v1847, %v1664
      %v2830 = vmul.f32 %v1852, %v1664
      %v2831 = vmul.f32 %v1857, %v1664
      %v2832 = vmul.f32 %v1862, %v1664
      %v2833 = vmul.f32 %v1867, %v1664
      %v2834 = vmul.f32 %v1872, %v1664
      %v2835 = vmul.f32 %v1877, %v1664
      %v2836 = vmul.f32 %v1882, %v1664
      %v2837 = vadd.f32 %v2783, %v2810
      %v2838 = vadd.f32 %v2784, %v2811
      %v2839 = vadd.f32 %v2785, %v2812
      %v2840 = vadd.f32 %v2786, %v2813
      %v2841 = vadd.f32 %v2787, %v2814
      %v2842 = vadd.f32 %v2788, %v2815
      %v2843 = vadd.f32 %v2789, %v2816
      %v2844 = vadd.f32 %v2790, %v2817
      %v2845 = vadd.f32 %v2791, %v2818
      %v2846 = vadd.f32 %v2792, %v2819
      %v2847 = vadd.f32 %v2793, %v2820
      %v2848 = vadd.f32 %v2794, %v2821
      %v2849 = vadd.f32 %v2795, %v2822
      %v2850 = vadd.f32 %v2796, %v2823
      %v2851 = vadd.f32 %v2797, %v2824
      %v2852 = vadd.f32 %v2798, %v2825
      %v2853 = vadd.f32 %v2799, %v2826
      %v2854 = vadd.f32 %v2800, %v2827
      %v2855 = vadd.f32 %v2801, %v2828
      %v2856 = vadd.f32 %v2802, %v2829
      %v2857 = vadd.f32 %v2803, %v2830
      %v2858 = vadd.f32 %v2804, %v2831
      %v2859 = vadd.f32 %v2805, %v2832
      %v2860 = vadd.f32 %v2806, %v2833
      %v2861 = vadd.f32 %v2807, %v2834
      %v2862 = vadd.f32 %v2808, %v2835
      %v2863 = vadd.f32 %v2809, %v2836
      %v2864 = vmul.f32 %v1973, %v1885
      %v2865 = vmul.f32 %v1978, %v1885
      %v2866 = vmul.f32 %v1983, %v1885
      %v2867 = vmul.f32 %v1988, %v1885
      %v2868 = vmul.f32 %v1993, %v1885
      %v2869 = vmul.f32 %v1998, %v1885
      %v2870 = vmul.f32 %v2003, %v1885
      %v2871 = vmul.f32 %v2008, %v1885
      %v2872 = vmul.f32 %v2013, %v1885
      %v2873 = vmul.f32 %v2018, %v1885
      %v2874 = vmul.f32 %v2023, %v1885
      %v2875 = vmul.f32 %v2028, %v1885
      %v2876 = vmul.f32 %v2033, %v1885
      %v2877 = vmul.f32 %v2038, %v1885
      %v2878 = vmul.f32 %v2043, %v1885
      %v2879 = vmul.f32 %v2048, %v1885
      %v2880 = vmul.f32 %v2053, %v1885
      %v2881 = vmul.f32 %v2058, %v1885
      %v2882 = vmul.f32 %v2063, %v1885
      %v2883 = vmul.f32 %v2068, %v1885
      %v2884 = vmul.f32 %v2073, %v1885
      %v2885 = vmul.f32 %v2078, %v1885
      %v2886 = vmul.f32 %v2083, %v1885
      %v2887 = vmul.f32 %v2088, %v1885
      %v2888 = vmul.f32 %v2093, %v1885
      %v2889 = vmul.f32 %v2098, %v1885
      %v2890 = vmul.f32 %v2103, %v1885
      %v2891 = vadd.f32 %v2837, %v2864
      %v2892 = vadd.f32 %v2838, %v2865
      %v2893 = vadd.f32 %v2839, %v2866
      %v2894 = vadd.f32 %v2840, %v2867
      %v2895 = vadd.f32 %v2841, %v2868
      %v2896 = vadd.f32 %v2842, %v2869
      %v2897 = vadd.f32 %v2843, %v2870
      %v2898 = vadd.f32 %v2844, %v2871
      %v2899 = vadd.f32 %v2845, %v2872
      %v2900 = vadd.f32 %v2846, %v2873
      %v2901 = vadd.f32 %v2847, %v2874
      %v2902 = vadd.f32 %v2848, %v2875
      %v2903 = vadd.f32 %v2849, %v2876
      %v2904 = vadd.f32 %v2850, %v2877
      %v2905 = vadd.f32 %v2851, %v2878
      %v2906 = vadd.f32 %v2852, %v2879
      %v2907 = vadd.f32 %v2853, %v2880
      %v2908 = vadd.f32 %v2854, %v2881
      %v2909 = vadd.f32 %v2855, %v2882
      %v2910 = vadd.f32 %v2856, %v2883
      %v2911 = vadd.f32 %v2857, %v2884
      %v2912 = vadd.f32 %v2858, %v2885
      %v2913 = vadd.f32 %v2859, %v2886
      %v2914 = vadd.f32 %v2860, %v2887
      %v2915 = vadd.f32 %v2861, %v2888
      %v2916 = vadd.f32 %v2862, %v2889
      %v2917 = vadd.f32 %v2863, %v2890
      %v2918 = vld [vmem:[%s391 + $0x10] sm:$0xff]
      %v2919 = vld [vmem:[%s391 + $0x18] sm:$0xff]
      %v2920 = vld [vmem:[%s391 + $0x20] sm:$0xff]
      %v2921 = vld [vmem:[%s391 + $0x28] sm:$0xff]
      %v2922 = vld [vmem:[%s391 + $0x30] sm:$0xff]
      %v2923 = vld [vmem:[%s391 + $0x38] sm:$0xff]
      %v2924 = vld [vmem:[%s391 + $0x40] sm:$0xff]
      %v2925 = vld [vmem:[%s391 + $0x48] sm:$0xff]
      %v2926 = vld [vmem:[%s391 + $0x50] sm:$0xff]
      %v2927 = vld [vmem:[%s391 + $0x58] sm:$0xff]
      %v2928 = vld [vmem:[%s391 + $0x60] sm:$0xff]
      %v2929 = vld [vmem:[%s391 + $0x68] sm:$0xff]
      %v2930 = vld [vmem:[%s391 + $0x70] sm:$0xff]
      %v2931 = vld [vmem:[%s391 + $0x78] sm:$0xff]
      %v2932 = vld [vmem:[%s391 + $0x80] sm:$0xff]
      %v2933 = vld [vmem:[%s391 + $0x88] sm:$0xff]
      %v2934 = vld [vmem:[%s391 + $0x90] sm:$0xff]
      %v2935 = vld [vmem:[%s391 + $0x98] sm:$0xff]
      %v2936 = vld [vmem:[%s391 + $0xa0] sm:$0xff]
      %v2937 = vld [vmem:[%s391 + $0xa8] sm:$0xff]
      %v2938 = vld [vmem:[%s391 + $0xb0] sm:$0xff]
      %v2939 = vld [vmem:[%s391 + $0xb8] sm:$0xff]
      %v2940 = vld [vmem:[%s391 + $0xc0] sm:$0xff]
      %v2941 = vld [vmem:[%s391 + $0xc8] sm:$0xff]
      %v2942 = vld [vmem:[%s391 + $0xd0] sm:$0xff]
      %v2943 = vld [vmem:[%s391 + $0xd8] sm:$0xff]
      %v2944 = vld [vmem:[%s391 + $0xe0] sm:$0x3]
      %2946 = vset.pattern.permute.xlu0 0
      %2947 = vperm.xlu0 %2946, %v2918
      %v2948 = vpop.permute.xlu0 %2947
      %2951 = vset.pattern.permute.xlu0 0
      %2952 = vperm.xlu0 %2951, %v2919
      %v2953 = vpop.permute.xlu0 %2952
      %2956 = vset.pattern.permute.xlu0 0
      %2957 = vperm.xlu0 %2956, %v2920
      %v2958 = vpop.permute.xlu0 %2957
      %2961 = vset.pattern.permute.xlu0 0
      %2962 = vperm.xlu0 %2961, %v2921
      %v2963 = vpop.permute.xlu0 %2962
      %2966 = vset.pattern.permute.xlu0 0
      %2967 = vperm.xlu0 %2966, %v2922
      %v2968 = vpop.permute.xlu0 %2967
      %2971 = vset.pattern.permute.xlu0 0
      %2972 = vperm.xlu0 %2971, %v2923
      %v2973 = vpop.permute.xlu0 %2972
      %2976 = vset.pattern.permute.xlu0 0
      %2977 = vperm.xlu0 %2976, %v2924
      %v2978 = vpop.permute.xlu0 %2977
      %2981 = vset.pattern.permute.xlu0 0
      %2982 = vperm.xlu0 %2981, %v2925
      %v2983 = vpop.permute.xlu0 %2982
      %2986 = vset.pattern.permute.xlu0 0
      %2987 = vperm.xlu0 %2986, %v2926
      %v2988 = vpop.permute.xlu0 %2987
      %2991 = vset.pattern.permute.xlu0 0
      %2992 = vperm.xlu0 %2991, %v2927
      %v2993 = vpop.permute.xlu0 %2992
      %2996 = vset.pattern.permute.xlu0 0
      %2997 = vperm.xlu0 %2996, %v2928
      %v2998 = vpop.permute.xlu0 %2997
      %3001 = vset.pattern.permute.xlu0 0
      %3002 = vperm.xlu0 %3001, %v2929
      %v3003 = vpop.permute.xlu0 %3002
      %3006 = vset.pattern.permute.xlu0 0
      %3007 = vperm.xlu0 %3006, %v2930
      %v3008 = vpop.permute.xlu0 %3007
      %3011 = vset.pattern.permute.xlu0 0
      %3012 = vperm.xlu0 %3011, %v2931
      %v3013 = vpop.permute.xlu0 %3012
      %3016 = vset.pattern.permute.xlu0 0
      %3017 = vperm.xlu0 %3016, %v2932
      %v3018 = vpop.permute.xlu0 %3017
      %3021 = vset.pattern.permute.xlu0 0
      %3022 = vperm.xlu0 %3021, %v2933
      %v3023 = vpop.permute.xlu0 %3022
      %3026 = vset.pattern.permute.xlu0 0
      %3027 = vperm.xlu0 %3026, %v2934
      %v3028 = vpop.permute.xlu0 %3027
      %3031 = vset.pattern.permute.xlu0 0
      %3032 = vperm.xlu0 %3031, %v2935
      %v3033 = vpop.permute.xlu0 %3032
      %3036 = vset.pattern.permute.xlu0 0
      %3037 = vperm.xlu0 %3036, %v2936
      %v3038 = vpop.permute.xlu0 %3037
      %3041 = vset.pattern.permute.xlu0 0
      %3042 = vperm.xlu0 %3041, %v2937
      %v3043 = vpop.permute.xlu0 %3042
      %3046 = vset.pattern.permute.xlu0 0
      %3047 = vperm.xlu0 %3046, %v2938
      %v3048 = vpop.permute.xlu0 %3047
      %3051 = vset.pattern.permute.xlu0 0
      %3052 = vperm.xlu0 %3051, %v2939
      %v3053 = vpop.permute.xlu0 %3052
      %3056 = vset.pattern.permute.xlu0 0
      %3057 = vperm.xlu0 %3056, %v2940
      %v3058 = vpop.permute.xlu0 %3057
      %3061 = vset.pattern.permute.xlu0 0
      %3062 = vperm.xlu0 %3061, %v2941
      %v3063 = vpop.permute.xlu0 %3062
      %3066 = vset.pattern.permute.xlu0 0
      %3067 = vperm.xlu0 %3066, %v2942
      %v3068 = vpop.permute.xlu0 %3067
      %3071 = vset.pattern.permute.xlu0 0
      %3072 = vperm.xlu0 %3071, %v2943
      %v3073 = vpop.permute.xlu0 %3072
      %3076 = vset.pattern.permute.xlu0 0
      %3077 = vperm.xlu0 %3076, %v2944
      %v3078 = vpop.permute.xlu0 %3077
      %v3080 = vmul.f32 %v2948, %v2106
      %v3081 = vmul.f32 %v2953, %v2106
      %v3082 = vmul.f32 %v2958, %v2106
      %v3083 = vmul.f32 %v2963, %v2106
      %v3084 = vmul.f32 %v2968, %v2106
      %v3085 = vmul.f32 %v2973, %v2106
      %v3086 = vmul.f32 %v2978, %v2106
      %v3087 = vmul.f32 %v2983, %v2106
      %v3088 = vmul.f32 %v2988, %v2106
      %v3089 = vmul.f32 %v2993, %v2106
      %v3090 = vmul.f32 %v2998, %v2106
      %v3091 = vmul.f32 %v3003, %v2106
      %v3092 = vmul.f32 %v3008, %v2106
      %v3093 = vmul.f32 %v3013, %v2106
      %v3094 = vmul.f32 %v3018, %v2106
      %v3095 = vmul.f32 %v3023, %v2106
      %v3096 = vmul.f32 %v3028, %v2106
      %v3097 = vmul.f32 %v3033, %v2106
      %v3098 = vmul.f32 %v3038, %v2106
      %v3099 = vmul.f32 %v3043, %v2106
      %v3100 = vmul.f32 %v3048, %v2106
      %v3101 = vmul.f32 %v3053, %v2106
      %v3102 = vmul.f32 %v3058, %v2106
      %v3103 = vmul.f32 %v3063, %v2106
      %v3104 = vmul.f32 %v3068, %v2106
      %v3105 = vmul.f32 %v3073, %v2106
      %v3106 = vmul.f32 %v3078, %v2106
      %v3107 = vadd.f32 %v2891, %v3080
      %v3108 = vadd.f32 %v2892, %v3081
      %v3109 = vadd.f32 %v2893, %v3082
      %v3110 = vadd.f32 %v2894, %v3083
      %v3111 = vadd.f32 %v2895, %v3084
      %v3112 = vadd.f32 %v2896, %v3085
      %v3113 = vadd.f32 %v2897, %v3086
      %v3114 = vadd.f32 %v2898, %v3087
      %v3115 = vadd.f32 %v2899, %v3088
      %v3116 = vadd.f32 %v2900, %v3089
      %v3117 = vadd.f32 %v2901, %v3090
      %v3118 = vadd.f32 %v2902, %v3091
      %v3119 = vadd.f32 %v2903, %v3092
      %v3120 = vadd.f32 %v2904, %v3093
      %v3121 = vadd.f32 %v2905, %v3094
      %v3122 = vadd.f32 %v2906, %v3095
      %v3123 = vadd.f32 %v2907, %v3096
      %v3124 = vadd.f32 %v2908, %v3097
      %v3125 = vadd.f32 %v2909, %v3098
      %v3126 = vadd.f32 %v2910, %v3099
      %v3127 = vadd.f32 %v2911, %v3100
      %v3128 = vadd.f32 %v2912, %v3101
      %v3129 = vadd.f32 %v2913, %v3102
      %v3130 = vadd.f32 %v2914, %v3103
      %v3131 = vadd.f32 %v2915, %v3104
      %v3132 = vadd.f32 %v2916, %v3105
      %v3133 = vadd.f32 %v2917, %v3106
      %v3134 = vmax.f32 %v2135, %v3107
      %v3135 = vmax.f32 %v2136, %v3108
      %v3136 = vmax.f32 %v2137, %v3109
      %v3137 = vmax.f32 %v2138, %v3110
      %v3138 = vmax.f32 %v2139, %v3111
      %v3139 = vmax.f32 %v2140, %v3112
      %v3140 = vmax.f32 %v2141, %v3113
      %v3141 = vmax.f32 %v2142, %v3114
      %v3142 = vmax.f32 %v2143, %v3115
      %v3143 = vmax.f32 %v2144, %v3116
      %v3144 = vmax.f32 %v2145, %v3117
      %v3145 = vmax.f32 %v2146, %v3118
      %v3146 = vmax.f32 %v2147, %v3119
      %v3147 = vmax.f32 %v2148, %v3120
      %v3148 = vmax.f32 %v2149, %v3121
      %v3149 = vmax.f32 %v2150, %v3122
      %v3150 = vmax.f32 %v2151, %v3123
      %v3151 = vmax.f32 %v2152, %v3124
      %v3152 = vmax.f32 %v2153, %v3125
      %v3153 = vmax.f32 %v2154, %v3126
      %v3154 = vmax.f32 %v2155, %v3127
      %v3155 = vmax.f32 %v2156, %v3128
      %v3156 = vmax.f32 %v2157, %v3129
      %v3157 = vmax.f32 %v2158, %v3130
      %v3158 = vmax.f32 %v2159, %v3131
      %v3159 = vmax.f32 %v2160, %v3132
      %v3160 = vmax.f32 %v2161, %v3133
      %v3161 = vmul.f32 %v867, %v335
      %v3162 = vmul.f32 %v872, %v335
      %v3163 = vmul.f32 %v877, %v335
      %v3164 = vmul.f32 %v882, %v335
      %v3165 = vmul.f32 %v887, %v335
      %v3166 = vmul.f32 %v892, %v335
      %v3167 = vmul.f32 %v897, %v335
      %v3168 = vmul.f32 %v902, %v335
      %v3169 = vmul.f32 %v907, %v335
      %v3170 = vmul.f32 %v912, %v335
      %v3171 = vmul.f32 %v917, %v335
      %v3172 = vmul.f32 %v922, %v335
      %v3173 = vmul.f32 %v927, %v335
      %v3174 = vmul.f32 %v932, %v335
      %v3175 = vmul.f32 %v937, %v335
      %v3176 = vmul.f32 %v942, %v335
      %v3177 = vmul.f32 %v947, %v335
      %v3178 = vmul.f32 %v952, %v335
      %v3179 = vmul.f32 %v957, %v335
      %v3180 = vmul.f32 %v962, %v335
      %v3181 = vmul.f32 %v967, %v335
      %v3182 = vmul.f32 %v972, %v335
      %v3183 = vmul.f32 %v977, %v335
      %v3184 = vmul.f32 %v982, %v335
      %v3185 = vmul.f32 %v987, %v335
      %v3186 = vmul.f32 %v992, %v335
      %v3187 = vmul.f32 %v997, %v335
      %v3188 = vadd.f32 %v3161, 0.0
      %v3189 = vadd.f32 %v3162, 0.0
      %v3190 = vadd.f32 %v3163, 0.0
      %v3191 = vadd.f32 %v3164, 0.0
      %v3192 = vadd.f32 %v3165, 0.0
      %v3193 = vadd.f32 %v3166, 0.0
      %v3194 = vadd.f32 %v3167, 0.0
      %v3195 = vadd.f32 %v3168, 0.0
      %v3196 = vadd.f32 %v3169, 0.0
      %v3197 = vadd.f32 %v3170, 0.0
      %v3198 = vadd.f32 %v3171, 0.0
      %v3199 = vadd.f32 %v3172, 0.0
      %v3200 = vadd.f32 %v3173, 0.0
      %v3201 = vadd.f32 %v3174, 0.0
      %v3202 = vadd.f32 %v3175, 0.0
      %v3203 = vadd.f32 %v3176, 0.0
      %v3204 = vadd.f32 %v3177, 0.0
      %v3205 = vadd.f32 %v3178, 0.0
      %v3206 = vadd.f32 %v3179, 0.0
      %v3207 = vadd.f32 %v3180, 0.0
      %v3208 = vadd.f32 %v3181, 0.0
      %v3209 = vadd.f32 %v3182, 0.0
      %v3210 = vadd.f32 %v3183, 0.0
      %v3211 = vadd.f32 %v3184, 0.0
      %v3212 = vadd.f32 %v3185, 0.0
      %v3213 = vadd.f32 %v3186, 0.0
      %v3214 = vadd.f32 %v3187, 0.0
      %v3215 = vmul.f32 %v1089, %v557
      %v3216 = vmul.f32 %v1094, %v557
      %v3217 = vmul.f32 %v1099, %v557
      %v3218 = vmul.f32 %v1104, %v557
      %v3219 = vmul.f32 %v1109, %v557
      %v3220 = vmul.f32 %v1114, %v557
      %v3221 = vmul.f32 %v1119, %v557
      %v3222 = vmul.f32 %v1124, %v557
      %v3223 = vmul.f32 %v1129, %v557
      %v3224 = vmul.f32 %v1134, %v557
      %v3225 = vmul.f32 %v1139, %v557
      %v3226 = vmul.f32 %v1144, %v557
      %v3227 = vmul.f32 %v1149, %v557
      %v3228 = vmul.f32 %v1154, %v557
      %v3229 = vmul.f32 %v1159, %v557
      %v3230 = vmul.f32 %v1164, %v557
      %v3231 = vmul.f32 %v1169, %v557
      %v3232 = vmul.f32 %v1174, %v557
      %v3233 = vmul.f32 %v1179, %v557
      %v3234 = vmul.f32 %v1184, %v557
      %v3235 = vmul.f32 %v1189, %v557
      %v3236 = vmul.f32 %v1194, %v557
      %v3237 = vmul.f32 %v1199, %v557
      %v3238 = vmul.f32 %v1204, %v557
      %v3239 = vmul.f32 %v1209, %v557
      %v3240 = vmul.f32 %v1214, %v557
      %v3241 = vmul.f32 %v1219, %v557
      %v3242 = vadd.f32 %v3188, %v3215
      %v3243 = vadd.f32 %v3189, %v3216
      %v3244 = vadd.f32 %v3190, %v3217
      %v3245 = vadd.f32 %v3191, %v3218
      %v3246 = vadd.f32 %v3192, %v3219
      %v3247 = vadd.f32 %v3193, %v3220
      %v3248 = vadd.f32 %v3194, %v3221
      %v3249 = vadd.f32 %v3195, %v3222
      %v3250 = vadd.f32 %v3196, %v3223
      %v3251 = vadd.f32 %v3197, %v3224
      %v3252 = vadd.f32 %v3198, %v3225
      %v3253 = vadd.f32 %v3199, %v3226
      %v3254 = vadd.f32 %v3200, %v3227
      %v3255 = vadd.f32 %v3201, %v3228
      %v3256 = vadd.f32 %v3202, %v3229
      %v3257 = vadd.f32 %v3203, %v3230
      %v3258 = vadd.f32 %v3204, %v3231
      %v3259 = vadd.f32 %v3205, %v3232
      %v3260 = vadd.f32 %v3206, %v3233
      %v3261 = vadd.f32 %v3207, %v3234
      %v3262 = vadd.f32 %v3208, %v3235
      %v3263 = vadd.f32 %v3209, %v3236
      %v3264 = vadd.f32 %v3210, %v3237
      %v3265 = vadd.f32 %v3211, %v3238
      %v3266 = vadd.f32 %v3212, %v3239
      %v3267 = vadd.f32 %v3213, %v3240
      %v3268 = vadd.f32 %v3214, %v3241
      %v3269 = vmul.f32 %v1310, %v778
      %v3270 = vmul.f32 %v1315, %v778
      %v3271 = vmul.f32 %v1320, %v778
      %v3272 = vmul.f32 %v1325, %v778
      %v3273 = vmul.f32 %v1330, %v778
      %v3274 = vmul.f32 %v1335, %v778
      %v3275 = vmul.f32 %v1340, %v778
      %v3276 = vmul.f32 %v1345, %v778
      %v3277 = vmul.f32 %v1350, %v778
      %v3278 = vmul.f32 %v1355, %v778
      %v3279 = vmul.f32 %v1360, %v778
      %v3280 = vmul.f32 %v1365, %v778
      %v3281 = vmul.f32 %v1370, %v778
      %v3282 = vmul.f32 %v1375, %v778
      %v3283 = vmul.f32 %v1380, %v778
      %v3284 = vmul.f32 %v1385, %v778
      %v3285 = vmul.f32 %v1390, %v778
      %v3286 = vmul.f32 %v1395, %v778
      %v3287 = vmul.f32 %v1400, %v778
      %v3288 = vmul.f32 %v1405, %v778
      %v3289 = vmul.f32 %v1410, %v778
      %v3290 = vmul.f32 %v1415, %v778
      %v3291 = vmul.f32 %v1420, %v778
      %v3292 = vmul.f32 %v1425, %v778
      %v3293 = vmul.f32 %v1430, %v778
      %v3294 = vmul.f32 %v1435, %v778
      %v3295 = vmul.f32 %v1440, %v778
      %v3296 = vadd.f32 %v3242, %v3269
      %v3297 = vadd.f32 %v3243, %v3270
      %v3298 = vadd.f32 %v3244, %v3271
      %v3299 = vadd.f32 %v3245, %v3272
      %v3300 = vadd.f32 %v3246, %v3273
      %v3301 = vadd.f32 %v3247, %v3274
      %v3302 = vadd.f32 %v3248, %v3275
      %v3303 = vadd.f32 %v3249, %v3276
      %v3304 = vadd.f32 %v3250, %v3277
      %v3305 = vadd.f32 %v3251, %v3278
      %v3306 = vadd.f32 %v3252, %v3279
      %v3307 = vadd.f32 %v3253, %v3280
      %v3308 = vadd.f32 %v3254, %v3281
      %v3309 = vadd.f32 %v3255, %v3282
      %v3310 = vadd.f32 %v3256, %v3283
      %v3311 = vadd.f32 %v3257, %v3284
      %v3312 = vadd.f32 %v3258, %v3285
      %v3313 = vadd.f32 %v3259, %v3286
      %v3314 = vadd.f32 %v3260, %v3287
      %v3315 = vadd.f32 %v3261, %v3288
      %v3316 = vadd.f32 %v3262, %v3289
      %v3317 = vadd.f32 %v3263, %v3290
      %v3318 = vadd.f32 %v3264, %v3291
      %v3319 = vadd.f32 %v3265, %v3292
      %v3320 = vadd.f32 %v3266, %v3293
      %v3321 = vadd.f32 %v3267, %v3294
      %v3322 = vadd.f32 %v3268, %v3295
      %v3323 = vmul.f32 %v1531, %v1000
      %v3324 = vmul.f32 %v1536, %v1000
      %v3325 = vmul.f32 %v1541, %v1000
      %v3326 = vmul.f32 %v1546, %v1000
      %v3327 = vmul.f32 %v1551, %v1000
      %v3328 = vmul.f32 %v1556, %v1000
      %v3329 = vmul.f32 %v1561, %v1000
      %v3330 = vmul.f32 %v1566, %v1000
      %v3331 = vmul.f32 %v1571, %v1000
      %v3332 = vmul.f32 %v1576, %v1000
      %v3333 = vmul.f32 %v1581, %v1000
      %v3334 = vmul.f32 %v1586, %v1000
      %v3335 = vmul.f32 %v1591, %v1000
      %v3336 = vmul.f32 %v1596, %v1000
      %v3337 = vmul.f32 %v1601, %v1000
      %v3338 = vmul.f32 %v1606, %v1000
      %v3339 = vmul.f32 %v1611, %v1000
      %v3340 = vmul.f32 %v1616, %v1000
      %v3341 = vmul.f32 %v1621, %v1000
      %v3342 = vmul.f32 %v1626, %v1000
      %v3343 = vmul.f32 %v1631, %v1000
      %v3344 = vmul.f32 %v1636, %v1000
      %v3345 = vmul.f32 %v1641, %v1000
      %v3346 = vmul.f32 %v1646, %v1000
      %v3347 = vmul.f32 %v1651, %v1000
      %v3348 = vmul.f32 %v1656, %v1000
      %v3349 = vmul.f32 %v1661, %v1000
      %v3350 = vadd.f32 %v3296, %v3323
      %v3351 = vadd.f32 %v3297, %v3324
      %v3352 = vadd.f32 %v3298, %v3325
      %v3353 = vadd.f32 %v3299, %v3326
      %v3354 = vadd.f32 %v3300, %v3327
      %v3355 = vadd.f32 %v3301, %v3328
      %v3356 = vadd.f32 %v3302, %v3329
      %v3357 = vadd.f32 %v3303, %v3330
      %v3358 = vadd.f32 %v3304, %v3331
      %v3359 = vadd.f32 %v3305, %v3332
      %v3360 = vadd.f32 %v3306, %v3333
      %v3361 = vadd.f32 %v3307, %v3334
      %v3362 = vadd.f32 %v3308, %v3335
      %v3363 = vadd.f32 %v3309, %v3336
      %v3364 = vadd.f32 %v3310, %v3337
      %v3365 = vadd.f32 %v3311, %v3338
      %v3366 = vadd.f32 %v3312, %v3339
      %v3367 = vadd.f32 %v3313, %v3340
      %v3368 = vadd.f32 %v3314, %v3341
      %v3369 = vadd.f32 %v3315, %v3342
      %v3370 = vadd.f32 %v3316, %v3343
      %v3371 = vadd.f32 %v3317, %v3344
      %v3372 = vadd.f32 %v3318, %v3345
      %v3373 = vadd.f32 %v3319, %v3346
      %v3374 = vadd.f32 %v3320, %v3347
      %v3375 = vadd.f32 %v3321, %v3348
      %v3376 = vadd.f32 %v3322, %v3349
      %v3377 = vmul.f32 %v1752, %v1222
      %v3378 = vmul.f32 %v1757, %v1222
      %v3379 = vmul.f32 %v1762, %v1222
      %v3380 = vmul.f32 %v1767, %v1222
      %v3381 = vmul.f32 %v1772, %v1222
      %v3382 = vmul.f32 %v1777, %v1222
      %v3383 = vmul.f32 %v1782, %v1222
      %v3384 = vmul.f32 %v1787, %v1222
      %v3385 = vmul.f32 %v1792, %v1222
      %v3386 = vmul.f32 %v1797, %v1222
      %v3387 = vmul.f32 %v1802, %v1222
      %v3388 = vmul.f32 %v1807, %v1222
      %v3389 = vmul.f32 %v1812, %v1222
      %v3390 = vmul.f32 %v1817, %v1222
      %v3391 = vmul.f32 %v1822, %v1222
      %v3392 = vmul.f32 %v1827, %v1222
      %v3393 = vmul.f32 %v1832, %v1222
      %v3394 = vmul.f32 %v1837, %v1222
      %v3395 = vmul.f32 %v1842, %v1222
      %v3396 = vmul.f32 %v1847, %v1222
      %v3397 = vmul.f32 %v1852, %v1222
      %v3398 = vmul.f32 %v1857, %v1222
      %v3399 = vmul.f32 %v1862, %v1222
      %v3400 = vmul.f32 %v1867, %v1222
      %v3401 = vmul.f32 %v1872, %v1222
      %v3402 = vmul.f32 %v1877, %v1222
      %v3403 = vmul.f32 %v1882, %v1222
      %v3404 = vadd.f32 %v3350, %v3377
      %v3405 = vadd.f32 %v3351, %v3378
      %v3406 = vadd.f32 %v3352, %v3379
      %v3407 = vadd.f32 %v3353, %v3380
      %v3408 = vadd.f32 %v3354, %v3381
      %v3409 = vadd.f32 %v3355, %v3382
      %v3410 = vadd.f32 %v3356, %v3383
      %v3411 = vadd.f32 %v3357, %v3384
      %v3412 = vadd.f32 %v3358, %v3385
      %v3413 = vadd.f32 %v3359, %v3386
      %v3414 = vadd.f32 %v3360, %v3387
      %v3415 = vadd.f32 %v3361, %v3388
      %v3416 = vadd.f32 %v3362, %v3389
      %v3417 = vadd.f32 %v3363, %v3390
      %v3418 = vadd.f32 %v3364, %v3391
      %v3419 = vadd.f32 %v3365, %v3392
      %v3420 = vadd.f32 %v3366, %v3393
      %v3421 = vadd.f32 %v3367, %v3394
      %v3422 = vadd.f32 %v3368, %v3395
      %v3423 = vadd.f32 %v3369, %v3396
      %v3424 = vadd.f32 %v3370, %v3397
      %v3425 = vadd.f32 %v3371, %v3398
      %v3426 = vadd.f32 %v3372, %v3399
      %v3427 = vadd.f32 %v3373, %v3400
      %v3428 = vadd.f32 %v3374, %v3401
      %v3429 = vadd.f32 %v3375, %v3402
      %v3430 = vadd.f32 %v3376, %v3403
      %v3431 = vmul.f32 %v1973, %v1443
      %v3432 = vmul.f32 %v1978, %v1443
      %v3433 = vmul.f32 %v1983, %v1443
      %v3434 = vmul.f32 %v1988, %v1443
      %v3435 = vmul.f32 %v1993, %v1443
      %v3436 = vmul.f32 %v1998, %v1443
      %v3437 = vmul.f32 %v2003, %v1443
      %v3438 = vmul.f32 %v2008, %v1443
      %v3439 = vmul.f32 %v2013, %v1443
      %v3440 = vmul.f32 %v2018, %v1443
      %v3441 = vmul.f32 %v2023, %v1443
      %v3442 = vmul.f32 %v2028, %v1443
      %v3443 = vmul.f32 %v2033, %v1443
      %v3444 = vmul.f32 %v2038, %v1443
      %v3445 = vmul.f32 %v2043, %v1443
      %v3446 = vmul.f32 %v2048, %v1443
      %v3447 = vmul.f32 %v2053, %v1443
      %v3448 = vmul.f32 %v2058, %v1443
      %v3449 = vmul.f32 %v2063, %v1443
      %v3450 = vmul.f32 %v2068, %v1443
      %v3451 = vmul.f32 %v2073, %v1443
      %v3452 = vmul.f32 %v2078, %v1443
      %v3453 = vmul.f32 %v2083, %v1443
      %v3454 = vmul.f32 %v2088, %v1443
      %v3455 = vmul.f32 %v2093, %v1443
      %v3456 = vmul.f32 %v2098, %v1443
      %v3457 = vmul.f32 %v2103, %v1443
      %v3458 = vadd.f32 %v3404, %v3431
      %v3459 = vadd.f32 %v3405, %v3432
      %v3460 = vadd.f32 %v3406, %v3433
      %v3461 = vadd.f32 %v3407, %v3434
      %v3462 = vadd.f32 %v3408, %v3435
      %v3463 = vadd.f32 %v3409, %v3436
      %v3464 = vadd.f32 %v3410, %v3437
      %v3465 = vadd.f32 %v3411, %v3438
      %v3466 = vadd.f32 %v3412, %v3439
      %v3467 = vadd.f32 %v3413, %v3440
      %v3468 = vadd.f32 %v3414, %v3441
      %v3469 = vadd.f32 %v3415, %v3442
      %v3470 = vadd.f32 %v3416, %v3443
      %v3471 = vadd.f32 %v3417, %v3444
      %v3472 = vadd.f32 %v3418, %v3445
      %v3473 = vadd.f32 %v3419, %v3446
      %v3474 = vadd.f32 %v3420, %v3447
      %v3475 = vadd.f32 %v3421, %v3448
      %v3476 = vadd.f32 %v3422, %v3449
      %v3477 = vadd.f32 %v3423, %v3450
      %v3478 = vadd.f32 %v3424, %v3451
      %v3479 = vadd.f32 %v3425, %v3452
      %v3480 = vadd.f32 %v3426, %v3453
      %v3481 = vadd.f32 %v3427, %v3454
      %v3482 = vadd.f32 %v3428, %v3455
      %v3483 = vadd.f32 %v3429, %v3456
      %v3484 = vadd.f32 %v3430, %v3457
      %v3485 = vld [vmem:[%s834 + $0xf] sm:$0xff]
      %v3486 = vld [vmem:[%s834 + $0x17] sm:$0xff]
      %v3487 = vld [vmem:[%s834 + $0x1f] sm:$0xff]
      %v3488 = vld [vmem:[%s834 + $0x27] sm:$0xff]
      %v3489 = vld [vmem:[%s834 + $0x2f] sm:$0xff]
      %v3490 = vld [vmem:[%s834 + $0x37] sm:$0xff]
      %v3491 = vld [vmem:[%s834 + $0x3f] sm:$0xff]
      %v3492 = vld [vmem:[%s834 + $0x47] sm:$0xff]
      %v3493 = vld [vmem:[%s834 + $0x4f] sm:$0xff]
      %v3494 = vld [vmem:[%s834 + $0x57] sm:$0xff]
      %v3495 = vld [vmem:[%s834 + $0x5f] sm:$0xff]
      %v3496 = vld [vmem:[%s834 + $0x67] sm:$0xff]
      %v3497 = vld [vmem:[%s834 + $0x6f] sm:$0xff]
      %v3498 = vld [vmem:[%s834 + $0x77] sm:$0xff]
      %v3499 = vld [vmem:[%s834 + $0x7f] sm:$0xff]
      %v3500 = vld [vmem:[%s834 + $0x87] sm:$0xff]
      %v3501 = vld [vmem:[%s834 + $0x8f] sm:$0xff]
      %v3502 = vld [vmem:[%s834 + $0x97] sm:$0xff]
      %v3503 = vld [vmem:[%s834 + $0x9f] sm:$0xff]
      %v3504 = vld [vmem:[%s834 + $0xa7] sm:$0xff]
      %v3505 = vld [vmem:[%s834 + $0xaf] sm:$0xff]
      %v3506 = vld [vmem:[%s834 + $0xb7] sm:$0xff]
      %v3507 = vld [vmem:[%s834 + $0xbf] sm:$0xff]
      %v3508 = vld [vmem:[%s834 + $0xc7] sm:$0xff]
      %v3509 = vld [vmem:[%s834 + $0xcf] sm:$0xff]
      %v3510 = vld [vmem:[%s834 + $0xd7] sm:$0xff]
      %v3511 = vld [vmem:[%s834 + $0xdf] sm:$0x3]
      %3513 = vset.pattern.permute.xlu0 0
      %3514 = vperm.xlu0 %3513, %v3485
      %v3515 = vpop.permute.xlu0 %3514
      %3518 = vset.pattern.permute.xlu0 0
      %3519 = vperm.xlu0 %3518, %v3486
      %v3520 = vpop.permute.xlu0 %3519
      %3523 = vset.pattern.permute.xlu0 0
      %3524 = vperm.xlu0 %3523, %v3487
      %v3525 = vpop.permute.xlu0 %3524
      %3528 = vset.pattern.permute.xlu0 0
      %3529 = vperm.xlu0 %3528, %v3488
      %v3530 = vpop.permute.xlu0 %3529
      %3533 = vset.pattern.permute.xlu0 0
      %3534 = vperm.xlu0 %3533, %v3489
      %v3535 = vpop.permute.xlu0 %3534
      %3538 = vset.pattern.permute.xlu0 0
      %3539 = vperm.xlu0 %3538, %v3490
      %v3540 = vpop.permute.xlu0 %3539
      %3543 = vset.pattern.permute.xlu0 0
      %3544 = vperm.xlu0 %3543, %v3491
      %v3545 = vpop.permute.xlu0 %3544
      %3548 = vset.pattern.permute.xlu0 0
      %3549 = vperm.xlu0 %3548, %v3492
      %v3550 = vpop.permute.xlu0 %3549
      %3553 = vset.pattern.permute.xlu0 0
      %3554 = vperm.xlu0 %3553, %v3493
      %v3555 = vpop.permute.xlu0 %3554
      %3558 = vset.pattern.permute.xlu0 0
      %3559 = vperm.xlu0 %3558, %v3494
      %v3560 = vpop.permute.xlu0 %3559
      %3563 = vset.pattern.permute.xlu0 0
      %3564 = vperm.xlu0 %3563, %v3495
      %v3565 = vpop.permute.xlu0 %3564
      %3568 = vset.pattern.permute.xlu0 0
      %3569 = vperm.xlu0 %3568, %v3496
      %v3570 = vpop.permute.xlu0 %3569
      %3573 = vset.pattern.permute.xlu0 0
      %3574 = vperm.xlu0 %3573, %v3497
      %v3575 = vpop.permute.xlu0 %3574
      %3578 = vset.pattern.permute.xlu0 0
      %3579 = vperm.xlu0 %3578, %v3498
      %v3580 = vpop.permute.xlu0 %3579
      %3583 = vset.pattern.permute.xlu0 0
      %3584 = vperm.xlu0 %3583, %v3499
      %v3585 = vpop.permute.xlu0 %3584
      %3588 = vset.pattern.permute.xlu0 0
      %3589 = vperm.xlu0 %3588, %v3500
      %v3590 = vpop.permute.xlu0 %3589
      %3593 = vset.pattern.permute.xlu0 0
      %3594 = vperm.xlu0 %3593, %v3501
      %v3595 = vpop.permute.xlu0 %3594
      %3598 = vset.pattern.permute.xlu0 0
      %3599 = vperm.xlu0 %3598, %v3502
      %v3600 = vpop.permute.xlu0 %3599
      %3603 = vset.pattern.permute.xlu0 0
      %3604 = vperm.xlu0 %3603, %v3503
      %v3605 = vpop.permute.xlu0 %3604
      %3608 = vset.pattern.permute.xlu0 0
      %3609 = vperm.xlu0 %3608, %v3504
      %v3610 = vpop.permute.xlu0 %3609
      %3613 = vset.pattern.permute.xlu0 0
      %3614 = vperm.xlu0 %3613, %v3505
      %v3615 = vpop.permute.xlu0 %3614
      %3618 = vset.pattern.permute.xlu0 0
      %3619 = vperm.xlu0 %3618, %v3506
      %v3620 = vpop.permute.xlu0 %3619
      %3623 = vset.pattern.permute.xlu0 0
      %3624 = vperm.xlu0 %3623, %v3507
      %v3625 = vpop.permute.xlu0 %3624
      %3628 = vset.pattern.permute.xlu0 0
      %3629 = vperm.xlu0 %3628, %v3508
      %v3630 = vpop.permute.xlu0 %3629
      %3633 = vset.pattern.permute.xlu0 0
      %3634 = vperm.xlu0 %3633, %v3509
      %v3635 = vpop.permute.xlu0 %3634
      %3638 = vset.pattern.permute.xlu0 0
      %3639 = vperm.xlu0 %3638, %v3510
      %v3640 = vpop.permute.xlu0 %3639
      %3643 = vset.pattern.permute.xlu0 0
      %3644 = vperm.xlu0 %3643, %v3511
      %v3645 = vpop.permute.xlu0 %3644
      %v3647 = vmul.f32 %v3515, %v1664
      %v3648 = vmul.f32 %v3520, %v1664
      %v3649 = vmul.f32 %v3525, %v1664
      %v3650 = vmul.f32 %v3530, %v1664
      %v3651 = vmul.f32 %v3535, %v1664
      %v3652 = vmul.f32 %v3540, %v1664
      %v3653 = vmul.f32 %v3545, %v1664
      %v3654 = vmul.f32 %v3550, %v1664
      %v3655 = vmul.f32 %v3555, %v1664
      %v3656 = vmul.f32 %v3560, %v1664
      %v3657 = vmul.f32 %v3565, %v1664
      %v3658 = vmul.f32 %v3570, %v1664
      %v3659 = vmul.f32 %v3575, %v1664
      %v3660 = vmul.f32 %v3580, %v1664
      %v3661 = vmul.f32 %v3585, %v1664
      %v3662 = vmul.f32 %v3590, %v1664
      %v3663 = vmul.f32 %v3595, %v1664
      %v3664 = vmul.f32 %v3600, %v1664
      %v3665 = vmul.f32 %v3605, %v1664
      %v3666 = vmul.f32 %v3610, %v1664
      %v3667 = vmul.f32 %v3615, %v1664
      %v3668 = vmul.f32 %v3620, %v1664
      %v3669 = vmul.f32 %v3625, %v1664
      %v3670 = vmul.f32 %v3630, %v1664
      %v3671 = vmul.f32 %v3635, %v1664
      %v3672 = vmul.f32 %v3640, %v1664
      %v3673 = vmul.f32 %v3645, %v1664
      %v3674 = vadd.f32 %v3458, %v3647
      %v3675 = vadd.f32 %v3459, %v3648
      %v3676 = vadd.f32 %v3460, %v3649
      %v3677 = vadd.f32 %v3461, %v3650
      %v3678 = vadd.f32 %v3462, %v3651
      %v3679 = vadd.f32 %v3463, %v3652
      %v3680 = vadd.f32 %v3464, %v3653
      %v3681 = vadd.f32 %v3465, %v3654
      %v3682 = vadd.f32 %v3466, %v3655
      %v3683 = vadd.f32 %v3467, %v3656
      %v3684 = vadd.f32 %v3468, %v3657
      %v3685 = vadd.f32 %v3469, %v3658
      %v3686 = vadd.f32 %v3470, %v3659
      %v3687 = vadd.f32 %v3471, %v3660
      %v3688 = vadd.f32 %v3472, %v3661
      %v3689 = vadd.f32 %v3473, %v3662
      %v3690 = vadd.f32 %v3474, %v3663
      %v3691 = vadd.f32 %v3475, %v3664
      %v3692 = vadd.f32 %v3476, %v3665
      %v3693 = vadd.f32 %v3477, %v3666
      %v3694 = vadd.f32 %v3478, %v3667
      %v3695 = vadd.f32 %v3479, %v3668
      %v3696 = vadd.f32 %v3480, %v3669
      %v3697 = vadd.f32 %v3481, %v3670
      %v3698 = vadd.f32 %v3482, %v3671
      %v3699 = vadd.f32 %v3483, %v3672
      %v3700 = vadd.f32 %v3484, %v3673
      %v3701 = vld [vmem:[%s1056 + $0xf] sm:$0xff]
      %v3702 = vld [vmem:[%s1056 + $0x17] sm:$0xff]
      %v3703 = vld [vmem:[%s1056 + $0x1f] sm:$0xff]
      %v3704 = vld [vmem:[%s1056 + $0x27] sm:$0xff]
      %v3705 = vld [vmem:[%s1056 + $0x2f] sm:$0xff]
      %v3706 = vld [vmem:[%s1056 + $0x37] sm:$0xff]
      %v3707 = vld [vmem:[%s1056 + $0x3f] sm:$0xff]
      %v3708 = vld [vmem:[%s1056 + $0x47] sm:$0xff]
      %v3709 = vld [vmem:[%s1056 + $0x4f] sm:$0xff]
      %v3710 = vld [vmem:[%s1056 + $0x57] sm:$0xff]
      %v3711 = vld [vmem:[%s1056 + $0x5f] sm:$0xff]
      %v3712 = vld [vmem:[%s1056 + $0x67] sm:$0xff]
      %v3713 = vld [vmem:[%s1056 + $0x6f] sm:$0xff]
      %v3714 = vld [vmem:[%s1056 + $0x77] sm:$0xff]
      %v3715 = vld [vmem:[%s1056 + $0x7f] sm:$0xff]
      %v3716 = vld [vmem:[%s1056 + $0x87] sm:$0xff]
      %v3717 = vld [vmem:[%s1056 + $0x8f] sm:$0xff]
      %v3718 = vld [vmem:[%s1056 + $0x97] sm:$0xff]
      %v3719 = vld [vmem:[%s1056 + $0x9f] sm:$0xff]
      %v3720 = vld [vmem:[%s1056 + $0xa7] sm:$0xff]
      %v3721 = vld [vmem:[%s1056 + $0xaf] sm:$0xff]
      %v3722 = vld [vmem:[%s1056 + $0xb7] sm:$0xff]
      %v3723 = vld [vmem:[%s1056 + $0xbf] sm:$0xff]
      %v3724 = vld [vmem:[%s1056 + $0xc7] sm:$0xff]
      %v3725 = vld [vmem:[%s1056 + $0xcf] sm:$0xff]
      %v3726 = vld [vmem:[%s1056 + $0xd7] sm:$0xff]
      %v3727 = vld [vmem:[%s1056 + $0xdf] sm:$0x3]
      %3729 = vset.pattern.permute.xlu0 0
      %3730 = vperm.xlu0 %3729, %v3701
      %v3731 = vpop.permute.xlu0 %3730
      %3734 = vset.pattern.permute.xlu0 0
      %3735 = vperm.xlu0 %3734, %v3702
      %v3736 = vpop.permute.xlu0 %3735
      %3739 = vset.pattern.permute.xlu0 0
      %3740 = vperm.xlu0 %3739, %v3703
      %v3741 = vpop.permute.xlu0 %3740
      %3744 = vset.pattern.permute.xlu0 0
      %3745 = vperm.xlu0 %3744, %v3704
      %v3746 = vpop.permute.xlu0 %3745
      %3749 = vset.pattern.permute.xlu0 0
      %3750 = vperm.xlu0 %3749, %v3705
      %v3751 = vpop.permute.xlu0 %3750
      %3754 = vset.pattern.permute.xlu0 0
      %3755 = vperm.xlu0 %3754, %v3706
      %v3756 = vpop.permute.xlu0 %3755
      %3759 = vset.pattern.permute.xlu0 0
      %3760 = vperm.xlu0 %3759, %v3707
      %v3761 = vpop.permute.xlu0 %3760
      %3764 = vset.pattern.permute.xlu0 0
      %3765 = vperm.xlu0 %3764, %v3708
      %v3766 = vpop.permute.xlu0 %3765
      %3769 = vset.pattern.permute.xlu0 0
      %3770 = vperm.xlu0 %3769, %v3709
      %v3771 = vpop.permute.xlu0 %3770
      %3774 = vset.pattern.permute.xlu0 0
      %3775 = vperm.xlu0 %3774, %v3710
      %v3776 = vpop.permute.xlu0 %3775
      %3779 = vset.pattern.permute.xlu0 0
      %3780 = vperm.xlu0 %3779, %v3711
      %v3781 = vpop.permute.xlu0 %3780
      %3784 = vset.pattern.permute.xlu0 0
      %3785 = vperm.xlu0 %3784, %v3712
      %v3786 = vpop.permute.xlu0 %3785
      %3789 = vset.pattern.permute.xlu0 0
      %3790 = vperm.xlu0 %3789, %v3713
      %v3791 = vpop.permute.xlu0 %3790
      %3794 = vset.pattern.permute.xlu0 0
      %3795 = vperm.xlu0 %3794, %v3714
      %v3796 = vpop.permute.xlu0 %3795
      %3799 = vset.pattern.permute.xlu0 0
      %3800 = vperm.xlu0 %3799, %v3715
      %v3801 = vpop.permute.xlu0 %3800
      %3804 = vset.pattern.permute.xlu0 0
      %3805 = vperm.xlu0 %3804, %v3716
      %v3806 = vpop.permute.xlu0 %3805
      %3809 = vset.pattern.permute.xlu0 0
      %3810 = vperm.xlu0 %3809, %v3717
      %v3811 = vpop.permute.xlu0 %3810
      %3814 = vset.pattern.permute.xlu0 0
      %3815 = vperm.xlu0 %3814, %v3718
      %v3816 = vpop.permute.xlu0 %3815
      %3819 = vset.pattern.permute.xlu0 0
      %3820 = vperm.xlu0 %3819, %v3719
      %v3821 = vpop.permute.xlu0 %3820
      %3824 = vset.pattern.permute.xlu0 0
      %3825 = vperm.xlu0 %3824, %v3720
      %v3826 = vpop.permute.xlu0 %3825
      %3829 = vset.pattern.permute.xlu0 0
      %3830 = vperm.xlu0 %3829, %v3721
      %v3831 = vpop.permute.xlu0 %3830
      %3834 = vset.pattern.permute.xlu0 0
      %3835 = vperm.xlu0 %3834, %v3722
      %v3836 = vpop.permute.xlu0 %3835
      %3839 = vset.pattern.permute.xlu0 0
      %3840 = vperm.xlu0 %3839, %v3723
      %v3841 = vpop.permute.xlu0 %3840
      %3844 = vset.pattern.permute.xlu0 0
      %3845 = vperm.xlu0 %3844, %v3724
      %v3846 = vpop.permute.xlu0 %3845
      %3849 = vset.pattern.permute.xlu0 0
      %3850 = vperm.xlu0 %3849, %v3725
      %v3851 = vpop.permute.xlu0 %3850
      %3854 = vset.pattern.permute.xlu0 0
      %3855 = vperm.xlu0 %3854, %v3726
      %v3856 = vpop.permute.xlu0 %3855
      %3859 = vset.pattern.permute.xlu0 0
      %3860 = vperm.xlu0 %3859, %v3727
      %v3861 = vpop.permute.xlu0 %3860
      %v3863 = vmul.f32 %v3731, %v1885
      %v3864 = vmul.f32 %v3736, %v1885
      %v3865 = vmul.f32 %v3741, %v1885
      %v3866 = vmul.f32 %v3746, %v1885
      %v3867 = vmul.f32 %v3751, %v1885
      %v3868 = vmul.f32 %v3756, %v1885
      %v3869 = vmul.f32 %v3761, %v1885
      %v3870 = vmul.f32 %v3766, %v1885
      %v3871 = vmul.f32 %v3771, %v1885
      %v3872 = vmul.f32 %v3776, %v1885
      %v3873 = vmul.f32 %v3781, %v1885
      %v3874 = vmul.f32 %v3786, %v1885
      %v3875 = vmul.f32 %v3791, %v1885
      %v3876 = vmul.f32 %v3796, %v1885
      %v3877 = vmul.f32 %v3801, %v1885
      %v3878 = vmul.f32 %v3806, %v1885
      %v3879 = vmul.f32 %v3811, %v1885
      %v3880 = vmul.f32 %v3816, %v1885
      %v3881 = vmul.f32 %v3821, %v1885
      %v3882 = vmul.f32 %v3826, %v1885
      %v3883 = vmul.f32 %v3831, %v1885
      %v3884 = vmul.f32 %v3836, %v1885
      %v3885 = vmul.f32 %v3841, %v1885
      %v3886 = vmul.f32 %v3846, %v1885
      %v3887 = vmul.f32 %v3851, %v1885
      %v3888 = vmul.f32 %v3856, %v1885
      %v3889 = vmul.f32 %v3861, %v1885
      %v3890 = vadd.f32 %v3674, %v3863
      %v3891 = vadd.f32 %v3675, %v3864
      %v3892 = vadd.f32 %v3676, %v3865
      %v3893 = vadd.f32 %v3677, %v3866
      %v3894 = vadd.f32 %v3678, %v3867
      %v3895 = vadd.f32 %v3679, %v3868
      %v3896 = vadd.f32 %v3680, %v3869
      %v3897 = vadd.f32 %v3681, %v3870
      %v3898 = vadd.f32 %v3682, %v3871
      %v3899 = vadd.f32 %v3683, %v3872
      %v3900 = vadd.f32 %v3684, %v3873
      %v3901 = vadd.f32 %v3685, %v3874
      %v3902 = vadd.f32 %v3686, %v3875
      %v3903 = vadd.f32 %v3687, %v3876
      %v3904 = vadd.f32 %v3688, %v3877
      %v3905 = vadd.f32 %v3689, %v3878
      %v3906 = vadd.f32 %v3690, %v3879
      %v3907 = vadd.f32 %v3691, %v3880
      %v3908 = vadd.f32 %v3692, %v3881
      %v3909 = vadd.f32 %v3693, %v3882
      %v3910 = vadd.f32 %v3694, %v3883
      %v3911 = vadd.f32 %v3695, %v3884
      %v3912 = vadd.f32 %v3696, %v3885
      %v3913 = vadd.f32 %v3697, %v3886
      %v3914 = vadd.f32 %v3698, %v3887
      %v3915 = vadd.f32 %v3699, %v3888
      %v3916 = vadd.f32 %v3700, %v3889
      %v3917 = vld [vmem:[%s834 + $0x10] sm:$0xff]
      %v3918 = vld [vmem:[%s834 + $0x18] sm:$0xff]
      %v3919 = vld [vmem:[%s834 + $0x20] sm:$0xff]
      %v3920 = vld [vmem:[%s834 + $0x28] sm:$0xff]
      %v3921 = vld [vmem:[%s834 + $0x30] sm:$0xff]
      %v3922 = vld [vmem:[%s834 + $0x38] sm:$0xff]
      %v3923 = vld [vmem:[%s834 + $0x40] sm:$0xff]
      %v3924 = vld [vmem:[%s834 + $0x48] sm:$0xff]
      %v3925 = vld [vmem:[%s834 + $0x50] sm:$0xff]
      %v3926 = vld [vmem:[%s834 + $0x58] sm:$0xff]
      %v3927 = vld [vmem:[%s834 + $0x60] sm:$0xff]
      %v3928 = vld [vmem:[%s834 + $0x68] sm:$0xff]
      %v3929 = vld [vmem:[%s834 + $0x70] sm:$0xff]
      %v3930 = vld [vmem:[%s834 + $0x78] sm:$0xff]
      %v3931 = vld [vmem:[%s834 + $0x80] sm:$0xff]
      %v3932 = vld [vmem:[%s834 + $0x88] sm:$0xff]
      %v3933 = vld [vmem:[%s834 + $0x90] sm:$0xff]
      %v3934 = vld [vmem:[%s834 + $0x98] sm:$0xff]
      %v3935 = vld [vmem:[%s834 + $0xa0] sm:$0xff]
      %v3936 = vld [vmem:[%s834 + $0xa8] sm:$0xff]
      %v3937 = vld [vmem:[%s834 + $0xb0] sm:$0xff]
      %v3938 = vld [vmem:[%s834 + $0xb8] sm:$0xff]
      %v3939 = vld [vmem:[%s834 + $0xc0] sm:$0xff]
      %v3940 = vld [vmem:[%s834 + $0xc8] sm:$0xff]
      %v3941 = vld [vmem:[%s834 + $0xd0] sm:$0xff]
      %v3942 = vld [vmem:[%s834 + $0xd8] sm:$0xff]
      %v3943 = vld [vmem:[%s834 + $0xe0] sm:$0x3]
      %3945 = vset.pattern.permute.xlu0 0
      %3946 = vperm.xlu0 %3945, %v3917
      %v3947 = vpop.permute.xlu0 %3946
      %3950 = vset.pattern.permute.xlu0 0
      %3951 = vperm.xlu0 %3950, %v3918
      %v3952 = vpop.permute.xlu0 %3951
      %3955 = vset.pattern.permute.xlu0 0
      %3956 = vperm.xlu0 %3955, %v3919
      %v3957 = vpop.permute.xlu0 %3956
      %3960 = vset.pattern.permute.xlu0 0
      %3961 = vperm.xlu0 %3960, %v3920
      %v3962 = vpop.permute.xlu0 %3961
      %3965 = vset.pattern.permute.xlu0 0
      %3966 = vperm.xlu0 %3965, %v3921
      %v3967 = vpop.permute.xlu0 %3966
      %3970 = vset.pattern.permute.xlu0 0
      %3971 = vperm.xlu0 %3970, %v3922
      %v3972 = vpop.permute.xlu0 %3971
      %3975 = vset.pattern.permute.xlu0 0
      %3976 = vperm.xlu0 %3975, %v3923
      %v3977 = vpop.permute.xlu0 %3976
      %3980 = vset.pattern.permute.xlu0 0
      %3981 = vperm.xlu0 %3980, %v3924
      %v3982 = vpop.permute.xlu0 %3981
      %3985 = vset.pattern.permute.xlu0 0
      %3986 = vperm.xlu0 %3985, %v3925
      %v3987 = vpop.permute.xlu0 %3986
      %3990 = vset.pattern.permute.xlu0 0
      %3991 = vperm.xlu0 %3990, %v3926
      %v3992 = vpop.permute.xlu0 %3991
      %3995 = vset.pattern.permute.xlu0 0
      %3996 = vperm.xlu0 %3995, %v3927
      %v3997 = vpop.permute.xlu0 %3996
      %4000 = vset.pattern.permute.xlu0 0
      %4001 = vperm.xlu0 %4000, %v3928
      %v4002 = vpop.permute.xlu0 %4001
      %4005 = vset.pattern.permute.xlu0 0
      %4006 = vperm.xlu0 %4005, %v3929
      %v4007 = vpop.permute.xlu0 %4006
      %4010 = vset.pattern.permute.xlu0 0
      %4011 = vperm.xlu0 %4010, %v3930
      %v4012 = vpop.permute.xlu0 %4011
      %4015 = vset.pattern.permute.xlu0 0
      %4016 = vperm.xlu0 %4015, %v3931
      %v4017 = vpop.permute.xlu0 %4016
      %4020 = vset.pattern.permute.xlu0 0
      %4021 = vperm.xlu0 %4020, %v3932
      %v4022 = vpop.permute.xlu0 %4021
      %4025 = vset.pattern.permute.xlu0 0
      %4026 = vperm.xlu0 %4025, %v3933
      %v4027 = vpop.permute.xlu0 %4026
      %4030 = vset.pattern.permute.xlu0 0
      %4031 = vperm.xlu0 %4030, %v3934
      %v4032 = vpop.permute.xlu0 %4031
      %4035 = vset.pattern.permute.xlu0 0
      %4036 = vperm.xlu0 %4035, %v3935
      %v4037 = vpop.permute.xlu0 %4036
      %4040 = vset.pattern.permute.xlu0 0
      %4041 = vperm.xlu0 %4040, %v3936
      %v4042 = vpop.permute.xlu0 %4041
      %4045 = vset.pattern.permute.xlu0 0
      %4046 = vperm.xlu0 %4045, %v3937
      %v4047 = vpop.permute.xlu0 %4046
      %4050 = vset.pattern.permute.xlu0 0
      %4051 = vperm.xlu0 %4050, %v3938
      %v4052 = vpop.permute.xlu0 %4051
      %4055 = vset.pattern.permute.xlu0 0
      %4056 = vperm.xlu0 %4055, %v3939
      %v4057 = vpop.permute.xlu0 %4056
      %4060 = vset.pattern.permute.xlu0 0
      %4061 = vperm.xlu0 %4060, %v3940
      %v4062 = vpop.permute.xlu0 %4061
      %4065 = vset.pattern.permute.xlu0 0
      %4066 = vperm.xlu0 %4065, %v3941
      %v4067 = vpop.permute.xlu0 %4066
      %4070 = vset.pattern.permute.xlu0 0
      %4071 = vperm.xlu0 %4070, %v3942
      %v4072 = vpop.permute.xlu0 %4071
      %4075 = vset.pattern.permute.xlu0 0
      %4076 = vperm.xlu0 %4075, %v3943
      %v4077 = vpop.permute.xlu0 %4076
      %v4079 = vmul.f32 %v3947, %v2106
      %v4080 = vmul.f32 %v3952, %v2106
      %v4081 = vmul.f32 %v3957, %v2106
      %v4082 = vmul.f32 %v3962, %v2106
      %v4083 = vmul.f32 %v3967, %v2106
      %v4084 = vmul.f32 %v3972, %v2106
      %v4085 = vmul.f32 %v3977, %v2106
      %v4086 = vmul.f32 %v3982, %v2106
      %v4087 = vmul.f32 %v3987, %v2106
      %v4088 = vmul.f32 %v3992, %v2106
      %v4089 = vmul.f32 %v3997, %v2106
      %v4090 = vmul.f32 %v4002, %v2106
      %v4091 = vmul.f32 %v4007, %v2106
      %v4092 = vmul.f32 %v4012, %v2106
      %v4093 = vmul.f32 %v4017, %v2106
      %v4094 = vmul.f32 %v4022, %v2106
      %v4095 = vmul.f32 %v4027, %v2106
      %v4096 = vmul.f32 %v4032, %v2106
      %v4097 = vmul.f32 %v4037, %v2106
      %v4098 = vmul.f32 %v4042, %v2106
      %v4099 = vmul.f32 %v4047, %v2106
      %v4100 = vmul.f32 %v4052, %v2106
      %v4101 = vmul.f32 %v4057, %v2106
      %v4102 = vmul.f32 %v4062, %v2106
      %v4103 = vmul.f32 %v4067, %v2106
      %v4104 = vmul.f32 %v4072, %v2106
      %v4105 = vmul.f32 %v4077, %v2106
      %v4106 = vadd.f32 %v3890, %v4079
      %v4107 = vadd.f32 %v3891, %v4080
      %v4108 = vadd.f32 %v3892, %v4081
      %v4109 = vadd.f32 %v3893, %v4082
      %v4110 = vadd.f32 %v3894, %v4083
      %v4111 = vadd.f32 %v3895, %v4084
      %v4112 = vadd.f32 %v3896, %v4085
      %v4113 = vadd.f32 %v3897, %v4086
      %v4114 = vadd.f32 %v3898, %v4087
      %v4115 = vadd.f32 %v3899, %v4088
      %v4116 = vadd.f32 %v3900, %v4089
      %v4117 = vadd.f32 %v3901, %v4090
      %v4118 = vadd.f32 %v3902, %v4091
      %v4119 = vadd.f32 %v3903, %v4092
      %v4120 = vadd.f32 %v3904, %v4093
      %v4121 = vadd.f32 %v3905, %v4094
      %v4122 = vadd.f32 %v3906, %v4095
      %v4123 = vadd.f32 %v3907, %v4096
      %v4124 = vadd.f32 %v3908, %v4097
      %v4125 = vadd.f32 %v3909, %v4098
      %v4126 = vadd.f32 %v3910, %v4099
      %v4127 = vadd.f32 %v3911, %v4100
      %v4128 = vadd.f32 %v3912, %v4101
      %v4129 = vadd.f32 %v3913, %v4102
      %v4130 = vadd.f32 %v3914, %v4103
      %v4131 = vadd.f32 %v3915, %v4104
      %v4132 = vadd.f32 %v3916, %v4105
      %v4133 = vmax.f32 %v3134, %v4106
      %v4134 = vmax.f32 %v3135, %v4107
      %v4135 = vmax.f32 %v3136, %v4108
      %v4136 = vmax.f32 %v3137, %v4109
      %v4137 = vmax.f32 %v3138, %v4110
      %v4138 = vmax.f32 %v3139, %v4111
      %v4139 = vmax.f32 %v3140, %v4112
      %v4140 = vmax.f32 %v3141, %v4113
      %v4141 = vmax.f32 %v3142, %v4114
      %v4142 = vmax.f32 %v3143, %v4115
      %v4143 = vmax.f32 %v3144, %v4116
      %v4144 = vmax.f32 %v3145, %v4117
      %v4145 = vmax.f32 %v3146, %v4118
      %v4146 = vmax.f32 %v3147, %v4119
      %v4147 = vmax.f32 %v3148, %v4120
      %v4148 = vmax.f32 %v3149, %v4121
      %v4149 = vmax.f32 %v3150, %v4122
      %v4150 = vmax.f32 %v3151, %v4123
      %v4151 = vmax.f32 %v3152, %v4124
      %v4152 = vmax.f32 %v3153, %v4125
      %v4153 = vmax.f32 %v3154, %v4126
      %v4154 = vmax.f32 %v3155, %v4127
      %v4155 = vmax.f32 %v3156, %v4128
      %v4156 = vmax.f32 %v3157, %v4129
      %v4157 = vmax.f32 %v3158, %v4130
      %v4158 = vmax.f32 %v3159, %v4131
      %v4159 = vmax.f32 %v3160, %v4132
      %v4160 = vmul.f32 %v1089, %v335
      %v4161 = vmul.f32 %v1094, %v335
      %v4162 = vmul.f32 %v1099, %v335
      %v4163 = vmul.f32 %v1104, %v335
      %v4164 = vmul.f32 %v1109, %v335
      %v4165 = vmul.f32 %v1114, %v335
      %v4166 = vmul.f32 %v1119, %v335
      %v4167 = vmul.f32 %v1124, %v335
      %v4168 = vmul.f32 %v1129, %v335
      %v4169 = vmul.f32 %v1134, %v335
      %v4170 = vmul.f32 %v1139, %v335
      %v4171 = vmul.f32 %v1144, %v335
      %v4172 = vmul.f32 %v1149, %v335
      %v4173 = vmul.f32 %v1154, %v335
      %v4174 = vmul.f32 %v1159, %v335
      %v4175 = vmul.f32 %v1164, %v335
      %v4176 = vmul.f32 %v1169, %v335
      %v4177 = vmul.f32 %v1174, %v335
      %v4178 = vmul.f32 %v1179, %v335
      %v4179 = vmul.f32 %v1184, %v335
      %v4180 = vmul.f32 %v1189, %v335
      %v4181 = vmul.f32 %v1194, %v335
      %v4182 = vmul.f32 %v1199, %v335
      %v4183 = vmul.f32 %v1204, %v335
      %v4184 = vmul.f32 %v1209, %v335
      %v4185 = vmul.f32 %v1214, %v335
      %v4186 = vmul.f32 %v1219, %v335
      %v4187 = vadd.f32 %v4160, 0.0
      %v4188 = vadd.f32 %v4161, 0.0
      %v4189 = vadd.f32 %v4162, 0.0
      %v4190 = vadd.f32 %v4163, 0.0
      %v4191 = vadd.f32 %v4164, 0.0
      %v4192 = vadd.f32 %v4165, 0.0
      %v4193 = vadd.f32 %v4166, 0.0
      %v4194 = vadd.f32 %v4167, 0.0
      %v4195 = vadd.f32 %v4168, 0.0
      %v4196 = vadd.f32 %v4169, 0.0
      %v4197 = vadd.f32 %v4170, 0.0
      %v4198 = vadd.f32 %v4171, 0.0
      %v4199 = vadd.f32 %v4172, 0.0
      %v4200 = vadd.f32 %v4173, 0.0
      %v4201 = vadd.f32 %v4174, 0.0
      %v4202 = vadd.f32 %v4175, 0.0
      %v4203 = vadd.f32 %v4176, 0.0
      %v4204 = vadd.f32 %v4177, 0.0
      %v4205 = vadd.f32 %v4178, 0.0
      %v4206 = vadd.f32 %v4179, 0.0
      %v4207 = vadd.f32 %v4180, 0.0
      %v4208 = vadd.f32 %v4181, 0.0
      %v4209 = vadd.f32 %v4182, 0.0
      %v4210 = vadd.f32 %v4183, 0.0
      %v4211 = vadd.f32 %v4184, 0.0
      %v4212 = vadd.f32 %v4185, 0.0
      %v4213 = vadd.f32 %v4186, 0.0
      %v4214 = vmul.f32 %v1310, %v557
      %v4215 = vmul.f32 %v1315, %v557
      %v4216 = vmul.f32 %v1320, %v557
      %v4217 = vmul.f32 %v1325, %v557
      %v4218 = vmul.f32 %v1330, %v557
      %v4219 = vmul.f32 %v1335, %v557
      %v4220 = vmul.f32 %v1340, %v557
      %v4221 = vmul.f32 %v1345, %v557
      %v4222 = vmul.f32 %v1350, %v557
      %v4223 = vmul.f32 %v1355, %v557
      %v4224 = vmul.f32 %v1360, %v557
      %v4225 = vmul.f32 %v1365, %v557
      %v4226 = vmul.f32 %v1370, %v557
      %v4227 = vmul.f32 %v1375, %v557
      %v4228 = vmul.f32 %v1380, %v557
      %v4229 = vmul.f32 %v1385, %v557
      %v4230 = vmul.f32 %v1390, %v557
      %v4231 = vmul.f32 %v1395, %v557
      %v4232 = vmul.f32 %v1400, %v557
      %v4233 = vmul.f32 %v1405, %v557
      %v4234 = vmul.f32 %v1410, %v557
      %v4235 = vmul.f32 %v1415, %v557
      %v4236 = vmul.f32 %v1420, %v557
      %v4237 = vmul.f32 %v1425, %v557
      %v4238 = vmul.f32 %v1430, %v557
      %v4239 = vmul.f32 %v1435, %v557
      %v4240 = vmul.f32 %v1440, %v557
      %v4241 = vadd.f32 %v4187, %v4214
      %v4242 = vadd.f32 %v4188, %v4215
      %v4243 = vadd.f32 %v4189, %v4216
      %v4244 = vadd.f32 %v4190, %v4217
      %v4245 = vadd.f32 %v4191, %v4218
      %v4246 = vadd.f32 %v4192, %v4219
      %v4247 = vadd.f32 %v4193, %v4220
      %v4248 = vadd.f32 %v4194, %v4221
      %v4249 = vadd.f32 %v4195, %v4222
      %v4250 = vadd.f32 %v4196, %v4223
      %v4251 = vadd.f32 %v4197, %v4224
      %v4252 = vadd.f32 %v4198, %v4225
      %v4253 = vadd.f32 %v4199, %v4226
      %v4254 = vadd.f32 %v4200, %v4227
      %v4255 = vadd.f32 %v4201, %v4228
      %v4256 = vadd.f32 %v4202, %v4229
      %v4257 = vadd.f32 %v4203, %v4230
      %v4258 = vadd.f32 %v4204, %v4231
      %v4259 = vadd.f32 %v4205, %v4232
      %v4260 = vadd.f32 %v4206, %v4233
      %v4261 = vadd.f32 %v4207, %v4234
      %v4262 = vadd.f32 %v4208, %v4235
      %v4263 = vadd.f32 %v4209, %v4236
      %v4264 = vadd.f32 %v4210, %v4237
      %v4265 = vadd.f32 %v4211, %v4238
      %v4266 = vadd.f32 %v4212, %v4239
      %v4267 = vadd.f32 %v4213, %v4240
      %v4268 = vmul.f32 %v2624, %v778
      %v4269 = vmul.f32 %v2629, %v778
      %v4270 = vmul.f32 %v2634, %v778
      %v4271 = vmul.f32 %v2639, %v778
      %v4272 = vmul.f32 %v2644, %v778
      %v4273 = vmul.f32 %v2649, %v778
      %v4274 = vmul.f32 %v2654, %v778
      %v4275 = vmul.f32 %v2659, %v778
      %v4276 = vmul.f32 %v2664, %v778
      %v4277 = vmul.f32 %v2669, %v778
      %v4278 = vmul.f32 %v2674, %v778
      %v4279 = vmul.f32 %v2679, %v778
      %v4280 = vmul.f32 %v2684, %v778
      %v4281 = vmul.f32 %v2689, %v778
      %v4282 = vmul.f32 %v2694, %v778
      %v4283 = vmul.f32 %v2699, %v778
      %v4284 = vmul.f32 %v2704, %v778
      %v4285 = vmul.f32 %v2709, %v778
      %v4286 = vmul.f32 %v2714, %v778
      %v4287 = vmul.f32 %v2719, %v778
      %v4288 = vmul.f32 %v2724, %v778
      %v4289 = vmul.f32 %v2729, %v778
      %v4290 = vmul.f32 %v2734, %v778
      %v4291 = vmul.f32 %v2739, %v778
      %v4292 = vmul.f32 %v2744, %v778
      %v4293 = vmul.f32 %v2749, %v778
      %v4294 = vmul.f32 %v2754, %v778
      %v4295 = vadd.f32 %v4241, %v4268
      %v4296 = vadd.f32 %v4242, %v4269
      %v4297 = vadd.f32 %v4243, %v4270
      %v4298 = vadd.f32 %v4244, %v4271
      %v4299 = vadd.f32 %v4245, %v4272
      %v4300 = vadd.f32 %v4246, %v4273
      %v4301 = vadd.f32 %v4247, %v4274
      %v4302 = vadd.f32 %v4248, %v4275
      %v4303 = vadd.f32 %v4249, %v4276
      %v4304 = vadd.f32 %v4250, %v4277
      %v4305 = vadd.f32 %v4251, %v4278
      %v4306 = vadd.f32 %v4252, %v4279
      %v4307 = vadd.f32 %v4253, %v4280
      %v4308 = vadd.f32 %v4254, %v4281
      %v4309 = vadd.f32 %v4255, %v4282
      %v4310 = vadd.f32 %v4256, %v4283
      %v4311 = vadd.f32 %v4257, %v4284
      %v4312 = vadd.f32 %v4258, %v4285
      %v4313 = vadd.f32 %v4259, %v4286
      %v4314 = vadd.f32 %v4260, %v4287
      %v4315 = vadd.f32 %v4261, %v4288
      %v4316 = vadd.f32 %v4262, %v4289
      %v4317 = vadd.f32 %v4263, %v4290
      %v4318 = vadd.f32 %v4264, %v4291
      %v4319 = vadd.f32 %v4265, %v4292
      %v4320 = vadd.f32 %v4266, %v4293
      %v4321 = vadd.f32 %v4267, %v4294
      %v4322 = vmul.f32 %v1752, %v1000
      %v4323 = vmul.f32 %v1757, %v1000
      %v4324 = vmul.f32 %v1762, %v1000
      %v4325 = vmul.f32 %v1767, %v1000
      %v4326 = vmul.f32 %v1772, %v1000
      %v4327 = vmul.f32 %v1777, %v1000
      %v4328 = vmul.f32 %v1782, %v1000
      %v4329 = vmul.f32 %v1787, %v1000
      %v4330 = vmul.f32 %v1792, %v1000
      %v4331 = vmul.f32 %v1797, %v1000
      %v4332 = vmul.f32 %v1802, %v1000
      %v4333 = vmul.f32 %v1807, %v1000
      %v4334 = vmul.f32 %v1812, %v1000
      %v4335 = vmul.f32 %v1817, %v1000
      %v4336 = vmul.f32 %v1822, %v1000
      %v4337 = vmul.f32 %v1827, %v1000
      %v4338 = vmul.f32 %v1832, %v1000
      %v4339 = vmul.f32 %v1837, %v1000
      %v4340 = vmul.f32 %v1842, %v1000
      %v4341 = vmul.f32 %v1847, %v1000
      %v4342 = vmul.f32 %v1852, %v1000
      %v4343 = vmul.f32 %v1857, %v1000
      %v4344 = vmul.f32 %v1862, %v1000
      %v4345 = vmul.f32 %v1867, %v1000
      %v4346 = vmul.f32 %v1872, %v1000
      %v4347 = vmul.f32 %v1877, %v1000
      %v4348 = vmul.f32 %v1882, %v1000
      %v4349 = vadd.f32 %v4295, %v4322
      %v4350 = vadd.f32 %v4296, %v4323
      %v4351 = vadd.f32 %v4297, %v4324
      %v4352 = vadd.f32 %v4298, %v4325
      %v4353 = vadd.f32 %v4299, %v4326
      %v4354 = vadd.f32 %v4300, %v4327
      %v4355 = vadd.f32 %v4301, %v4328
      %v4356 = vadd.f32 %v4302, %v4329
      %v4357 = vadd.f32 %v4303, %v4330
      %v4358 = vadd.f32 %v4304, %v4331
      %v4359 = vadd.f32 %v4305, %v4332
      %v4360 = vadd.f32 %v4306, %v4333
      %v4361 = vadd.f32 %v4307, %v4334
      %v4362 = vadd.f32 %v4308, %v4335
      %v4363 = vadd.f32 %v4309, %v4336
      %v4364 = vadd.f32 %v4310, %v4337
      %v4365 = vadd.f32 %v4311, %v4338
      %v4366 = vadd.f32 %v4312, %v4339
      %v4367 = vadd.f32 %v4313, %v4340
      %v4368 = vadd.f32 %v4314, %v4341
      %v4369 = vadd.f32 %v4315, %v4342
      %v4370 = vadd.f32 %v4316, %v4343
      %v4371 = vadd.f32 %v4317, %v4344
      %v4372 = vadd.f32 %v4318, %v4345
      %v4373 = vadd.f32 %v4319, %v4346
      %v4374 = vadd.f32 %v4320, %v4347
      %v4375 = vadd.f32 %v4321, %v4348
      %v4376 = vmul.f32 %v1973, %v1222
      %v4377 = vmul.f32 %v1978, %v1222
      %v4378 = vmul.f32 %v1983, %v1222
      %v4379 = vmul.f32 %v1988, %v1222
      %v4380 = vmul.f32 %v1993, %v1222
      %v4381 = vmul.f32 %v1998, %v1222
      %v4382 = vmul.f32 %v2003, %v1222
      %v4383 = vmul.f32 %v2008, %v1222
      %v4384 = vmul.f32 %v2013, %v1222
      %v4385 = vmul.f32 %v2018, %v1222
      %v4386 = vmul.f32 %v2023, %v1222
      %v4387 = vmul.f32 %v2028, %v1222
      %v4388 = vmul.f32 %v2033, %v1222
      %v4389 = vmul.f32 %v2038, %v1222
      %v4390 = vmul.f32 %v2043, %v1222
      %v4391 = vmul.f32 %v2048, %v1222
      %v4392 = vmul.f32 %v2053, %v1222
      %v4393 = vmul.f32 %v2058, %v1222
      %v4394 = vmul.f32 %v2063, %v1222
      %v4395 = vmul.f32 %v2068, %v1222
      %v4396 = vmul.f32 %v2073, %v1222
      %v4397 = vmul.f32 %v2078, %v1222
      %v4398 = vmul.f32 %v2083, %v1222
      %v4399 = vmul.f32 %v2088, %v1222
      %v4400 = vmul.f32 %v2093, %v1222
      %v4401 = vmul.f32 %v2098, %v1222
      %v4402 = vmul.f32 %v2103, %v1222
      %v4403 = vadd.f32 %v4349, %v4376
      %v4404 = vadd.f32 %v4350, %v4377
      %v4405 = vadd.f32 %v4351, %v4378
      %v4406 = vadd.f32 %v4352, %v4379
      %v4407 = vadd.f32 %v4353, %v4380
      %v4408 = vadd.f32 %v4354, %v4381
      %v4409 = vadd.f32 %v4355, %v4382
      %v4410 = vadd.f32 %v4356, %v4383
      %v4411 = vadd.f32 %v4357, %v4384
      %v4412 = vadd.f32 %v4358, %v4385
      %v4413 = vadd.f32 %v4359, %v4386
      %v4414 = vadd.f32 %v4360, %v4387
      %v4415 = vadd.f32 %v4361, %v4388
      %v4416 = vadd.f32 %v4362, %v4389
      %v4417 = vadd.f32 %v4363, %v4390
      %v4418 = vadd.f32 %v4364, %v4391
      %v4419 = vadd.f32 %v4365, %v4392
      %v4420 = vadd.f32 %v4366, %v4393
      %v4421 = vadd.f32 %v4367, %v4394
      %v4422 = vadd.f32 %v4368, %v4395
      %v4423 = vadd.f32 %v4369, %v4396
      %v4424 = vadd.f32 %v4370, %v4397
      %v4425 = vadd.f32 %v4371, %v4398
      %v4426 = vadd.f32 %v4372, %v4399
      %v4427 = vadd.f32 %v4373, %v4400
      %v4428 = vadd.f32 %v4374, %v4401
      %v4429 = vadd.f32 %v4375, %v4402
      %v4430 = vmul.f32 %v2948, %v1443
      %v4431 = vmul.f32 %v2953, %v1443
      %v4432 = vmul.f32 %v2958, %v1443
      %v4433 = vmul.f32 %v2963, %v1443
      %v4434 = vmul.f32 %v2968, %v1443
      %v4435 = vmul.f32 %v2973, %v1443
      %v4436 = vmul.f32 %v2978, %v1443
      %v4437 = vmul.f32 %v2983, %v1443
      %v4438 = vmul.f32 %v2988, %v1443
      %v4439 = vmul.f32 %v2993, %v1443
      %v4440 = vmul.f32 %v2998, %v1443
      %v4441 = vmul.f32 %v3003, %v1443
      %v4442 = vmul.f32 %v3008, %v1443
      %v4443 = vmul.f32 %v3013, %v1443
      %v4444 = vmul.f32 %v3018, %v1443
      %v4445 = vmul.f32 %v3023, %v1443
      %v4446 = vmul.f32 %v3028, %v1443
      %v4447 = vmul.f32 %v3033, %v1443
      %v4448 = vmul.f32 %v3038, %v1443
      %v4449 = vmul.f32 %v3043, %v1443
      %v4450 = vmul.f32 %v3048, %v1443
      %v4451 = vmul.f32 %v3053, %v1443
      %v4452 = vmul.f32 %v3058, %v1443
      %v4453 = vmul.f32 %v3063, %v1443
      %v4454 = vmul.f32 %v3068, %v1443
      %v4455 = vmul.f32 %v3073, %v1443
      %v4456 = vmul.f32 %v3078, %v1443
      %v4457 = vadd.f32 %v4403, %v4430
      %v4458 = vadd.f32 %v4404, %v4431
      %v4459 = vadd.f32 %v4405, %v4432
      %v4460 = vadd.f32 %v4406, %v4433
      %v4461 = vadd.f32 %v4407, %v4434
      %v4462 = vadd.f32 %v4408, %v4435
      %v4463 = vadd.f32 %v4409, %v4436
      %v4464 = vadd.f32 %v4410, %v4437
      %v4465 = vadd.f32 %v4411, %v4438
      %v4466 = vadd.f32 %v4412, %v4439
      %v4467 = vadd.f32 %v4413, %v4440
      %v4468 = vadd.f32 %v4414, %v4441
      %v4469 = vadd.f32 %v4415, %v4442
      %v4470 = vadd.f32 %v4416, %v4443
      %v4471 = vadd.f32 %v4417, %v4444
      %v4472 = vadd.f32 %v4418, %v4445
      %v4473 = vadd.f32 %v4419, %v4446
      %v4474 = vadd.f32 %v4420, %v4447
      %v4475 = vadd.f32 %v4421, %v4448
      %v4476 = vadd.f32 %v4422, %v4449
      %v4477 = vadd.f32 %v4423, %v4450
      %v4478 = vadd.f32 %v4424, %v4451
      %v4479 = vadd.f32 %v4425, %v4452
      %v4480 = vadd.f32 %v4426, %v4453
      %v4481 = vadd.f32 %v4427, %v4454
      %v4482 = vadd.f32 %v4428, %v4455
      %v4483 = vadd.f32 %v4429, %v4456
      %v4484 = vmul.f32 %v3731, %v1664
      %v4485 = vmul.f32 %v3736, %v1664
      %v4486 = vmul.f32 %v3741, %v1664
      %v4487 = vmul.f32 %v3746, %v1664
      %v4488 = vmul.f32 %v3751, %v1664
      %v4489 = vmul.f32 %v3756, %v1664
      %v4490 = vmul.f32 %v3761, %v1664
      %v4491 = vmul.f32 %v3766, %v1664
      %v4492 = vmul.f32 %v3771, %v1664
      %v4493 = vmul.f32 %v3776, %v1664
      %v4494 = vmul.f32 %v3781, %v1664
      %v4495 = vmul.f32 %v3786, %v1664
      %v4496 = vmul.f32 %v3791, %v1664
      %v4497 = vmul.f32 %v3796, %v1664
      %v4498 = vmul.f32 %v3801, %v1664
      %v4499 = vmul.f32 %v3806, %v1664
      %v4500 = vmul.f32 %v3811, %v1664
      %v4501 = vmul.f32 %v3816, %v1664
      %v4502 = vmul.f32 %v3821, %v1664
      %v4503 = vmul.f32 %v3826, %v1664
      %v4504 = vmul.f32 %v3831, %v1664
      %v4505 = vmul.f32 %v3836, %v1664
      %v4506 = vmul.f32 %v3841, %v1664
      %v4507 = vmul.f32 %v3846, %v1664
      %v4508 = vmul.f32 %v3851, %v1664
      %v4509 = vmul.f32 %v3856, %v1664
      %v4510 = vmul.f32 %v3861, %v1664
      %v4511 = vadd.f32 %v4457, %v4484
      %v4512 = vadd.f32 %v4458, %v4485
      %v4513 = vadd.f32 %v4459, %v4486
      %v4514 = vadd.f32 %v4460, %v4487
      %v4515 = vadd.f32 %v4461, %v4488
      %v4516 = vadd.f32 %v4462, %v4489
      %v4517 = vadd.f32 %v4463, %v4490
      %v4518 = vadd.f32 %v4464, %v4491
      %v4519 = vadd.f32 %v4465, %v4492
      %v4520 = vadd.f32 %v4466, %v4493
      %v4521 = vadd.f32 %v4467, %v4494
      %v4522 = vadd.f32 %v4468, %v4495
      %v4523 = vadd.f32 %v4469, %v4496
      %v4524 = vadd.f32 %v4470, %v4497
      %v4525 = vadd.f32 %v4471, %v4498
      %v4526 = vadd.f32 %v4472, %v4499
      %v4527 = vadd.f32 %v4473, %v4500
      %v4528 = vadd.f32 %v4474, %v4501
      %v4529 = vadd.f32 %v4475, %v4502
      %v4530 = vadd.f32 %v4476, %v4503
      %v4531 = vadd.f32 %v4477, %v4504
      %v4532 = vadd.f32 %v4478, %v4505
      %v4533 = vadd.f32 %v4479, %v4506
      %v4534 = vadd.f32 %v4480, %v4507
      %v4535 = vadd.f32 %v4481, %v4508
      %v4536 = vadd.f32 %v4482, %v4509
      %v4537 = vadd.f32 %v4483, %v4510
      %v4538 = vmul.f32 %v3947, %v1885
      %v4539 = vmul.f32 %v3952, %v1885
      %v4540 = vmul.f32 %v3957, %v1885
      %v4541 = vmul.f32 %v3962, %v1885
      %v4542 = vmul.f32 %v3967, %v1885
      %v4543 = vmul.f32 %v3972, %v1885
      %v4544 = vmul.f32 %v3977, %v1885
      %v4545 = vmul.f32 %v3982, %v1885
      %v4546 = vmul.f32 %v3987, %v1885
      %v4547 = vmul.f32 %v3992, %v1885
      %v4548 = vmul.f32 %v3997, %v1885
      %v4549 = vmul.f32 %v4002, %v1885
      %v4550 = vmul.f32 %v4007, %v1885
      %v4551 = vmul.f32 %v4012, %v1885
      %v4552 = vmul.f32 %v4017, %v1885
      %v4553 = vmul.f32 %v4022, %v1885
      %v4554 = vmul.f32 %v4027, %v1885
      %v4555 = vmul.f32 %v4032, %v1885
      %v4556 = vmul.f32 %v4037, %v1885
      %v4557 = vmul.f32 %v4042, %v1885
      %v4558 = vmul.f32 %v4047, %v1885
      %v4559 = vmul.f32 %v4052, %v1885
      %v4560 = vmul.f32 %v4057, %v1885
      %v4561 = vmul.f32 %v4062, %v1885
      %v4562 = vmul.f32 %v4067, %v1885
      %v4563 = vmul.f32 %v4072, %v1885
      %v4564 = vmul.f32 %v4077, %v1885
      %v4565 = vadd.f32 %v4511, %v4538
      %v4566 = vadd.f32 %v4512, %v4539
      %v4567 = vadd.f32 %v4513, %v4540
      %v4568 = vadd.f32 %v4514, %v4541
      %v4569 = vadd.f32 %v4515, %v4542
      %v4570 = vadd.f32 %v4516, %v4543
      %v4571 = vadd.f32 %v4517, %v4544
      %v4572 = vadd.f32 %v4518, %v4545
      %v4573 = vadd.f32 %v4519, %v4546
      %v4574 = vadd.f32 %v4520, %v4547
      %v4575 = vadd.f32 %v4521, %v4548
      %v4576 = vadd.f32 %v4522, %v4549
      %v4577 = vadd.f32 %v4523, %v4550
      %v4578 = vadd.f32 %v4524, %v4551
      %v4579 = vadd.f32 %v4525, %v4552
      %v4580 = vadd.f32 %v4526, %v4553
      %v4581 = vadd.f32 %v4527, %v4554
      %v4582 = vadd.f32 %v4528, %v4555
      %v4583 = vadd.f32 %v4529, %v4556
      %v4584 = vadd.f32 %v4530, %v4557
      %v4585 = vadd.f32 %v4531, %v4558
      %v4586 = vadd.f32 %v4532, %v4559
      %v4587 = vadd.f32 %v4533, %v4560
      %v4588 = vadd.f32 %v4534, %v4561
      %v4589 = vadd.f32 %v4535, %v4562
      %v4590 = vadd.f32 %v4536, %v4563
      %v4591 = vadd.f32 %v4537, %v4564
      %v4592 = vld [vmem:[%s1056 + $0x10] sm:$0xff]
      %v4593 = vld [vmem:[%s1056 + $0x18] sm:$0xff]
      %v4594 = vld [vmem:[%s1056 + $0x20] sm:$0xff]
      %v4595 = vld [vmem:[%s1056 + $0x28] sm:$0xff]
      %v4596 = vld [vmem:[%s1056 + $0x30] sm:$0xff]
      %v4597 = vld [vmem:[%s1056 + $0x38] sm:$0xff]
      %v4598 = vld [vmem:[%s1056 + $0x40] sm:$0xff]
      %v4599 = vld [vmem:[%s1056 + $0x48] sm:$0xff]
      %v4600 = vld [vmem:[%s1056 + $0x50] sm:$0xff]
      %v4601 = vld [vmem:[%s1056 + $0x58] sm:$0xff]
      %v4602 = vld [vmem:[%s1056 + $0x60] sm:$0xff]
      %v4603 = vld [vmem:[%s1056 + $0x68] sm:$0xff]
      %v4604 = vld [vmem:[%s1056 + $0x70] sm:$0xff]
      %v4605 = vld [vmem:[%s1056 + $0x78] sm:$0xff]
      %v4606 = vld [vmem:[%s1056 + $0x80] sm:$0xff]
      %v4607 = vld [vmem:[%s1056 + $0x88] sm:$0xff]
      %v4608 = vld [vmem:[%s1056 + $0x90] sm:$0xff]
      %v4609 = vld [vmem:[%s1056 + $0x98] sm:$0xff]
      %v4610 = vld [vmem:[%s1056 + $0xa0] sm:$0xff]
      %v4611 = vld [vmem:[%s1056 + $0xa8] sm:$0xff]
      %v4612 = vld [vmem:[%s1056 + $0xb0] sm:$0xff]
      %v4613 = vld [vmem:[%s1056 + $0xb8] sm:$0xff]
      %v4614 = vld [vmem:[%s1056 + $0xc0] sm:$0xff]
      %v4615 = vld [vmem:[%s1056 + $0xc8] sm:$0xff]
      %v4616 = vld [vmem:[%s1056 + $0xd0] sm:$0xff]
      %v4617 = vld [vmem:[%s1056 + $0xd8] sm:$0xff]
      %v4618 = vld [vmem:[%s1056 + $0xe0] sm:$0x3]
      %4620 = vset.pattern.permute.xlu0 0
      %4621 = vperm.xlu0 %4620, %v4592
      %v4622 = vpop.permute.xlu0 %4621
      %4625 = vset.pattern.permute.xlu0 0
      %4626 = vperm.xlu0 %4625, %v4593
      %v4627 = vpop.permute.xlu0 %4626
      %4630 = vset.pattern.permute.xlu0 0
      %4631 = vperm.xlu0 %4630, %v4594
      %v4632 = vpop.permute.xlu0 %4631
      %4635 = vset.pattern.permute.xlu0 0
      %4636 = vperm.xlu0 %4635, %v4595
      %v4637 = vpop.permute.xlu0 %4636
      %4640 = vset.pattern.permute.xlu0 0
      %4641 = vperm.xlu0 %4640, %v4596
      %v4642 = vpop.permute.xlu0 %4641
      %4645 = vset.pattern.permute.xlu0 0
      %4646 = vperm.xlu0 %4645, %v4597
      %v4647 = vpop.permute.xlu0 %4646
      %4650 = vset.pattern.permute.xlu0 0
      %4651 = vperm.xlu0 %4650, %v4598
      %v4652 = vpop.permute.xlu0 %4651
      %4655 = vset.pattern.permute.xlu0 0
      %4656 = vperm.xlu0 %4655, %v4599
      %v4657 = vpop.permute.xlu0 %4656
      %4660 = vset.pattern.permute.xlu0 0
      %4661 = vperm.xlu0 %4660, %v4600
      %v4662 = vpop.permute.xlu0 %4661
      %4665 = vset.pattern.permute.xlu0 0
      %4666 = vperm.xlu0 %4665, %v4601
      %v4667 = vpop.permute.xlu0 %4666
      %4670 = vset.pattern.permute.xlu0 0
      %4671 = vperm.xlu0 %4670, %v4602
      %v4672 = vpop.permute.xlu0 %4671
      %4675 = vset.pattern.permute.xlu0 0
      %4676 = vperm.xlu0 %4675, %v4603
      %v4677 = vpop.permute.xlu0 %4676
      %4680 = vset.pattern.permute.xlu0 0
      %4681 = vperm.xlu0 %4680, %v4604
      %v4682 = vpop.permute.xlu0 %4681
      %4685 = vset.pattern.permute.xlu0 0
      %4686 = vperm.xlu0 %4685, %v4605
      %v4687 = vpop.permute.xlu0 %4686
      %4690 = vset.pattern.permute.xlu0 0
      %4691 = vperm.xlu0 %4690, %v4606
      %v4692 = vpop.permute.xlu0 %4691
      %4695 = vset.pattern.permute.xlu0 0
      %4696 = vperm.xlu0 %4695, %v4607
      %v4697 = vpop.permute.xlu0 %4696
      %4700 = vset.pattern.permute.xlu0 0
      %4701 = vperm.xlu0 %4700, %v4608
      %v4702 = vpop.permute.xlu0 %4701
      %4705 = vset.pattern.permute.xlu0 0
      %4706 = vperm.xlu0 %4705, %v4609
      %v4707 = vpop.permute.xlu0 %4706
      %4710 = vset.pattern.permute.xlu0 0
      %4711 = vperm.xlu0 %4710, %v4610
      %v4712 = vpop.permute.xlu0 %4711
      %4715 = vset.pattern.permute.xlu0 0
      %4716 = vperm.xlu0 %4715, %v4611
      %v4717 = vpop.permute.xlu0 %4716
      %4720 = vset.pattern.permute.xlu0 0
      %4721 = vperm.xlu0 %4720, %v4612
      %v4722 = vpop.permute.xlu0 %4721
      %4725 = vset.pattern.permute.xlu0 0
      %4726 = vperm.xlu0 %4725, %v4613
      %v4727 = vpop.permute.xlu0 %4726
      %4730 = vset.pattern.permute.xlu0 0
      %4731 = vperm.xlu0 %4730, %v4614
      %v4732 = vpop.permute.xlu0 %4731
      %4735 = vset.pattern.permute.xlu0 0
      %4736 = vperm.xlu0 %4735, %v4615
      %v4737 = vpop.permute.xlu0 %4736
      %4740 = vset.pattern.permute.xlu0 0
      %4741 = vperm.xlu0 %4740, %v4616
      %v4742 = vpop.permute.xlu0 %4741
      %4745 = vset.pattern.permute.xlu0 0
      %4746 = vperm.xlu0 %4745, %v4617
      %v4747 = vpop.permute.xlu0 %4746
      %4750 = vset.pattern.permute.xlu0 0
      %4751 = vperm.xlu0 %4750, %v4618
      %v4752 = vpop.permute.xlu0 %4751
      %v4754 = vmul.f32 %v4622, %v2106
      %v4755 = vmul.f32 %v4627, %v2106
      %v4756 = vmul.f32 %v4632, %v2106
      %v4757 = vmul.f32 %v4637, %v2106
      %v4758 = vmul.f32 %v4642, %v2106
      %v4759 = vmul.f32 %v4647, %v2106
      %v4760 = vmul.f32 %v4652, %v2106
      %v4761 = vmul.f32 %v4657, %v2106
      %v4762 = vmul.f32 %v4662, %v2106
      %v4763 = vmul.f32 %v4667, %v2106
      %v4764 = vmul.f32 %v4672, %v2106
      %v4765 = vmul.f32 %v4677, %v2106
      %v4766 = vmul.f32 %v4682, %v2106
      %v4767 = vmul.f32 %v4687, %v2106
      %v4768 = vmul.f32 %v4692, %v2106
      %v4769 = vmul.f32 %v4697, %v2106
      %v4770 = vmul.f32 %v4702, %v2106
      %v4771 = vmul.f32 %v4707, %v2106
      %v4772 = vmul.f32 %v4712, %v2106
      %v4773 = vmul.f32 %v4717, %v2106
      %v4774 = vmul.f32 %v4722, %v2106
      %v4775 = vmul.f32 %v4727, %v2106
      %v4776 = vmul.f32 %v4732, %v2106
      %v4777 = vmul.f32 %v4737, %v2106
      %v4778 = vmul.f32 %v4742, %v2106
      %v4779 = vmul.f32 %v4747, %v2106
      %v4780 = vmul.f32 %v4752, %v2106
      %v4781 = vadd.f32 %v4565, %v4754
      %v4782 = vadd.f32 %v4566, %v4755
      %v4783 = vadd.f32 %v4567, %v4756
      %v4784 = vadd.f32 %v4568, %v4757
      %v4785 = vadd.f32 %v4569, %v4758
      %v4786 = vadd.f32 %v4570, %v4759
      %v4787 = vadd.f32 %v4571, %v4760
      %v4788 = vadd.f32 %v4572, %v4761
      %v4789 = vadd.f32 %v4573, %v4762
      %v4790 = vadd.f32 %v4574, %v4763
      %v4791 = vadd.f32 %v4575, %v4764
      %v4792 = vadd.f32 %v4576, %v4765
      %v4793 = vadd.f32 %v4577, %v4766
      %v4794 = vadd.f32 %v4578, %v4767
      %v4795 = vadd.f32 %v4579, %v4768
      %v4796 = vadd.f32 %v4580, %v4769
      %v4797 = vadd.f32 %v4581, %v4770
      %v4798 = vadd.f32 %v4582, %v4771
      %v4799 = vadd.f32 %v4583, %v4772
      %v4800 = vadd.f32 %v4584, %v4773
      %v4801 = vadd.f32 %v4585, %v4774
      %v4802 = vadd.f32 %v4586, %v4775
      %v4803 = vadd.f32 %v4587, %v4776
      %v4804 = vadd.f32 %v4588, %v4777
      %v4805 = vadd.f32 %v4589, %v4778
      %v4806 = vadd.f32 %v4590, %v4779
      %v4807 = vadd.f32 %v4591, %v4780
      %v4808 = vmax.f32 %v4133, %v4781
      %v4809 = vmax.f32 %v4134, %v4782
      %v4810 = vmax.f32 %v4135, %v4783
      %v4811 = vmax.f32 %v4136, %v4784
      %v4812 = vmax.f32 %v4137, %v4785
      %v4813 = vmax.f32 %v4138, %v4786
      %v4814 = vmax.f32 %v4139, %v4787
      %v4815 = vmax.f32 %v4140, %v4788
      %v4816 = vmax.f32 %v4141, %v4789
      %v4817 = vmax.f32 %v4142, %v4790
      %v4818 = vmax.f32 %v4143, %v4791
      %v4819 = vmax.f32 %v4144, %v4792
      %v4820 = vmax.f32 %v4145, %v4793
      %v4821 = vmax.f32 %v4146, %v4794
      %v4822 = vmax.f32 %v4147, %v4795
      %v4823 = vmax.f32 %v4148, %v4796
      %v4824 = vmax.f32 %v4149, %v4797
      %v4825 = vmax.f32 %v4150, %v4798
      %v4826 = vmax.f32 %v4151, %v4799
      %v4827 = vmax.f32 %v4152, %v4800
      %v4828 = vmax.f32 %v4153, %v4801
      %v4829 = vmax.f32 %v4154, %v4802
      %v4830 = vmax.f32 %v4155, %v4803
      %v4831 = vmax.f32 %v4156, %v4804
      %v4832 = vmax.f32 %v4157, %v4805
      %v4833 = vmax.f32 %v4158, %v4806
      %v4834 = vmax.f32 %v4159, %v4807
      %v4835 = vld [vmem:[%s2] sm:$0x1]
      %v4837 = vperm.slane %v4835, 0
      %v4839 = vadd.f32 %v4808, %v4837
      %v4840 = vadd.f32 %v4809, %v4837
      %v4841 = vadd.f32 %v4810, %v4837
      %v4842 = vadd.f32 %v4811, %v4837
      %v4843 = vadd.f32 %v4812, %v4837
      %v4844 = vadd.f32 %v4813, %v4837
      %v4845 = vadd.f32 %v4814, %v4837
      %v4846 = vadd.f32 %v4815, %v4837
      %v4847 = vadd.f32 %v4816, %v4837
      %v4848 = vadd.f32 %v4817, %v4837
      %v4849 = vadd.f32 %v4818, %v4837
      %v4850 = vadd.f32 %v4819, %v4837
      %v4851 = vadd.f32 %v4820, %v4837
      %v4852 = vadd.f32 %v4821, %v4837
      %v4853 = vadd.f32 %v4822, %v4837
      %v4854 = vadd.f32 %v4823, %v4837
      %v4855 = vadd.f32 %v4824, %v4837
      %v4856 = vadd.f32 %v4825, %v4837
      %v4857 = vadd.f32 %v4826, %v4837
      %v4858 = vadd.f32 %v4827, %v4837
      %v4859 = vadd.f32 %v4828, %v4837
      %v4860 = vadd.f32 %v4829, %v4837
      %v4861 = vadd.f32 %v4830, %v4837
      %v4862 = vadd.f32 %v4831, %v4837
      %v4863 = vadd.f32 %v4832, %v4837
      %v4864 = vadd.f32 %v4833, %v4837
      %v4865 = vadd.f32 %v4834, %v4837
      %v4866 = vmax.f32 %v4839, 0.0
      %v4867 = vmax.f32 %v4840, 0.0
      %v4868 = vmax.f32 %v4841, 0.0
      %v4869 = vmax.f32 %v4842, 0.0
      %v4870 = vmax.f32 %v4843, 0.0
      %v4871 = vmax.f32 %v4844, 0.0
      %v4872 = vmax.f32 %v4845, 0.0
      %v4873 = vmax.f32 %v4846, 0.0
      %v4874 = vmax.f32 %v4847, 0.0
      %v4875 = vmax.f32 %v4848, 0.0
      %v4876 = vmax.f32 %v4849, 0.0
      %v4877 = vmax.f32 %v4850, 0.0
      %v4878 = vmax.f32 %v4851, 0.0
      %v4879 = vmax.f32 %v4852, 0.0
      %v4880 = vmax.f32 %v4853, 0.0
      %v4881 = vmax.f32 %v4854, 0.0
      %v4882 = vmax.f32 %v4855, 0.0
      %v4883 = vmax.f32 %v4856, 0.0
      %v4884 = vmax.f32 %v4857, 0.0
      %v4885 = vmax.f32 %v4858, 0.0
      %v4886 = vmax.f32 %v4859, 0.0
      %v4887 = vmax.f32 %v4860, 0.0
      %v4888 = vmax.f32 %v4861, 0.0
      %v4889 = vmax.f32 %v4862, 0.0
      %v4890 = vmax.f32 %v4863, 0.0
      %v4891 = vmax.f32 %v4864, 0.0
      %v4892 = vmax.f32 %v4865, 0.0
      %vm4893 = vcmask 261120
      %4894 = vst.msk [vmem:[%s170] sm:$0xff] %vm4893, %v4866
      %4895 = vst.msk [vmem:[%s170 + $0x8] sm:$0xff] %vm4893, %v4867
      %4896 = vst.msk [vmem:[%s170 + $0x10] sm:$0xff] %vm4893, %v4868
      %4897 = vst.msk [vmem:[%s170 + $0x18] sm:$0xff] %vm4893, %v4869
      %4898 = vst.msk [vmem:[%s170 + $0x20] sm:$0xff] %vm4893, %v4870
      %4899 = vst.msk [vmem:[%s170 + $0x28] sm:$0xff] %vm4893, %v4871
      %4900 = vst.msk [vmem:[%s170 + $0x30] sm:$0xff] %vm4893, %v4872
      %4901 = vst.msk [vmem:[%s170 + $0x38] sm:$0xff] %vm4893, %v4873
      %4902 = vst.msk [vmem:[%s170 + $0x40] sm:$0xff] %vm4893, %v4874
      %4903 = vst.msk [vmem:[%s170 + $0x48] sm:$0xff] %vm4893, %v4875
      %4904 = vst.msk [vmem:[%s170 + $0x50] sm:$0xff] %vm4893, %v4876
      %4905 = vst.msk [vmem:[%s170 + $0x58] sm:$0xff] %vm4893, %v4877
      %4906 = vst.msk [vmem:[%s170 + $0x60] sm:$0xff] %vm4893, %v4878
      %4907 = vst.msk [vmem:[%s170 + $0x68] sm:$0xff] %vm4893, %v4879
      %4908 = vst.msk [vmem:[%s170 + $0x70] sm:$0xff] %vm4893, %v4880
      %4909 = vst.msk [vmem:[%s170 + $0x78] sm:$0xff] %vm4893, %v4881
      %4910 = vst.msk [vmem:[%s170 + $0x80] sm:$0xff] %vm4893, %v4882
      %4911 = vst.msk [vmem:[%s170 + $0x88] sm:$0xff] %vm4893, %v4883
      %4912 = vst.msk [vmem:[%s170 + $0x90] sm:$0xff] %vm4893, %v4884
      %4913 = vst.msk [vmem:[%s170 + $0x98] sm:$0xff] %vm4893, %v4885
      %4914 = vst.msk [vmem:[%s170 + $0xa0] sm:$0xff] %vm4893, %v4886
      %4915 = vst.msk [vmem:[%s170 + $0xa8] sm:$0xff] %vm4893, %v4887
      %4916 = vst.msk [vmem:[%s170 + $0xb0] sm:$0xff] %vm4893, %v4888
      %4917 = vst.msk [vmem:[%s170 + $0xb8] sm:$0xff] %vm4893, %v4889
      %4918 = vst.msk [vmem:[%s170 + $0xc0] sm:$0xff] %vm4893, %v4890
      %4919 = vst.msk [vmem:[%s170 + $0xc8] sm:$0xff] %vm4893, %v4891
      %vm4920 = vcmask 254976
      %4921 = vst.msk [vmem:[%s170 + $0xd0] sm:$0x3] %vm4920, %v4892
      %p4922 = scmp.lt.s32.totalorder %s14, 1
      %s4923 = scalar_select %p4922, %s14, 1
      %s4924 = smul.addr %s4923, 27
      %s4925 = smul.addr %s4924, 8
      %s4926 = scalar_lea.vmem %s3, %s4925
      // Predicated region
      $region33: #{simple_cnn_forward.4} parent=31 // pred_check
        %p4927 = pneg %p100
      $region34: #{simple_cnn_forward.4} parent=31 // pred_check_branch
        %4929 = sbr.rel (%p4927) target = $region36
      $region35: #{simple_cnn_forward.4} parent=31 // pred_region
        _
      $region36: #{simple_cnn_forward.4} parent=31 // pred_fallthru
        _
    $region32: #{simple_cnn_forward.4} parent=5 // pred_fallthru
      _
    %p4930 = scmp.le.s32.totalorder 2, %s9
    // Predicated region
    $region37: #{simple_cnn_forward.4} parent=5 // pred_check
      %p4931 = pneg %p4930
    $region38: #{simple_cnn_forward.4} parent=5 // pred_check_branch
      %4933 = sbr.rel (%p4931) target = $region40
    $region39: #{simple_cnn_forward.4} parent=5 // pred_region
      %s4934 = ssub.s32 %s9, 2
      // Predicated region
      $region41: #{simple_cnn_forward.4} parent=39 // pred_check
        %p4935 = pneg %p106
      $region42: #{simple_cnn_forward.4} parent=39 // pred_check_branch
        %4937 = sbr.rel (%p4935) target = $region44
      $region43: #{simple_cnn_forward.4} parent=39 // pred_region
        %p4938 = scmp.lt.s32.totalorder %s15, 1
        %s4939 = scalar_select %p4938, %s15, 1
        %s4940 = smul.addr %s4939, 27
        %s4941 = smul.addr %s4940, 8
        %s4942 = scalar_lea.vmem %s3, %s4941
      $region44: #{simple_cnn_forward.4} parent=39 // pred_fallthru
        _
    $region40: #{simple_cnn_forward.4} parent=5 // pred_fallthru
      _
  $region6: #{simple_cnn_forward.4} parent=0 // loop_footer
    %s13 = sadd.s32 1, %s9
  $region7: #{simple_cnn_forward.4} parent=0 // loop_footer_branch
    %8 = sbr.rel target = $region3
  $region8: #{simple_cnn_forward.4} parent=0 // loop_exit
    _

</llo_original>
